<compile_context>
chip_gen: v7x
topology: tpu7x:2x2x1
jax: 0.10.0
libtpu: 0.0.40
codegen_flags: <defaults>
</compile_context>

<pallas_src>
import functools

import numpy as np
import jax
import jax.numpy as jnp
from jax import lax
from jax.experimental import pallas as pl
from jax.experimental.pallas import tpu as pltpu


# ----------------------------------------------------------------------------
# Single fused VAE forward kernel: 7 chained matmuls, all activations VMEM-resident.
# ----------------------------------------------------------------------------
def _vae_fused_kernel(x_ref, eps_ref,
                      w1_ref, b1_ref, w2_ref, b2_ref,
                      wmu_ref, bmu_ref, wlv_ref, blv_ref,
                      wd1_ref, bd1_ref, wd2_ref, bd2_ref, wd3_ref, bd3_ref,
                      out_ref, lat_ref, *, nz):
    f32 = jnp.float32
    bf16 = jnp.bfloat16

    def mm(a, w_ref, b_ref):
        # bf16 MXU matmul, f32 accumulation, bias fused in the epilogue.
        return jnp.dot(a.astype(bf16), w_ref[...], preferred_element_type=f32) + b_ref[...]

    lrelu = lambda v: jnp.where(v > 0, v, 0.2 * v)

    # ---- Encoder --------------------------------------------------------------
    h1 = lrelu(mm(x_ref[...], w1_ref, b1_ref))        # [N, ndf*8*8]
    h2 = lrelu(mm(h1, w2_ref, b2_ref))                # [N, 2ndf*4*4]

    # ---- mu / log_var heads + reparameterize (f32; exp on the EUP) ------------
    h2b = h2.astype(bf16)
    mu = jnp.dot(h2b, wmu_ref[...], preferred_element_type=f32) + bmu_ref[...]
    log_var = jnp.dot(h2b, wlv_ref[...], preferred_element_type=f32) + blv_ref[...]
    z = mu + eps_ref[...] * jnp.exp(0.5 * log_var)    # [N, nz], f32

    # ---- Decoder ---------------------------------------------------------------
    # NOTE: decoder consumes z cast to bf16; the returned latent_z is the f32 value.
    d1 = jnp.maximum(mm(z, wd1_ref, bd1_ref), 0.0)    # [N, 2ngf*4*4]
    d2 = jnp.maximum(mm(d1, wd2_ref, bd2_ref), 0.0)   # [N, ngf*8*8]
    d3 = jnp.tanh(mm(d2, wd3_ref, bd3_ref))           # [N, nc*16*16]

    out_ref[...] = d3.astype(out_ref.dtype)
    lat_ref[:, 0 * nz:1 * nz] = mu
    lat_ref[:, 1 * nz:2 * nz] = log_var
    lat_ref[:, 2 * nz:3 * nz] = z


def generator_forward(params, x, eps):
    n, nc, isize, _ = x.shape
    nz = eps.shape[1]
    out_dim = params["wd3"].shape[1]                  # nc * isize * isize

    # Only input-side XLA work: flatten (free reshape) + cast; eps passed as-is.
    x_flat = x.reshape(n, -1).astype(jnp.bfloat16)    # [N, nc*isize*isize]
    eps_f = eps.astype(jnp.float32)                   # [N, nz]

    ins = (x_flat, eps_f,
           params["w1"], params["b1"], params["w2"], params["b2"],
           params["wmu"], params["bmu"], params["wlv"], params["blv"],
           params["wd1"], params["bd1"], params["wd2"], params["bd2"],
           params["wd3"], params["bd3"])

    full2d = lambda shape: pl.BlockSpec(shape, lambda i: (0, 0))

    wkeys = ("w1", "w2", "wmu", "wlv", "wd1", "wd2", "wd3")
    flops = 2 * n * sum(int(params[k].shape[0]) * int(params[k].shape[1]) for k in wkeys)
    in_bytes = sum(int(a.size) * a.dtype.itemsize for a in ins)
    out_bytes = n * (out_dim + 3 * nz) * 4
    cost = pl.CostEstimate(
        flops=int(flops),
        transcendentals=int(n * (nz + out_dim)),      # exp + tanh
        bytes_accessed=int(in_bytes + out_bytes),
    )

    out_flat, lat = pl.pallas_call(
        functools.partial(_vae_fused_kernel, nz=nz),
        out_shape=(
            jax.ShapeDtypeStruct((n, out_dim), jnp.float32),   # image, lane-dense
            jax.ShapeDtypeStruct((n, 3 * nz), jnp.float32),    # [mu | log_var | z]
        ),
        grid=(1,),
        in_specs=[full2d(a.shape) for a in ins],
        out_specs=(full2d((n, out_dim)), full2d((n, 3 * nz))),
        compiler_params=pltpu.CompilerParams(
            dimension_semantics=("arbitrary",),
            vmem_limit_bytes=32 * 1024 * 1024,
        ),
        cost_estimate=cost,
    )(*ins)

    output = out_flat.reshape(n, nc, isize, isize)
    mu = lat[:, 0 * nz:1 * nz]
    log_var = lat[:, 1 * nz:2 * nz]
    latent_z = lat[:, 2 * nz:3 * nz]
    return output, latent_z, mu, log_var


# ----------------------------------------------------------------------------
# One-time weight folding: conv / transposed-conv -> block-Toeplitz matmul weights.
# ----------------------------------------------------------------------------
def _conv_toeplitz(w, ih, iw, stride, pad):
    """Conv2d weight [OC, IC, KH, KW] -> T[(oc,oy,ox), (ic,y,x)] so that
    out_flat = x_flat @ T.T reproduces the (stride, pad) convolution."""
    w = np.asarray(w, np.float32)
    oc, ic, kh, kw = w.shape
    oh = (ih + 2 * pad - kh) // stride + 1
    ow = (iw + 2 * pad - kw) // stride + 1
    t = np.zeros((oc, oh, ow, ic, ih, iw), np.float32)
    for i in range(kh):
        for j in range(kw):
            for oy in range(oh):
                y = stride * oy + i - pad
                if y < 0 or y >= ih:
                    continue
                for ox in range(ow):
                    x = stride * ox + j - pad
                    if x < 0 or x >= iw:
                        continue
                    t[:, oy, ox, :, y, x] = w[:, :, i, j]
    return t.reshape(oc * oh * ow, ic * ih * iw), oh, ow


def _convT_toeplitz(w, ih, iw, stride, pad):
    """ConvTranspose2d weight [IC, OC, KH, KW] -> T[(oc,oy,ox), (ic,y,x)]."""
    w = np.asarray(w, np.float32)
    ic, oc, kh, kw = w.shape
    oh = (ih - 1) * stride - 2 * pad + kh
    ow = (iw - 1) * stride - 2 * pad + kw
    t = np.zeros((oc, oh, ow, ic, ih, iw), np.float32)
    for y in range(ih):
        for x in range(iw):
            for i in range(kh):
                for j in range(kw):
                    oy = stride * y + i - pad
                    ox = stride * x + j - pad
                    if 0 <= oy < oh and 0 <= ox < ow:
                        t[:, oy, ox, :, y, x] = w[:, :, i, j].T
    return t.reshape(oc * oh * ow, ic * ih * iw), oh, ow


def prepare_params(raw, isize=16):
    """Fold PyTorch-layout weights into [in_feats, out_feats] bf16 Toeplitz matrices
    and [1, out_feats] f32 bias rows (hoisted out of the forward pass, run once)."""
    def wmat(t):
        return jnp.asarray(t.T, jnp.bfloat16)                 # [in_feats, out_feats]

    def brow(b, reps):
        return jnp.asarray(np.repeat(np.asarray(b, np.float32), reps).reshape(1, -1))

    t1, h1, w1 = _conv_toeplitz(raw["enc1_w"], isize, isize, 2, 1)
    t2, h2, w2 = _conv_toeplitz(raw["enc2_w"], h1, w1, 2, 1)
    tmu, hm, wm = _conv_toeplitz(raw["mu_w"], h2, w2, 1, 0)
    tlv, _, _ = _conv_toeplitz(raw["lv_w"], h2, w2, 1, 0)
    td1, hd1, wd1 = _convT_toeplitz(raw["dec1_w"], 1, 1, 1, 0)
    td2, hd2, wd2 = _convT_toeplitz(raw["dec2_w"], hd1, wd1, 2, 1)
    td3, hd3, wd3 = _convT_toeplitz(raw["dec3_w"], hd2, wd2, 2, 1)

    return {
        "w1": wmat(t1), "b1": brow(raw["enc1_b"], h1 * w1),
        "w2": wmat(t2), "b2": brow(raw["enc2_b"], h2 * w2),
        "wmu": wmat(tmu), "bmu": brow(raw["mu_b"], hm * wm),
        "wlv": wmat(tlv), "blv": brow(raw["lv_b"], hm * wm),
        "wd1": wmat(td1), "bd1": brow(raw["dec1_b"], hd1 * wd1),
        "wd2": wmat(td2), "bd2": brow(raw["dec2_b"], hd2 * wd2),
        "wd3": wmat(td3), "bd3": brow(raw["dec3_b"], hd3 * wd3),
    }


# ----------------------------------------------------------------------------
# Raw (PyTorch-layout) params + pure-JAX f32 reference for validation
# ----------------------------------------------------------------------------
def init_raw_params(key, nc, nz, ndf, ngf):
    def w(k, shape, scale=0.02):
        return scale * jax.random.normal(k, shape, jnp.float32)
    ks = jax.random.split(key, 14)
    return {
        "enc1_w": w(ks[0], (ndf, nc, 4, 4)),        "enc1_b": w(ks[1], (ndf,)),
        "enc2_w": w(ks[2], (ndf * 2, ndf, 4, 4)),   "enc2_b": w(ks[3], (ndf * 2,)),
        "mu_w":   w(ks[4], (nz, ndf * 2, 4, 4)),    "mu_b":   w(ks[5], (nz,)),
        "lv_w":   w(ks[6], (nz, ndf * 2, 4, 4)),    "lv_b":   w(ks[7], (nz,)),
        "dec1_w": w(ks[8], (nz, ngf * 2, 4, 4)),    "dec1_b": w(ks[9], (ngf * 2,)),
        "dec2_w": w(ks[10], (ngf * 2, ngf, 4, 4)),  "dec2_b": w(ks[11], (ngf,)),
        "dec3_w": w(ks[12], (ngf, nc, 4, 4)),       "dec3_b": w(ks[13], (nc,)),
    }


def _ref_conv(x, w, b, s, p):
    y = lax.conv_general_dilated(x, w, (s, s), [(p, p), (p, p)],
                                 dimension_numbers=("NCHW", "OIHW", "NCHW"),
                                 precision=lax.Precision.HIGHEST)
    return y + b.reshape(1, -1, 1, 1)


def _ref_convT(x, w, b, s, p):
    k = w.shape[2]
    wt = jnp.flip(w, (2, 3)).transpose(1, 0, 2, 3)
    y = lax.conv_general_dilated(x, wt, (1, 1), [(k - 1 - p, k - 1 - p)] * 2,
                                 lhs_dilation=(s, s),
                                 dimension_numbers=("NCHW", "OIHW", "NCHW"),
                                 precision=lax.Precision.HIGHEST)
    return y + b.reshape(1, -1, 1, 1)


def reference_forward(raw, x, eps):
    lrelu = lambda v: jnp.where(v > 0, v, 0.2 * v)
    n = x.shape[0]
    h = lrelu(_ref_conv(x, raw["enc1_w"], raw["enc1_b"], 2, 1))
    h = lrelu(_ref_conv(h, raw["enc2_w"], raw["enc2_b"], 2, 1))
    mu = _ref_conv(h, raw["mu_w"], raw["mu_b"], 1, 0).reshape(n, -1)
    log_var = _ref_conv(h, raw["lv_w"], raw["lv_b"], 1, 0).reshape(n, -1)
    z = mu + eps * jnp.exp(0.5 * log_var)
    d = jax.nn.relu(_ref_convT(z.reshape(n, -1, 1, 1), raw["dec1_w"], raw["dec1_b"], 1, 0))
    d = jax.nn.relu(_ref_convT(d, raw["dec2_w"], raw["dec2_b"], 2, 1))
    out = jnp.tanh(_ref_convT(d, raw["dec3_w"], raw["dec3_b"], 2, 1))
    return out, z, mu, log_var


if __name__ == "__main__":
    nc, isize, nz, ndf, ngf, batch = 4, 16, 32, 16, 16, 2

    root = jax.random.PRNGKey(0)
    k_param, k_x, k_eps = jax.random.split(root, 3)
    raw = init_raw_params(k_param, nc, nz, ndf, ngf)
    params = prepare_params(raw, isize)    # one-time Toeplitz weight folding
    x = jax.random.normal(k_x, (batch, nc, isize, isize), jnp.float32)
    eps = jax.random.normal(k_eps, (batch, nz), jnp.float32)

    fwd = jax.jit(generator_forward)
    output, latent_z, mu, log_var = fwd(params, x, eps)
    jax.block_until_ready((output, latent_z, mu, log_var))

    assert output.shape == (batch, nc, isize, isize)
    assert latent_z.shape == (batch, nz)
    assert mu.shape == (batch, nz) and log_var.shape == (batch, nz)

    # Validate against a pure-JAX f32 reference (tolerances account for bf16 matmuls).
    ref_out, ref_z, ref_mu, ref_lv = jax.jit(reference_forward)(raw, x, eps)
    np.testing.assert_allclose(np.asarray(mu), np.asarray(ref_mu), rtol=2e-2, atol=2e-2)
    np.testing.assert_allclose(np.asarray(log_var), np.asarray(ref_lv), rtol=2e-2, atol=2e-2)
    np.testing.assert_allclose(np.asarray(latent_z), np.asarray(ref_z), rtol=2e-2, atol=2e-2)
    np.testing.assert_allclose(np.asarray(output), np.asarray(ref_out), rtol=2e-2, atol=2e-2)

    print("KERNEL_OK")
</pallas_src>

<mosaic_0001>
module attributes {stable_mosaic.version = 11 : i64} {
  func.func @_vae_fused_kernel(%arg0: i32, %arg1: memref<2x1024xbf16, #tpu.memory_space<vmem>>, %arg2: memref<2x32xf32, #tpu.memory_space<vmem>>, %arg3: memref<1024x1024xbf16, #tpu.memory_space<vmem>>, %arg4: memref<1x1024xf32, #tpu.memory_space<vmem>>, %arg5: memref<1024x512xbf16, #tpu.memory_space<vmem>>, %arg6: memref<1x512xf32, #tpu.memory_space<vmem>>, %arg7: memref<512x32xbf16, #tpu.memory_space<vmem>>, %arg8: memref<1x32xf32, #tpu.memory_space<vmem>>, %arg9: memref<512x32xbf16, #tpu.memory_space<vmem>>, %arg10: memref<1x32xf32, #tpu.memory_space<vmem>>, %arg11: memref<32x512xbf16, #tpu.memory_space<vmem>>, %arg12: memref<1x512xf32, #tpu.memory_space<vmem>>, %arg13: memref<512x1024xbf16, #tpu.memory_space<vmem>>, %arg14: memref<1x1024xf32, #tpu.memory_space<vmem>>, %arg15: memref<1024x1024xbf16, #tpu.memory_space<vmem>>, %arg16: memref<1x1024xf32, #tpu.memory_space<vmem>>, %arg17: memref<2x1024xf32, #tpu.memory_space<vmem>>, %arg18: memref<2x96xf32, #tpu.memory_space<vmem>>) attributes {dimension_semantics = [#tpu.dimension_semantics<arbitrary>], iteration_bounds = array<i64: 1>, scalar_prefetch = 0 : i64, scratch_operands = 0 : i64, tpu.core_type = #tpu.core_type<tc>, window_params = [{pipeline_mode = #tpu.pipeline_mode<synchronous>, transform_indices = @transform_0, window_bounds = array<i64: 2, 1024>}, {pipeline_mode = #tpu.pipeline_mode<synchronous>, transform_indices = @transform_1, window_bounds = array<i64: 2, 32>}, {pipeline_mode = #tpu.pipeline_mode<synchronous>, transform_indices = @transform_2, window_bounds = array<i64: 1024, 1024>}, {pipeline_mode = #tpu.pipeline_mode<synchronous>, transform_indices = @transform_3, window_bounds = array<i64: 1, 1024>}, {pipeline_mode = #tpu.pipeline_mode<synchronous>, transform_indices = @transform_4, window_bounds = array<i64: 1024, 512>}, {pipeline_mode = #tpu.pipeline_mode<synchronous>, transform_indices = @transform_5, window_bounds = array<i64: 1, 512>}, {pipeline_mode = #tpu.pipeline_mode<synchronous>, transform_indices = @transform_6, window_bounds = array<i64: 512, 32>}, {pipeline_mode = #tpu.pipeline_mode<synchronous>, transform_indices = @transform_7, window_bounds = array<i64: 1, 32>}, {pipeline_mode = #tpu.pipeline_mode<synchronous>, transform_indices = @transform_8, window_bounds = array<i64: 512, 32>}, {pipeline_mode = #tpu.pipeline_mode<synchronous>, transform_indices = @transform_9, window_bounds = array<i64: 1, 32>}, {pipeline_mode = #tpu.pipeline_mode<synchronous>, transform_indices = @transform_10, window_bounds = array<i64: 32, 512>}, {pipeline_mode = #tpu.pipeline_mode<synchronous>, transform_indices = @transform_11, window_bounds = array<i64: 1, 512>}, {pipeline_mode = #tpu.pipeline_mode<synchronous>, transform_indices = @transform_12, window_bounds = array<i64: 512, 1024>}, {pipeline_mode = #tpu.pipeline_mode<synchronous>, transform_indices = @transform_13, window_bounds = array<i64: 1, 1024>}, {pipeline_mode = #tpu.pipeline_mode<synchronous>, transform_indices = @transform_14, window_bounds = array<i64: 1024, 1024>}, {pipeline_mode = #tpu.pipeline_mode<synchronous>, transform_indices = @transform_15, window_bounds = array<i64: 1, 1024>}, {pipeline_mode = #tpu.pipeline_mode<synchronous>, transform_indices = @transform_16, window_bounds = array<i64: 2, 1024>}, {pipeline_mode = #tpu.pipeline_mode<synchronous>, transform_indices = @transform_17, window_bounds = array<i64: 2, 96>}]} {
    %c0 = arith.constant 0 : index
    %c0_0 = arith.constant 0 : index
    %0 = vector.load %arg1[%c0, %c0_0] : memref<2x1024xbf16, #tpu.memory_space<vmem>>, vector<2x1024xbf16>
    %c0_1 = arith.constant 0 : index
    %c0_2 = arith.constant 0 : index
    %1 = vector.load %arg3[%c0_1, %c0_2] : memref<1024x1024xbf16, #tpu.memory_space<vmem>>, vector<1024x1024xbf16>
    %cst = arith.constant dense<0.000000e+00> : vector<2x1024xf32>
    %2 = tpu.matmul %0, %1, %cst {dimension_numbers = #tpu.dot_dimension_numbers<[1], [0], [0], [1], [0, 0, 1, 1], [], []>} : vector<2x1024xbf16>, vector<1024x1024xbf16>, vector<2x1024xf32> -> vector<2x1024xf32>
    %c0_3 = arith.constant 0 : index
    %c0_4 = arith.constant 0 : index
    %3 = vector.load %arg4[%c0_3, %c0_4] : memref<1x1024xf32, #tpu.memory_space<vmem>>, vector<1x1024xf32>
    %4 = vector.broadcast %3 : vector<1x1024xf32> to vector<2x1024xf32>
    %5 = arith.addf %2, %4 : vector<2x1024xf32>
    %cst_5 = arith.constant 0.000000e+00 : f32
    %6 = vector.broadcast %cst_5 : f32 to vector<2x1024xf32>
    %7 = arith.cmpf ogt, %5, %6 : vector<2x1024xf32>
    %cst_6 = arith.constant 2.000000e-01 : f32
    %8 = vector.broadcast %cst_6 : f32 to vector<2x1024xf32>
    %9 = arith.mulf %8, %5 : vector<2x1024xf32>
    %10 = arith.select %7, %5, %9 : vector<2x1024xi1>, vector<2x1024xf32>
    %11 = arith.truncf %10 : vector<2x1024xf32> to vector<2x1024xbf16>
    %c0_7 = arith.constant 0 : index
    %c0_8 = arith.constant 0 : index
    %12 = vector.load %arg5[%c0_7, %c0_8] : memref<1024x512xbf16, #tpu.memory_space<vmem>>, vector<1024x512xbf16>
    %cst_9 = arith.constant dense<0.000000e+00> : vector<2x512xf32>
    %13 = tpu.matmul %11, %12, %cst_9 {dimension_numbers = #tpu.dot_dimension_numbers<[1], [0], [0], [1], [0, 0, 1, 1], [], []>} : vector<2x1024xbf16>, vector<1024x512xbf16>, vector<2x512xf32> -> vector<2x512xf32>
    %c0_10 = arith.constant 0 : index
    %c0_11 = arith.constant 0 : index
    %14 = vector.load %arg6[%c0_10, %c0_11] : memref<1x512xf32, #tpu.memory_space<vmem>>, vector<1x512xf32>
    %15 = vector.broadcast %14 : vector<1x512xf32> to vector<2x512xf32>
    %16 = arith.addf %13, %15 : vector<2x512xf32>
    %cst_12 = arith.constant 0.000000e+00 : f32
    %17 = vector.broadcast %cst_12 : f32 to vector<2x512xf32>
    %18 = arith.cmpf ogt, %16, %17 : vector<2x512xf32>
    %cst_13 = arith.constant 2.000000e-01 : f32
    %19 = vector.broadcast %cst_13 : f32 to vector<2x512xf32>
    %20 = arith.mulf %19, %16 : vector<2x512xf32>
    %21 = arith.select %18, %16, %20 : vector<2x512xi1>, vector<2x512xf32>
    %22 = arith.truncf %21 : vector<2x512xf32> to vector<2x512xbf16>
    %c0_14 = arith.constant 0 : index
    %c0_15 = arith.constant 0 : index
    %23 = vector.load %arg7[%c0_14, %c0_15] : memref<512x32xbf16, #tpu.memory_space<vmem>>, vector<512x32xbf16>
    %cst_16 = arith.constant dense<0.000000e+00> : vector<2x32xf32>
    %24 = tpu.matmul %22, %23, %cst_16 {dimension_numbers = #tpu.dot_dimension_numbers<[1], [0], [0], [1], [0, 0, 1, 1], [], []>} : vector<2x512xbf16>, vector<512x32xbf16>, vector<2x32xf32> -> vector<2x32xf32>
    %c0_17 = arith.constant 0 : index
    %c0_18 = arith.constant 0 : index
    %25 = vector.load %arg8[%c0_17, %c0_18] : memref<1x32xf32, #tpu.memory_space<vmem>>, vector<1x32xf32>
    %26 = vector.broadcast %25 : vector<1x32xf32> to vector<2x32xf32>
    %27 = arith.addf %24, %26 : vector<2x32xf32>
    %c0_19 = arith.constant 0 : index
    %c0_20 = arith.constant 0 : index
    %28 = vector.load %arg9[%c0_19, %c0_20] : memref<512x32xbf16, #tpu.memory_space<vmem>>, vector<512x32xbf16>
    %cst_21 = arith.constant dense<0.000000e+00> : vector<2x32xf32>
    %29 = tpu.matmul %22, %28, %cst_21 {dimension_numbers = #tpu.dot_dimension_numbers<[1], [0], [0], [1], [0, 0, 1, 1], [], []>} : vector<2x512xbf16>, vector<512x32xbf16>, vector<2x32xf32> -> vector<2x32xf32>
    %c0_22 = arith.constant 0 : index
    %c0_23 = arith.constant 0 : index
    %30 = vector.load %arg10[%c0_22, %c0_23] : memref<1x32xf32, #tpu.memory_space<vmem>>, vector<1x32xf32>
    %31 = vector.broadcast %30 : vector<1x32xf32> to vector<2x32xf32>
    %32 = arith.addf %29, %31 : vector<2x32xf32>
    %c0_24 = arith.constant 0 : index
    %c0_25 = arith.constant 0 : index
    %33 = vector.load %arg2[%c0_24, %c0_25] : memref<2x32xf32, #tpu.memory_space<vmem>>, vector<2x32xf32>
    %cst_26 = arith.constant 5.000000e-01 : f32
    %34 = vector.broadcast %cst_26 : f32 to vector<2x32xf32>
    %35 = arith.mulf %34, %32 : vector<2x32xf32>
    %36 = math.exp %35 : vector<2x32xf32>
    %37 = arith.mulf %33, %36 : vector<2x32xf32>
    %38 = arith.addf %27, %37 : vector<2x32xf32>
    %39 = arith.truncf %38 : vector<2x32xf32> to vector<2x32xbf16>
    %c0_27 = arith.constant 0 : index
    %c0_28 = arith.constant 0 : index
    %40 = vector.load %arg11[%c0_27, %c0_28] : memref<32x512xbf16, #tpu.memory_space<vmem>>, vector<32x512xbf16>
    %cst_29 = arith.constant dense<0.000000e+00> : vector<2x512xf32>
    %41 = tpu.matmul %39, %40, %cst_29 {dimension_numbers = #tpu.dot_dimension_numbers<[1], [0], [0], [1], [0, 0, 1, 1], [], []>} : vector<2x32xbf16>, vector<32x512xbf16>, vector<2x512xf32> -> vector<2x512xf32>
    %c0_30 = arith.constant 0 : index
    %c0_31 = arith.constant 0 : index
    %42 = vector.load %arg12[%c0_30, %c0_31] : memref<1x512xf32, #tpu.memory_space<vmem>>, vector<1x512xf32>
    %43 = vector.broadcast %42 : vector<1x512xf32> to vector<2x512xf32>
    %44 = arith.addf %41, %43 : vector<2x512xf32>
    %cst_32 = arith.constant 0.000000e+00 : f32
    %45 = vector.broadcast %cst_32 : f32 to vector<2x512xf32>
    %46 = arith.maximumf %44, %45 : vector<2x512xf32>
    %47 = arith.truncf %46 : vector<2x512xf32> to vector<2x512xbf16>
    %c0_33 = arith.constant 0 : index
    %c0_34 = arith.constant 0 : index
    %48 = vector.load %arg13[%c0_33, %c0_34] : memref<512x1024xbf16, #tpu.memory_space<vmem>>, vector<512x1024xbf16>
    %cst_35 = arith.constant dense<0.000000e+00> : vector<2x1024xf32>
    %49 = tpu.matmul %47, %48, %cst_35 {dimension_numbers = #tpu.dot_dimension_numbers<[1], [0], [0], [1], [0, 0, 1, 1], [], []>} : vector<2x512xbf16>, vector<512x1024xbf16>, vector<2x1024xf32> -> vector<2x1024xf32>
    %c0_36 = arith.constant 0 : index
    %c0_37 = arith.constant 0 : index
    %50 = vector.load %arg14[%c0_36, %c0_37] : memref<1x1024xf32, #tpu.memory_space<vmem>>, vector<1x1024xf32>
    %51 = vector.broadcast %50 : vector<1x1024xf32> to vector<2x1024xf32>
    %52 = arith.addf %49, %51 : vector<2x1024xf32>
    %cst_38 = arith.constant 0.000000e+00 : f32
    %53 = vector.broadcast %cst_38 : f32 to vector<2x1024xf32>
    %54 = arith.maximumf %52, %53 : vector<2x1024xf32>
    %55 = arith.truncf %54 : vector<2x1024xf32> to vector<2x1024xbf16>
    %c0_39 = arith.constant 0 : index
    %c0_40 = arith.constant 0 : index
    %56 = vector.load %arg15[%c0_39, %c0_40] : memref<1024x1024xbf16, #tpu.memory_space<vmem>>, vector<1024x1024xbf16>
    %cst_41 = arith.constant dense<0.000000e+00> : vector<2x1024xf32>
    %57 = tpu.matmul %55, %56, %cst_41 {dimension_numbers = #tpu.dot_dimension_numbers<[1], [0], [0], [1], [0, 0, 1, 1], [], []>} : vector<2x1024xbf16>, vector<1024x1024xbf16>, vector<2x1024xf32> -> vector<2x1024xf32>
    %c0_42 = arith.constant 0 : index
    %c0_43 = arith.constant 0 : index
    %58 = vector.load %arg16[%c0_42, %c0_43] : memref<1x1024xf32, #tpu.memory_space<vmem>>, vector<1x1024xf32>
    %59 = vector.broadcast %58 : vector<1x1024xf32> to vector<2x1024xf32>
    %60 = arith.addf %57, %59 : vector<2x1024xf32>
    %61 = math.tanh %60 : vector<2x1024xf32>
    %c0_44 = arith.constant 0 : index
    %c0_45 = arith.constant 0 : index
    %62 = vector.load %arg17[%c0_44, %c0_45] : memref<2x1024xf32, #tpu.memory_space<vmem>>, vector<2x1024xf32>
    tpu.vector_store %arg17[%c0_44, %c0_45], %61 {strides = array<i32>} : memref<2x1024xf32, #tpu.memory_space<vmem>>, vector<2x1024xf32>,
    %c0_46 = arith.constant 0 : index
    %c0_47 = arith.constant 0 : index
    %63 = vector.load %arg18[%c0_46, %c0_47] : memref<2x96xf32, #tpu.memory_space<vmem>>, vector<2x32xf32>
    tpu.vector_store %arg18[%c0_46, %c0_47], %27 {strides = array<i32>} : memref<2x96xf32, #tpu.memory_space<vmem>>, vector<2x32xf32>,
    %c0_48 = arith.constant 0 : index
    %c32 = arith.constant 32 : index
    %64 = vector.load %arg18[%c0_48, %c32] : memref<2x96xf32, #tpu.memory_space<vmem>>, vector<2x32xf32>
    tpu.vector_store %arg18[%c0_48, %c32], %32 {strides = array<i32>} : memref<2x96xf32, #tpu.memory_space<vmem>>, vector<2x32xf32>,
    %c0_49 = arith.constant 0 : index
    %c64 = arith.constant 64 : index
    %65 = vector.load %arg18[%c0_49, %c64] : memref<2x96xf32, #tpu.memory_space<vmem>>, vector<2x32xf32>
    tpu.vector_store %arg18[%c0_49, %c64], %38 {strides = array<i32>} : memref<2x96xf32, #tpu.memory_space<vmem>>, vector<2x32xf32>,
    return
  }
  func.func @transform_0(%arg0: i32) -> (i32, i32) {
    %c0_i32 = arith.constant 0 : i32
    %c0_i32_0 = arith.constant 0 : i32
    %c0_i32_1 = arith.constant 0 : i32
    return %c0_i32, %c0_i32_0 : i32, i32
  }
  func.func @transform_1(%arg0: i32) -> (i32, i32) {
    %c0_i32 = arith.constant 0 : i32
    %c0_i32_0 = arith.constant 0 : i32
    %c0_i32_1 = arith.constant 0 : i32
    return %c0_i32, %c0_i32_0 : i32, i32
  }
  func.func @transform_2(%arg0: i32) -> (i32, i32) {
    %c0_i32 = arith.constant 0 : i32
    %c0_i32_0 = arith.constant 0 : i32
    %c0_i32_1 = arith.constant 0 : i32
    return %c0_i32, %c0_i32_0 : i32, i32
  }
  func.func @transform_3(%arg0: i32) -> (i32, i32) {
    %c0_i32 = arith.constant 0 : i32
    %c0_i32_0 = arith.constant 0 : i32
    %c0_i32_1 = arith.constant 0 : i32
    return %c0_i32, %c0_i32_0 : i32, i32
  }
  func.func @transform_4(%arg0: i32) -> (i32, i32) {
    %c0_i32 = arith.constant 0 : i32
    %c0_i32_0 = arith.constant 0 : i32
    %c0_i32_1 = arith.constant 0 : i32
    return %c0_i32, %c0_i32_0 : i32, i32
  }
  func.func @transform_5(%arg0: i32) -> (i32, i32) {
    %c0_i32 = arith.constant 0 : i32
    %c0_i32_0 = arith.constant 0 : i32
    %c0_i32_1 = arith.constant 0 : i32
    return %c0_i32, %c0_i32_0 : i32, i32
  }
  func.func @transform_6(%arg0: i32) -> (i32, i32) {
    %c0_i32 = arith.constant 0 : i32
    %c0_i32_0 = arith.constant 0 : i32
    %c0_i32_1 = arith.constant 0 : i32
    return %c0_i32, %c0_i32_0 : i32, i32
  }
  func.func @transform_7(%arg0: i32) -> (i32, i32) {
    %c0_i32 = arith.constant 0 : i32
    %c0_i32_0 = arith.constant 0 : i32
    %c0_i32_1 = arith.constant 0 : i32
    return %c0_i32, %c0_i32_0 : i32, i32
  }
  func.func @transform_8(%arg0: i32) -> (i32, i32) {
    %c0_i32 = arith.constant 0 : i32
    %c0_i32_0 = arith.constant 0 : i32
    %c0_i32_1 = arith.constant 0 : i32
    return %c0_i32, %c0_i32_0 : i32, i32
  }
  func.func @transform_9(%arg0: i32) -> (i32, i32) {
    %c0_i32 = arith.constant 0 : i32
    %c0_i32_0 = arith.constant 0 : i32
    %c0_i32_1 = arith.constant 0 : i32
    return %c0_i32, %c0_i32_0 : i32, i32
  }
  func.func @transform_10(%arg0: i32) -> (i32, i32) {
    %c0_i32 = arith.constant 0 : i32
    %c0_i32_0 = arith.constant 0 : i32
    %c0_i32_1 = arith.constant 0 : i32
    return %c0_i32, %c0_i32_0 : i32, i32
  }
  func.func @transform_11(%arg0: i32) -> (i32, i32) {
    %c0_i32 = arith.constant 0 : i32
    %c0_i32_0 = arith.constant 0 : i32
    %c0_i32_1 = arith.constant 0 : i32
    return %c0_i32, %c0_i32_0 : i32, i32
  }
  func.func @transform_12(%arg0: i32) -> (i32, i32) {
    %c0_i32 = arith.constant 0 : i32
    %c0_i32_0 = arith.constant 0 : i32
    %c0_i32_1 = arith.constant 0 : i32
    return %c0_i32, %c0_i32_0 : i32, i32
  }
  func.func @transform_13(%arg0: i32) -> (i32, i32) {
    %c0_i32 = arith.constant 0 : i32
    %c0_i32_0 = arith.constant 0 : i32
    %c0_i32_1 = arith.constant 0 : i32
    return %c0_i32, %c0_i32_0 : i32, i32
  }
  func.func @transform_14(%arg0: i32) -> (i32, i32) {
    %c0_i32 = arith.constant 0 : i32
    %c0_i32_0 = arith.constant 0 : i32
    %c0_i32_1 = arith.constant 0 : i32
    return %c0_i32, %c0_i32_0 : i32, i32
  }
  func.func @transform_15(%arg0: i32) -> (i32, i32) {
    %c0_i32 = arith.constant 0 : i32
    %c0_i32_0 = arith.constant 0 : i32
    %c0_i32_1 = arith.constant 0 : i32
    return %c0_i32, %c0_i32_0 : i32, i32
  }
  func.func @transform_16(%arg0: i32) -> (i32, i32) {
    %c0_i32 = arith.constant 0 : i32
    %c0_i32_0 = arith.constant 0 : i32
    %c0_i32_1 = arith.constant 0 : i32
    return %c0_i32, %c0_i32_0 : i32, i32
  }
  func.func @transform_17(%arg0: i32) -> (i32, i32) {
    %c0_i32 = arith.constant 0 : i32
    %c0_i32_0 = arith.constant 0 : i32
    %c0_i32_1 = arith.constant 0 : i32
    return %c0_i32, %c0_i32_0 : i32, i32
  }
}

</mosaic_0001>

<llo_original>
// kernel: generator_forward.1
$region0: #{generator_forward.1}
  #allocation0 [shape = 'u32[]', space=smem, size = 0x4, offset = 0x4, fixed_abs, tag = 'smem constant byte address 0x4 - core index']
  #allocation1 [shape = 'u32[144,128]{1,0:T(1,128)}', space=vmem, size = 0x12000, scoped, tag = 'internal scratch']
  %s0 = inlined_call_operand.vmem [shape: bf16[2,1024], index: 0, kind: input, shape index: {}]
  %s1 = inlined_call_operand.hbm [shape: f32[2,32], index: 1, kind: input, shape index: {}]
  %s2 = inlined_call_operand.hbm [shape: bf16[1024,1024], index: 2, kind: input, shape index: {}]
  %s3 = inlined_call_operand.hbm [shape: f32[1,1024], index: 3, kind: input, shape index: {}]
  %s4 = inlined_call_operand.hbm [shape: bf16[1024,512], index: 4, kind: input, shape index: {}]
  %s5 = inlined_call_operand.hbm [shape: f32[1,512], index: 5, kind: input, shape index: {}]
  %s6 = inlined_call_operand.vmem [shape: bf16[512,32], index: 6, kind: input, shape index: {}]
  %s7 = inlined_call_operand.hbm [shape: f32[1,32], index: 7, kind: input, shape index: {}]
  %s8 = inlined_call_operand.vmem [shape: bf16[512,32], index: 8, kind: input, shape index: {}]
  %s9 = inlined_call_operand.hbm [shape: f32[1,32], index: 9, kind: input, shape index: {}]
  %s10 = inlined_call_operand.hbm [shape: bf16[32,512], index: 10, kind: input, shape index: {}]
  %s11 = inlined_call_operand.hbm [shape: f32[1,512], index: 11, kind: input, shape index: {}]
  %s12 = inlined_call_operand.hbm [shape: bf16[512,1024], index: 12, kind: input, shape index: {}]
  %s13 = inlined_call_operand.hbm [shape: f32[1,1024], index: 13, kind: input, shape index: {}]
  %s14 = inlined_call_operand.hbm [shape: bf16[1024,1024], index: 14, kind: input, shape index: {}]
  %s15 = inlined_call_operand.hbm [shape: f32[1,1024], index: 15, kind: input, shape index: {}]
  %s16 = inlined_call_operand.vmem [shape: f32[2,1024], index: 16, kind: output, shape index: {0}]
  %s17 = inlined_call_operand.vmem [shape: f32[2,96], index: 17, kind: output, shape index: {1}]
  %18 = xla_tuple %s16, %s17
  %s19 = sld [smem:[#allocation0]]
  $region134: #{generator_forward.1} parent=0
    _
  %s21 = ssub.s32 1, %s19
  %s22 = scalar_select 0, %s21, %s19
  $region1: #{generator_forward.1} parent=0
    #allocation2 [shape = 'u8[1024]{0}', space=vmem, size = 0x400, scoped, tag = 'input window, operand 1, single buffered']
    #allocation3 [shape = 's32[1]{0}', space=sflag, size = 0x4, scoped, tag = 'scoped memory for generator_forward.1']
    #allocation4 [shape = 'u8[2097152]{0}', space=vmem, size = 0x200000, scoped, tag = 'input window, operand 2, single buffered']
    #allocation5 [shape = 's32[1]{0}', space=sflag, size = 0x4, scoped, tag = 'scoped memory for generator_forward.1']
    #allocation6 [shape = 'u8[4096]{0}', space=vmem, size = 0x1000, scoped, tag = 'input window, operand 3, single buffered']
    #allocation7 [shape = 'u8[1048576]{0}', space=vmem, size = 0x100000, scoped, tag = 'input window, operand 4, single buffered']
    #allocation8 [shape = 's32[1]{0}', space=sflag, size = 0x4, scoped, tag = 'scoped memory for generator_forward.1']
    #allocation9 [shape = 'u8[2048]{0}', space=vmem, size = 0x800, scoped, tag = 'input window, operand 5, single buffered']
    #allocation10 [shape = 'u8[512]{0}', space=vmem, size = 0x400, scoped, tag = 'input window, operand 7, single buffered']
    #allocation11 [shape = 's32[1]{0}', space=sflag, size = 0x4, scoped, tag = 'scoped memory for generator_forward.1']
    #allocation12 [shape = 'u8[512]{0}', space=vmem, size = 0x400, scoped, tag = 'input window, operand 9, single buffered']
    #allocation13 [shape = 'u8[32768]{0}', space=vmem, size = 0x8000, scoped, tag = 'input window, operand 10, single buffered']
    #allocation14 [shape = 's32[1]{0}', space=sflag, size = 0x4, scoped, tag = 'scoped memory for generator_forward.1']
    #allocation15 [shape = 'u8[2048]{0}', space=vmem, size = 0x800, scoped, tag = 'input window, operand 11, single buffered']
    #allocation16 [shape = 'u8[1048576]{0}', space=vmem, size = 0x100000, scoped, tag = 'input window, operand 12, single buffered']
    #allocation17 [shape = 's32[1]{0}', space=sflag, size = 0x4, scoped, tag = 'scoped memory for generator_forward.1']
    #allocation18 [shape = 'u8[4096]{0}', space=vmem, size = 0x1000, scoped, tag = 'input window, operand 13, single buffered']
    #allocation19 [shape = 'u8[2097152]{0}', space=vmem, size = 0x200000, scoped, tag = 'input window, operand 14, single buffered']
    #allocation20 [shape = 's32[1]{0}', space=sflag, size = 0x4, scoped, tag = 'scoped memory for generator_forward.1']
    #allocation21 [shape = 'u8[4096]{0}', space=vmem, size = 0x1000, scoped, tag = 'input window, operand 15, single buffered']
    %23 = vsyncpa [#allocation3], 0
    %24 = vsyncpa [#allocation5], 0
    %25 = vsyncpa [#allocation8], 0
    %26 = vsyncpa [#allocation11], 0
    %27 = vsyncpa [#allocation14], 0
    %28 = vsyncpa [#allocation17], 0
    %29 = vsyncpa [#allocation20], 0
    // Predicated region
    $region2: #{generator_forward.1} parent=1 // pred_check
      _
    $region3: #{generator_forward.1} parent=1 // pred_check_branch
      %31 = sbr.rel (0) target = $region5
    $region4: #{generator_forward.1} parent=1 // pred_region
      _
    $region5: #{generator_forward.1} parent=1 // pred_fallthru
      _
    // Predicated region
    $region6: #{generator_forward.1} parent=1 // pred_check
      _
    $region7: #{generator_forward.1} parent=1 // pred_check_branch
      %33 = sbr.rel (0) target = $region9
    $region8: #{generator_forward.1} parent=1 // pred_region
      %s35 = ssub.s32 32, 32
      %36 = vsyncadd [#allocation3], %s35
      %s38 = sshll.u32 [#allocation2], 4
      %s39 = int_to_ptr.vmem [resolvable:$true] %s38
      %41 = dma.hbm_to_vmem [thread:$0]  %s1, 32, %s39, [#allocation3]
    $region9: #{generator_forward.1} parent=1 // pred_fallthru
      _
    // Predicated region
    $region10: #{generator_forward.1} parent=1 // pred_check
      _
    $region11: #{generator_forward.1} parent=1 // pred_check_branch
      %43 = sbr.rel (0) target = $region13
    $region12: #{generator_forward.1} parent=1 // pred_region
      %s45 = ssub.s32 65536, 65536
      %46 = vsyncadd [#allocation5], %s45
      %s47 = sshll.u32 [#allocation4], 4
      %s48 = int_to_ptr.vmem [resolvable:$true] %s47
      %53 = dma.hbm_to_vmem [thread:$0]  %s2, 65536, %s48, [#allocation5], 512, 512, 32
    $region13: #{generator_forward.1} parent=1 // pred_fallthru
      _
    // Predicated region
    $region14: #{generator_forward.1} parent=1 // pred_check
      _
    $region15: #{generator_forward.1} parent=1 // pred_check_branch
      %55 = sbr.rel (0) target = $region17
    $region16: #{generator_forward.1} parent=1 // pred_region
      %s57 = ssub.s32 128, 128
      %58 = vsyncadd [#allocation5], %s57
      %s60 = sshll.u32 [#allocation6], 4
      %s61 = int_to_ptr.vmem [resolvable:$true] %s60
      %63 = dma.hbm_to_vmem [thread:$0]  %s3, 128, %s61, [#allocation5]
    $region17: #{generator_forward.1} parent=1 // pred_fallthru
      _
    // Predicated region
    $region18: #{generator_forward.1} parent=1 // pred_check
      _
    $region19: #{generator_forward.1} parent=1 // pred_check_branch
      %65 = sbr.rel (0) target = $region21
    $region20: #{generator_forward.1} parent=1 // pred_region
      %s67 = ssub.s32 32768, 32768
      %68 = vsyncadd [#allocation8], %s67
      %s69 = sshll.u32 [#allocation7], 4
      %s70 = int_to_ptr.vmem [resolvable:$true] %s69
      %75 = dma.hbm_to_vmem [thread:$0]  %s4, 32768, %s70, [#allocation8], 256, 256, 16
    $region21: #{generator_forward.1} parent=1 // pred_fallthru
      _
    // Predicated region
    $region22: #{generator_forward.1} parent=1 // pred_check
      _
    $region23: #{generator_forward.1} parent=1 // pred_check_branch
      %77 = sbr.rel (0) target = $region25
    $region24: #{generator_forward.1} parent=1 // pred_region
      %s79 = ssub.s32 64, 64
      %80 = vsyncadd [#allocation8], %s79
      %s82 = sshll.u32 [#allocation9], 4
      %s83 = int_to_ptr.vmem [resolvable:$true] %s82
      %85 = dma.hbm_to_vmem [thread:$0]  %s5, 64, %s83, [#allocation8]
    $region25: #{generator_forward.1} parent=1 // pred_fallthru
      _
    // Predicated region
    $region26: #{generator_forward.1} parent=1 // pred_check
      _
    $region27: #{generator_forward.1} parent=1 // pred_check_branch
      %87 = sbr.rel (0) target = $region29
    $region28: #{generator_forward.1} parent=1 // pred_region
      _
    $region29: #{generator_forward.1} parent=1 // pred_fallthru
      _
    // Predicated region
    $region30: #{generator_forward.1} parent=1 // pred_check
      _
    $region31: #{generator_forward.1} parent=1 // pred_check_branch
      %89 = sbr.rel (0) target = $region33
    $region32: #{generator_forward.1} parent=1 // pred_region
      %s91 = ssub.s32 16, 16
      %92 = vsyncadd [#allocation11], %s91
      %s94 = sshll.u32 [#allocation10], 4
      %s95 = int_to_ptr.vmem [resolvable:$true] %s94
      %97 = dma.hbm_to_vmem [thread:$0]  %s7, 16, %s95, [#allocation11]
    $region33: #{generator_forward.1} parent=1 // pred_fallthru
      _
    // Predicated region
    $region34: #{generator_forward.1} parent=1 // pred_check
      _
    $region35: #{generator_forward.1} parent=1 // pred_check_branch
      %99 = sbr.rel (0) target = $region37
    $region36: #{generator_forward.1} parent=1 // pred_region
      _
    $region37: #{generator_forward.1} parent=1 // pred_fallthru
      _
    // Predicated region
    $region38: #{generator_forward.1} parent=1 // pred_check
      _
    $region39: #{generator_forward.1} parent=1 // pred_check_branch
      %101 = sbr.rel (0) target = $region41
    $region40: #{generator_forward.1} parent=1 // pred_region
      %s103 = ssub.s32 16, 16
      %104 = vsyncadd [#allocation11], %s103
      %s106 = sshll.u32 [#allocation12], 4
      %s107 = int_to_ptr.vmem [resolvable:$true] %s106
      %109 = dma.hbm_to_vmem [thread:$0]  %s9, 16, %s107, [#allocation11]
    $region41: #{generator_forward.1} parent=1 // pred_fallthru
      _
    // Predicated region
    $region42: #{generator_forward.1} parent=1 // pred_check
      _
    $region43: #{generator_forward.1} parent=1 // pred_check_branch
      %111 = sbr.rel (0) target = $region45
    $region44: #{generator_forward.1} parent=1 // pred_region
      %s113 = ssub.s32 1024, 1024
      %114 = vsyncadd [#allocation14], %s113
      %s115 = sshll.u32 [#allocation13], 4
      %s116 = int_to_ptr.vmem [resolvable:$true] %s115
      %121 = dma.hbm_to_vmem [thread:$0]  %s10, 1024, %s116, [#allocation14], 256, 256, 16
    $region45: #{generator_forward.1} parent=1 // pred_fallthru
      _
    // Predicated region
    $region46: #{generator_forward.1} parent=1 // pred_check
      _
    $region47: #{generator_forward.1} parent=1 // pred_check_branch
      %123 = sbr.rel (0) target = $region49
    $region48: #{generator_forward.1} parent=1 // pred_region
      %s125 = ssub.s32 64, 64
      %126 = vsyncadd [#allocation14], %s125
      %s128 = sshll.u32 [#allocation15], 4
      %s129 = int_to_ptr.vmem [resolvable:$true] %s128
      %131 = dma.hbm_to_vmem [thread:$0]  %s11, 64, %s129, [#allocation14]
    $region49: #{generator_forward.1} parent=1 // pred_fallthru
      _
    // Predicated region
    $region50: #{generator_forward.1} parent=1 // pred_check
      _
    $region51: #{generator_forward.1} parent=1 // pred_check_branch
      %133 = sbr.rel (0) target = $region53
    $region52: #{generator_forward.1} parent=1 // pred_region
      %s135 = ssub.s32 32768, 32768
      %136 = vsyncadd [#allocation17], %s135
      %s137 = sshll.u32 [#allocation16], 4
      %s138 = int_to_ptr.vmem [resolvable:$true] %s137
      %143 = dma.hbm_to_vmem [thread:$0]  %s12, 32768, %s138, [#allocation17], 512, 512, 32
    $region53: #{generator_forward.1} parent=1 // pred_fallthru
      _
    // Predicated region
    $region54: #{generator_forward.1} parent=1 // pred_check
      _
    $region55: #{generator_forward.1} parent=1 // pred_check_branch
      %145 = sbr.rel (0) target = $region57
    $region56: #{generator_forward.1} parent=1 // pred_region
      %s147 = ssub.s32 128, 128
      %148 = vsyncadd [#allocation17], %s147
      %s150 = sshll.u32 [#allocation18], 4
      %s151 = int_to_ptr.vmem [resolvable:$true] %s150
      %153 = dma.hbm_to_vmem [thread:$0]  %s13, 128, %s151, [#allocation17]
    $region57: #{generator_forward.1} parent=1 // pred_fallthru
      _
    // Predicated region
    $region58: #{generator_forward.1} parent=1 // pred_check
      _
    $region59: #{generator_forward.1} parent=1 // pred_check_branch
      %155 = sbr.rel (0) target = $region61
    $region60: #{generator_forward.1} parent=1 // pred_region
      %s157 = ssub.s32 65536, 65536
      %158 = vsyncadd [#allocation20], %s157
      %s159 = sshll.u32 [#allocation19], 4
      %s160 = int_to_ptr.vmem [resolvable:$true] %s159
      %165 = dma.hbm_to_vmem [thread:$0]  %s14, 65536, %s160, [#allocation20], 512, 512, 32
    $region61: #{generator_forward.1} parent=1 // pred_fallthru
      _
    // Predicated region
    $region62: #{generator_forward.1} parent=1 // pred_check
      _
    $region63: #{generator_forward.1} parent=1 // pred_check_branch
      %167 = sbr.rel (0) target = $region65
    $region64: #{generator_forward.1} parent=1 // pred_region
      %s169 = ssub.s32 128, 128
      %170 = vsyncadd [#allocation20], %s169
      %s172 = sshll.u32 [#allocation21], 4
      %s173 = int_to_ptr.vmem [resolvable:$true] %s172
      %175 = dma.hbm_to_vmem [thread:$0]  %s15, 128, %s173, [#allocation20]
    $region65: #{generator_forward.1} parent=1 // pred_fallthru
      _
    // Predicated region
    $region66: #{generator_forward.1} parent=1 // pred_check
      _
    $region67: #{generator_forward.1} parent=1 // pred_check_branch
      %177 = sbr.rel (0) target = $region69
    $region68: #{generator_forward.1} parent=1 // pred_region
      %178 = dma.done [#allocation3], 32
    $region69: #{generator_forward.1} parent=1 // pred_fallthru
      _
    // Predicated region
    $region70: #{generator_forward.1} parent=1 // pred_check
      _
    $region71: #{generator_forward.1} parent=1 // pred_check_branch
      %180 = sbr.rel (0) target = $region73
    $region72: #{generator_forward.1} parent=1 // pred_region
      %181 = dma.done [#allocation5], 65536
    $region73: #{generator_forward.1} parent=1 // pred_fallthru
      _
    // Predicated region
    $region74: #{generator_forward.1} parent=1 // pred_check
      _
    $region75: #{generator_forward.1} parent=1 // pred_check_branch
      %183 = sbr.rel (0) target = $region77
    $region76: #{generator_forward.1} parent=1 // pred_region
      %184 = dma.done [#allocation5], 128
    $region77: #{generator_forward.1} parent=1 // pred_fallthru
      _
    // Predicated region
    $region78: #{generator_forward.1} parent=1 // pred_check
      _
    $region79: #{generator_forward.1} parent=1 // pred_check_branch
      %186 = sbr.rel (0) target = $region81
    $region80: #{generator_forward.1} parent=1 // pred_region
      %187 = dma.done [#allocation8], 32768
    $region81: #{generator_forward.1} parent=1 // pred_fallthru
      _
    // Predicated region
    $region82: #{generator_forward.1} parent=1 // pred_check
      _
    $region83: #{generator_forward.1} parent=1 // pred_check_branch
      %189 = sbr.rel (0) target = $region85
    $region84: #{generator_forward.1} parent=1 // pred_region
      %190 = dma.done [#allocation8], 64
    $region85: #{generator_forward.1} parent=1 // pred_fallthru
      _
    // Predicated region
    $region86: #{generator_forward.1} parent=1 // pred_check
      _
    $region87: #{generator_forward.1} parent=1 // pred_check_branch
      %192 = sbr.rel (0) target = $region89
    $region88: #{generator_forward.1} parent=1 // pred_region
      %193 = dma.done [#allocation11], 16
    $region89: #{generator_forward.1} parent=1 // pred_fallthru
      _
    // Predicated region
    $region90: #{generator_forward.1} parent=1 // pred_check
      _
    $region91: #{generator_forward.1} parent=1 // pred_check_branch
      %195 = sbr.rel (0) target = $region93
    $region92: #{generator_forward.1} parent=1 // pred_region
      %196 = dma.done [#allocation11], 16
    $region93: #{generator_forward.1} parent=1 // pred_fallthru
      _
    // Predicated region
    $region94: #{generator_forward.1} parent=1 // pred_check
      _
    $region95: #{generator_forward.1} parent=1 // pred_check_branch
      %198 = sbr.rel (0) target = $region97
    $region96: #{generator_forward.1} parent=1 // pred_region
      %199 = dma.done [#allocation14], 1024
    $region97: #{generator_forward.1} parent=1 // pred_fallthru
      _
    // Predicated region
    $region98: #{generator_forward.1} parent=1 // pred_check
      _
    $region99: #{generator_forward.1} parent=1 // pred_check_branch
      %201 = sbr.rel (0) target = $region101
    $region100: #{generator_forward.1} parent=1 // pred_region
      %202 = dma.done [#allocation14], 64
    $region101: #{generator_forward.1} parent=1 // pred_fallthru
      _
    // Predicated region
    $region102: #{generator_forward.1} parent=1 // pred_check
      _
    $region103: #{generator_forward.1} parent=1 // pred_check_branch
      %204 = sbr.rel (0) target = $region105
    $region104: #{generator_forward.1} parent=1 // pred_region
      %205 = dma.done [#allocation17], 32768
    $region105: #{generator_forward.1} parent=1 // pred_fallthru
      _
    // Predicated region
    $region106: #{generator_forward.1} parent=1 // pred_check
      _
    $region107: #{generator_forward.1} parent=1 // pred_check_branch
      %207 = sbr.rel (0) target = $region109
    $region108: #{generator_forward.1} parent=1 // pred_region
      %208 = dma.done [#allocation17], 128
    $region109: #{generator_forward.1} parent=1 // pred_fallthru
      _
    // Predicated region
    $region110: #{generator_forward.1} parent=1 // pred_check
      _
    $region111: #{generator_forward.1} parent=1 // pred_check_branch
      %210 = sbr.rel (0) target = $region113
    $region112: #{generator_forward.1} parent=1 // pred_region
      %211 = dma.done [#allocation20], 65536
    $region113: #{generator_forward.1} parent=1 // pred_fallthru
      _
    // Predicated region
    $region114: #{generator_forward.1} parent=1 // pred_check
      _
    $region115: #{generator_forward.1} parent=1 // pred_check_branch
      %213 = sbr.rel (0) target = $region117
    $region116: #{generator_forward.1} parent=1 // pred_region
      %214 = dma.done [#allocation20], 128
    $region117: #{generator_forward.1} parent=1 // pred_fallthru
      _
    %v216 = vld [vmem:[%s0] sm:$0xff]
    %v217 = vld [vmem:[#allocation4] sm:$0xff]
    %v218 = vld [vmem:[#allocation4 + $0x8] sm:$0xff]
    %v219 = vld [vmem:[#allocation4 + $0x10] sm:$0xff]
    %v220 = vld [vmem:[#allocation4 + $0x18] sm:$0xff]
    %v221 = vld [vmem:[#allocation4 + $0x20] sm:$0xff]
    %v222 = vld [vmem:[#allocation4 + $0x28] sm:$0xff]
    %v223 = vld [vmem:[#allocation4 + $0x30] sm:$0xff]
    %v224 = vld [vmem:[#allocation4 + $0x38] sm:$0xff]
    %v225 = vld [vmem:[#allocation4 + $0x40] sm:$0xff]
    %v226 = vld [vmem:[#allocation4 + $0x48] sm:$0xff]
    %v227 = vld [vmem:[#allocation4 + $0x50] sm:$0xff]
    %v228 = vld [vmem:[#allocation4 + $0x58] sm:$0xff]
    %v229 = vld [vmem:[#allocation4 + $0x60] sm:$0xff]
    %v230 = vld [vmem:[#allocation4 + $0x68] sm:$0xff]
    %v231 = vld [vmem:[#allocation4 + $0x70] sm:$0xff]
    %v232 = vld [vmem:[#allocation4 + $0x78] sm:$0xff]
    %v233 = vld [vmem:[#allocation4 + $0x80] sm:$0xff]
    %v234 = vld [vmem:[#allocation4 + $0x88] sm:$0xff]
    %v235 = vld [vmem:[#allocation4 + $0x90] sm:$0xff]
    %v236 = vld [vmem:[#allocation4 + $0x98] sm:$0xff]
    %v237 = vld [vmem:[#allocation4 + $0xa0] sm:$0xff]
    %v238 = vld [vmem:[#allocation4 + $0xa8] sm:$0xff]
    %v239 = vld [vmem:[#allocation4 + $0xb0] sm:$0xff]
    %v240 = vld [vmem:[#allocation4 + $0xb8] sm:$0xff]
    %v241 = vld [vmem:[#allocation4 + $0xc0] sm:$0xff]
    %v242 = vld [vmem:[#allocation4 + $0xc8] sm:$0xff]
    %v243 = vld [vmem:[#allocation4 + $0xd0] sm:$0xff]
    %v244 = vld [vmem:[#allocation4 + $0xd8] sm:$0xff]
    %v245 = vld [vmem:[#allocation4 + $0xe0] sm:$0xff]
    %v246 = vld [vmem:[#allocation4 + $0xe8] sm:$0xff]
    %v247 = vld [vmem:[#allocation4 + $0xf0] sm:$0xff]
    %v248 = vld [vmem:[#allocation4 + $0xf8] sm:$0xff]
    %v249 = vld [vmem:[#allocation4 + $0x100] sm:$0xff]
    %v250 = vld [vmem:[#allocation4 + $0x108] sm:$0xff]
    %v251 = vld [vmem:[#allocation4 + $0x110] sm:$0xff]
    %v252 = vld [vmem:[#allocation4 + $0x118] sm:$0xff]
    %v253 = vld [vmem:[#allocation4 + $0x120] sm:$0xff]
    %v254 = vld [vmem:[#allocation4 + $0x128] sm:$0xff]
    %v255 = vld [vmem:[#allocation4 + $0x130] sm:$0xff]
    %v256 = vld [vmem:[#allocation4 + $0x138] sm:$0xff]
    %v257 = vld [vmem:[#allocation4 + $0x140] sm:$0xff]
    %v258 = vld [vmem:[#allocation4 + $0x148] sm:$0xff]
    %v259 = vld [vmem:[#allocation4 + $0x150] sm:$0xff]
    %v260 = vld [vmem:[#allocation4 + $0x158] sm:$0xff]
    %v261 = vld [vmem:[#allocation4 + $0x160] sm:$0xff]
    %v262 = vld [vmem:[#allocation4 + $0x168] sm:$0xff]
    %v263 = vld [vmem:[#allocation4 + $0x170] sm:$0xff]
    %v264 = vld [vmem:[#allocation4 + $0x178] sm:$0xff]
    %v265 = vld [vmem:[#allocation4 + $0x180] sm:$0xff]
    %v266 = vld [vmem:[#allocation4 + $0x188] sm:$0xff]
    %v267 = vld [vmem:[#allocation4 + $0x190] sm:$0xff]
    %v268 = vld [vmem:[#allocation4 + $0x198] sm:$0xff]
    %v269 = vld [vmem:[#allocation4 + $0x1a0] sm:$0xff]
    %v270 = vld [vmem:[#allocation4 + $0x1a8] sm:$0xff]
    %v271 = vld [vmem:[#allocation4 + $0x1b0] sm:$0xff]
    %v272 = vld [vmem:[#allocation4 + $0x1b8] sm:$0xff]
    %v273 = vld [vmem:[#allocation4 + $0x1c0] sm:$0xff]
    %v274 = vld [vmem:[#allocation4 + $0x1c8] sm:$0xff]
    %v275 = vld [vmem:[#allocation4 + $0x1d0] sm:$0xff]
    %v276 = vld [vmem:[#allocation4 + $0x1d8] sm:$0xff]
    %v277 = vld [vmem:[#allocation4 + $0x1e0] sm:$0xff]
    %v278 = vld [vmem:[#allocation4 + $0x1e8] sm:$0xff]
    %v279 = vld [vmem:[#allocation4 + $0x1f0] sm:$0xff]
    %v280 = vld [vmem:[#allocation4 + $0x1f8] sm:$0xff]
    %v281 = vld [vmem:[#allocation4 + $0x200] sm:$0xff]
    %v282 = vld [vmem:[#allocation4 + $0x208] sm:$0xff]
    %v283 = vld [vmem:[#allocation4 + $0x210] sm:$0xff]
    %v284 = vld [vmem:[#allocation4 + $0x218] sm:$0xff]
    %v285 = vld [vmem:[#allocation4 + $0x220] sm:$0xff]
    %v286 = vld [vmem:[#allocation4 + $0x228] sm:$0xff]
    %v287 = vld [vmem:[#allocation4 + $0x230] sm:$0xff]
    %v288 = vld [vmem:[#allocation4 + $0x238] sm:$0xff]
    %v289 = vld [vmem:[#allocation4 + $0x240] sm:$0xff]
    %v290 = vld [vmem:[#allocation4 + $0x248] sm:$0xff]
    %v291 = vld [vmem:[#allocation4 + $0x250] sm:$0xff]
    %v292 = vld [vmem:[#allocation4 + $0x258] sm:$0xff]
    %v293 = vld [vmem:[#allocation4 + $0x260] sm:$0xff]
    %v294 = vld [vmem:[#allocation4 + $0x268] sm:$0xff]
    %v295 = vld [vmem:[#allocation4 + $0x270] sm:$0xff]
    %v296 = vld [vmem:[#allocation4 + $0x278] sm:$0xff]
    %v297 = vld [vmem:[#allocation4 + $0x280] sm:$0xff]
    %v298 = vld [vmem:[#allocation4 + $0x288] sm:$0xff]
    %v299 = vld [vmem:[#allocation4 + $0x290] sm:$0xff]
    %v300 = vld [vmem:[#allocation4 + $0x298] sm:$0xff]
    %v301 = vld [vmem:[#allocation4 + $0x2a0] sm:$0xff]
    %v302 = vld [vmem:[#allocation4 + $0x2a8] sm:$0xff]
    %v303 = vld [vmem:[#allocation4 + $0x2b0] sm:$0xff]
    %v304 = vld [vmem:[#allocation4 + $0x2b8] sm:$0xff]
    %v305 = vld [vmem:[#allocation4 + $0x2c0] sm:$0xff]
    %v306 = vld [vmem:[#allocation4 + $0x2c8] sm:$0xff]
    %v307 = vld [vmem:[#allocation4 + $0x2d0] sm:$0xff]
    %v308 = vld [vmem:[#allocation4 + $0x2d8] sm:$0xff]
    %v309 = vld [vmem:[#allocation4 + $0x2e0] sm:$0xff]
    %v310 = vld [vmem:[#allocation4 + $0x2e8] sm:$0xff]
    %v311 = vld [vmem:[#allocation4 + $0x2f0] sm:$0xff]
    %v312 = vld [vmem:[#allocation4 + $0x2f8] sm:$0xff]
    %v313 = vld [vmem:[#allocation4 + $0x300] sm:$0xff]
    %v314 = vld [vmem:[#allocation4 + $0x308] sm:$0xff]
    %v315 = vld [vmem:[#allocation4 + $0x310] sm:$0xff]
    %v316 = vld [vmem:[#allocation4 + $0x318] sm:$0xff]
    %v317 = vld [vmem:[#allocation4 + $0x320] sm:$0xff]
    %v318 = vld [vmem:[#allocation4 + $0x328] sm:$0xff]
    %v319 = vld [vmem:[#allocation4 + $0x330] sm:$0xff]
    %v320 = vld [vmem:[#allocation4 + $0x338] sm:$0xff]
    %v321 = vld [vmem:[#allocation4 + $0x340] sm:$0xff]
    %v322 = vld [vmem:[#allocation4 + $0x348] sm:$0xff]
    %v323 = vld [vmem:[#allocation4 + $0x350] sm:$0xff]
    %v324 = vld [vmem:[#allocation4 + $0x358] sm:$0xff]
    %v325 = vld [vmem:[#allocation4 + $0x360] sm:$0xff]
    %v326 = vld [vmem:[#allocation4 + $0x368] sm:$0xff]
    %v327 = vld [vmem:[#allocation4 + $0x370] sm:$0xff]
    %v328 = vld [vmem:[#allocation4 + $0x378] sm:$0xff]
    %v329 = vld [vmem:[#allocation4 + $0x380] sm:$0xff]
    %v330 = vld [vmem:[#allocation4 + $0x388] sm:$0xff]
    %v331 = vld [vmem:[#allocation4 + $0x390] sm:$0xff]
    %v332 = vld [vmem:[#allocation4 + $0x398] sm:$0xff]
    %v333 = vld [vmem:[#allocation4 + $0x3a0] sm:$0xff]
    %v334 = vld [vmem:[#allocation4 + $0x3a8] sm:$0xff]
    %v335 = vld [vmem:[#allocation4 + $0x3b0] sm:$0xff]
    %v336 = vld [vmem:[#allocation4 + $0x3b8] sm:$0xff]
    %v337 = vld [vmem:[#allocation4 + $0x3c0] sm:$0xff]
    %v338 = vld [vmem:[#allocation4 + $0x3c8] sm:$0xff]
    %v339 = vld [vmem:[#allocation4 + $0x3d0] sm:$0xff]
    %v340 = vld [vmem:[#allocation4 + $0x3d8] sm:$0xff]
    %v341 = vld [vmem:[#allocation4 + $0x3e0] sm:$0xff]
    %v342 = vld [vmem:[#allocation4 + $0x3e8] sm:$0xff]
    %v343 = vld [vmem:[#allocation4 + $0x3f0] sm:$0xff]
    %v344 = vld [vmem:[#allocation4 + $0x3f8] sm:$0xff]
    %v345 = vld [vmem:[#allocation4 + $0x400] sm:$0xff]
    %v346 = vld [vmem:[#allocation4 + $0x408] sm:$0xff]
    %v347 = vld [vmem:[#allocation4 + $0x410] sm:$0xff]
    %v348 = vld [vmem:[#allocation4 + $0x418] sm:$0xff]
    %v349 = vld [vmem:[#allocation4 + $0x420] sm:$0xff]
    %v350 = vld [vmem:[#allocation4 + $0x428] sm:$0xff]
    %v351 = vld [vmem:[#allocation4 + $0x430] sm:$0xff]
    %v352 = vld [vmem:[#allocation4 + $0x438] sm:$0xff]
    %v353 = vld [vmem:[#allocation4 + $0x440] sm:$0xff]
    %v354 = vld [vmem:[#allocation4 + $0x448] sm:$0xff]
    %v355 = vld [vmem:[#allocation4 + $0x450] sm:$0xff]
    %v356 = vld [vmem:[#allocation4 + $0x458] sm:$0xff]
    %v357 = vld [vmem:[#allocation4 + $0x460] sm:$0xff]
    %v358 = vld [vmem:[#allocation4 + $0x468] sm:$0xff]
    %v359 = vld [vmem:[#allocation4 + $0x470] sm:$0xff]
    %v360 = vld [vmem:[#allocation4 + $0x478] sm:$0xff]
    %v361 = vld [vmem:[#allocation4 + $0x480] sm:$0xff]
    %v362 = vld [vmem:[#allocation4 + $0x488] sm:$0xff]
    %v363 = vld [vmem:[#allocation4 + $0x490] sm:$0xff]
    %v364 = vld [vmem:[#allocation4 + $0x498] sm:$0xff]
    %v365 = vld [vmem:[#allocation4 + $0x4a0] sm:$0xff]
    %v366 = vld [vmem:[#allocation4 + $0x4a8] sm:$0xff]
    %v367 = vld [vmem:[#allocation4 + $0x4b0] sm:$0xff]
    %v368 = vld [vmem:[#allocation4 + $0x4b8] sm:$0xff]
    %v369 = vld [vmem:[#allocation4 + $0x4c0] sm:$0xff]
    %v370 = vld [vmem:[#allocation4 + $0x4c8] sm:$0xff]
    %v371 = vld [vmem:[#allocation4 + $0x4d0] sm:$0xff]
    %v372 = vld [vmem:[#allocation4 + $0x4d8] sm:$0xff]
    %v373 = vld [vmem:[#allocation4 + $0x4e0] sm:$0xff]
    %v374 = vld [vmem:[#allocation4 + $0x4e8] sm:$0xff]
    %v375 = vld [vmem:[#allocation4 + $0x4f0] sm:$0xff]
    %v376 = vld [vmem:[#allocation4 + $0x4f8] sm:$0xff]
    %v377 = vld [vmem:[#allocation4 + $0x500] sm:$0xff]
    %v378 = vld [vmem:[#allocation4 + $0x508] sm:$0xff]
    %v379 = vld [vmem:[#allocation4 + $0x510] sm:$0xff]
    %v380 = vld [vmem:[#allocation4 + $0x518] sm:$0xff]
    %v381 = vld [vmem:[#allocation4 + $0x520] sm:$0xff]
    %v382 = vld [vmem:[#allocation4 + $0x528] sm:$0xff]
    %v383 = vld [vmem:[#allocation4 + $0x530] sm:$0xff]
    %v384 = vld [vmem:[#allocation4 + $0x538] sm:$0xff]
    %v385 = vld [vmem:[#allocation4 + $0x540] sm:$0xff]
    %v386 = vld [vmem:[#allocation4 + $0x548] sm:$0xff]
    %v387 = vld [vmem:[#allocation4 + $0x550] sm:$0xff]
    %v388 = vld [vmem:[#allocation4 + $0x558] sm:$0xff]
    %v389 = vld [vmem:[#allocation4 + $0x560] sm:$0xff]
    %v390 = vld [vmem:[#allocation4 + $0x568] sm:$0xff]
    %v391 = vld [vmem:[#allocation4 + $0x570] sm:$0xff]
    %v392 = vld [vmem:[#allocation4 + $0x578] sm:$0xff]
    %v393 = vld [vmem:[#allocation4 + $0x580] sm:$0xff]
    %v394 = vld [vmem:[#allocation4 + $0x588] sm:$0xff]
    %v395 = vld [vmem:[#allocation4 + $0x590] sm:$0xff]
    %v396 = vld [vmem:[#allocation4 + $0x598] sm:$0xff]
    %v397 = vld [vmem:[#allocation4 + $0x5a0] sm:$0xff]
    %v398 = vld [vmem:[#allocation4 + $0x5a8] sm:$0xff]
    %v399 = vld [vmem:[#allocation4 + $0x5b0] sm:$0xff]
    %v400 = vld [vmem:[#allocation4 + $0x5b8] sm:$0xff]
    %v401 = vld [vmem:[#allocation4 + $0x5c0] sm:$0xff]
    %v402 = vld [vmem:[#allocation4 + $0x5c8] sm:$0xff]
    %v403 = vld [vmem:[#allocation4 + $0x5d0] sm:$0xff]
    %v404 = vld [vmem:[#allocation4 + $0x5d8] sm:$0xff]
    %v405 = vld [vmem:[#allocation4 + $0x5e0] sm:$0xff]
    %v406 = vld [vmem:[#allocation4 + $0x5e8] sm:$0xff]
    %v407 = vld [vmem:[#allocation4 + $0x5f0] sm:$0xff]
    %v408 = vld [vmem:[#allocation4 + $0x5f8] sm:$0xff]
    %v409 = vld [vmem:[#allocation4 + $0x600] sm:$0xff]
    %v410 = vld [vmem:[#allocation4 + $0x608] sm:$0xff]
    %v411 = vld [vmem:[#allocation4 + $0x610] sm:$0xff]
    %v412 = vld [vmem:[#allocation4 + $0x618] sm:$0xff]
    %v413 = vld [vmem:[#allocation4 + $0x620] sm:$0xff]
    %v414 = vld [vmem:[#allocation4 + $0x628] sm:$0xff]
    %v415 = vld [vmem:[#allocation4 + $0x630] sm:$0xff]
    %v416 = vld [vmem:[#allocation4 + $0x638] sm:$0xff]
    %v417 = vld [vmem:[#allocation4 + $0x640] sm:$0xff]
    %v418 = vld [vmem:[#allocation4 + $0x648] sm:$0xff]
    %v419 = vld [vmem:[#allocation4 + $0x650] sm:$0xff]
    %v420 = vld [vmem:[#allocation4 + $0x658] sm:$0xff]
    %v421 = vld [vmem:[#allocation4 + $0x660] sm:$0xff]
    %v422 = vld [vmem:[#allocation4 + $0x668] sm:$0xff]
    %v423 = vld [vmem:[#allocation4 + $0x670] sm:$0xff]
    %v424 = vld [vmem:[#allocation4 + $0x678] sm:$0xff]
    %v425 = vld [vmem:[#allocation4 + $0x680] sm:$0xff]
    %v426 = vld [vmem:[#allocation4 + $0x688] sm:$0xff]
    %v427 = vld [vmem:[#allocation4 + $0x690] sm:$0xff]
    %v428 = vld [vmem:[#allocation4 + $0x698] sm:$0xff]
    %v429 = vld [vmem:[#allocation4 + $0x6a0] sm:$0xff]
    %v430 = vld [vmem:[#allocation4 + $0x6a8] sm:$0xff]
    %v431 = vld [vmem:[#allocation4 + $0x6b0] sm:$0xff]
    %v432 = vld [vmem:[#allocation4 + $0x6b8] sm:$0xff]
    %v433 = vld [vmem:[#allocation4 + $0x6c0] sm:$0xff]
    %v434 = vld [vmem:[#allocation4 + $0x6c8] sm:$0xff]
    %v435 = vld [vmem:[#allocation4 + $0x6d0] sm:$0xff]
    %v436 = vld [vmem:[#allocation4 + $0x6d8] sm:$0xff]
    %v437 = vld [vmem:[#allocation4 + $0x6e0] sm:$0xff]
    %v438 = vld [vmem:[#allocation4 + $0x6e8] sm:$0xff]
    %v439 = vld [vmem:[#allocation4 + $0x6f0] sm:$0xff]
    %v440 = vld [vmem:[#allocation4 + $0x6f8] sm:$0xff]
    %v441 = vld [vmem:[#allocation4 + $0x700] sm:$0xff]
    %v442 = vld [vmem:[#allocation4 + $0x708] sm:$0xff]
    %v443 = vld [vmem:[#allocation4 + $0x710] sm:$0xff]
    %v444 = vld [vmem:[#allocation4 + $0x718] sm:$0xff]
    %v445 = vld [vmem:[#allocation4 + $0x720] sm:$0xff]
    %v446 = vld [vmem:[#allocation4 + $0x728] sm:$0xff]
    %v447 = vld [vmem:[#allocation4 + $0x730] sm:$0xff]
    %v448 = vld [vmem:[#allocation4 + $0x738] sm:$0xff]
    %v449 = vld [vmem:[#allocation4 + $0x740] sm:$0xff]
    %v450 = vld [vmem:[#allocation4 + $0x748] sm:$0xff]
    %v451 = vld [vmem:[#allocation4 + $0x750] sm:$0xff]
    %v452 = vld [vmem:[#allocation4 + $0x758] sm:$0xff]
    %v453 = vld [vmem:[#allocation4 + $0x760] sm:$0xff]
    %v454 = vld [vmem:[#allocation4 + $0x768] sm:$0xff]
    %v455 = vld [vmem:[#allocation4 + $0x770] sm:$0xff]
    %v456 = vld [vmem:[#allocation4 + $0x778] sm:$0xff]
    %v457 = vld [vmem:[#allocation4 + $0x780] sm:$0xff]
    %v458 = vld [vmem:[#allocation4 + $0x788] sm:$0xff]
    %v459 = vld [vmem:[#allocation4 + $0x790] sm:$0xff]
    %v460 = vld [vmem:[#allocation4 + $0x798] sm:$0xff]
    %v461 = vld [vmem:[#allocation4 + $0x7a0] sm:$0xff]
    %v462 = vld [vmem:[#allocation4 + $0x7a8] sm:$0xff]
    %v463 = vld [vmem:[#allocation4 + $0x7b0] sm:$0xff]
    %v464 = vld [vmem:[#allocation4 + $0x7b8] sm:$0xff]
    %v465 = vld [vmem:[#allocation4 + $0x7c0] sm:$0xff]
    %v466 = vld [vmem:[#allocation4 + $0x7c8] sm:$0xff]
    %v467 = vld [vmem:[#allocation4 + $0x7d0] sm:$0xff]
    %v468 = vld [vmem:[#allocation4 + $0x7d8] sm:$0xff]
    %v469 = vld [vmem:[#allocation4 + $0x7e0] sm:$0xff]
    %v470 = vld [vmem:[#allocation4 + $0x7e8] sm:$0xff]
    %v471 = vld [vmem:[#allocation4 + $0x7f0] sm:$0xff]
    %v472 = vld [vmem:[#allocation4 + $0x7f8] sm:$0xff]
    %v473 = vld [vmem:[#allocation4 + $0x800] sm:$0xff]
    %v474 = vld [vmem:[#allocation4 + $0x808] sm:$0xff]
    %v475 = vld [vmem:[#allocation4 + $0x810] sm:$0xff]
    %v476 = vld [vmem:[#allocation4 + $0x818] sm:$0xff]
    %v477 = vld [vmem:[#allocation4 + $0x820] sm:$0xff]
    %v478 = vld [vmem:[#allocation4 + $0x828] sm:$0xff]
    %v479 = vld [vmem:[#allocation4 + $0x830] sm:$0xff]
    %v480 = vld [vmem:[#allocation4 + $0x838] sm:$0xff]
    %v481 = vld [vmem:[#allocation4 + $0x840] sm:$0xff]
    %v482 = vld [vmem:[#allocation4 + $0x848] sm:$0xff]
    %v483 = vld [vmem:[#allocation4 + $0x850] sm:$0xff]
    %v484 = vld [vmem:[#allocation4 + $0x858] sm:$0xff]
    %v485 = vld [vmem:[#allocation4 + $0x860] sm:$0xff]
    %v486 = vld [vmem:[#allocation4 + $0x868] sm:$0xff]
    %v487 = vld [vmem:[#allocation4 + $0x870] sm:$0xff]
    %v488 = vld [vmem:[#allocation4 + $0x878] sm:$0xff]
    %v489 = vld [vmem:[#allocation4 + $0x880] sm:$0xff]
    %v490 = vld [vmem:[#allocation4 + $0x888] sm:$0xff]
    %v491 = vld [vmem:[#allocation4 + $0x890] sm:$0xff]
    %v492 = vld [vmem:[#allocation4 + $0x898] sm:$0xff]
    %v493 = vld [vmem:[#allocation4 + $0x8a0] sm:$0xff]
    %v494 = vld [vmem:[#allocation4 + $0x8a8] sm:$0xff]
    %v495 = vld [vmem:[#allocation4 + $0x8b0] sm:$0xff]
    %v496 = vld [vmem:[#allocation4 + $0x8b8] sm:$0xff]
    %v497 = vld [vmem:[#allocation4 + $0x8c0] sm:$0xff]
    %v498 = vld [vmem:[#allocation4 + $0x8c8] sm:$0xff]
    %v499 = vld [vmem:[#allocation4 + $0x8d0] sm:$0xff]
    %v500 = vld [vmem:[#allocation4 + $0x8d8] sm:$0xff]
    %v501 = vld [vmem:[#allocation4 + $0x8e0] sm:$0xff]
    %v502 = vld [vmem:[#allocation4 + $0x8e8] sm:$0xff]
    %v503 = vld [vmem:[#allocation4 + $0x8f0] sm:$0xff]
    %v504 = vld [vmem:[#allocation4 + $0x8f8] sm:$0xff]
    %v505 = vld [vmem:[#allocation4 + $0x900] sm:$0xff]
    %v506 = vld [vmem:[#allocation4 + $0x908] sm:$0xff]
    %v507 = vld [vmem:[#allocation4 + $0x910] sm:$0xff]
    %v508 = vld [vmem:[#allocation4 + $0x918] sm:$0xff]
    %v509 = vld [vmem:[#allocation4 + $0x920] sm:$0xff]
    %v510 = vld [vmem:[#allocation4 + $0x928] sm:$0xff]
    %v511 = vld [vmem:[#allocation4 + $0x930] sm:$0xff]
    %v512 = vld [vmem:[#allocation4 + $0x938] sm:$0xff]
    %v513 = vld [vmem:[#allocation4 + $0x940] sm:$0xff]
    %v514 = vld [vmem:[#allocation4 + $0x948] sm:$0xff]
    %v515 = vld [vmem:[#allocation4 + $0x950] sm:$0xff]
    %v516 = vld [vmem:[#allocation4 + $0x958] sm:$0xff]
    %v517 = vld [vmem:[#allocation4 + $0x960] sm:$0xff]
    %v518 = vld [vmem:[#allocation4 + $0x968] sm:$0xff]
    %v519 = vld [vmem:[#allocation4 + $0x970] sm:$0xff]
    %v520 = vld [vmem:[#allocation4 + $0x978] sm:$0xff]
    %v521 = vld [vmem:[#allocation4 + $0x980] sm:$0xff]
    %v522 = vld [vmem:[#allocation4 + $0x988] sm:$0xff]
    %v523 = vld [vmem:[#allocation4 + $0x990] sm:$0xff]
    %v524 = vld [vmem:[#allocation4 + $0x998] sm:$0xff]
    %v525 = vld [vmem:[#allocation4 + $0x9a0] sm:$0xff]
    %v526 = vld [vmem:[#allocation4 + $0x9a8] sm:$0xff]
    %v527 = vld [vmem:[#allocation4 + $0x9b0] sm:$0xff]
    %v528 = vld [vmem:[#allocation4 + $0x9b8] sm:$0xff]
    %v529 = vld [vmem:[#allocation4 + $0x9c0] sm:$0xff]
    %v530 = vld [vmem:[#allocation4 + $0x9c8] sm:$0xff]
    %v531 = vld [vmem:[#allocation4 + $0x9d0] sm:$0xff]
    %v532 = vld [vmem:[#allocation4 + $0x9d8] sm:$0xff]
    %v533 = vld [vmem:[#allocation4 + $0x9e0] sm:$0xff]
    %v534 = vld [vmem:[#allocation4 + $0x9e8] sm:$0xff]
    %v535 = vld [vmem:[#allocation4 + $0x9f0] sm:$0xff]
    %v536 = vld [vmem:[#allocation4 + $0x9f8] sm:$0xff]
    %v537 = vld [vmem:[#allocation4 + $0xa00] sm:$0xff]
    %v538 = vld [vmem:[#allocation4 + $0xa08] sm:$0xff]
    %v539 = vld [vmem:[#allocation4 + $0xa10] sm:$0xff]
    %v540 = vld [vmem:[#allocation4 + $0xa18] sm:$0xff]
    %v541 = vld [vmem:[#allocation4 + $0xa20] sm:$0xff]
    %v542 = vld [vmem:[#allocation4 + $0xa28] sm:$0xff]
    %v543 = vld [vmem:[#allocation4 + $0xa30] sm:$0xff]
    %v544 = vld [vmem:[#allocation4 + $0xa38] sm:$0xff]
    %v545 = vld [vmem:[#allocation4 + $0xa40] sm:$0xff]
    %v546 = vld [vmem:[#allocation4 + $0xa48] sm:$0xff]
    %v547 = vld [vmem:[#allocation4 + $0xa50] sm:$0xff]
    %v548 = vld [vmem:[#allocation4 + $0xa58] sm:$0xff]
    %v549 = vld [vmem:[#allocation4 + $0xa60] sm:$0xff]
    %v550 = vld [vmem:[#allocation4 + $0xa68] sm:$0xff]
    %v551 = vld [vmem:[#allocation4 + $0xa70] sm:$0xff]
    %v552 = vld [vmem:[#allocation4 + $0xa78] sm:$0xff]
    %v553 = vld [vmem:[#allocation4 + $0xa80] sm:$0xff]
    %v554 = vld [vmem:[#allocation4 + $0xa88] sm:$0xff]
    %v555 = vld [vmem:[#allocation4 + $0xa90] sm:$0xff]
    %v556 = vld [vmem:[#allocation4 + $0xa98] sm:$0xff]
    %v557 = vld [vmem:[#allocation4 + $0xaa0] sm:$0xff]
    %v558 = vld [vmem:[#allocation4 + $0xaa8] sm:$0xff]
    %v559 = vld [vmem:[#allocation4 + $0xab0] sm:$0xff]
    %v560 = vld [vmem:[#allocation4 + $0xab8] sm:$0xff]
    %v561 = vld [vmem:[#allocation4 + $0xac0] sm:$0xff]
    %v562 = vld [vmem:[#allocation4 + $0xac8] sm:$0xff]
    %v563 = vld [vmem:[#allocation4 + $0xad0] sm:$0xff]
    %v564 = vld [vmem:[#allocation4 + $0xad8] sm:$0xff]
    %v565 = vld [vmem:[#allocation4 + $0xae0] sm:$0xff]
    %v566 = vld [vmem:[#allocation4 + $0xae8] sm:$0xff]
    %v567 = vld [vmem:[#allocation4 + $0xaf0] sm:$0xff]
    %v568 = vld [vmem:[#allocation4 + $0xaf8] sm:$0xff]
    %v569 = vld [vmem:[#allocation4 + $0xb00] sm:$0xff]
    %v570 = vld [vmem:[#allocation4 + $0xb08] sm:$0xff]
    %v571 = vld [vmem:[#allocation4 + $0xb10] sm:$0xff]
    %v572 = vld [vmem:[#allocation4 + $0xb18] sm:$0xff]
    %v573 = vld [vmem:[#allocation4 + $0xb20] sm:$0xff]
    %v574 = vld [vmem:[#allocation4 + $0xb28] sm:$0xff]
    %v575 = vld [vmem:[#allocation4 + $0xb30] sm:$0xff]
    %v576 = vld [vmem:[#allocation4 + $0xb38] sm:$0xff]
    %v577 = vld [vmem:[#allocation4 + $0xb40] sm:$0xff]
    %v578 = vld [vmem:[#allocation4 + $0xb48] sm:$0xff]
    %v579 = vld [vmem:[#allocation4 + $0xb50] sm:$0xff]
    %v580 = vld [vmem:[#allocation4 + $0xb58] sm:$0xff]
    %v581 = vld [vmem:[#allocation4 + $0xb60] sm:$0xff]
    %v582 = vld [vmem:[#allocation4 + $0xb68] sm:$0xff]
    %v583 = vld [vmem:[#allocation4 + $0xb70] sm:$0xff]
    %v584 = vld [vmem:[#allocation4 + $0xb78] sm:$0xff]
    %v585 = vld [vmem:[#allocation4 + $0xb80] sm:$0xff]
    %v586 = vld [vmem:[#allocation4 + $0xb88] sm:$0xff]
    %v587 = vld [vmem:[#allocation4 + $0xb90] sm:$0xff]
    %v588 = vld [vmem:[#allocation4 + $0xb98] sm:$0xff]
    %v589 = vld [vmem:[#allocation4 + $0xba0] sm:$0xff]
    %v590 = vld [vmem:[#allocation4 + $0xba8] sm:$0xff]
    %v591 = vld [vmem:[#allocation4 + $0xbb0] sm:$0xff]
    %v592 = vld [vmem:[#allocation4 + $0xbb8] sm:$0xff]
    %v593 = vld [vmem:[#allocation4 + $0xbc0] sm:$0xff]
    %v594 = vld [vmem:[#allocation4 + $0xbc8] sm:$0xff]
    %v595 = vld [vmem:[#allocation4 + $0xbd0] sm:$0xff]
    %v596 = vld [vmem:[#allocation4 + $0xbd8] sm:$0xff]
    %v597 = vld [vmem:[#allocation4 + $0xbe0] sm:$0xff]
    %v598 = vld [vmem:[#allocation4 + $0xbe8] sm:$0xff]
    %v599 = vld [vmem:[#allocation4 + $0xbf0] sm:$0xff]
    %v600 = vld [vmem:[#allocation4 + $0xbf8] sm:$0xff]
    %v601 = vld [vmem:[#allocation4 + $0xc00] sm:$0xff]
    %v602 = vld [vmem:[#allocation4 + $0xc08] sm:$0xff]
    %v603 = vld [vmem:[#allocation4 + $0xc10] sm:$0xff]
    %v604 = vld [vmem:[#allocation4 + $0xc18] sm:$0xff]
    %v605 = vld [vmem:[#allocation4 + $0xc20] sm:$0xff]
    %v606 = vld [vmem:[#allocation4 + $0xc28] sm:$0xff]
    %v607 = vld [vmem:[#allocation4 + $0xc30] sm:$0xff]
    %v608 = vld [vmem:[#allocation4 + $0xc38] sm:$0xff]
    %v609 = vld [vmem:[#allocation4 + $0xc40] sm:$0xff]
    %v610 = vld [vmem:[#allocation4 + $0xc48] sm:$0xff]
    %v611 = vld [vmem:[#allocation4 + $0xc50] sm:$0xff]
    %v612 = vld [vmem:[#allocation4 + $0xc58] sm:$0xff]
    %v613 = vld [vmem:[#allocation4 + $0xc60] sm:$0xff]
    %v614 = vld [vmem:[#allocation4 + $0xc68] sm:$0xff]
    %v615 = vld [vmem:[#allocation4 + $0xc70] sm:$0xff]
    %v616 = vld [vmem:[#allocation4 + $0xc78] sm:$0xff]
    %v617 = vld [vmem:[#allocation4 + $0xc80] sm:$0xff]
    %v618 = vld [vmem:[#allocation4 + $0xc88] sm:$0xff]
    %v619 = vld [vmem:[#allocation4 + $0xc90] sm:$0xff]
    %v620 = vld [vmem:[#allocation4 + $0xc98] sm:$0xff]
    %v621 = vld [vmem:[#allocation4 + $0xca0] sm:$0xff]
    %v622 = vld [vmem:[#allocation4 + $0xca8] sm:$0xff]
    %v623 = vld [vmem:[#allocation4 + $0xcb0] sm:$0xff]
    %v624 = vld [vmem:[#allocation4 + $0xcb8] sm:$0xff]
    %v625 = vld [vmem:[#allocation4 + $0xcc0] sm:$0xff]
    %v626 = vld [vmem:[#allocation4 + $0xcc8] sm:$0xff]
    %v627 = vld [vmem:[#allocation4 + $0xcd0] sm:$0xff]
    %v628 = vld [vmem:[#allocation4 + $0xcd8] sm:$0xff]
    %v629 = vld [vmem:[#allocation4 + $0xce0] sm:$0xff]
    %v630 = vld [vmem:[#allocation4 + $0xce8] sm:$0xff]
    %v631 = vld [vmem:[#allocation4 + $0xcf0] sm:$0xff]
    %v632 = vld [vmem:[#allocation4 + $0xcf8] sm:$0xff]
    %v633 = vld [vmem:[#allocation4 + $0xd00] sm:$0xff]
    %v634 = vld [vmem:[#allocation4 + $0xd08] sm:$0xff]
    %v635 = vld [vmem:[#allocation4 + $0xd10] sm:$0xff]
    %v636 = vld [vmem:[#allocation4 + $0xd18] sm:$0xff]
    %v637 = vld [vmem:[#allocation4 + $0xd20] sm:$0xff]
    %v638 = vld [vmem:[#allocation4 + $0xd28] sm:$0xff]
    %v639 = vld [vmem:[#allocation4 + $0xd30] sm:$0xff]
    %v640 = vld [vmem:[#allocation4 + $0xd38] sm:$0xff]
    %v641 = vld [vmem:[#allocation4 + $0xd40] sm:$0xff]
    %v642 = vld [vmem:[#allocation4 + $0xd48] sm:$0xff]
    %v643 = vld [vmem:[#allocation4 + $0xd50] sm:$0xff]
    %v644 = vld [vmem:[#allocation4 + $0xd58] sm:$0xff]
    %v645 = vld [vmem:[#allocation4 + $0xd60] sm:$0xff]
    %v646 = vld [vmem:[#allocation4 + $0xd68] sm:$0xff]
    %v647 = vld [vmem:[#allocation4 + $0xd70] sm:$0xff]
    %v648 = vld [vmem:[#allocation4 + $0xd78] sm:$0xff]
    %v649 = vld [vmem:[#allocation4 + $0xd80] sm:$0xff]
    %v650 = vld [vmem:[#allocation4 + $0xd88] sm:$0xff]
    %v651 = vld [vmem:[#allocation4 + $0xd90] sm:$0xff]
    %v652 = vld [vmem:[#allocation4 + $0xd98] sm:$0xff]
    %v653 = vld [vmem:[#allocation4 + $0xda0] sm:$0xff]
    %v654 = vld [vmem:[#allocation4 + $0xda8] sm:$0xff]
    %v655 = vld [vmem:[#allocation4 + $0xdb0] sm:$0xff]
    %v656 = vld [vmem:[#allocation4 + $0xdb8] sm:$0xff]
    %v657 = vld [vmem:[#allocation4 + $0xdc0] sm:$0xff]
    %v658 = vld [vmem:[#allocation4 + $0xdc8] sm:$0xff]
    %v659 = vld [vmem:[#allocation4 + $0xdd0] sm:$0xff]
    %v660 = vld [vmem:[#allocation4 + $0xdd8] sm:$0xff]
    %v661 = vld [vmem:[#allocation4 + $0xde0] sm:$0xff]
    %v662 = vld [vmem:[#allocation4 + $0xde8] sm:$0xff]
    %v663 = vld [vmem:[#allocation4 + $0xdf0] sm:$0xff]
    %v664 = vld [vmem:[#allocation4 + $0xdf8] sm:$0xff]
    %v665 = vld [vmem:[#allocation4 + $0xe00] sm:$0xff]
    %v666 = vld [vmem:[#allocation4 + $0xe08] sm:$0xff]
    %v667 = vld [vmem:[#allocation4 + $0xe10] sm:$0xff]
    %v668 = vld [vmem:[#allocation4 + $0xe18] sm:$0xff]
    %v669 = vld [vmem:[#allocation4 + $0xe20] sm:$0xff]
    %v670 = vld [vmem:[#allocation4 + $0xe28] sm:$0xff]
    %v671 = vld [vmem:[#allocation4 + $0xe30] sm:$0xff]
    %v672 = vld [vmem:[#allocation4 + $0xe38] sm:$0xff]
    %v673 = vld [vmem:[#allocation4 + $0xe40] sm:$0xff]
    %v674 = vld [vmem:[#allocation4 + $0xe48] sm:$0xff]
    %v675 = vld [vmem:[#allocation4 + $0xe50] sm:$0xff]
    %v676 = vld [vmem:[#allocation4 + $0xe58] sm:$0xff]
    %v677 = vld [vmem:[#allocation4 + $0xe60] sm:$0xff]
    %v678 = vld [vmem:[#allocation4 + $0xe68] sm:$0xff]
    %v679 = vld [vmem:[#allocation4 + $0xe70] sm:$0xff]
    %v680 = vld [vmem:[#allocation4 + $0xe78] sm:$0xff]
    %v681 = vld [vmem:[#allocation4 + $0xe80] sm:$0xff]
    %v682 = vld [vmem:[#allocation4 + $0xe88] sm:$0xff]
    %v683 = vld [vmem:[#allocation4 + $0xe90] sm:$0xff]
    %v684 = vld [vmem:[#allocation4 + $0xe98] sm:$0xff]
    %v685 = vld [vmem:[#allocation4 + $0xea0] sm:$0xff]
    %v686 = vld [vmem:[#allocation4 + $0xea8] sm:$0xff]
    %v687 = vld [vmem:[#allocation4 + $0xeb0] sm:$0xff]
    %v688 = vld [vmem:[#allocation4 + $0xeb8] sm:$0xff]
    %v689 = vld [vmem:[#allocation4 + $0xec0] sm:$0xff]
    %v690 = vld [vmem:[#allocation4 + $0xec8] sm:$0xff]
    %v691 = vld [vmem:[#allocation4 + $0xed0] sm:$0xff]
    %v692 = vld [vmem:[#allocation4 + $0xed8] sm:$0xff]
    %v693 = vld [vmem:[#allocation4 + $0xee0] sm:$0xff]
    %v694 = vld [vmem:[#allocation4 + $0xee8] sm:$0xff]
    %v695 = vld [vmem:[#allocation4 + $0xef0] sm:$0xff]
    %v696 = vld [vmem:[#allocation4 + $0xef8] sm:$0xff]
    %v697 = vld [vmem:[#allocation4 + $0xf00] sm:$0xff]
    %v698 = vld [vmem:[#allocation4 + $0xf08] sm:$0xff]
    %v699 = vld [vmem:[#allocation4 + $0xf10] sm:$0xff]
    %v700 = vld [vmem:[#allocation4 + $0xf18] sm:$0xff]
    %v701 = vld [vmem:[#allocation4 + $0xf20] sm:$0xff]
    %v702 = vld [vmem:[#allocation4 + $0xf28] sm:$0xff]
    %v703 = vld [vmem:[#allocation4 + $0xf30] sm:$0xff]
    %v704 = vld [vmem:[#allocation4 + $0xf38] sm:$0xff]
    %v705 = vld [vmem:[#allocation4 + $0xf40] sm:$0xff]
    %v706 = vld [vmem:[#allocation4 + $0xf48] sm:$0xff]
    %v707 = vld [vmem:[#allocation4 + $0xf50] sm:$0xff]
    %v708 = vld [vmem:[#allocation4 + $0xf58] sm:$0xff]
    %v709 = vld [vmem:[#allocation4 + $0xf60] sm:$0xff]
    %v710 = vld [vmem:[#allocation4 + $0xf68] sm:$0xff]
    %v711 = vld [vmem:[#allocation4 + $0xf70] sm:$0xff]
    %v712 = vld [vmem:[#allocation4 + $0xf78] sm:$0xff]
    %v713 = vld [vmem:[#allocation4 + $0xf80] sm:$0xff]
    %v714 = vld [vmem:[#allocation4 + $0xf88] sm:$0xff]
    %v715 = vld [vmem:[#allocation4 + $0xf90] sm:$0xff]
    %v716 = vld [vmem:[#allocation4 + $0xf98] sm:$0xff]
    %v717 = vld [vmem:[#allocation4 + $0xfa0] sm:$0xff]
    %v718 = vld [vmem:[#allocation4 + $0xfa8] sm:$0xff]
    %v719 = vld [vmem:[#allocation4 + $0xfb0] sm:$0xff]
    %v720 = vld [vmem:[#allocation4 + $0xfb8] sm:$0xff]
    %v721 = vld [vmem:[#allocation4 + $0xfc0] sm:$0xff]
    %v722 = vld [vmem:[#allocation4 + $0xfc8] sm:$0xff]
    %v723 = vld [vmem:[#allocation4 + $0xfd0] sm:$0xff]
    %v724 = vld [vmem:[#allocation4 + $0xfd8] sm:$0xff]
    %v725 = vld [vmem:[#allocation4 + $0xfe0] sm:$0xff]
    %v726 = vld [vmem:[#allocation4 + $0xfe8] sm:$0xff]
    %v727 = vld [vmem:[#allocation4 + $0xff0] sm:$0xff]
    %v728 = vld [vmem:[#allocation4 + $0xff8] sm:$0xff]
    %v729 = vld [vmem:[#allocation6] sm:$0xff]
    %v731 = vlaneseq
    %v732 = vshrl.u32 %v731, 7
    %v733 = vsub.s32 0, %v732
    %v734 = vrot.slane %v729, %v733
    %v735 = vlaneseq
    %v736 = vshrl.u32 %v735, 7
    %v737 = vsub.s32 1, %v736
    %v738 = vrot.slane %v729, %v737
    %v739 = vlaneseq
    %v740 = vshrl.u32 %v739, 7
    %v741 = vsub.s32 2, %v740
    %v742 = vrot.slane %v729, %v741
    %v743 = vlaneseq
    %v744 = vshrl.u32 %v743, 7
    %v745 = vsub.s32 3, %v744
    %v746 = vrot.slane %v729, %v745
    %v747 = vlaneseq
    %v748 = vshrl.u32 %v747, 7
    %v749 = vsub.s32 4, %v748
    %v750 = vrot.slane %v729, %v749
    %v751 = vlaneseq
    %v752 = vshrl.u32 %v751, 7
    %v753 = vsub.s32 5, %v752
    %v754 = vrot.slane %v729, %v753
    %v755 = vlaneseq
    %v756 = vshrl.u32 %v755, 7
    %v757 = vsub.s32 6, %v756
    %v758 = vrot.slane %v729, %v757
    %v759 = vlaneseq
    %v760 = vshrl.u32 %v759, 7
    %v761 = vsub.s32 7, %v760
    %v762 = vrot.slane %v729, %v761
    %v772 = vcombine.high %v216, %v216
    %v774 = vunpack.c.l.s4 1966171168
    %v775 = vunpack.c.0.s8 %v774
    %v776 = vlaneseq
    %v777 = vshrl.u32 %v776, 7
    %v778 = vsub.s32 %v775, %v777
    %v779 = vrot.slane %v216, %v778
    %v781 = vunpack.c.l.s4 1966171168
    %v782 = vunpack.c.0.s8 %v781
    %v783 = vlaneseq
    %v784 = vshrl.u32 %v783, 7
    %v785 = vsub.s32 %v782, %v784
    %v786 = vrot.slane %v772, %v785
    %v787 = vcombine.high %v779, %v779
    %v788 = vcombine.high %v786, %v786
    %v790 = vunpack.c.l.s4 1966171168
    %v791 = vunpack.c.0.s8 %v790
    %v792 = vlaneseq
    %v793 = vshrl.u32 %v792, 7
    %v794 = vsub.s32 %v791, %v793
    %v795 = vrot.slane %v779, %v794
    %v797 = vunpack.c.l.s4 1966171168
    %v798 = vunpack.c.0.s8 %v797
    %v799 = vlaneseq
    %v800 = vshrl.u32 %v799, 7
    %v801 = vsub.s32 %v798, %v800
    %v802 = vrot.slane %v786, %v801
    %v804 = vunpack.c.l.s4 1966171168
    %v805 = vunpack.c.0.s8 %v804
    %v806 = vlaneseq
    %v807 = vshrl.u32 %v806, 7
    %v808 = vsub.s32 %v805, %v807
    %v809 = vrot.slane %v787, %v808
    %v811 = vunpack.c.l.s4 1966171168
    %v812 = vunpack.c.0.s8 %v811
    %v813 = vlaneseq
    %v814 = vshrl.u32 %v813, 7
    %v815 = vsub.s32 %v812, %v814
    %v816 = vrot.slane %v788, %v815
    %v817 = vcombine.high %v795, %v795
    %v818 = vcombine.high %v802, %v802
    %v819 = vcombine.high %v809, %v809
    %v820 = vcombine.high %v816, %v816
    %v1341 = vunpack.c.l.b16 %v217
    %v1342 = vunpack.c.h.b16 %v217
    %v1343 = vunpack.c.l.b16 %v218
    %v1344 = vunpack.c.h.b16 %v218
    %v1345 = vunpack.c.l.b16 %v219
    %v1346 = vunpack.c.h.b16 %v219
    %v1347 = vunpack.c.l.b16 %v220
    %v1348 = vunpack.c.h.b16 %v220
    %v1349 = vunpack.c.l.b16 %v221
    %v1350 = vunpack.c.h.b16 %v221
    %v1351 = vunpack.c.l.b16 %v222
    %v1352 = vunpack.c.h.b16 %v222
    %v1353 = vunpack.c.l.b16 %v223
    %v1354 = vunpack.c.h.b16 %v223
    %v1355 = vunpack.c.l.b16 %v224
    %v1356 = vunpack.c.h.b16 %v224
    %v1357 = vunpack.c.l.b16 %v225
    %v1358 = vunpack.c.h.b16 %v225
    %v1359 = vunpack.c.l.b16 %v226
    %v1360 = vunpack.c.h.b16 %v226
    %v1361 = vunpack.c.l.b16 %v227
    %v1362 = vunpack.c.h.b16 %v227
    %v1363 = vunpack.c.l.b16 %v228
    %v1364 = vunpack.c.h.b16 %v228
    %v1365 = vunpack.c.l.b16 %v229
    %v1366 = vunpack.c.h.b16 %v229
    %v1367 = vunpack.c.l.b16 %v230
    %v1368 = vunpack.c.h.b16 %v230
    %v1369 = vunpack.c.l.b16 %v231
    %v1370 = vunpack.c.h.b16 %v231
    %v1371 = vunpack.c.l.b16 %v232
    %v1372 = vunpack.c.h.b16 %v232
    %v1373 = vunpack.c.l.b16 %v233
    %v1374 = vunpack.c.h.b16 %v233
    %v1375 = vunpack.c.l.b16 %v234
    %v1376 = vunpack.c.h.b16 %v234
    %v1377 = vunpack.c.l.b16 %v235
    %v1378 = vunpack.c.h.b16 %v235
    %v1379 = vunpack.c.l.b16 %v236
    %v1380 = vunpack.c.h.b16 %v236
    %v1381 = vunpack.c.l.b16 %v237
    %v1382 = vunpack.c.h.b16 %v237
    %v1383 = vunpack.c.l.b16 %v238
    %v1384 = vunpack.c.h.b16 %v238
    %v1385 = vunpack.c.l.b16 %v239
    %v1386 = vunpack.c.h.b16 %v239
    %v1387 = vunpack.c.l.b16 %v240
    %v1388 = vunpack.c.h.b16 %v240
    %v1389 = vunpack.c.l.b16 %v241
    %v1390 = vunpack.c.h.b16 %v241
    %v1391 = vunpack.c.l.b16 %v242
    %v1392 = vunpack.c.h.b16 %v242
    %v1393 = vunpack.c.l.b16 %v243
    %v1394 = vunpack.c.h.b16 %v243
    %v1395 = vunpack.c.l.b16 %v244
    %v1396 = vunpack.c.h.b16 %v244
    %v1397 = vunpack.c.l.b16 %v245
    %v1398 = vunpack.c.h.b16 %v245
    %v1399 = vunpack.c.l.b16 %v246
    %v1400 = vunpack.c.h.b16 %v246
    %v1401 = vunpack.c.l.b16 %v247
    %v1402 = vunpack.c.h.b16 %v247
    %v1403 = vunpack.c.l.b16 %v248
    %v1404 = vunpack.c.h.b16 %v248
    %v1405 = vunpack.c.l.b16 %v249
    %v1406 = vunpack.c.h.b16 %v249
    %v1407 = vunpack.c.l.b16 %v250
    %v1408 = vunpack.c.h.b16 %v250
    %v1409 = vunpack.c.l.b16 %v251
    %v1410 = vunpack.c.h.b16 %v251
    %v1411 = vunpack.c.l.b16 %v252
    %v1412 = vunpack.c.h.b16 %v252
    %v1413 = vunpack.c.l.b16 %v253
    %v1414 = vunpack.c.h.b16 %v253
    %v1415 = vunpack.c.l.b16 %v254
    %v1416 = vunpack.c.h.b16 %v254
    %v1417 = vunpack.c.l.b16 %v255
    %v1418 = vunpack.c.h.b16 %v255
    %v1419 = vunpack.c.l.b16 %v256
    %v1420 = vunpack.c.h.b16 %v256
    %v1421 = vunpack.c.l.b16 %v257
    %v1422 = vunpack.c.h.b16 %v257
    %v1423 = vunpack.c.l.b16 %v258
    %v1424 = vunpack.c.h.b16 %v258
    %v1425 = vunpack.c.l.b16 %v259
    %v1426 = vunpack.c.h.b16 %v259
    %v1427 = vunpack.c.l.b16 %v260
    %v1428 = vunpack.c.h.b16 %v260
    %v1429 = vunpack.c.l.b16 %v261
    %v1430 = vunpack.c.h.b16 %v261
    %v1431 = vunpack.c.l.b16 %v262
    %v1432 = vunpack.c.h.b16 %v262
    %v1433 = vunpack.c.l.b16 %v263
    %v1434 = vunpack.c.h.b16 %v263
    %v1435 = vunpack.c.l.b16 %v264
    %v1436 = vunpack.c.h.b16 %v264
    %v1437 = vunpack.c.l.b16 %v265
    %v1438 = vunpack.c.h.b16 %v265
    %v1439 = vunpack.c.l.b16 %v266
    %v1440 = vunpack.c.h.b16 %v266
    %v1441 = vunpack.c.l.b16 %v267
    %v1442 = vunpack.c.h.b16 %v267
    %v1443 = vunpack.c.l.b16 %v268
    %v1444 = vunpack.c.h.b16 %v268
    %v1445 = vunpack.c.l.b16 %v269
    %v1446 = vunpack.c.h.b16 %v269
    %v1447 = vunpack.c.l.b16 %v270
    %v1448 = vunpack.c.h.b16 %v270
    %v1449 = vunpack.c.l.b16 %v271
    %v1450 = vunpack.c.h.b16 %v271
    %v1451 = vunpack.c.l.b16 %v272
    %v1452 = vunpack.c.h.b16 %v272
    %v1453 = vunpack.c.l.b16 %v273
    %v1454 = vunpack.c.h.b16 %v273
    %v1455 = vunpack.c.l.b16 %v274
    %v1456 = vunpack.c.h.b16 %v274
    %v1457 = vunpack.c.l.b16 %v275
    %v1458 = vunpack.c.h.b16 %v275
    %v1459 = vunpack.c.l.b16 %v276
    %v1460 = vunpack.c.h.b16 %v276
    %v1461 = vunpack.c.l.b16 %v277
    %v1462 = vunpack.c.h.b16 %v277
    %v1463 = vunpack.c.l.b16 %v278
    %v1464 = vunpack.c.h.b16 %v278
    %v1465 = vunpack.c.l.b16 %v279
    %v1466 = vunpack.c.h.b16 %v279
    %v1467 = vunpack.c.l.b16 %v280
    %v1468 = vunpack.c.h.b16 %v280
    %v1469 = vunpack.c.l.b16 %v281
    %v1470 = vunpack.c.h.b16 %v281
    %v1471 = vunpack.c.l.b16 %v282
    %v1472 = vunpack.c.h.b16 %v282
    %v1473 = vunpack.c.l.b16 %v283
    %v1474 = vunpack.c.h.b16 %v283
    %v1475 = vunpack.c.l.b16 %v284
    %v1476 = vunpack.c.h.b16 %v284
    %v1477 = vunpack.c.l.b16 %v285
    %v1478 = vunpack.c.h.b16 %v285
    %v1479 = vunpack.c.l.b16 %v286
    %v1480 = vunpack.c.h.b16 %v286
    %v1481 = vunpack.c.l.b16 %v287
    %v1482 = vunpack.c.h.b16 %v287
    %v1483 = vunpack.c.l.b16 %v288
    %v1484 = vunpack.c.h.b16 %v288
    %v1485 = vunpack.c.l.b16 %v289
    %v1486 = vunpack.c.h.b16 %v289
    %v1487 = vunpack.c.l.b16 %v290
    %v1488 = vunpack.c.h.b16 %v290
    %v1489 = vunpack.c.l.b16 %v291
    %v1490 = vunpack.c.h.b16 %v291
    %v1491 = vunpack.c.l.b16 %v292
    %v1492 = vunpack.c.h.b16 %v292
    %v1493 = vunpack.c.l.b16 %v293
    %v1494 = vunpack.c.h.b16 %v293
    %v1495 = vunpack.c.l.b16 %v294
    %v1496 = vunpack.c.h.b16 %v294
    %v1497 = vunpack.c.l.b16 %v295
    %v1498 = vunpack.c.h.b16 %v295
    %v1499 = vunpack.c.l.b16 %v296
    %v1500 = vunpack.c.h.b16 %v296
    %v1501 = vunpack.c.l.b16 %v297
    %v1502 = vunpack.c.h.b16 %v297
    %v1503 = vunpack.c.l.b16 %v298
    %v1504 = vunpack.c.h.b16 %v298
    %v1505 = vunpack.c.l.b16 %v299
    %v1506 = vunpack.c.h.b16 %v299
    %v1507 = vunpack.c.l.b16 %v300
    %v1508 = vunpack.c.h.b16 %v300
    %v1509 = vunpack.c.l.b16 %v301
    %v1510 = vunpack.c.h.b16 %v301
    %v1511 = vunpack.c.l.b16 %v302
    %v1512 = vunpack.c.h.b16 %v302
    %v1513 = vunpack.c.l.b16 %v303
    %v1514 = vunpack.c.h.b16 %v303
    %v1515 = vunpack.c.l.b16 %v304
    %v1516 = vunpack.c.h.b16 %v304
    %v1517 = vunpack.c.l.b16 %v305
    %v1518 = vunpack.c.h.b16 %v305
    %v1519 = vunpack.c.l.b16 %v306
    %v1520 = vunpack.c.h.b16 %v306
    %v1521 = vunpack.c.l.b16 %v307
    %v1522 = vunpack.c.h.b16 %v307
    %v1523 = vunpack.c.l.b16 %v308
    %v1524 = vunpack.c.h.b16 %v308
    %v1525 = vunpack.c.l.b16 %v309
    %v1526 = vunpack.c.h.b16 %v309
    %v1527 = vunpack.c.l.b16 %v310
    %v1528 = vunpack.c.h.b16 %v310
    %v1529 = vunpack.c.l.b16 %v311
    %v1530 = vunpack.c.h.b16 %v311
    %v1531 = vunpack.c.l.b16 %v312
    %v1532 = vunpack.c.h.b16 %v312
    %v1533 = vunpack.c.l.b16 %v313
    %v1534 = vunpack.c.h.b16 %v313
    %v1535 = vunpack.c.l.b16 %v314
    %v1536 = vunpack.c.h.b16 %v314
    %v1537 = vunpack.c.l.b16 %v315
    %v1538 = vunpack.c.h.b16 %v315
    %v1539 = vunpack.c.l.b16 %v316
    %v1540 = vunpack.c.h.b16 %v316
    %v1541 = vunpack.c.l.b16 %v317
    %v1542 = vunpack.c.h.b16 %v317
    %v1543 = vunpack.c.l.b16 %v318
    %v1544 = vunpack.c.h.b16 %v318
    %v1545 = vunpack.c.l.b16 %v319
    %v1546 = vunpack.c.h.b16 %v319
    %v1547 = vunpack.c.l.b16 %v320
    %v1548 = vunpack.c.h.b16 %v320
    %v1549 = vunpack.c.l.b16 %v321
    %v1550 = vunpack.c.h.b16 %v321
    %v1551 = vunpack.c.l.b16 %v322
    %v1552 = vunpack.c.h.b16 %v322
    %v1553 = vunpack.c.l.b16 %v323
    %v1554 = vunpack.c.h.b16 %v323
    %v1555 = vunpack.c.l.b16 %v324
    %v1556 = vunpack.c.h.b16 %v324
    %v1557 = vunpack.c.l.b16 %v325
    %v1558 = vunpack.c.h.b16 %v325
    %v1559 = vunpack.c.l.b16 %v326
    %v1560 = vunpack.c.h.b16 %v326
    %v1561 = vunpack.c.l.b16 %v327
    %v1562 = vunpack.c.h.b16 %v327
    %v1563 = vunpack.c.l.b16 %v328
    %v1564 = vunpack.c.h.b16 %v328
    %v1565 = vunpack.c.l.b16 %v329
    %v1566 = vunpack.c.h.b16 %v329
    %v1567 = vunpack.c.l.b16 %v330
    %v1568 = vunpack.c.h.b16 %v330
    %v1569 = vunpack.c.l.b16 %v331
    %v1570 = vunpack.c.h.b16 %v331
    %v1571 = vunpack.c.l.b16 %v332
    %v1572 = vunpack.c.h.b16 %v332
    %v1573 = vunpack.c.l.b16 %v333
    %v1574 = vunpack.c.h.b16 %v333
    %v1575 = vunpack.c.l.b16 %v334
    %v1576 = vunpack.c.h.b16 %v334
    %v1577 = vunpack.c.l.b16 %v335
    %v1578 = vunpack.c.h.b16 %v335
    %v1579 = vunpack.c.l.b16 %v336
    %v1580 = vunpack.c.h.b16 %v336
    %v1581 = vunpack.c.l.b16 %v337
    %v1582 = vunpack.c.h.b16 %v337
    %v1583 = vunpack.c.l.b16 %v338
    %v1584 = vunpack.c.h.b16 %v338
    %v1585 = vunpack.c.l.b16 %v339
    %v1586 = vunpack.c.h.b16 %v339
    %v1587 = vunpack.c.l.b16 %v340
    %v1588 = vunpack.c.h.b16 %v340
    %v1589 = vunpack.c.l.b16 %v341
    %v1590 = vunpack.c.h.b16 %v341
    %v1591 = vunpack.c.l.b16 %v342
    %v1592 = vunpack.c.h.b16 %v342
    %v1593 = vunpack.c.l.b16 %v343
    %v1594 = vunpack.c.h.b16 %v343
    %v1595 = vunpack.c.l.b16 %v344
    %v1596 = vunpack.c.h.b16 %v344
    %v1597 = vunpack.c.l.b16 %v345
    %v1598 = vunpack.c.h.b16 %v345
    %v1599 = vunpack.c.l.b16 %v346
    %v1600 = vunpack.c.h.b16 %v346
    %v1601 = vunpack.c.l.b16 %v347
    %v1602 = vunpack.c.h.b16 %v347
    %v1603 = vunpack.c.l.b16 %v348
    %v1604 = vunpack.c.h.b16 %v348
    %v1605 = vunpack.c.l.b16 %v349
    %v1606 = vunpack.c.h.b16 %v349
    %v1607 = vunpack.c.l.b16 %v350
    %v1608 = vunpack.c.h.b16 %v350
    %v1609 = vunpack.c.l.b16 %v351
    %v1610 = vunpack.c.h.b16 %v351
    %v1611 = vunpack.c.l.b16 %v352
    %v1612 = vunpack.c.h.b16 %v352
    %v1613 = vunpack.c.l.b16 %v353
    %v1614 = vunpack.c.h.b16 %v353
    %v1615 = vunpack.c.l.b16 %v354
    %v1616 = vunpack.c.h.b16 %v354
    %v1617 = vunpack.c.l.b16 %v355
    %v1618 = vunpack.c.h.b16 %v355
    %v1619 = vunpack.c.l.b16 %v356
    %v1620 = vunpack.c.h.b16 %v356
    %v1621 = vunpack.c.l.b16 %v357
    %v1622 = vunpack.c.h.b16 %v357
    %v1623 = vunpack.c.l.b16 %v358
    %v1624 = vunpack.c.h.b16 %v358
    %v1625 = vunpack.c.l.b16 %v359
    %v1626 = vunpack.c.h.b16 %v359
    %v1627 = vunpack.c.l.b16 %v360
    %v1628 = vunpack.c.h.b16 %v360
    %v1629 = vunpack.c.l.b16 %v361
    %v1630 = vunpack.c.h.b16 %v361
    %v1631 = vunpack.c.l.b16 %v362
    %v1632 = vunpack.c.h.b16 %v362
    %v1633 = vunpack.c.l.b16 %v363
    %v1634 = vunpack.c.h.b16 %v363
    %v1635 = vunpack.c.l.b16 %v364
    %v1636 = vunpack.c.h.b16 %v364
    %v1637 = vunpack.c.l.b16 %v365
    %v1638 = vunpack.c.h.b16 %v365
    %v1639 = vunpack.c.l.b16 %v366
    %v1640 = vunpack.c.h.b16 %v366
    %v1641 = vunpack.c.l.b16 %v367
    %v1642 = vunpack.c.h.b16 %v367
    %v1643 = vunpack.c.l.b16 %v368
    %v1644 = vunpack.c.h.b16 %v368
    %v1645 = vunpack.c.l.b16 %v369
    %v1646 = vunpack.c.h.b16 %v369
    %v1647 = vunpack.c.l.b16 %v370
    %v1648 = vunpack.c.h.b16 %v370
    %v1649 = vunpack.c.l.b16 %v371
    %v1650 = vunpack.c.h.b16 %v371
    %v1651 = vunpack.c.l.b16 %v372
    %v1652 = vunpack.c.h.b16 %v372
    %v1653 = vunpack.c.l.b16 %v373
    %v1654 = vunpack.c.h.b16 %v373
    %v1655 = vunpack.c.l.b16 %v374
    %v1656 = vunpack.c.h.b16 %v374
    %v1657 = vunpack.c.l.b16 %v375
    %v1658 = vunpack.c.h.b16 %v375
    %v1659 = vunpack.c.l.b16 %v376
    %v1660 = vunpack.c.h.b16 %v376
    %v1661 = vunpack.c.l.b16 %v377
    %v1662 = vunpack.c.h.b16 %v377
    %v1663 = vunpack.c.l.b16 %v378
    %v1664 = vunpack.c.h.b16 %v378
    %v1665 = vunpack.c.l.b16 %v379
    %v1666 = vunpack.c.h.b16 %v379
    %v1667 = vunpack.c.l.b16 %v380
    %v1668 = vunpack.c.h.b16 %v380
    %v1669 = vunpack.c.l.b16 %v381
    %v1670 = vunpack.c.h.b16 %v381
    %v1671 = vunpack.c.l.b16 %v382
    %v1672 = vunpack.c.h.b16 %v382
    %v1673 = vunpack.c.l.b16 %v383
    %v1674 = vunpack.c.h.b16 %v383
    %v1675 = vunpack.c.l.b16 %v384
    %v1676 = vunpack.c.h.b16 %v384
    %v1677 = vunpack.c.l.b16 %v385
    %v1678 = vunpack.c.h.b16 %v385
    %v1679 = vunpack.c.l.b16 %v386
    %v1680 = vunpack.c.h.b16 %v386
    %v1681 = vunpack.c.l.b16 %v387
    %v1682 = vunpack.c.h.b16 %v387
    %v1683 = vunpack.c.l.b16 %v388
    %v1684 = vunpack.c.h.b16 %v388
    %v1685 = vunpack.c.l.b16 %v389
    %v1686 = vunpack.c.h.b16 %v389
    %v1687 = vunpack.c.l.b16 %v390
    %v1688 = vunpack.c.h.b16 %v390
    %v1689 = vunpack.c.l.b16 %v391
    %v1690 = vunpack.c.h.b16 %v391
    %v1691 = vunpack.c.l.b16 %v392
    %v1692 = vunpack.c.h.b16 %v392
    %v1693 = vunpack.c.l.b16 %v393
    %v1694 = vunpack.c.h.b16 %v393
    %v1695 = vunpack.c.l.b16 %v394
    %v1696 = vunpack.c.h.b16 %v394
    %v1697 = vunpack.c.l.b16 %v395
    %v1698 = vunpack.c.h.b16 %v395
    %v1699 = vunpack.c.l.b16 %v396
    %v1700 = vunpack.c.h.b16 %v396
    %v1701 = vunpack.c.l.b16 %v397
    %v1702 = vunpack.c.h.b16 %v397
    %v1703 = vunpack.c.l.b16 %v398
    %v1704 = vunpack.c.h.b16 %v398
    %v1705 = vunpack.c.l.b16 %v399
    %v1706 = vunpack.c.h.b16 %v399
    %v1707 = vunpack.c.l.b16 %v400
    %v1708 = vunpack.c.h.b16 %v400
    %v1709 = vunpack.c.l.b16 %v401
    %v1710 = vunpack.c.h.b16 %v401
    %v1711 = vunpack.c.l.b16 %v402
    %v1712 = vunpack.c.h.b16 %v402
    %v1713 = vunpack.c.l.b16 %v403
    %v1714 = vunpack.c.h.b16 %v403
    %v1715 = vunpack.c.l.b16 %v404
    %v1716 = vunpack.c.h.b16 %v404
    %v1717 = vunpack.c.l.b16 %v405
    %v1718 = vunpack.c.h.b16 %v405
    %v1719 = vunpack.c.l.b16 %v406
    %v1720 = vunpack.c.h.b16 %v406
    %v1721 = vunpack.c.l.b16 %v407
    %v1722 = vunpack.c.h.b16 %v407
    %v1723 = vunpack.c.l.b16 %v408
    %v1724 = vunpack.c.h.b16 %v408
    %v1725 = vunpack.c.l.b16 %v409
    %v1726 = vunpack.c.h.b16 %v409
    %v1727 = vunpack.c.l.b16 %v410
    %v1728 = vunpack.c.h.b16 %v410
    %v1729 = vunpack.c.l.b16 %v411
    %v1730 = vunpack.c.h.b16 %v411
    %v1731 = vunpack.c.l.b16 %v412
    %v1732 = vunpack.c.h.b16 %v412
    %v1733 = vunpack.c.l.b16 %v413
    %v1734 = vunpack.c.h.b16 %v413
    %v1735 = vunpack.c.l.b16 %v414
    %v1736 = vunpack.c.h.b16 %v414
    %v1737 = vunpack.c.l.b16 %v415
    %v1738 = vunpack.c.h.b16 %v415
    %v1739 = vunpack.c.l.b16 %v416
    %v1740 = vunpack.c.h.b16 %v416
    %v1741 = vunpack.c.l.b16 %v417
    %v1742 = vunpack.c.h.b16 %v417
    %v1743 = vunpack.c.l.b16 %v418
    %v1744 = vunpack.c.h.b16 %v418
    %v1745 = vunpack.c.l.b16 %v419
    %v1746 = vunpack.c.h.b16 %v419
    %v1747 = vunpack.c.l.b16 %v420
    %v1748 = vunpack.c.h.b16 %v420
    %v1749 = vunpack.c.l.b16 %v421
    %v1750 = vunpack.c.h.b16 %v421
    %v1751 = vunpack.c.l.b16 %v422
    %v1752 = vunpack.c.h.b16 %v422
    %v1753 = vunpack.c.l.b16 %v423
    %v1754 = vunpack.c.h.b16 %v423
    %v1755 = vunpack.c.l.b16 %v424
    %v1756 = vunpack.c.h.b16 %v424
    %v1757 = vunpack.c.l.b16 %v425
    %v1758 = vunpack.c.h.b16 %v425
    %v1759 = vunpack.c.l.b16 %v426
    %v1760 = vunpack.c.h.b16 %v426
    %v1761 = vunpack.c.l.b16 %v427
    %v1762 = vunpack.c.h.b16 %v427
    %v1763 = vunpack.c.l.b16 %v428
    %v1764 = vunpack.c.h.b16 %v428
    %v1765 = vunpack.c.l.b16 %v429
    %v1766 = vunpack.c.h.b16 %v429
    %v1767 = vunpack.c.l.b16 %v430
    %v1768 = vunpack.c.h.b16 %v430
    %v1769 = vunpack.c.l.b16 %v431
    %v1770 = vunpack.c.h.b16 %v431
    %v1771 = vunpack.c.l.b16 %v432
    %v1772 = vunpack.c.h.b16 %v432
    %v1773 = vunpack.c.l.b16 %v433
    %v1774 = vunpack.c.h.b16 %v433
    %v1775 = vunpack.c.l.b16 %v434
    %v1776 = vunpack.c.h.b16 %v434
    %v1777 = vunpack.c.l.b16 %v435
    %v1778 = vunpack.c.h.b16 %v435
    %v1779 = vunpack.c.l.b16 %v436
    %v1780 = vunpack.c.h.b16 %v436
    %v1781 = vunpack.c.l.b16 %v437
    %v1782 = vunpack.c.h.b16 %v437
    %v1783 = vunpack.c.l.b16 %v438
    %v1784 = vunpack.c.h.b16 %v438
    %v1785 = vunpack.c.l.b16 %v439
    %v1786 = vunpack.c.h.b16 %v439
    %v1787 = vunpack.c.l.b16 %v440
    %v1788 = vunpack.c.h.b16 %v440
    %v1789 = vunpack.c.l.b16 %v441
    %v1790 = vunpack.c.h.b16 %v441
    %v1791 = vunpack.c.l.b16 %v442
    %v1792 = vunpack.c.h.b16 %v442
    %v1793 = vunpack.c.l.b16 %v443
    %v1794 = vunpack.c.h.b16 %v443
    %v1795 = vunpack.c.l.b16 %v444
    %v1796 = vunpack.c.h.b16 %v444
    %v1797 = vunpack.c.l.b16 %v445
    %v1798 = vunpack.c.h.b16 %v445
    %v1799 = vunpack.c.l.b16 %v446
    %v1800 = vunpack.c.h.b16 %v446
    %v1801 = vunpack.c.l.b16 %v447
    %v1802 = vunpack.c.h.b16 %v447
    %v1803 = vunpack.c.l.b16 %v448
    %v1804 = vunpack.c.h.b16 %v448
    %v1805 = vunpack.c.l.b16 %v449
    %v1806 = vunpack.c.h.b16 %v449
    %v1807 = vunpack.c.l.b16 %v450
    %v1808 = vunpack.c.h.b16 %v450
    %v1809 = vunpack.c.l.b16 %v451
    %v1810 = vunpack.c.h.b16 %v451
    %v1811 = vunpack.c.l.b16 %v452
    %v1812 = vunpack.c.h.b16 %v452
    %v1813 = vunpack.c.l.b16 %v453
    %v1814 = vunpack.c.h.b16 %v453
    %v1815 = vunpack.c.l.b16 %v454
    %v1816 = vunpack.c.h.b16 %v454
    %v1817 = vunpack.c.l.b16 %v455
    %v1818 = vunpack.c.h.b16 %v455
    %v1819 = vunpack.c.l.b16 %v456
    %v1820 = vunpack.c.h.b16 %v456
    %v1821 = vunpack.c.l.b16 %v457
    %v1822 = vunpack.c.h.b16 %v457
    %v1823 = vunpack.c.l.b16 %v458
    %v1824 = vunpack.c.h.b16 %v458
    %v1825 = vunpack.c.l.b16 %v459
    %v1826 = vunpack.c.h.b16 %v459
    %v1827 = vunpack.c.l.b16 %v460
    %v1828 = vunpack.c.h.b16 %v460
    %v1829 = vunpack.c.l.b16 %v461
    %v1830 = vunpack.c.h.b16 %v461
    %v1831 = vunpack.c.l.b16 %v462
    %v1832 = vunpack.c.h.b16 %v462
    %v1833 = vunpack.c.l.b16 %v463
    %v1834 = vunpack.c.h.b16 %v463
    %v1835 = vunpack.c.l.b16 %v464
    %v1836 = vunpack.c.h.b16 %v464
    %v1837 = vunpack.c.l.b16 %v465
    %v1838 = vunpack.c.h.b16 %v465
    %v1839 = vunpack.c.l.b16 %v466
    %v1840 = vunpack.c.h.b16 %v466
    %v1841 = vunpack.c.l.b16 %v467
    %v1842 = vunpack.c.h.b16 %v467
    %v1843 = vunpack.c.l.b16 %v468
    %v1844 = vunpack.c.h.b16 %v468
    %v1845 = vunpack.c.l.b16 %v469
    %v1846 = vunpack.c.h.b16 %v469
    %v1847 = vunpack.c.l.b16 %v470
    %v1848 = vunpack.c.h.b16 %v470
    %v1849 = vunpack.c.l.b16 %v471
    %v1850 = vunpack.c.h.b16 %v471
    %v1851 = vunpack.c.l.b16 %v472
    %v1852 = vunpack.c.h.b16 %v472
    %v1853 = vunpack.c.l.b16 %v473
    %v1854 = vunpack.c.h.b16 %v473
    %v1855 = vunpack.c.l.b16 %v474
    %v1856 = vunpack.c.h.b16 %v474
    %v1857 = vunpack.c.l.b16 %v475
    %v1858 = vunpack.c.h.b16 %v475
    %v1859 = vunpack.c.l.b16 %v476
    %v1860 = vunpack.c.h.b16 %v476
    %v1861 = vunpack.c.l.b16 %v477
    %v1862 = vunpack.c.h.b16 %v477
    %v1863 = vunpack.c.l.b16 %v478
    %v1864 = vunpack.c.h.b16 %v478
    %v1865 = vunpack.c.l.b16 %v479
    %v1866 = vunpack.c.h.b16 %v479
    %v1867 = vunpack.c.l.b16 %v480
    %v1868 = vunpack.c.h.b16 %v480
    %v1869 = vunpack.c.l.b16 %v481
    %v1870 = vunpack.c.h.b16 %v481
    %v1871 = vunpack.c.l.b16 %v482
    %v1872 = vunpack.c.h.b16 %v482
    %v1873 = vunpack.c.l.b16 %v483
    %v1874 = vunpack.c.h.b16 %v483
    %v1875 = vunpack.c.l.b16 %v484
    %v1876 = vunpack.c.h.b16 %v484
    %v1877 = vunpack.c.l.b16 %v485
    %v1878 = vunpack.c.h.b16 %v485
    %v1879 = vunpack.c.l.b16 %v486
    %v1880 = vunpack.c.h.b16 %v486
    %v1881 = vunpack.c.l.b16 %v487
    %v1882 = vunpack.c.h.b16 %v487
    %v1883 = vunpack.c.l.b16 %v488
    %v1884 = vunpack.c.h.b16 %v488
    %v1885 = vunpack.c.l.b16 %v489
    %v1886 = vunpack.c.h.b16 %v489
    %v1887 = vunpack.c.l.b16 %v490
    %v1888 = vunpack.c.h.b16 %v490
    %v1889 = vunpack.c.l.b16 %v491
    %v1890 = vunpack.c.h.b16 %v491
    %v1891 = vunpack.c.l.b16 %v492
    %v1892 = vunpack.c.h.b16 %v492
    %v1893 = vunpack.c.l.b16 %v493
    %v1894 = vunpack.c.h.b16 %v493
    %v1895 = vunpack.c.l.b16 %v494
    %v1896 = vunpack.c.h.b16 %v494
    %v1897 = vunpack.c.l.b16 %v495
    %v1898 = vunpack.c.h.b16 %v495
    %v1899 = vunpack.c.l.b16 %v496
    %v1900 = vunpack.c.h.b16 %v496
    %v1901 = vunpack.c.l.b16 %v497
    %v1902 = vunpack.c.h.b16 %v497
    %v1903 = vunpack.c.l.b16 %v498
    %v1904 = vunpack.c.h.b16 %v498
    %v1905 = vunpack.c.l.b16 %v499
    %v1906 = vunpack.c.h.b16 %v499
    %v1907 = vunpack.c.l.b16 %v500
    %v1908 = vunpack.c.h.b16 %v500
    %v1909 = vunpack.c.l.b16 %v501
    %v1910 = vunpack.c.h.b16 %v501
    %v1911 = vunpack.c.l.b16 %v502
    %v1912 = vunpack.c.h.b16 %v502
    %v1913 = vunpack.c.l.b16 %v503
    %v1914 = vunpack.c.h.b16 %v503
    %v1915 = vunpack.c.l.b16 %v504
    %v1916 = vunpack.c.h.b16 %v504
    %v1917 = vunpack.c.l.b16 %v505
    %v1918 = vunpack.c.h.b16 %v505
    %v1919 = vunpack.c.l.b16 %v506
    %v1920 = vunpack.c.h.b16 %v506
    %v1921 = vunpack.c.l.b16 %v507
    %v1922 = vunpack.c.h.b16 %v507
    %v1923 = vunpack.c.l.b16 %v508
    %v1924 = vunpack.c.h.b16 %v508
    %v1925 = vunpack.c.l.b16 %v509
    %v1926 = vunpack.c.h.b16 %v509
    %v1927 = vunpack.c.l.b16 %v510
    %v1928 = vunpack.c.h.b16 %v510
    %v1929 = vunpack.c.l.b16 %v511
    %v1930 = vunpack.c.h.b16 %v511
    %v1931 = vunpack.c.l.b16 %v512
    %v1932 = vunpack.c.h.b16 %v512
    %v1933 = vunpack.c.l.b16 %v513
    %v1934 = vunpack.c.h.b16 %v513
    %v1935 = vunpack.c.l.b16 %v514
    %v1936 = vunpack.c.h.b16 %v514
    %v1937 = vunpack.c.l.b16 %v515
    %v1938 = vunpack.c.h.b16 %v515
    %v1939 = vunpack.c.l.b16 %v516
    %v1940 = vunpack.c.h.b16 %v516
    %v1941 = vunpack.c.l.b16 %v517
    %v1942 = vunpack.c.h.b16 %v517
    %v1943 = vunpack.c.l.b16 %v518
    %v1944 = vunpack.c.h.b16 %v518
    %v1945 = vunpack.c.l.b16 %v519
    %v1946 = vunpack.c.h.b16 %v519
    %v1947 = vunpack.c.l.b16 %v520
    %v1948 = vunpack.c.h.b16 %v520
    %v1949 = vunpack.c.l.b16 %v521
    %v1950 = vunpack.c.h.b16 %v521
    %v1951 = vunpack.c.l.b16 %v522
    %v1952 = vunpack.c.h.b16 %v522
    %v1953 = vunpack.c.l.b16 %v523
    %v1954 = vunpack.c.h.b16 %v523
    %v1955 = vunpack.c.l.b16 %v524
    %v1956 = vunpack.c.h.b16 %v524
    %v1957 = vunpack.c.l.b16 %v525
    %v1958 = vunpack.c.h.b16 %v525
    %v1959 = vunpack.c.l.b16 %v526
    %v1960 = vunpack.c.h.b16 %v526
    %v1961 = vunpack.c.l.b16 %v527
    %v1962 = vunpack.c.h.b16 %v527
    %v1963 = vunpack.c.l.b16 %v528
    %v1964 = vunpack.c.h.b16 %v528
    %v1965 = vunpack.c.l.b16 %v529
    %v1966 = vunpack.c.h.b16 %v529
    %v1967 = vunpack.c.l.b16 %v530
    %v1968 = vunpack.c.h.b16 %v530
    %v1969 = vunpack.c.l.b16 %v531
    %v1970 = vunpack.c.h.b16 %v531
    %v1971 = vunpack.c.l.b16 %v532
    %v1972 = vunpack.c.h.b16 %v532
    %v1973 = vunpack.c.l.b16 %v533
    %v1974 = vunpack.c.h.b16 %v533
    %v1975 = vunpack.c.l.b16 %v534
    %v1976 = vunpack.c.h.b16 %v534
    %v1977 = vunpack.c.l.b16 %v535
    %v1978 = vunpack.c.h.b16 %v535
    %v1979 = vunpack.c.l.b16 %v536
    %v1980 = vunpack.c.h.b16 %v536
    %v1981 = vunpack.c.l.b16 %v537
    %v1982 = vunpack.c.h.b16 %v537
    %v1983 = vunpack.c.l.b16 %v538
    %v1984 = vunpack.c.h.b16 %v538
    %v1985 = vunpack.c.l.b16 %v539
    %v1986 = vunpack.c.h.b16 %v539
    %v1987 = vunpack.c.l.b16 %v540
    %v1988 = vunpack.c.h.b16 %v540
    %v1989 = vunpack.c.l.b16 %v541
    %v1990 = vunpack.c.h.b16 %v541
    %v1991 = vunpack.c.l.b16 %v542
    %v1992 = vunpack.c.h.b16 %v542
    %v1993 = vunpack.c.l.b16 %v543
    %v1994 = vunpack.c.h.b16 %v543
    %v1995 = vunpack.c.l.b16 %v544
    %v1996 = vunpack.c.h.b16 %v544
    %v1997 = vunpack.c.l.b16 %v545
    %v1998 = vunpack.c.h.b16 %v545
    %v1999 = vunpack.c.l.b16 %v546
    %v2000 = vunpack.c.h.b16 %v546
    %v2001 = vunpack.c.l.b16 %v547
    %v2002 = vunpack.c.h.b16 %v547
    %v2003 = vunpack.c.l.b16 %v548
    %v2004 = vunpack.c.h.b16 %v548
    %v2005 = vunpack.c.l.b16 %v549
    %v2006 = vunpack.c.h.b16 %v549
    %v2007 = vunpack.c.l.b16 %v550
    %v2008 = vunpack.c.h.b16 %v550
    %v2009 = vunpack.c.l.b16 %v551
    %v2010 = vunpack.c.h.b16 %v551
    %v2011 = vunpack.c.l.b16 %v552
    %v2012 = vunpack.c.h.b16 %v552
    %v2013 = vunpack.c.l.b16 %v553
    %v2014 = vunpack.c.h.b16 %v553
    %v2015 = vunpack.c.l.b16 %v554
    %v2016 = vunpack.c.h.b16 %v554
    %v2017 = vunpack.c.l.b16 %v555
    %v2018 = vunpack.c.h.b16 %v555
    %v2019 = vunpack.c.l.b16 %v556
    %v2020 = vunpack.c.h.b16 %v556
    %v2021 = vunpack.c.l.b16 %v557
    %v2022 = vunpack.c.h.b16 %v557
    %v2023 = vunpack.c.l.b16 %v558
    %v2024 = vunpack.c.h.b16 %v558
    %v2025 = vunpack.c.l.b16 %v559
    %v2026 = vunpack.c.h.b16 %v559
    %v2027 = vunpack.c.l.b16 %v560
    %v2028 = vunpack.c.h.b16 %v560
    %v2029 = vunpack.c.l.b16 %v561
    %v2030 = vunpack.c.h.b16 %v561
    %v2031 = vunpack.c.l.b16 %v562
    %v2032 = vunpack.c.h.b16 %v562
    %v2033 = vunpack.c.l.b16 %v563
    %v2034 = vunpack.c.h.b16 %v563
    %v2035 = vunpack.c.l.b16 %v564
    %v2036 = vunpack.c.h.b16 %v564
    %v2037 = vunpack.c.l.b16 %v565
    %v2038 = vunpack.c.h.b16 %v565
    %v2039 = vunpack.c.l.b16 %v566
    %v2040 = vunpack.c.h.b16 %v566
    %v2041 = vunpack.c.l.b16 %v567
    %v2042 = vunpack.c.h.b16 %v567
    %v2043 = vunpack.c.l.b16 %v568
    %v2044 = vunpack.c.h.b16 %v568
    %v2045 = vunpack.c.l.b16 %v569
    %v2046 = vunpack.c.h.b16 %v569
    %v2047 = vunpack.c.l.b16 %v570
    %v2048 = vunpack.c.h.b16 %v570
    %v2049 = vunpack.c.l.b16 %v571
    %v2050 = vunpack.c.h.b16 %v571
    %v2051 = vunpack.c.l.b16 %v572
    %v2052 = vunpack.c.h.b16 %v572
    %v2053 = vunpack.c.l.b16 %v573
    %v2054 = vunpack.c.h.b16 %v573
    %v2055 = vunpack.c.l.b16 %v574
    %v2056 = vunpack.c.h.b16 %v574
    %v2057 = vunpack.c.l.b16 %v575
    %v2058 = vunpack.c.h.b16 %v575
    %v2059 = vunpack.c.l.b16 %v576
    %v2060 = vunpack.c.h.b16 %v576
    %v2061 = vunpack.c.l.b16 %v577
    %v2062 = vunpack.c.h.b16 %v577
    %v2063 = vunpack.c.l.b16 %v578
    %v2064 = vunpack.c.h.b16 %v578
    %v2065 = vunpack.c.l.b16 %v579
    %v2066 = vunpack.c.h.b16 %v579
    %v2067 = vunpack.c.l.b16 %v580
    %v2068 = vunpack.c.h.b16 %v580
    %v2069 = vunpack.c.l.b16 %v581
    %v2070 = vunpack.c.h.b16 %v581
    %v2071 = vunpack.c.l.b16 %v582
    %v2072 = vunpack.c.h.b16 %v582
    %v2073 = vunpack.c.l.b16 %v583
    %v2074 = vunpack.c.h.b16 %v583
    %v2075 = vunpack.c.l.b16 %v584
    %v2076 = vunpack.c.h.b16 %v584
    %v2077 = vunpack.c.l.b16 %v585
    %v2078 = vunpack.c.h.b16 %v585
    %v2079 = vunpack.c.l.b16 %v586
    %v2080 = vunpack.c.h.b16 %v586
    %v2081 = vunpack.c.l.b16 %v587
    %v2082 = vunpack.c.h.b16 %v587
    %v2083 = vunpack.c.l.b16 %v588
    %v2084 = vunpack.c.h.b16 %v588
    %v2085 = vunpack.c.l.b16 %v589
    %v2086 = vunpack.c.h.b16 %v589
    %v2087 = vunpack.c.l.b16 %v590
    %v2088 = vunpack.c.h.b16 %v590
    %v2089 = vunpack.c.l.b16 %v591
    %v2090 = vunpack.c.h.b16 %v591
    %v2091 = vunpack.c.l.b16 %v592
    %v2092 = vunpack.c.h.b16 %v592
    %v2093 = vunpack.c.l.b16 %v593
    %v2094 = vunpack.c.h.b16 %v593
    %v2095 = vunpack.c.l.b16 %v594
    %v2096 = vunpack.c.h.b16 %v594
    %v2097 = vunpack.c.l.b16 %v595
    %v2098 = vunpack.c.h.b16 %v595
    %v2099 = vunpack.c.l.b16 %v596
    %v2100 = vunpack.c.h.b16 %v596
    %v2101 = vunpack.c.l.b16 %v597
    %v2102 = vunpack.c.h.b16 %v597
    %v2103 = vunpack.c.l.b16 %v598
    %v2104 = vunpack.c.h.b16 %v598
    %v2105 = vunpack.c.l.b16 %v599
    %v2106 = vunpack.c.h.b16 %v599
    %v2107 = vunpack.c.l.b16 %v600
    %v2108 = vunpack.c.h.b16 %v600
    %v2109 = vunpack.c.l.b16 %v601
    %v2110 = vunpack.c.h.b16 %v601
    %v2111 = vunpack.c.l.b16 %v602
    %v2112 = vunpack.c.h.b16 %v602
    %v2113 = vunpack.c.l.b16 %v603
    %v2114 = vunpack.c.h.b16 %v603
    %v2115 = vunpack.c.l.b16 %v604
    %v2116 = vunpack.c.h.b16 %v604
    %v2117 = vunpack.c.l.b16 %v605
    %v2118 = vunpack.c.h.b16 %v605
    %v2119 = vunpack.c.l.b16 %v606
    %v2120 = vunpack.c.h.b16 %v606
    %v2121 = vunpack.c.l.b16 %v607
    %v2122 = vunpack.c.h.b16 %v607
    %v2123 = vunpack.c.l.b16 %v608
    %v2124 = vunpack.c.h.b16 %v608
    %v2125 = vunpack.c.l.b16 %v609
    %v2126 = vunpack.c.h.b16 %v609
    %v2127 = vunpack.c.l.b16 %v610
    %v2128 = vunpack.c.h.b16 %v610
    %v2129 = vunpack.c.l.b16 %v611
    %v2130 = vunpack.c.h.b16 %v611
    %v2131 = vunpack.c.l.b16 %v612
    %v2132 = vunpack.c.h.b16 %v612
    %v2133 = vunpack.c.l.b16 %v613
    %v2134 = vunpack.c.h.b16 %v613
    %v2135 = vunpack.c.l.b16 %v614
    %v2136 = vunpack.c.h.b16 %v614
    %v2137 = vunpack.c.l.b16 %v615
    %v2138 = vunpack.c.h.b16 %v615
    %v2139 = vunpack.c.l.b16 %v616
    %v2140 = vunpack.c.h.b16 %v616
    %v2141 = vunpack.c.l.b16 %v617
    %v2142 = vunpack.c.h.b16 %v617
    %v2143 = vunpack.c.l.b16 %v618
    %v2144 = vunpack.c.h.b16 %v618
    %v2145 = vunpack.c.l.b16 %v619
    %v2146 = vunpack.c.h.b16 %v619
    %v2147 = vunpack.c.l.b16 %v620
    %v2148 = vunpack.c.h.b16 %v620
    %v2149 = vunpack.c.l.b16 %v621
    %v2150 = vunpack.c.h.b16 %v621
    %v2151 = vunpack.c.l.b16 %v622
    %v2152 = vunpack.c.h.b16 %v622
    %v2153 = vunpack.c.l.b16 %v623
    %v2154 = vunpack.c.h.b16 %v623
    %v2155 = vunpack.c.l.b16 %v624
    %v2156 = vunpack.c.h.b16 %v624
    %v2157 = vunpack.c.l.b16 %v625
    %v2158 = vunpack.c.h.b16 %v625
    %v2159 = vunpack.c.l.b16 %v626
    %v2160 = vunpack.c.h.b16 %v626
    %v2161 = vunpack.c.l.b16 %v627
    %v2162 = vunpack.c.h.b16 %v627
    %v2163 = vunpack.c.l.b16 %v628
    %v2164 = vunpack.c.h.b16 %v628
    %v2165 = vunpack.c.l.b16 %v629
    %v2166 = vunpack.c.h.b16 %v629
    %v2167 = vunpack.c.l.b16 %v630
    %v2168 = vunpack.c.h.b16 %v630
    %v2169 = vunpack.c.l.b16 %v631
    %v2170 = vunpack.c.h.b16 %v631
    %v2171 = vunpack.c.l.b16 %v632
    %v2172 = vunpack.c.h.b16 %v632
    %v2173 = vunpack.c.l.b16 %v633
    %v2174 = vunpack.c.h.b16 %v633
    %v2175 = vunpack.c.l.b16 %v634
    %v2176 = vunpack.c.h.b16 %v634
    %v2177 = vunpack.c.l.b16 %v635
    %v2178 = vunpack.c.h.b16 %v635
    %v2179 = vunpack.c.l.b16 %v636
    %v2180 = vunpack.c.h.b16 %v636
    %v2181 = vunpack.c.l.b16 %v637
    %v2182 = vunpack.c.h.b16 %v637
    %v2183 = vunpack.c.l.b16 %v638
    %v2184 = vunpack.c.h.b16 %v638
    %v2185 = vunpack.c.l.b16 %v639
    %v2186 = vunpack.c.h.b16 %v639
    %v2187 = vunpack.c.l.b16 %v640
    %v2188 = vunpack.c.h.b16 %v640
    %v2189 = vunpack.c.l.b16 %v641
    %v2190 = vunpack.c.h.b16 %v641
    %v2191 = vunpack.c.l.b16 %v642
    %v2192 = vunpack.c.h.b16 %v642
    %v2193 = vunpack.c.l.b16 %v643
    %v2194 = vunpack.c.h.b16 %v643
    %v2195 = vunpack.c.l.b16 %v644
    %v2196 = vunpack.c.h.b16 %v644
    %v2197 = vunpack.c.l.b16 %v645
    %v2198 = vunpack.c.h.b16 %v645
    %v2199 = vunpack.c.l.b16 %v646
    %v2200 = vunpack.c.h.b16 %v646
    %v2201 = vunpack.c.l.b16 %v647
    %v2202 = vunpack.c.h.b16 %v647
    %v2203 = vunpack.c.l.b16 %v648
    %v2204 = vunpack.c.h.b16 %v648
    %v2205 = vunpack.c.l.b16 %v649
    %v2206 = vunpack.c.h.b16 %v649
    %v2207 = vunpack.c.l.b16 %v650
    %v2208 = vunpack.c.h.b16 %v650
    %v2209 = vunpack.c.l.b16 %v651
    %v2210 = vunpack.c.h.b16 %v651
    %v2211 = vunpack.c.l.b16 %v652
    %v2212 = vunpack.c.h.b16 %v652
    %v2213 = vunpack.c.l.b16 %v653
    %v2214 = vunpack.c.h.b16 %v653
    %v2215 = vunpack.c.l.b16 %v654
    %v2216 = vunpack.c.h.b16 %v654
    %v2217 = vunpack.c.l.b16 %v655
    %v2218 = vunpack.c.h.b16 %v655
    %v2219 = vunpack.c.l.b16 %v656
    %v2220 = vunpack.c.h.b16 %v656
    %v2221 = vunpack.c.l.b16 %v657
    %v2222 = vunpack.c.h.b16 %v657
    %v2223 = vunpack.c.l.b16 %v658
    %v2224 = vunpack.c.h.b16 %v658
    %v2225 = vunpack.c.l.b16 %v659
    %v2226 = vunpack.c.h.b16 %v659
    %v2227 = vunpack.c.l.b16 %v660
    %v2228 = vunpack.c.h.b16 %v660
    %v2229 = vunpack.c.l.b16 %v661
    %v2230 = vunpack.c.h.b16 %v661
    %v2231 = vunpack.c.l.b16 %v662
    %v2232 = vunpack.c.h.b16 %v662
    %v2233 = vunpack.c.l.b16 %v663
    %v2234 = vunpack.c.h.b16 %v663
    %v2235 = vunpack.c.l.b16 %v664
    %v2236 = vunpack.c.h.b16 %v664
    %v2237 = vunpack.c.l.b16 %v665
    %v2238 = vunpack.c.h.b16 %v665
    %v2239 = vunpack.c.l.b16 %v666
    %v2240 = vunpack.c.h.b16 %v666
    %v2241 = vunpack.c.l.b16 %v667
    %v2242 = vunpack.c.h.b16 %v667
    %v2243 = vunpack.c.l.b16 %v668
    %v2244 = vunpack.c.h.b16 %v668
    %v2245 = vunpack.c.l.b16 %v669
    %v2246 = vunpack.c.h.b16 %v669
    %v2247 = vunpack.c.l.b16 %v670
    %v2248 = vunpack.c.h.b16 %v670
    %v2249 = vunpack.c.l.b16 %v671
    %v2250 = vunpack.c.h.b16 %v671
    %v2251 = vunpack.c.l.b16 %v672
    %v2252 = vunpack.c.h.b16 %v672
    %v2253 = vunpack.c.l.b16 %v673
    %v2254 = vunpack.c.h.b16 %v673
    %v2255 = vunpack.c.l.b16 %v674
    %v2256 = vunpack.c.h.b16 %v674
    %v2257 = vunpack.c.l.b16 %v675
    %v2258 = vunpack.c.h.b16 %v675
    %v2259 = vunpack.c.l.b16 %v676
    %v2260 = vunpack.c.h.b16 %v676
    %v2261 = vunpack.c.l.b16 %v677
    %v2262 = vunpack.c.h.b16 %v677
    %v2263 = vunpack.c.l.b16 %v678
    %v2264 = vunpack.c.h.b16 %v678
    %v2265 = vunpack.c.l.b16 %v679
    %v2266 = vunpack.c.h.b16 %v679
    %v2267 = vunpack.c.l.b16 %v680
    %v2268 = vunpack.c.h.b16 %v680
    %v2269 = vunpack.c.l.b16 %v681
    %v2270 = vunpack.c.h.b16 %v681
    %v2271 = vunpack.c.l.b16 %v682
    %v2272 = vunpack.c.h.b16 %v682
    %v2273 = vunpack.c.l.b16 %v683
    %v2274 = vunpack.c.h.b16 %v683
    %v2275 = vunpack.c.l.b16 %v684
    %v2276 = vunpack.c.h.b16 %v684
    %v2277 = vunpack.c.l.b16 %v685
    %v2278 = vunpack.c.h.b16 %v685
    %v2279 = vunpack.c.l.b16 %v686
    %v2280 = vunpack.c.h.b16 %v686
    %v2281 = vunpack.c.l.b16 %v687
    %v2282 = vunpack.c.h.b16 %v687
    %v2283 = vunpack.c.l.b16 %v688
    %v2284 = vunpack.c.h.b16 %v688
    %v2285 = vunpack.c.l.b16 %v689
    %v2286 = vunpack.c.h.b16 %v689
    %v2287 = vunpack.c.l.b16 %v690
    %v2288 = vunpack.c.h.b16 %v690
    %v2289 = vunpack.c.l.b16 %v691
    %v2290 = vunpack.c.h.b16 %v691
    %v2291 = vunpack.c.l.b16 %v692
    %v2292 = vunpack.c.h.b16 %v692
    %v2293 = vunpack.c.l.b16 %v693
    %v2294 = vunpack.c.h.b16 %v693
    %v2295 = vunpack.c.l.b16 %v694
    %v2296 = vunpack.c.h.b16 %v694
    %v2297 = vunpack.c.l.b16 %v695
    %v2298 = vunpack.c.h.b16 %v695
    %v2299 = vunpack.c.l.b16 %v696
    %v2300 = vunpack.c.h.b16 %v696
    %v2301 = vunpack.c.l.b16 %v697
    %v2302 = vunpack.c.h.b16 %v697
    %v2303 = vunpack.c.l.b16 %v698
    %v2304 = vunpack.c.h.b16 %v698
    %v2305 = vunpack.c.l.b16 %v699
    %v2306 = vunpack.c.h.b16 %v699
    %v2307 = vunpack.c.l.b16 %v700
    %v2308 = vunpack.c.h.b16 %v700
    %v2309 = vunpack.c.l.b16 %v701
    %v2310 = vunpack.c.h.b16 %v701
    %v2311 = vunpack.c.l.b16 %v702
    %v2312 = vunpack.c.h.b16 %v702
    %v2313 = vunpack.c.l.b16 %v703
    %v2314 = vunpack.c.h.b16 %v703
    %v2315 = vunpack.c.l.b16 %v704
    %v2316 = vunpack.c.h.b16 %v704
    %v2317 = vunpack.c.l.b16 %v705
    %v2318 = vunpack.c.h.b16 %v705
    %v2319 = vunpack.c.l.b16 %v706
    %v2320 = vunpack.c.h.b16 %v706
    %v2321 = vunpack.c.l.b16 %v707
    %v2322 = vunpack.c.h.b16 %v707
    %v2323 = vunpack.c.l.b16 %v708
    %v2324 = vunpack.c.h.b16 %v708
    %v2325 = vunpack.c.l.b16 %v709
    %v2326 = vunpack.c.h.b16 %v709
    %v2327 = vunpack.c.l.b16 %v710
    %v2328 = vunpack.c.h.b16 %v710
    %v2329 = vunpack.c.l.b16 %v711
    %v2330 = vunpack.c.h.b16 %v711
    %v2331 = vunpack.c.l.b16 %v712
    %v2332 = vunpack.c.h.b16 %v712
    %v2333 = vunpack.c.l.b16 %v713
    %v2334 = vunpack.c.h.b16 %v713
    %v2335 = vunpack.c.l.b16 %v714
    %v2336 = vunpack.c.h.b16 %v714
    %v2337 = vunpack.c.l.b16 %v715
    %v2338 = vunpack.c.h.b16 %v715
    %v2339 = vunpack.c.l.b16 %v716
    %v2340 = vunpack.c.h.b16 %v716
    %v2341 = vunpack.c.l.b16 %v717
    %v2342 = vunpack.c.h.b16 %v717
    %v2343 = vunpack.c.l.b16 %v718
    %v2344 = vunpack.c.h.b16 %v718
    %v2345 = vunpack.c.l.b16 %v719
    %v2346 = vunpack.c.h.b16 %v719
    %v2347 = vunpack.c.l.b16 %v720
    %v2348 = vunpack.c.h.b16 %v720
    %v2349 = vunpack.c.l.b16 %v721
    %v2350 = vunpack.c.h.b16 %v721
    %v2351 = vunpack.c.l.b16 %v722
    %v2352 = vunpack.c.h.b16 %v722
    %v2353 = vunpack.c.l.b16 %v723
    %v2354 = vunpack.c.h.b16 %v723
    %v2355 = vunpack.c.l.b16 %v724
    %v2356 = vunpack.c.h.b16 %v724
    %v2357 = vunpack.c.l.b16 %v725
    %v2358 = vunpack.c.h.b16 %v725
    %v2359 = vunpack.c.l.b16 %v726
    %v2360 = vunpack.c.h.b16 %v726
    %v2361 = vunpack.c.l.b16 %v727
    %v2362 = vunpack.c.h.b16 %v727
    %v2363 = vunpack.c.l.b16 %v728
    %v2364 = vunpack.c.h.b16 %v728
    %v2365 = vpack.c.b16 %v1349, %v1341
    %v2366 = vpack.c.b16 %v1350, %v1342
    %v2367 = vpack.c.b16 %v1351, %v1343
    %v2368 = vpack.c.b16 %v1352, %v1344
    %v2369 = vpack.c.b16 %v1353, %v1345
    %v2370 = vpack.c.b16 %v1354, %v1346
    %v2371 = vpack.c.b16 %v1355, %v1347
    %v2372 = vpack.c.b16 %v1356, %v1348
    %v2373 = vpack.c.b16 %v1365, %v1357
    %v2374 = vpack.c.b16 %v1366, %v1358
    %v2375 = vpack.c.b16 %v1367, %v1359
    %v2376 = vpack.c.b16 %v1368, %v1360
    %v2377 = vpack.c.b16 %v1369, %v1361
    %v2378 = vpack.c.b16 %v1370, %v1362
    %v2379 = vpack.c.b16 %v1371, %v1363
    %v2380 = vpack.c.b16 %v1372, %v1364
    %v2381 = vpack.c.b16 %v1381, %v1373
    %v2382 = vpack.c.b16 %v1382, %v1374
    %v2383 = vpack.c.b16 %v1383, %v1375
    %v2384 = vpack.c.b16 %v1384, %v1376
    %v2385 = vpack.c.b16 %v1385, %v1377
    %v2386 = vpack.c.b16 %v1386, %v1378
    %v2387 = vpack.c.b16 %v1387, %v1379
    %v2388 = vpack.c.b16 %v1388, %v1380
    %v2389 = vpack.c.b16 %v1397, %v1389
    %v2390 = vpack.c.b16 %v1398, %v1390
    %v2391 = vpack.c.b16 %v1399, %v1391
    %v2392 = vpack.c.b16 %v1400, %v1392
    %v2393 = vpack.c.b16 %v1401, %v1393
    %v2394 = vpack.c.b16 %v1402, %v1394
    %v2395 = vpack.c.b16 %v1403, %v1395
    %v2396 = vpack.c.b16 %v1404, %v1396
    %v2397 = vpack.c.b16 %v1413, %v1405
    %v2398 = vpack.c.b16 %v1414, %v1406
    %v2399 = vpack.c.b16 %v1415, %v1407
    %v2400 = vpack.c.b16 %v1416, %v1408
    %v2401 = vpack.c.b16 %v1417, %v1409
    %v2402 = vpack.c.b16 %v1418, %v1410
    %v2403 = vpack.c.b16 %v1419, %v1411
    %v2404 = vpack.c.b16 %v1420, %v1412
    %v2405 = vpack.c.b16 %v1429, %v1421
    %v2406 = vpack.c.b16 %v1430, %v1422
    %v2407 = vpack.c.b16 %v1431, %v1423
    %v2408 = vpack.c.b16 %v1432, %v1424
    %v2409 = vpack.c.b16 %v1433, %v1425
    %v2410 = vpack.c.b16 %v1434, %v1426
    %v2411 = vpack.c.b16 %v1435, %v1427
    %v2412 = vpack.c.b16 %v1436, %v1428
    %v2413 = vpack.c.b16 %v1445, %v1437
    %v2414 = vpack.c.b16 %v1446, %v1438
    %v2415 = vpack.c.b16 %v1447, %v1439
    %v2416 = vpack.c.b16 %v1448, %v1440
    %v2417 = vpack.c.b16 %v1449, %v1441
    %v2418 = vpack.c.b16 %v1450, %v1442
    %v2419 = vpack.c.b16 %v1451, %v1443
    %v2420 = vpack.c.b16 %v1452, %v1444
    %v2421 = vpack.c.b16 %v1461, %v1453
    %v2422 = vpack.c.b16 %v1462, %v1454
    %v2423 = vpack.c.b16 %v1463, %v1455
    %v2424 = vpack.c.b16 %v1464, %v1456
    %v2425 = vpack.c.b16 %v1465, %v1457
    %v2426 = vpack.c.b16 %v1466, %v1458
    %v2427 = vpack.c.b16 %v1467, %v1459
    %v2428 = vpack.c.b16 %v1468, %v1460
    %v2429 = vpack.c.b16 %v1477, %v1469
    %v2430 = vpack.c.b16 %v1478, %v1470
    %v2431 = vpack.c.b16 %v1479, %v1471
    %v2432 = vpack.c.b16 %v1480, %v1472
    %v2433 = vpack.c.b16 %v1481, %v1473
    %v2434 = vpack.c.b16 %v1482, %v1474
    %v2435 = vpack.c.b16 %v1483, %v1475
    %v2436 = vpack.c.b16 %v1484, %v1476
    %v2437 = vpack.c.b16 %v1493, %v1485
    %v2438 = vpack.c.b16 %v1494, %v1486
    %v2439 = vpack.c.b16 %v1495, %v1487
    %v2440 = vpack.c.b16 %v1496, %v1488
    %v2441 = vpack.c.b16 %v1497, %v1489
    %v2442 = vpack.c.b16 %v1498, %v1490
    %v2443 = vpack.c.b16 %v1499, %v1491
    %v2444 = vpack.c.b16 %v1500, %v1492
    %v2445 = vpack.c.b16 %v1509, %v1501
    %v2446 = vpack.c.b16 %v1510, %v1502
    %v2447 = vpack.c.b16 %v1511, %v1503
    %v2448 = vpack.c.b16 %v1512, %v1504
    %v2449 = vpack.c.b16 %v1513, %v1505
    %v2450 = vpack.c.b16 %v1514, %v1506
    %v2451 = vpack.c.b16 %v1515, %v1507
    %v2452 = vpack.c.b16 %v1516, %v1508
    %v2453 = vpack.c.b16 %v1525, %v1517
    %v2454 = vpack.c.b16 %v1526, %v1518
    %v2455 = vpack.c.b16 %v1527, %v1519
    %v2456 = vpack.c.b16 %v1528, %v1520
    %v2457 = vpack.c.b16 %v1529, %v1521
    %v2458 = vpack.c.b16 %v1530, %v1522
    %v2459 = vpack.c.b16 %v1531, %v1523
    %v2460 = vpack.c.b16 %v1532, %v1524
    %v2461 = vpack.c.b16 %v1541, %v1533
    %v2462 = vpack.c.b16 %v1542, %v1534
    %v2463 = vpack.c.b16 %v1543, %v1535
    %v2464 = vpack.c.b16 %v1544, %v1536
    %v2465 = vpack.c.b16 %v1545, %v1537
    %v2466 = vpack.c.b16 %v1546, %v1538
    %v2467 = vpack.c.b16 %v1547, %v1539
    %v2468 = vpack.c.b16 %v1548, %v1540
    %v2469 = vpack.c.b16 %v1557, %v1549
    %v2470 = vpack.c.b16 %v1558, %v1550
    %v2471 = vpack.c.b16 %v1559, %v1551
    %v2472 = vpack.c.b16 %v1560, %v1552
    %v2473 = vpack.c.b16 %v1561, %v1553
    %v2474 = vpack.c.b16 %v1562, %v1554
    %v2475 = vpack.c.b16 %v1563, %v1555
    %v2476 = vpack.c.b16 %v1564, %v1556
    %v2477 = vpack.c.b16 %v1573, %v1565
    %v2478 = vpack.c.b16 %v1574, %v1566
    %v2479 = vpack.c.b16 %v1575, %v1567
    %v2480 = vpack.c.b16 %v1576, %v1568
    %v2481 = vpack.c.b16 %v1577, %v1569
    %v2482 = vpack.c.b16 %v1578, %v1570
    %v2483 = vpack.c.b16 %v1579, %v1571
    %v2484 = vpack.c.b16 %v1580, %v1572
    %v2485 = vpack.c.b16 %v1589, %v1581
    %v2486 = vpack.c.b16 %v1590, %v1582
    %v2487 = vpack.c.b16 %v1591, %v1583
    %v2488 = vpack.c.b16 %v1592, %v1584
    %v2489 = vpack.c.b16 %v1593, %v1585
    %v2490 = vpack.c.b16 %v1594, %v1586
    %v2491 = vpack.c.b16 %v1595, %v1587
    %v2492 = vpack.c.b16 %v1596, %v1588
    %v2493 = vpack.c.b16 %v1605, %v1597
    %v2494 = vpack.c.b16 %v1606, %v1598
    %v2495 = vpack.c.b16 %v1607, %v1599
    %v2496 = vpack.c.b16 %v1608, %v1600
    %v2497 = vpack.c.b16 %v1609, %v1601
    %v2498 = vpack.c.b16 %v1610, %v1602
    %v2499 = vpack.c.b16 %v1611, %v1603
    %v2500 = vpack.c.b16 %v1612, %v1604
    %v2501 = vpack.c.b16 %v1621, %v1613
    %v2502 = vpack.c.b16 %v1622, %v1614
    %v2503 = vpack.c.b16 %v1623, %v1615
    %v2504 = vpack.c.b16 %v1624, %v1616
    %v2505 = vpack.c.b16 %v1625, %v1617
    %v2506 = vpack.c.b16 %v1626, %v1618
    %v2507 = vpack.c.b16 %v1627, %v1619
    %v2508 = vpack.c.b16 %v1628, %v1620
    %v2509 = vpack.c.b16 %v1637, %v1629
    %v2510 = vpack.c.b16 %v1638, %v1630
    %v2511 = vpack.c.b16 %v1639, %v1631
    %v2512 = vpack.c.b16 %v1640, %v1632
    %v2513 = vpack.c.b16 %v1641, %v1633
    %v2514 = vpack.c.b16 %v1642, %v1634
    %v2515 = vpack.c.b16 %v1643, %v1635
    %v2516 = vpack.c.b16 %v1644, %v1636
    %v2517 = vpack.c.b16 %v1653, %v1645
    %v2518 = vpack.c.b16 %v1654, %v1646
    %v2519 = vpack.c.b16 %v1655, %v1647
    %v2520 = vpack.c.b16 %v1656, %v1648
    %v2521 = vpack.c.b16 %v1657, %v1649
    %v2522 = vpack.c.b16 %v1658, %v1650
    %v2523 = vpack.c.b16 %v1659, %v1651
    %v2524 = vpack.c.b16 %v1660, %v1652
    %v2525 = vpack.c.b16 %v1669, %v1661
    %v2526 = vpack.c.b16 %v1670, %v1662
    %v2527 = vpack.c.b16 %v1671, %v1663
    %v2528 = vpack.c.b16 %v1672, %v1664
    %v2529 = vpack.c.b16 %v1673, %v1665
    %v2530 = vpack.c.b16 %v1674, %v1666
    %v2531 = vpack.c.b16 %v1675, %v1667
    %v2532 = vpack.c.b16 %v1676, %v1668
    %v2533 = vpack.c.b16 %v1685, %v1677
    %v2534 = vpack.c.b16 %v1686, %v1678
    %v2535 = vpack.c.b16 %v1687, %v1679
    %v2536 = vpack.c.b16 %v1688, %v1680
    %v2537 = vpack.c.b16 %v1689, %v1681
    %v2538 = vpack.c.b16 %v1690, %v1682
    %v2539 = vpack.c.b16 %v1691, %v1683
    %v2540 = vpack.c.b16 %v1692, %v1684
    %v2541 = vpack.c.b16 %v1701, %v1693
    %v2542 = vpack.c.b16 %v1702, %v1694
    %v2543 = vpack.c.b16 %v1703, %v1695
    %v2544 = vpack.c.b16 %v1704, %v1696
    %v2545 = vpack.c.b16 %v1705, %v1697
    %v2546 = vpack.c.b16 %v1706, %v1698
    %v2547 = vpack.c.b16 %v1707, %v1699
    %v2548 = vpack.c.b16 %v1708, %v1700
    %v2549 = vpack.c.b16 %v1717, %v1709
    %v2550 = vpack.c.b16 %v1718, %v1710
    %v2551 = vpack.c.b16 %v1719, %v1711
    %v2552 = vpack.c.b16 %v1720, %v1712
    %v2553 = vpack.c.b16 %v1721, %v1713
    %v2554 = vpack.c.b16 %v1722, %v1714
    %v2555 = vpack.c.b16 %v1723, %v1715
    %v2556 = vpack.c.b16 %v1724, %v1716
    %v2557 = vpack.c.b16 %v1733, %v1725
    %v2558 = vpack.c.b16 %v1734, %v1726
    %v2559 = vpack.c.b16 %v1735, %v1727
    %v2560 = vpack.c.b16 %v1736, %v1728
    %v2561 = vpack.c.b16 %v1737, %v1729
    %v2562 = vpack.c.b16 %v1738, %v1730
    %v2563 = vpack.c.b16 %v1739, %v1731
    %v2564 = vpack.c.b16 %v1740, %v1732
    %v2565 = vpack.c.b16 %v1749, %v1741
    %v2566 = vpack.c.b16 %v1750, %v1742
    %v2567 = vpack.c.b16 %v1751, %v1743
    %v2568 = vpack.c.b16 %v1752, %v1744
    %v2569 = vpack.c.b16 %v1753, %v1745
    %v2570 = vpack.c.b16 %v1754, %v1746
    %v2571 = vpack.c.b16 %v1755, %v1747
    %v2572 = vpack.c.b16 %v1756, %v1748
    %v2573 = vpack.c.b16 %v1765, %v1757
    %v2574 = vpack.c.b16 %v1766, %v1758
    %v2575 = vpack.c.b16 %v1767, %v1759
    %v2576 = vpack.c.b16 %v1768, %v1760
    %v2577 = vpack.c.b16 %v1769, %v1761
    %v2578 = vpack.c.b16 %v1770, %v1762
    %v2579 = vpack.c.b16 %v1771, %v1763
    %v2580 = vpack.c.b16 %v1772, %v1764
    %v2581 = vpack.c.b16 %v1781, %v1773
    %v2582 = vpack.c.b16 %v1782, %v1774
    %v2583 = vpack.c.b16 %v1783, %v1775
    %v2584 = vpack.c.b16 %v1784, %v1776
    %v2585 = vpack.c.b16 %v1785, %v1777
    %v2586 = vpack.c.b16 %v1786, %v1778
    %v2587 = vpack.c.b16 %v1787, %v1779
    %v2588 = vpack.c.b16 %v1788, %v1780
    %v2589 = vpack.c.b16 %v1797, %v1789
    %v2590 = vpack.c.b16 %v1798, %v1790
    %v2591 = vpack.c.b16 %v1799, %v1791
    %v2592 = vpack.c.b16 %v1800, %v1792
    %v2593 = vpack.c.b16 %v1801, %v1793
    %v2594 = vpack.c.b16 %v1802, %v1794
    %v2595 = vpack.c.b16 %v1803, %v1795
    %v2596 = vpack.c.b16 %v1804, %v1796
    %v2597 = vpack.c.b16 %v1813, %v1805
    %v2598 = vpack.c.b16 %v1814, %v1806
    %v2599 = vpack.c.b16 %v1815, %v1807
    %v2600 = vpack.c.b16 %v1816, %v1808
    %v2601 = vpack.c.b16 %v1817, %v1809
    %v2602 = vpack.c.b16 %v1818, %v1810
    %v2603 = vpack.c.b16 %v1819, %v1811
    %v2604 = vpack.c.b16 %v1820, %v1812
    %v2605 = vpack.c.b16 %v1829, %v1821
    %v2606 = vpack.c.b16 %v1830, %v1822
    %v2607 = vpack.c.b16 %v1831, %v1823
    %v2608 = vpack.c.b16 %v1832, %v1824
    %v2609 = vpack.c.b16 %v1833, %v1825
    %v2610 = vpack.c.b16 %v1834, %v1826
    %v2611 = vpack.c.b16 %v1835, %v1827
    %v2612 = vpack.c.b16 %v1836, %v1828
    %v2613 = vpack.c.b16 %v1845, %v1837
    %v2614 = vpack.c.b16 %v1846, %v1838
    %v2615 = vpack.c.b16 %v1847, %v1839
    %v2616 = vpack.c.b16 %v1848, %v1840
    %v2617 = vpack.c.b16 %v1849, %v1841
    %v2618 = vpack.c.b16 %v1850, %v1842
    %v2619 = vpack.c.b16 %v1851, %v1843
    %v2620 = vpack.c.b16 %v1852, %v1844
    %v2621 = vpack.c.b16 %v1861, %v1853
    %v2622 = vpack.c.b16 %v1862, %v1854
    %v2623 = vpack.c.b16 %v1863, %v1855
    %v2624 = vpack.c.b16 %v1864, %v1856
    %v2625 = vpack.c.b16 %v1865, %v1857
    %v2626 = vpack.c.b16 %v1866, %v1858
    %v2627 = vpack.c.b16 %v1867, %v1859
    %v2628 = vpack.c.b16 %v1868, %v1860
    %v2629 = vpack.c.b16 %v1877, %v1869
    %v2630 = vpack.c.b16 %v1878, %v1870
    %v2631 = vpack.c.b16 %v1879, %v1871
    %v2632 = vpack.c.b16 %v1880, %v1872
    %v2633 = vpack.c.b16 %v1881, %v1873
    %v2634 = vpack.c.b16 %v1882, %v1874
    %v2635 = vpack.c.b16 %v1883, %v1875
    %v2636 = vpack.c.b16 %v1884, %v1876
    %v2637 = vpack.c.b16 %v1893, %v1885
    %v2638 = vpack.c.b16 %v1894, %v1886
    %v2639 = vpack.c.b16 %v1895, %v1887
    %v2640 = vpack.c.b16 %v1896, %v1888
    %v2641 = vpack.c.b16 %v1897, %v1889
    %v2642 = vpack.c.b16 %v1898, %v1890
    %v2643 = vpack.c.b16 %v1899, %v1891
    %v2644 = vpack.c.b16 %v1900, %v1892
    %v2645 = vpack.c.b16 %v1909, %v1901
    %v2646 = vpack.c.b16 %v1910, %v1902
    %v2647 = vpack.c.b16 %v1911, %v1903
    %v2648 = vpack.c.b16 %v1912, %v1904
    %v2649 = vpack.c.b16 %v1913, %v1905
    %v2650 = vpack.c.b16 %v1914, %v1906
    %v2651 = vpack.c.b16 %v1915, %v1907
    %v2652 = vpack.c.b16 %v1916, %v1908
    %v2653 = vpack.c.b16 %v1925, %v1917
    %v2654 = vpack.c.b16 %v1926, %v1918
    %v2655 = vpack.c.b16 %v1927, %v1919
    %v2656 = vpack.c.b16 %v1928, %v1920
    %v2657 = vpack.c.b16 %v1929, %v1921
    %v2658 = vpack.c.b16 %v1930, %v1922
    %v2659 = vpack.c.b16 %v1931, %v1923
    %v2660 = vpack.c.b16 %v1932, %v1924
    %v2661 = vpack.c.b16 %v1941, %v1933
    %v2662 = vpack.c.b16 %v1942, %v1934
    %v2663 = vpack.c.b16 %v1943, %v1935
    %v2664 = vpack.c.b16 %v1944, %v1936
    %v2665 = vpack.c.b16 %v1945, %v1937
    %v2666 = vpack.c.b16 %v1946, %v1938
    %v2667 = vpack.c.b16 %v1947, %v1939
    %v2668 = vpack.c.b16 %v1948, %v1940
    %v2669 = vpack.c.b16 %v1957, %v1949
    %v2670 = vpack.c.b16 %v1958, %v1950
    %v2671 = vpack.c.b16 %v1959, %v1951
    %v2672 = vpack.c.b16 %v1960, %v1952
    %v2673 = vpack.c.b16 %v1961, %v1953
    %v2674 = vpack.c.b16 %v1962, %v1954
    %v2675 = vpack.c.b16 %v1963, %v1955
    %v2676 = vpack.c.b16 %v1964, %v1956
    %v2677 = vpack.c.b16 %v1973, %v1965
    %v2678 = vpack.c.b16 %v1974, %v1966
    %v2679 = vpack.c.b16 %v1975, %v1967
    %v2680 = vpack.c.b16 %v1976, %v1968
    %v2681 = vpack.c.b16 %v1977, %v1969
    %v2682 = vpack.c.b16 %v1978, %v1970
    %v2683 = vpack.c.b16 %v1979, %v1971
    %v2684 = vpack.c.b16 %v1980, %v1972
    %v2685 = vpack.c.b16 %v1989, %v1981
    %v2686 = vpack.c.b16 %v1990, %v1982
    %v2687 = vpack.c.b16 %v1991, %v1983
    %v2688 = vpack.c.b16 %v1992, %v1984
    %v2689 = vpack.c.b16 %v1993, %v1985
    %v2690 = vpack.c.b16 %v1994, %v1986
    %v2691 = vpack.c.b16 %v1995, %v1987
    %v2692 = vpack.c.b16 %v1996, %v1988
    %v2693 = vpack.c.b16 %v2005, %v1997
    %v2694 = vpack.c.b16 %v2006, %v1998
    %v2695 = vpack.c.b16 %v2007, %v1999
    %v2696 = vpack.c.b16 %v2008, %v2000
    %v2697 = vpack.c.b16 %v2009, %v2001
    %v2698 = vpack.c.b16 %v2010, %v2002
    %v2699 = vpack.c.b16 %v2011, %v2003
    %v2700 = vpack.c.b16 %v2012, %v2004
    %v2701 = vpack.c.b16 %v2021, %v2013
    %v2702 = vpack.c.b16 %v2022, %v2014
    %v2703 = vpack.c.b16 %v2023, %v2015
    %v2704 = vpack.c.b16 %v2024, %v2016
    %v2705 = vpack.c.b16 %v2025, %v2017
    %v2706 = vpack.c.b16 %v2026, %v2018
    %v2707 = vpack.c.b16 %v2027, %v2019
    %v2708 = vpack.c.b16 %v2028, %v2020
    %v2709 = vpack.c.b16 %v2037, %v2029
    %v2710 = vpack.c.b16 %v2038, %v2030
    %v2711 = vpack.c.b16 %v2039, %v2031
    %v2712 = vpack.c.b16 %v2040, %v2032
    %v2713 = vpack.c.b16 %v2041, %v2033
    %v2714 = vpack.c.b16 %v2042, %v2034
    %v2715 = vpack.c.b16 %v2043, %v2035
    %v2716 = vpack.c.b16 %v2044, %v2036
    %v2717 = vpack.c.b16 %v2053, %v2045
    %v2718 = vpack.c.b16 %v2054, %v2046
    %v2719 = vpack.c.b16 %v2055, %v2047
    %v2720 = vpack.c.b16 %v2056, %v2048
    %v2721 = vpack.c.b16 %v2057, %v2049
    %v2722 = vpack.c.b16 %v2058, %v2050
    %v2723 = vpack.c.b16 %v2059, %v2051
    %v2724 = vpack.c.b16 %v2060, %v2052
    %v2725 = vpack.c.b16 %v2069, %v2061
    %v2726 = vpack.c.b16 %v2070, %v2062
    %v2727 = vpack.c.b16 %v2071, %v2063
    %v2728 = vpack.c.b16 %v2072, %v2064
    %v2729 = vpack.c.b16 %v2073, %v2065
    %v2730 = vpack.c.b16 %v2074, %v2066
    %v2731 = vpack.c.b16 %v2075, %v2067
    %v2732 = vpack.c.b16 %v2076, %v2068
    %v2733 = vpack.c.b16 %v2085, %v2077
    %v2734 = vpack.c.b16 %v2086, %v2078
    %v2735 = vpack.c.b16 %v2087, %v2079
    %v2736 = vpack.c.b16 %v2088, %v2080
    %v2737 = vpack.c.b16 %v2089, %v2081
    %v2738 = vpack.c.b16 %v2090, %v2082
    %v2739 = vpack.c.b16 %v2091, %v2083
    %v2740 = vpack.c.b16 %v2092, %v2084
    %v2741 = vpack.c.b16 %v2101, %v2093
    %v2742 = vpack.c.b16 %v2102, %v2094
    %v2743 = vpack.c.b16 %v2103, %v2095
    %v2744 = vpack.c.b16 %v2104, %v2096
    %v2745 = vpack.c.b16 %v2105, %v2097
    %v2746 = vpack.c.b16 %v2106, %v2098
    %v2747 = vpack.c.b16 %v2107, %v2099
    %v2748 = vpack.c.b16 %v2108, %v2100
    %v2749 = vpack.c.b16 %v2117, %v2109
    %v2750 = vpack.c.b16 %v2118, %v2110
    %v2751 = vpack.c.b16 %v2119, %v2111
    %v2752 = vpack.c.b16 %v2120, %v2112
    %v2753 = vpack.c.b16 %v2121, %v2113
    %v2754 = vpack.c.b16 %v2122, %v2114
    %v2755 = vpack.c.b16 %v2123, %v2115
    %v2756 = vpack.c.b16 %v2124, %v2116
    %v2757 = vpack.c.b16 %v2133, %v2125
    %v2758 = vpack.c.b16 %v2134, %v2126
    %v2759 = vpack.c.b16 %v2135, %v2127
    %v2760 = vpack.c.b16 %v2136, %v2128
    %v2761 = vpack.c.b16 %v2137, %v2129
    %v2762 = vpack.c.b16 %v2138, %v2130
    %v2763 = vpack.c.b16 %v2139, %v2131
    %v2764 = vpack.c.b16 %v2140, %v2132
    %v2765 = vpack.c.b16 %v2149, %v2141
    %v2766 = vpack.c.b16 %v2150, %v2142
    %v2767 = vpack.c.b16 %v2151, %v2143
    %v2768 = vpack.c.b16 %v2152, %v2144
    %v2769 = vpack.c.b16 %v2153, %v2145
    %v2770 = vpack.c.b16 %v2154, %v2146
    %v2771 = vpack.c.b16 %v2155, %v2147
    %v2772 = vpack.c.b16 %v2156, %v2148
    %v2773 = vpack.c.b16 %v2165, %v2157
    %v2774 = vpack.c.b16 %v2166, %v2158
    %v2775 = vpack.c.b16 %v2167, %v2159
    %v2776 = vpack.c.b16 %v2168, %v2160
    %v2777 = vpack.c.b16 %v2169, %v2161
    %v2778 = vpack.c.b16 %v2170, %v2162
    %v2779 = vpack.c.b16 %v2171, %v2163
    %v2780 = vpack.c.b16 %v2172, %v2164
    %v2781 = vpack.c.b16 %v2181, %v2173
    %v2782 = vpack.c.b16 %v2182, %v2174
    %v2783 = vpack.c.b16 %v2183, %v2175
    %v2784 = vpack.c.b16 %v2184, %v2176
    %v2785 = vpack.c.b16 %v2185, %v2177
    %v2786 = vpack.c.b16 %v2186, %v2178
    %v2787 = vpack.c.b16 %v2187, %v2179
    %v2788 = vpack.c.b16 %v2188, %v2180
    %v2789 = vpack.c.b16 %v2197, %v2189
    %v2790 = vpack.c.b16 %v2198, %v2190
    %v2791 = vpack.c.b16 %v2199, %v2191
    %v2792 = vpack.c.b16 %v2200, %v2192
    %v2793 = vpack.c.b16 %v2201, %v2193
    %v2794 = vpack.c.b16 %v2202, %v2194
    %v2795 = vpack.c.b16 %v2203, %v2195
    %v2796 = vpack.c.b16 %v2204, %v2196
    %v2797 = vpack.c.b16 %v2213, %v2205
    %v2798 = vpack.c.b16 %v2214, %v2206
    %v2799 = vpack.c.b16 %v2215, %v2207
    %v2800 = vpack.c.b16 %v2216, %v2208
    %v2801 = vpack.c.b16 %v2217, %v2209
    %v2802 = vpack.c.b16 %v2218, %v2210
    %v2803 = vpack.c.b16 %v2219, %v2211
    %v2804 = vpack.c.b16 %v2220, %v2212
    %v2805 = vpack.c.b16 %v2229, %v2221
    %v2806 = vpack.c.b16 %v2230, %v2222
    %v2807 = vpack.c.b16 %v2231, %v2223
    %v2808 = vpack.c.b16 %v2232, %v2224
    %v2809 = vpack.c.b16 %v2233, %v2225
    %v2810 = vpack.c.b16 %v2234, %v2226
    %v2811 = vpack.c.b16 %v2235, %v2227
    %v2812 = vpack.c.b16 %v2236, %v2228
    %v2813 = vpack.c.b16 %v2245, %v2237
    %v2814 = vpack.c.b16 %v2246, %v2238
    %v2815 = vpack.c.b16 %v2247, %v2239
    %v2816 = vpack.c.b16 %v2248, %v2240
    %v2817 = vpack.c.b16 %v2249, %v2241
    %v2818 = vpack.c.b16 %v2250, %v2242
    %v2819 = vpack.c.b16 %v2251, %v2243
    %v2820 = vpack.c.b16 %v2252, %v2244
    %v2821 = vpack.c.b16 %v2261, %v2253
    %v2822 = vpack.c.b16 %v2262, %v2254
    %v2823 = vpack.c.b16 %v2263, %v2255
    %v2824 = vpack.c.b16 %v2264, %v2256
    %v2825 = vpack.c.b16 %v2265, %v2257
    %v2826 = vpack.c.b16 %v2266, %v2258
    %v2827 = vpack.c.b16 %v2267, %v2259
    %v2828 = vpack.c.b16 %v2268, %v2260
    %v2829 = vpack.c.b16 %v2277, %v2269
    %v2830 = vpack.c.b16 %v2278, %v2270
    %v2831 = vpack.c.b16 %v2279, %v2271
    %v2832 = vpack.c.b16 %v2280, %v2272
    %v2833 = vpack.c.b16 %v2281, %v2273
    %v2834 = vpack.c.b16 %v2282, %v2274
    %v2835 = vpack.c.b16 %v2283, %v2275
    %v2836 = vpack.c.b16 %v2284, %v2276
    %v2837 = vpack.c.b16 %v2293, %v2285
    %v2838 = vpack.c.b16 %v2294, %v2286
    %v2839 = vpack.c.b16 %v2295, %v2287
    %v2840 = vpack.c.b16 %v2296, %v2288
    %v2841 = vpack.c.b16 %v2297, %v2289
    %v2842 = vpack.c.b16 %v2298, %v2290
    %v2843 = vpack.c.b16 %v2299, %v2291
    %v2844 = vpack.c.b16 %v2300, %v2292
    %v2845 = vpack.c.b16 %v2309, %v2301
    %v2846 = vpack.c.b16 %v2310, %v2302
    %v2847 = vpack.c.b16 %v2311, %v2303
    %v2848 = vpack.c.b16 %v2312, %v2304
    %v2849 = vpack.c.b16 %v2313, %v2305
    %v2850 = vpack.c.b16 %v2314, %v2306
    %v2851 = vpack.c.b16 %v2315, %v2307
    %v2852 = vpack.c.b16 %v2316, %v2308
    %v2853 = vpack.c.b16 %v2325, %v2317
    %v2854 = vpack.c.b16 %v2326, %v2318
    %v2855 = vpack.c.b16 %v2327, %v2319
    %v2856 = vpack.c.b16 %v2328, %v2320
    %v2857 = vpack.c.b16 %v2329, %v2321
    %v2858 = vpack.c.b16 %v2330, %v2322
    %v2859 = vpack.c.b16 %v2331, %v2323
    %v2860 = vpack.c.b16 %v2332, %v2324
    %v2861 = vpack.c.b16 %v2341, %v2333
    %v2862 = vpack.c.b16 %v2342, %v2334
    %v2863 = vpack.c.b16 %v2343, %v2335
    %v2864 = vpack.c.b16 %v2344, %v2336
    %v2865 = vpack.c.b16 %v2345, %v2337
    %v2866 = vpack.c.b16 %v2346, %v2338
    %v2867 = vpack.c.b16 %v2347, %v2339
    %v2868 = vpack.c.b16 %v2348, %v2340
    %v2869 = vpack.c.b16 %v2357, %v2349
    %v2870 = vpack.c.b16 %v2358, %v2350
    %v2871 = vpack.c.b16 %v2359, %v2351
    %v2872 = vpack.c.b16 %v2360, %v2352
    %v2873 = vpack.c.b16 %v2361, %v2353
    %v2874 = vpack.c.b16 %v2362, %v2354
    %v2875 = vpack.c.b16 %v2363, %v2355
    %v2876 = vpack.c.b16 %v2364, %v2356
    %3389 = vmatprep.subr.bf16.mxu0 %v2366
    %3390 = vmatpush1.bf16.msra.mxu0 %v2365
    %3391 = vmatprep.subr.bf16.mxu0 %v2374
    %3392 = vmatpush1.bf16.msra.mxu0 %v2373
    %3393 = vmatprep.subr.bf16.mxu0 %v2382
    %3394 = vmatpush1.bf16.msra.mxu0 %v2381
    %3395 = vmatprep.subr.bf16.mxu0 %v2390
    %3396 = vmatpush1.bf16.msra.mxu0 %v2389
    %3397 = vmatprep.subr.bf16.mxu0 %v2398
    %3398 = vmatpush1.bf16.msra.mxu0 %v2397
    %3399 = vmatprep.subr.bf16.mxu0 %v2406
    %3400 = vmatpush1.bf16.msra.mxu0 %v2405
    %3401 = vmatprep.subr.bf16.mxu0 %v2414
    %3402 = vmatpush1.bf16.msra.mxu0 %v2413
    %3403 = vmatprep.subr.bf16.mxu0 %v2422
    %3404 = vmatpush1.bf16.msra.mxu0 %v2421
    %3405 = vmatprep.subr.bf16.mxu0 %v2430
    %3406 = vmatpush1.bf16.msra.mxu0 %v2429
    %3407 = vmatprep.subr.bf16.mxu0 %v2438
    %3408 = vmatpush1.bf16.msra.mxu0 %v2437
    %3409 = vmatprep.subr.bf16.mxu0 %v2446
    %3410 = vmatpush1.bf16.msra.mxu0 %v2445
    %3411 = vmatprep.subr.bf16.mxu0 %v2454
    %3412 = vmatpush1.bf16.msra.mxu0 %v2453
    %3413 = vmatprep.subr.bf16.mxu0 %v2462
    %3414 = vmatpush1.bf16.msra.mxu0 %v2461
    %3415 = vmatprep.subr.bf16.mxu0 %v2470
    %3416 = vmatpush1.bf16.msra.mxu0 %v2469
    %3417 = vmatprep.subr.bf16.mxu0 %v2478
    %3418 = vmatpush1.bf16.msra.mxu0 %v2477
    %3419 = vmatprep.subr.bf16.mxu0 %v2486
    %3420 = vmatpush1.bf16.msra.mxu0 %v2485
    %3421 = vmatprep.mubr.bf16.mxu0 %v809
    %3422 = vmatmul.mubr.bf16.gmra.mrb[0].mxu0 %v795
    %v3423 = vpop.f32.mrb[0].mxu0
    %v3424 = vadd.f32 %v734, %v3423
    %v3425 = vpop.f32.mrb[0].mxu0
    %v3426 = vadd.f32 %v738, %v3425
    %v3427 = vpop.f32.mrb[0].mxu0
    %v3428 = vpop.f32.mrb[0].mxu0
    %3429 = vdwg.mxu0
    %3430 = vmatprep.subr.bf16.mxu0 %v2494
    %3431 = vmatpush1.bf16.msra.mxu0 %v2493
    %3432 = vmatprep.subr.bf16.mxu0 %v2502
    %3433 = vmatpush1.bf16.msra.mxu0 %v2501
    %3434 = vmatprep.subr.bf16.mxu0 %v2510
    %3435 = vmatpush1.bf16.msra.mxu0 %v2509
    %3436 = vmatprep.subr.bf16.mxu0 %v2518
    %3437 = vmatpush1.bf16.msra.mxu0 %v2517
    %3438 = vmatprep.subr.bf16.mxu0 %v2526
    %3439 = vmatpush1.bf16.msra.mxu0 %v2525
    %3440 = vmatprep.subr.bf16.mxu0 %v2534
    %3441 = vmatpush1.bf16.msra.mxu0 %v2533
    %3442 = vmatprep.subr.bf16.mxu0 %v2542
    %3443 = vmatpush1.bf16.msra.mxu0 %v2541
    %3444 = vmatprep.subr.bf16.mxu0 %v2550
    %3445 = vmatpush1.bf16.msra.mxu0 %v2549
    %3446 = vmatprep.subr.bf16.mxu0 %v2558
    %3447 = vmatpush1.bf16.msra.mxu0 %v2557
    %3448 = vmatprep.subr.bf16.mxu0 %v2566
    %3449 = vmatpush1.bf16.msra.mxu0 %v2565
    %3450 = vmatprep.subr.bf16.mxu0 %v2574
    %3451 = vmatpush1.bf16.msra.mxu0 %v2573
    %3452 = vmatprep.subr.bf16.mxu0 %v2582
    %3453 = vmatpush1.bf16.msra.mxu0 %v2581
    %3454 = vmatprep.subr.bf16.mxu0 %v2590
    %3455 = vmatpush1.bf16.msra.mxu0 %v2589
    %3456 = vmatprep.subr.bf16.mxu0 %v2598
    %3457 = vmatpush1.bf16.msra.mxu0 %v2597
    %3458 = vmatprep.subr.bf16.mxu0 %v2606
    %3459 = vmatpush1.bf16.msra.mxu0 %v2605
    %3460 = vmatprep.subr.bf16.mxu0 %v2614
    %3461 = vmatpush1.bf16.msra.mxu0 %v2613
    %3462 = vmatprep.mubr.bf16.mxu0 %v819
    %3463 = vmatmul.mubr.bf16.gmra.mrb[0].mxu0 %v817
    %v3464 = vpop.f32.mrb[0].mxu0
    %v3465 = vadd.f32 %v3424, %v3464
    %v3466 = vpop.f32.mrb[0].mxu0
    %v3467 = vadd.f32 %v3426, %v3466
    %v3468 = vpop.f32.mrb[0].mxu0
    %v3469 = vpop.f32.mrb[0].mxu0
    %3470 = vdwg.mxu0
    %3471 = vmatprep.subr.bf16.mxu0 %v2622
    %3472 = vmatpush1.bf16.msra.mxu0 %v2621
    %3473 = vmatprep.subr.bf16.mxu0 %v2630
    %3474 = vmatpush1.bf16.msra.mxu0 %v2629
    %3475 = vmatprep.subr.bf16.mxu0 %v2638
    %3476 = vmatpush1.bf16.msra.mxu0 %v2637
    %3477 = vmatprep.subr.bf16.mxu0 %v2646
    %3478 = vmatpush1.bf16.msra.mxu0 %v2645
    %3479 = vmatprep.subr.bf16.mxu0 %v2654
    %3480 = vmatpush1.bf16.msra.mxu0 %v2653
    %3481 = vmatprep.subr.bf16.mxu0 %v2662
    %3482 = vmatpush1.bf16.msra.mxu0 %v2661
    %3483 = vmatprep.subr.bf16.mxu0 %v2670
    %3484 = vmatpush1.bf16.msra.mxu0 %v2669
    %3485 = vmatprep.subr.bf16.mxu0 %v2678
    %3486 = vmatpush1.bf16.msra.mxu0 %v2677
    %3487 = vmatprep.subr.bf16.mxu0 %v2686
    %3488 = vmatpush1.bf16.msra.mxu0 %v2685
    %3489 = vmatprep.subr.bf16.mxu0 %v2694
    %3490 = vmatpush1.bf16.msra.mxu0 %v2693
    %3491 = vmatprep.subr.bf16.mxu0 %v2702
    %3492 = vmatpush1.bf16.msra.mxu0 %v2701
    %3493 = vmatprep.subr.bf16.mxu0 %v2710
    %3494 = vmatpush1.bf16.msra.mxu0 %v2709
    %3495 = vmatprep.subr.bf16.mxu0 %v2718
    %3496 = vmatpush1.bf16.msra.mxu0 %v2717
    %3497 = vmatprep.subr.bf16.mxu0 %v2726
    %3498 = vmatpush1.bf16.msra.mxu0 %v2725
    %3499 = vmatprep.subr.bf16.mxu0 %v2734
    %3500 = vmatpush1.bf16.msra.mxu0 %v2733
    %3501 = vmatprep.subr.bf16.mxu0 %v2742
    %3502 = vmatpush1.bf16.msra.mxu0 %v2741
    %3503 = vmatprep.mubr.bf16.mxu0 %v816
    %3504 = vmatmul.mubr.bf16.gmra.mrb[0].mxu0 %v802
    %v3505 = vpop.f32.mrb[0].mxu0
    %v3506 = vadd.f32 %v3465, %v3505
    %v3507 = vpop.f32.mrb[0].mxu0
    %v3508 = vadd.f32 %v3467, %v3507
    %v3509 = vpop.f32.mrb[0].mxu0
    %v3510 = vpop.f32.mrb[0].mxu0
    %3511 = vdwg.mxu0
    %3512 = vmatprep.subr.bf16.mxu0 %v2750
    %3513 = vmatpush1.bf16.msra.mxu0 %v2749
    %3514 = vmatprep.subr.bf16.mxu0 %v2758
    %3515 = vmatpush1.bf16.msra.mxu0 %v2757
    %3516 = vmatprep.subr.bf16.mxu0 %v2766
    %3517 = vmatpush1.bf16.msra.mxu0 %v2765
    %3518 = vmatprep.subr.bf16.mxu0 %v2774
    %3519 = vmatpush1.bf16.msra.mxu0 %v2773
    %3520 = vmatprep.subr.bf16.mxu0 %v2782
    %3521 = vmatpush1.bf16.msra.mxu0 %v2781
    %3522 = vmatprep.subr.bf16.mxu0 %v2790
    %3523 = vmatpush1.bf16.msra.mxu0 %v2789
    %3524 = vmatprep.subr.bf16.mxu0 %v2798
    %3525 = vmatpush1.bf16.msra.mxu0 %v2797
    %3526 = vmatprep.subr.bf16.mxu0 %v2806
    %3527 = vmatpush1.bf16.msra.mxu0 %v2805
    %3528 = vmatprep.subr.bf16.mxu0 %v2814
    %3529 = vmatpush1.bf16.msra.mxu0 %v2813
    %3530 = vmatprep.subr.bf16.mxu0 %v2822
    %3531 = vmatpush1.bf16.msra.mxu0 %v2821
    %3532 = vmatprep.subr.bf16.mxu0 %v2830
    %3533 = vmatpush1.bf16.msra.mxu0 %v2829
    %3534 = vmatprep.subr.bf16.mxu0 %v2838
    %3535 = vmatpush1.bf16.msra.mxu0 %v2837
    %3536 = vmatprep.subr.bf16.mxu0 %v2846
    %3537 = vmatpush1.bf16.msra.mxu0 %v2845
    %3538 = vmatprep.subr.bf16.mxu0 %v2854
    %3539 = vmatpush1.bf16.msra.mxu0 %v2853
    %3540 = vmatprep.subr.bf16.mxu0 %v2862
    %3541 = vmatpush1.bf16.msra.mxu0 %v2861
    %3542 = vmatprep.subr.bf16.mxu0 %v2870
    %3543 = vmatpush1.bf16.msra.mxu0 %v2869
    %3544 = vmatprep.mubr.bf16.mxu0 %v820
    %3545 = vmatmul.mubr.bf16.gmra.mrb[0].mxu0 %v818
    %v3546 = vpop.f32.mrb[0].mxu0
    %v3547 = vadd.f32 %v3506, %v3546
    %v3548 = vpop.f32.mrb[0].mxu0
    %v3549 = vadd.f32 %v3508, %v3548
    %v3550 = vpop.f32.mrb[0].mxu0
    %v3551 = vpop.f32.mrb[0].mxu0
    %3552 = vdwg.mxu0
    %3553 = vmatprep.subr.bf16.mxu0 %v2368
    %3554 = vmatpush1.bf16.msra.mxu0 %v2367
    %3555 = vmatprep.subr.bf16.mxu0 %v2376
    %3556 = vmatpush1.bf16.msra.mxu0 %v2375
    %3557 = vmatprep.subr.bf16.mxu0 %v2384
    %3558 = vmatpush1.bf16.msra.mxu0 %v2383
    %3559 = vmatprep.subr.bf16.mxu0 %v2392
    %3560 = vmatpush1.bf16.msra.mxu0 %v2391
    %3561 = vmatprep.subr.bf16.mxu0 %v2400
    %3562 = vmatpush1.bf16.msra.mxu0 %v2399
    %3563 = vmatprep.subr.bf16.mxu0 %v2408
    %3564 = vmatpush1.bf16.msra.mxu0 %v2407
    %3565 = vmatprep.subr.bf16.mxu0 %v2416
    %3566 = vmatpush1.bf16.msra.mxu0 %v2415
    %3567 = vmatprep.subr.bf16.mxu0 %v2424
    %3568 = vmatpush1.bf16.msra.mxu0 %v2423
    %3569 = vmatprep.subr.bf16.mxu0 %v2432
    %3570 = vmatpush1.bf16.msra.mxu0 %v2431
    %3571 = vmatprep.subr.bf16.mxu0 %v2440
    %3572 = vmatpush1.bf16.msra.mxu0 %v2439
    %3573 = vmatprep.subr.bf16.mxu0 %v2448
    %3574 = vmatpush1.bf16.msra.mxu0 %v2447
    %3575 = vmatprep.subr.bf16.mxu0 %v2456
    %3576 = vmatpush1.bf16.msra.mxu0 %v2455
    %3577 = vmatprep.subr.bf16.mxu0 %v2464
    %3578 = vmatpush1.bf16.msra.mxu0 %v2463
    %3579 = vmatprep.subr.bf16.mxu0 %v2472
    %3580 = vmatpush1.bf16.msra.mxu0 %v2471
    %3581 = vmatprep.subr.bf16.mxu0 %v2480
    %3582 = vmatpush1.bf16.msra.mxu0 %v2479
    %3583 = vmatprep.subr.bf16.mxu0 %v2488
    %3584 = vmatpush1.bf16.msra.mxu0 %v2487
    %3585 = vmatprep.mubr.bf16.mxu0 %v809
    %3586 = vmatmul.mubr.bf16.gmra.mrb[0].mxu0 %v795
    %v3587 = vpop.f32.mrb[0].mxu0
    %v3588 = vadd.f32 %v742, %v3587
    %v3589 = vpop.f32.mrb[0].mxu0
    %v3590 = vadd.f32 %v746, %v3589
    %v3591 = vpop.f32.mrb[0].mxu0
    %v3592 = vpop.f32.mrb[0].mxu0
    %3593 = vdwg.mxu0
    %3594 = vmatprep.subr.bf16.mxu0 %v2496
    %3595 = vmatpush1.bf16.msra.mxu0 %v2495
    %3596 = vmatprep.subr.bf16.mxu0 %v2504
    %3597 = vmatpush1.bf16.msra.mxu0 %v2503
    %3598 = vmatprep.subr.bf16.mxu0 %v2512
    %3599 = vmatpush1.bf16.msra.mxu0 %v2511
    %3600 = vmatprep.subr.bf16.mxu0 %v2520
    %3601 = vmatpush1.bf16.msra.mxu0 %v2519
    %3602 = vmatprep.subr.bf16.mxu0 %v2528
    %3603 = vmatpush1.bf16.msra.mxu0 %v2527
    %3604 = vmatprep.subr.bf16.mxu0 %v2536
    %3605 = vmatpush1.bf16.msra.mxu0 %v2535
    %3606 = vmatprep.subr.bf16.mxu0 %v2544
    %3607 = vmatpush1.bf16.msra.mxu0 %v2543
    %3608 = vmatprep.subr.bf16.mxu0 %v2552
    %3609 = vmatpush1.bf16.msra.mxu0 %v2551
    %3610 = vmatprep.subr.bf16.mxu0 %v2560
    %3611 = vmatpush1.bf16.msra.mxu0 %v2559
    %3612 = vmatprep.subr.bf16.mxu0 %v2568
    %3613 = vmatpush1.bf16.msra.mxu0 %v2567
    %3614 = vmatprep.subr.bf16.mxu0 %v2576
    %3615 = vmatpush1.bf16.msra.mxu0 %v2575
    %3616 = vmatprep.subr.bf16.mxu0 %v2584
    %3617 = vmatpush1.bf16.msra.mxu0 %v2583
    %3618 = vmatprep.subr.bf16.mxu0 %v2592
    %3619 = vmatpush1.bf16.msra.mxu0 %v2591
    %3620 = vmatprep.subr.bf16.mxu0 %v2600
    %3621 = vmatpush1.bf16.msra.mxu0 %v2599
    %3622 = vmatprep.subr.bf16.mxu0 %v2608
    %3623 = vmatpush1.bf16.msra.mxu0 %v2607
    %3624 = vmatprep.subr.bf16.mxu0 %v2616
    %3625 = vmatpush1.bf16.msra.mxu0 %v2615
    %3626 = vmatprep.mubr.bf16.mxu0 %v819
    %3627 = vmatmul.mubr.bf16.gmra.mrb[0].mxu0 %v817
    %v3628 = vpop.f32.mrb[0].mxu0
    %v3629 = vadd.f32 %v3588, %v3628
    %v3630 = vpop.f32.mrb[0].mxu0
    %v3631 = vadd.f32 %v3590, %v3630
    %v3632 = vpop.f32.mrb[0].mxu0
    %v3633 = vpop.f32.mrb[0].mxu0
    %3634 = vdwg.mxu0
    %3635 = vmatprep.subr.bf16.mxu0 %v2624
    %3636 = vmatpush1.bf16.msra.mxu0 %v2623
    %3637 = vmatprep.subr.bf16.mxu0 %v2632
    %3638 = vmatpush1.bf16.msra.mxu0 %v2631
    %3639 = vmatprep.subr.bf16.mxu0 %v2640
    %3640 = vmatpush1.bf16.msra.mxu0 %v2639
    %3641 = vmatprep.subr.bf16.mxu0 %v2648
    %3642 = vmatpush1.bf16.msra.mxu0 %v2647
    %3643 = vmatprep.subr.bf16.mxu0 %v2656
    %3644 = vmatpush1.bf16.msra.mxu0 %v2655
    %3645 = vmatprep.subr.bf16.mxu0 %v2664
    %3646 = vmatpush1.bf16.msra.mxu0 %v2663
    %3647 = vmatprep.subr.bf16.mxu0 %v2672
    %3648 = vmatpush1.bf16.msra.mxu0 %v2671
    %3649 = vmatprep.subr.bf16.mxu0 %v2680
    %3650 = vmatpush1.bf16.msra.mxu0 %v2679
    %3651 = vmatprep.subr.bf16.mxu0 %v2688
    %3652 = vmatpush1.bf16.msra.mxu0 %v2687
    %3653 = vmatprep.subr.bf16.mxu0 %v2696
    %3654 = vmatpush1.bf16.msra.mxu0 %v2695
    %3655 = vmatprep.subr.bf16.mxu0 %v2704
    %3656 = vmatpush1.bf16.msra.mxu0 %v2703
    %3657 = vmatprep.subr.bf16.mxu0 %v2712
    %3658 = vmatpush1.bf16.msra.mxu0 %v2711
    %3659 = vmatprep.subr.bf16.mxu0 %v2720
    %3660 = vmatpush1.bf16.msra.mxu0 %v2719
    %3661 = vmatprep.subr.bf16.mxu0 %v2728
    %3662 = vmatpush1.bf16.msra.mxu0 %v2727
    %3663 = vmatprep.subr.bf16.mxu0 %v2736
    %3664 = vmatpush1.bf16.msra.mxu0 %v2735
    %3665 = vmatprep.subr.bf16.mxu0 %v2744
    %3666 = vmatpush1.bf16.msra.mxu0 %v2743
    %3667 = vmatprep.mubr.bf16.mxu0 %v816
    %3668 = vmatmul.mubr.bf16.gmra.mrb[0].mxu0 %v802
    %v3669 = vpop.f32.mrb[0].mxu0
    %v3670 = vadd.f32 %v3629, %v3669
    %v3671 = vpop.f32.mrb[0].mxu0
    %v3672 = vadd.f32 %v3631, %v3671
    %v3673 = vpop.f32.mrb[0].mxu0
    %v3674 = vpop.f32.mrb[0].mxu0
    %3675 = vdwg.mxu0
    %3676 = vmatprep.subr.bf16.mxu0 %v2752
    %3677 = vmatpush1.bf16.msra.mxu0 %v2751
    %3678 = vmatprep.subr.bf16.mxu0 %v2760
    %3679 = vmatpush1.bf16.msra.mxu0 %v2759
    %3680 = vmatprep.subr.bf16.mxu0 %v2768
    %3681 = vmatpush1.bf16.msra.mxu0 %v2767
    %3682 = vmatprep.subr.bf16.mxu0 %v2776
    %3683 = vmatpush1.bf16.msra.mxu0 %v2775
    %3684 = vmatprep.subr.bf16.mxu0 %v2784
    %3685 = vmatpush1.bf16.msra.mxu0 %v2783
    %3686 = vmatprep.subr.bf16.mxu0 %v2792
    %3687 = vmatpush1.bf16.msra.mxu0 %v2791
    %3688 = vmatprep.subr.bf16.mxu0 %v2800
    %3689 = vmatpush1.bf16.msra.mxu0 %v2799
    %3690 = vmatprep.subr.bf16.mxu0 %v2808
    %3691 = vmatpush1.bf16.msra.mxu0 %v2807
    %3692 = vmatprep.subr.bf16.mxu0 %v2816
    %3693 = vmatpush1.bf16.msra.mxu0 %v2815
    %3694 = vmatprep.subr.bf16.mxu0 %v2824
    %3695 = vmatpush1.bf16.msra.mxu0 %v2823
    %3696 = vmatprep.subr.bf16.mxu0 %v2832
    %3697 = vmatpush1.bf16.msra.mxu0 %v2831
    %3698 = vmatprep.subr.bf16.mxu0 %v2840
    %3699 = vmatpush1.bf16.msra.mxu0 %v2839
    %3700 = vmatprep.subr.bf16.mxu0 %v2848
    %3701 = vmatpush1.bf16.msra.mxu0 %v2847
    %3702 = vmatprep.subr.bf16.mxu0 %v2856
    %3703 = vmatpush1.bf16.msra.mxu0 %v2855
    %3704 = vmatprep.subr.bf16.mxu0 %v2864
    %3705 = vmatpush1.bf16.msra.mxu0 %v2863
    %3706 = vmatprep.subr.bf16.mxu0 %v2872
    %3707 = vmatpush1.bf16.msra.mxu0 %v2871
    %3708 = vmatprep.mubr.bf16.mxu0 %v820
    %3709 = vmatmul.mubr.bf16.gmra.mrb[0].mxu0 %v818
    %v3710 = vpop.f32.mrb[0].mxu0
    %v3711 = vadd.f32 %v3670, %v3710
    %v3712 = vpop.f32.mrb[0].mxu0
    %v3713 = vadd.f32 %v3672, %v3712
    %v3714 = vpop.f32.mrb[0].mxu0
    %v3715 = vpop.f32.mrb[0].mxu0
    %3716 = vdwg.mxu0
    %3717 = vmatprep.subr.bf16.mxu0 %v2370
    %3718 = vmatpush1.bf16.msra.mxu0 %v2369
    %3719 = vmatprep.subr.bf16.mxu0 %v2378
    %3720 = vmatpush1.bf16.msra.mxu0 %v2377
    %3721 = vmatprep.subr.bf16.mxu0 %v2386
    %3722 = vmatpush1.bf16.msra.mxu0 %v2385
    %3723 = vmatprep.subr.bf16.mxu0 %v2394
    %3724 = vmatpush1.bf16.msra.mxu0 %v2393
    %3725 = vmatprep.subr.bf16.mxu0 %v2402
    %3726 = vmatpush1.bf16.msra.mxu0 %v2401
    %3727 = vmatprep.subr.bf16.mxu0 %v2410
    %3728 = vmatpush1.bf16.msra.mxu0 %v2409
    %3729 = vmatprep.subr.bf16.mxu0 %v2418
    %3730 = vmatpush1.bf16.msra.mxu0 %v2417
    %3731 = vmatprep.subr.bf16.mxu0 %v2426
    %3732 = vmatpush1.bf16.msra.mxu0 %v2425
    %3733 = vmatprep.subr.bf16.mxu0 %v2434
    %3734 = vmatpush1.bf16.msra.mxu0 %v2433
    %3735 = vmatprep.subr.bf16.mxu0 %v2442
    %3736 = vmatpush1.bf16.msra.mxu0 %v2441
    %3737 = vmatprep.subr.bf16.mxu0 %v2450
    %3738 = vmatpush1.bf16.msra.mxu0 %v2449
    %3739 = vmatprep.subr.bf16.mxu0 %v2458
    %3740 = vmatpush1.bf16.msra.mxu0 %v2457
    %3741 = vmatprep.subr.bf16.mxu0 %v2466
    %3742 = vmatpush1.bf16.msra.mxu0 %v2465
    %3743 = vmatprep.subr.bf16.mxu0 %v2474
    %3744 = vmatpush1.bf16.msra.mxu0 %v2473
    %3745 = vmatprep.subr.bf16.mxu0 %v2482
    %3746 = vmatpush1.bf16.msra.mxu0 %v2481
    %3747 = vmatprep.subr.bf16.mxu0 %v2490
    %3748 = vmatpush1.bf16.msra.mxu0 %v2489
    %3749 = vmatprep.mubr.bf16.mxu0 %v809
    %3750 = vmatmul.mubr.bf16.gmra.mrb[0].mxu0 %v795
    %v3751 = vpop.f32.mrb[0].mxu0
    %v3752 = vadd.f32 %v750, %v3751
    %v3753 = vpop.f32.mrb[0].mxu0
    %v3754 = vadd.f32 %v754, %v3753
    %v3755 = vpop.f32.mrb[0].mxu0
    %v3756 = vpop.f32.mrb[0].mxu0
    %3757 = vdwg.mxu0
    %3758 = vmatprep.subr.bf16.mxu0 %v2498
    %3759 = vmatpush1.bf16.msra.mxu0 %v2497
    %3760 = vmatprep.subr.bf16.mxu0 %v2506
    %3761 = vmatpush1.bf16.msra.mxu0 %v2505
    %3762 = vmatprep.subr.bf16.mxu0 %v2514
    %3763 = vmatpush1.bf16.msra.mxu0 %v2513
    %3764 = vmatprep.subr.bf16.mxu0 %v2522
    %3765 = vmatpush1.bf16.msra.mxu0 %v2521
    %3766 = vmatprep.subr.bf16.mxu0 %v2530
    %3767 = vmatpush1.bf16.msra.mxu0 %v2529
    %3768 = vmatprep.subr.bf16.mxu0 %v2538
    %3769 = vmatpush1.bf16.msra.mxu0 %v2537
    %3770 = vmatprep.subr.bf16.mxu0 %v2546
    %3771 = vmatpush1.bf16.msra.mxu0 %v2545
    %3772 = vmatprep.subr.bf16.mxu0 %v2554
    %3773 = vmatpush1.bf16.msra.mxu0 %v2553
    %3774 = vmatprep.subr.bf16.mxu0 %v2562
    %3775 = vmatpush1.bf16.msra.mxu0 %v2561
    %3776 = vmatprep.subr.bf16.mxu0 %v2570
    %3777 = vmatpush1.bf16.msra.mxu0 %v2569
    %3778 = vmatprep.subr.bf16.mxu0 %v2578
    %3779 = vmatpush1.bf16.msra.mxu0 %v2577
    %3780 = vmatprep.subr.bf16.mxu0 %v2586
    %3781 = vmatpush1.bf16.msra.mxu0 %v2585
    %3782 = vmatprep.subr.bf16.mxu0 %v2594
    %3783 = vmatpush1.bf16.msra.mxu0 %v2593
    %3784 = vmatprep.subr.bf16.mxu0 %v2602
    %3785 = vmatpush1.bf16.msra.mxu0 %v2601
    %3786 = vmatprep.subr.bf16.mxu0 %v2610
    %3787 = vmatpush1.bf16.msra.mxu0 %v2609
    %3788 = vmatprep.subr.bf16.mxu0 %v2618
    %3789 = vmatpush1.bf16.msra.mxu0 %v2617
    %3790 = vmatprep.mubr.bf16.mxu0 %v819
    %3791 = vmatmul.mubr.bf16.gmra.mrb[0].mxu0 %v817
    %v3792 = vpop.f32.mrb[0].mxu0
    %v3793 = vadd.f32 %v3752, %v3792
    %v3794 = vpop.f32.mrb[0].mxu0
    %v3795 = vadd.f32 %v3754, %v3794
    %v3796 = vpop.f32.mrb[0].mxu0
    %v3797 = vpop.f32.mrb[0].mxu0
    %3798 = vdwg.mxu0
    %3799 = vmatprep.subr.bf16.mxu0 %v2626
    %3800 = vmatpush1.bf16.msra.mxu0 %v2625
    %3801 = vmatprep.subr.bf16.mxu0 %v2634
    %3802 = vmatpush1.bf16.msra.mxu0 %v2633
    %3803 = vmatprep.subr.bf16.mxu0 %v2642
    %3804 = vmatpush1.bf16.msra.mxu0 %v2641
    %3805 = vmatprep.subr.bf16.mxu0 %v2650
    %3806 = vmatpush1.bf16.msra.mxu0 %v2649
    %3807 = vmatprep.subr.bf16.mxu0 %v2658
    %3808 = vmatpush1.bf16.msra.mxu0 %v2657
    %3809 = vmatprep.subr.bf16.mxu0 %v2666
    %3810 = vmatpush1.bf16.msra.mxu0 %v2665
    %3811 = vmatprep.subr.bf16.mxu0 %v2674
    %3812 = vmatpush1.bf16.msra.mxu0 %v2673
    %3813 = vmatprep.subr.bf16.mxu0 %v2682
    %3814 = vmatpush1.bf16.msra.mxu0 %v2681
    %3815 = vmatprep.subr.bf16.mxu0 %v2690
    %3816 = vmatpush1.bf16.msra.mxu0 %v2689
    %3817 = vmatprep.subr.bf16.mxu0 %v2698
    %3818 = vmatpush1.bf16.msra.mxu0 %v2697
    %3819 = vmatprep.subr.bf16.mxu0 %v2706
    %3820 = vmatpush1.bf16.msra.mxu0 %v2705
    %3821 = vmatprep.subr.bf16.mxu0 %v2714
    %3822 = vmatpush1.bf16.msra.mxu0 %v2713
    %3823 = vmatprep.subr.bf16.mxu0 %v2722
    %3824 = vmatpush1.bf16.msra.mxu0 %v2721
    %3825 = vmatprep.subr.bf16.mxu0 %v2730
    %3826 = vmatpush1.bf16.msra.mxu0 %v2729
    %3827 = vmatprep.subr.bf16.mxu0 %v2738
    %3828 = vmatpush1.bf16.msra.mxu0 %v2737
    %3829 = vmatprep.subr.bf16.mxu0 %v2746
    %3830 = vmatpush1.bf16.msra.mxu0 %v2745
    %3831 = vmatprep.mubr.bf16.mxu0 %v816
    %3832 = vmatmul.mubr.bf16.gmra.mrb[0].mxu0 %v802
    %v3833 = vpop.f32.mrb[0].mxu0
    %v3834 = vadd.f32 %v3793, %v3833
    %v3835 = vpop.f32.mrb[0].mxu0
    %v3836 = vadd.f32 %v3795, %v3835
    %v3837 = vpop.f32.mrb[0].mxu0
    %v3838 = vpop.f32.mrb[0].mxu0
    %3839 = vdwg.mxu0
    %3840 = vmatprep.subr.bf16.mxu0 %v2754
    %3841 = vmatpush1.bf16.msra.mxu0 %v2753
    %3842 = vmatprep.subr.bf16.mxu0 %v2762
    %3843 = vmatpush1.bf16.msra.mxu0 %v2761
    %3844 = vmatprep.subr.bf16.mxu0 %v2770
    %3845 = vmatpush1.bf16.msra.mxu0 %v2769
    %3846 = vmatprep.subr.bf16.mxu0 %v2778
    %3847 = vmatpush1.bf16.msra.mxu0 %v2777
    %3848 = vmatprep.subr.bf16.mxu0 %v2786
    %3849 = vmatpush1.bf16.msra.mxu0 %v2785
    %3850 = vmatprep.subr.bf16.mxu0 %v2794
    %3851 = vmatpush1.bf16.msra.mxu0 %v2793
    %3852 = vmatprep.subr.bf16.mxu0 %v2802
    %3853 = vmatpush1.bf16.msra.mxu0 %v2801
    %3854 = vmatprep.subr.bf16.mxu0 %v2810
    %3855 = vmatpush1.bf16.msra.mxu0 %v2809
    %3856 = vmatprep.subr.bf16.mxu0 %v2818
    %3857 = vmatpush1.bf16.msra.mxu0 %v2817
    %3858 = vmatprep.subr.bf16.mxu0 %v2826
    %3859 = vmatpush1.bf16.msra.mxu0 %v2825
    %3860 = vmatprep.subr.bf16.mxu0 %v2834
    %3861 = vmatpush1.bf16.msra.mxu0 %v2833
    %3862 = vmatprep.subr.bf16.mxu0 %v2842
    %3863 = vmatpush1.bf16.msra.mxu0 %v2841
    %3864 = vmatprep.subr.bf16.mxu0 %v2850
    %3865 = vmatpush1.bf16.msra.mxu0 %v2849
    %3866 = vmatprep.subr.bf16.mxu0 %v2858
    %3867 = vmatpush1.bf16.msra.mxu0 %v2857
    %3868 = vmatprep.subr.bf16.mxu0 %v2866
    %3869 = vmatpush1.bf16.msra.mxu0 %v2865
    %3870 = vmatprep.subr.bf16.mxu0 %v2874
    %3871 = vmatpush1.bf16.msra.mxu0 %v2873
    %3872 = vmatprep.mubr.bf16.mxu0 %v820
    %3873 = vmatmul.mubr.bf16.gmra.mrb[0].mxu0 %v818
    %v3874 = vpop.f32.mrb[0].mxu0
    %v3875 = vadd.f32 %v3834, %v3874
    %v3876 = vpop.f32.mrb[0].mxu0
    %v3877 = vadd.f32 %v3836, %v3876
    %v3878 = vpop.f32.mrb[0].mxu0
    %v3879 = vpop.f32.mrb[0].mxu0
    %3880 = vdwg.mxu0
    %3881 = vmatprep.subr.bf16.mxu0 %v2372
    %3882 = vmatpush1.bf16.msra.mxu0 %v2371
    %3883 = vmatprep.subr.bf16.mxu0 %v2380
    %3884 = vmatpush1.bf16.msra.mxu0 %v2379
    %3885 = vmatprep.subr.bf16.mxu0 %v2388
    %3886 = vmatpush1.bf16.msra.mxu0 %v2387
    %3887 = vmatprep.subr.bf16.mxu0 %v2396
    %3888 = vmatpush1.bf16.msra.mxu0 %v2395
    %3889 = vmatprep.subr.bf16.mxu0 %v2404
    %3890 = vmatpush1.bf16.msra.mxu0 %v2403
    %3891 = vmatprep.subr.bf16.mxu0 %v2412
    %3892 = vmatpush1.bf16.msra.mxu0 %v2411
    %3893 = vmatprep.subr.bf16.mxu0 %v2420
    %3894 = vmatpush1.bf16.msra.mxu0 %v2419
    %3895 = vmatprep.subr.bf16.mxu0 %v2428
    %3896 = vmatpush1.bf16.msra.mxu0 %v2427
    %3897 = vmatprep.subr.bf16.mxu0 %v2436
    %3898 = vmatpush1.bf16.msra.mxu0 %v2435
    %3899 = vmatprep.subr.bf16.mxu0 %v2444
    %3900 = vmatpush1.bf16.msra.mxu0 %v2443
    %3901 = vmatprep.subr.bf16.mxu0 %v2452
    %3902 = vmatpush1.bf16.msra.mxu0 %v2451
    %3903 = vmatprep.subr.bf16.mxu0 %v2460
    %3904 = vmatpush1.bf16.msra.mxu0 %v2459
    %3905 = vmatprep.subr.bf16.mxu0 %v2468
    %3906 = vmatpush1.bf16.msra.mxu0 %v2467
    %3907 = vmatprep.subr.bf16.mxu0 %v2476
    %3908 = vmatpush1.bf16.msra.mxu0 %v2475
    %3909 = vmatprep.subr.bf16.mxu0 %v2484
    %3910 = vmatpush1.bf16.msra.mxu0 %v2483
    %3911 = vmatprep.subr.bf16.mxu0 %v2492
    %3912 = vmatpush1.bf16.msra.mxu0 %v2491
    %3913 = vmatprep.mubr.bf16.mxu0 %v809
    %3914 = vmatmul.mubr.bf16.gmra.mrb[0].mxu0 %v795
    %v3915 = vpop.f32.mrb[0].mxu0
    %v3916 = vadd.f32 %v758, %v3915
    %v3917 = vpop.f32.mrb[0].mxu0
    %v3918 = vadd.f32 %v762, %v3917
    %v3919 = vpop.f32.mrb[0].mxu0
    %v3920 = vpop.f32.mrb[0].mxu0
    %3921 = vdwg.mxu0
    %3922 = vmatprep.subr.bf16.mxu0 %v2500
    %3923 = vmatpush1.bf16.msra.mxu0 %v2499
    %3924 = vmatprep.subr.bf16.mxu0 %v2508
    %3925 = vmatpush1.bf16.msra.mxu0 %v2507
    %3926 = vmatprep.subr.bf16.mxu0 %v2516
    %3927 = vmatpush1.bf16.msra.mxu0 %v2515
    %3928 = vmatprep.subr.bf16.mxu0 %v2524
    %3929 = vmatpush1.bf16.msra.mxu0 %v2523
    %3930 = vmatprep.subr.bf16.mxu0 %v2532
    %3931 = vmatpush1.bf16.msra.mxu0 %v2531
    %3932 = vmatprep.subr.bf16.mxu0 %v2540
    %3933 = vmatpush1.bf16.msra.mxu0 %v2539
    %3934 = vmatprep.subr.bf16.mxu0 %v2548
    %3935 = vmatpush1.bf16.msra.mxu0 %v2547
    %3936 = vmatprep.subr.bf16.mxu0 %v2556
    %3937 = vmatpush1.bf16.msra.mxu0 %v2555
    %3938 = vmatprep.subr.bf16.mxu0 %v2564
    %3939 = vmatpush1.bf16.msra.mxu0 %v2563
    %3940 = vmatprep.subr.bf16.mxu0 %v2572
    %3941 = vmatpush1.bf16.msra.mxu0 %v2571
    %3942 = vmatprep.subr.bf16.mxu0 %v2580
    %3943 = vmatpush1.bf16.msra.mxu0 %v2579
    %3944 = vmatprep.subr.bf16.mxu0 %v2588
    %3945 = vmatpush1.bf16.msra.mxu0 %v2587
    %3946 = vmatprep.subr.bf16.mxu0 %v2596
    %3947 = vmatpush1.bf16.msra.mxu0 %v2595
    %3948 = vmatprep.subr.bf16.mxu0 %v2604
    %3949 = vmatpush1.bf16.msra.mxu0 %v2603
    %3950 = vmatprep.subr.bf16.mxu0 %v2612
    %3951 = vmatpush1.bf16.msra.mxu0 %v2611
    %3952 = vmatprep.subr.bf16.mxu0 %v2620
    %3953 = vmatpush1.bf16.msra.mxu0 %v2619
    %3954 = vmatprep.mubr.bf16.mxu0 %v819
    %3955 = vmatmul.mubr.bf16.gmra.mrb[0].mxu0 %v817
    %v3956 = vpop.f32.mrb[0].mxu0
    %v3957 = vadd.f32 %v3916, %v3956
    %v3958 = vpop.f32.mrb[0].mxu0
    %v3959 = vadd.f32 %v3918, %v3958
    %v3960 = vpop.f32.mrb[0].mxu0
    %v3961 = vpop.f32.mrb[0].mxu0
    %3962 = vdwg.mxu0
    %3963 = vmatprep.subr.bf16.mxu0 %v2628
    %3964 = vmatpush1.bf16.msra.mxu0 %v2627
    %3965 = vmatprep.subr.bf16.mxu0 %v2636
    %3966 = vmatpush1.bf16.msra.mxu0 %v2635
    %3967 = vmatprep.subr.bf16.mxu0 %v2644
    %3968 = vmatpush1.bf16.msra.mxu0 %v2643
    %3969 = vmatprep.subr.bf16.mxu0 %v2652
    %3970 = vmatpush1.bf16.msra.mxu0 %v2651
    %3971 = vmatprep.subr.bf16.mxu0 %v2660
    %3972 = vmatpush1.bf16.msra.mxu0 %v2659
    %3973 = vmatprep.subr.bf16.mxu0 %v2668
    %3974 = vmatpush1.bf16.msra.mxu0 %v2667
    %3975 = vmatprep.subr.bf16.mxu0 %v2676
    %3976 = vmatpush1.bf16.msra.mxu0 %v2675
    %3977 = vmatprep.subr.bf16.mxu0 %v2684
    %3978 = vmatpush1.bf16.msra.mxu0 %v2683
    %3979 = vmatprep.subr.bf16.mxu0 %v2692
    %3980 = vmatpush1.bf16.msra.mxu0 %v2691
    %3981 = vmatprep.subr.bf16.mxu0 %v2700
    %3982 = vmatpush1.bf16.msra.mxu0 %v2699
    %3983 = vmatprep.subr.bf16.mxu0 %v2708
    %3984 = vmatpush1.bf16.msra.mxu0 %v2707
    %3985 = vmatprep.subr.bf16.mxu0 %v2716
    %3986 = vmatpush1.bf16.msra.mxu0 %v2715
    %3987 = vmatprep.subr.bf16.mxu0 %v2724
    %3988 = vmatpush1.bf16.msra.mxu0 %v2723
    %3989 = vmatprep.subr.bf16.mxu0 %v2732
    %3990 = vmatpush1.bf16.msra.mxu0 %v2731
    %3991 = vmatprep.subr.bf16.mxu0 %v2740
    %3992 = vmatpush1.bf16.msra.mxu0 %v2739
    %3993 = vmatprep.subr.bf16.mxu0 %v2748
    %3994 = vmatpush1.bf16.msra.mxu0 %v2747
    %3995 = vmatprep.mubr.bf16.mxu0 %v816
    %3996 = vmatmul.mubr.bf16.gmra.mrb[0].mxu0 %v802
    %v3997 = vpop.f32.mrb[0].mxu0
    %v3998 = vadd.f32 %v3957, %v3997
    %v3999 = vpop.f32.mrb[0].mxu0
    %v4000 = vadd.f32 %v3959, %v3999
    %v4001 = vpop.f32.mrb[0].mxu0
    %v4002 = vpop.f32.mrb[0].mxu0
    %4003 = vdwg.mxu0
    %4004 = vmatprep.subr.bf16.mxu0 %v2756
    %4005 = vmatpush1.bf16.msra.mxu0 %v2755
    %4006 = vmatprep.subr.bf16.mxu0 %v2764
    %4007 = vmatpush1.bf16.msra.mxu0 %v2763
    %4008 = vmatprep.subr.bf16.mxu0 %v2772
    %4009 = vmatpush1.bf16.msra.mxu0 %v2771
    %4010 = vmatprep.subr.bf16.mxu0 %v2780
    %4011 = vmatpush1.bf16.msra.mxu0 %v2779
    %4012 = vmatprep.subr.bf16.mxu0 %v2788
    %4013 = vmatpush1.bf16.msra.mxu0 %v2787
    %4014 = vmatprep.subr.bf16.mxu0 %v2796
    %4015 = vmatpush1.bf16.msra.mxu0 %v2795
    %4016 = vmatprep.subr.bf16.mxu0 %v2804
    %4017 = vmatpush1.bf16.msra.mxu0 %v2803
    %4018 = vmatprep.subr.bf16.mxu0 %v2812
    %4019 = vmatpush1.bf16.msra.mxu0 %v2811
    %4020 = vmatprep.subr.bf16.mxu0 %v2820
    %4021 = vmatpush1.bf16.msra.mxu0 %v2819
    %4022 = vmatprep.subr.bf16.mxu0 %v2828
    %4023 = vmatpush1.bf16.msra.mxu0 %v2827
    %4024 = vmatprep.subr.bf16.mxu0 %v2836
    %4025 = vmatpush1.bf16.msra.mxu0 %v2835
    %4026 = vmatprep.subr.bf16.mxu0 %v2844
    %4027 = vmatpush1.bf16.msra.mxu0 %v2843
    %4028 = vmatprep.subr.bf16.mxu0 %v2852
    %4029 = vmatpush1.bf16.msra.mxu0 %v2851
    %4030 = vmatprep.subr.bf16.mxu0 %v2860
    %4031 = vmatpush1.bf16.msra.mxu0 %v2859
    %4032 = vmatprep.subr.bf16.mxu0 %v2868
    %4033 = vmatpush1.bf16.msra.mxu0 %v2867
    %4034 = vmatprep.subr.bf16.mxu0 %v2876
    %4035 = vmatpush1.bf16.msra.mxu0 %v2875
    %4036 = vmatprep.mubr.bf16.mxu0 %v820
    %4037 = vmatmul.mubr.bf16.gmra.mrb[0].mxu0 %v818
    %v4038 = vpop.f32.mrb[0].mxu0
    %v4039 = vadd.f32 %v3998, %v4038
    %v4040 = vpop.f32.mrb[0].mxu0
    %v4041 = vadd.f32 %v4000, %v4040
    %v4042 = vpop.f32.mrb[0].mxu0
    %v4043 = vpop.f32.mrb[0].mxu0
    %4044 = vdwg.mxu0
    %vm4045 = vcmp.gt.f32.partialorder %v3547, 0.0
    %vm4046 = vcmp.gt.f32.partialorder %v3549, 0.0
    %vm4047 = vcmp.gt.f32.partialorder %v3711, 0.0
    %vm4048 = vcmp.gt.f32.partialorder %v3713, 0.0
    %vm4049 = vcmp.gt.f32.partialorder %v3875, 0.0
    %vm4050 = vcmp.gt.f32.partialorder %v3877, 0.0
    %vm4051 = vcmp.gt.f32.partialorder %v4039, 0.0
    %vm4052 = vcmp.gt.f32.partialorder %v4041, 0.0
    %v4053 = vmul.f32 %v3547, 0.2
    %v4054 = vmul.f32 %v3549, 0.2
    %v4055 = vmul.f32 %v3711, 0.2
    %v4056 = vmul.f32 %v3713, 0.2
    %v4057 = vmul.f32 %v3875, 0.2
    %v4058 = vmul.f32 %v3877, 0.2
    %v4059 = vmul.f32 %v4039, 0.2
    %v4060 = vmul.f32 %v4041, 0.2
    %v4061 = vsel %vm4045, %v3547, %v4053
    %v4062 = vsel %vm4046, %v3549, %v4054
    %v4063 = vsel %vm4047, %v3711, %v4055
    %v4064 = vsel %vm4048, %v3713, %v4056
    %v4065 = vsel %vm4049, %v3875, %v4057
    %v4066 = vsel %vm4050, %v3877, %v4058
    %v4067 = vsel %vm4051, %v4039, %v4059
    %v4068 = vsel %vm4052, %v4041, %v4060
    %v4069 = vpack.c.bf16 %v4061, %v4061
    %v4070 = vpack.c.bf16 %v4062, %v4062
    %v4071 = vpack.c.bf16 %v4063, %v4063
    %v4072 = vpack.c.bf16 %v4064, %v4064
    %v4073 = vpack.c.bf16 %v4065, %v4065
    %v4074 = vpack.c.bf16 %v4066, %v4066
    %v4075 = vpack.c.bf16 %v4067, %v4067
    %v4076 = vpack.c.bf16 %v4068, %v4068
    %v4077 = vld [vmem:[#allocation7] sm:$0xff]
    %v4078 = vld [vmem:[#allocation7 + $0x8] sm:$0xff]
    %v4079 = vld [vmem:[#allocation7 + $0x10] sm:$0xff]
    %v4080 = vld [vmem:[#allocation7 + $0x18] sm:$0xff]
    %v4081 = vld [vmem:[#allocation7 + $0x20] sm:$0xff]
    %v4082 = vld [vmem:[#allocation7 + $0x28] sm:$0xff]
    %v4083 = vld [vmem:[#allocation7 + $0x30] sm:$0xff]
    %v4084 = vld [vmem:[#allocation7 + $0x38] sm:$0xff]
    %v4085 = vld [vmem:[#allocation7 + $0x40] sm:$0xff]
    %v4086 = vld [vmem:[#allocation7 + $0x48] sm:$0xff]
    %v4087 = vld [vmem:[#allocation7 + $0x50] sm:$0xff]
    %v4088 = vld [vmem:[#allocation7 + $0x58] sm:$0xff]
    %v4089 = vld [vmem:[#allocation7 + $0x60] sm:$0xff]
    %v4090 = vld [vmem:[#allocation7 + $0x68] sm:$0xff]
    %v4091 = vld [vmem:[#allocation7 + $0x70] sm:$0xff]
    %v4092 = vld [vmem:[#allocation7 + $0x78] sm:$0xff]
    %v4093 = vld [vmem:[#allocation7 + $0x80] sm:$0xff]
    %v4094 = vld [vmem:[#allocation7 + $0x88] sm:$0xff]
    %v4095 = vld [vmem:[#allocation7 + $0x90] sm:$0xff]
    %v4096 = vld [vmem:[#allocation7 + $0x98] sm:$0xff]
    %v4097 = vld [vmem:[#allocation7 + $0xa0] sm:$0xff]
    %v4098 = vld [vmem:[#allocation7 + $0xa8] sm:$0xff]
    %v4099 = vld [vmem:[#allocation7 + $0xb0] sm:$0xff]
    %v4100 = vld [vmem:[#allocation7 + $0xb8] sm:$0xff]
    %v4101 = vld [vmem:[#allocation7 + $0xc0] sm:$0xff]
    %v4102 = vld [vmem:[#allocation7 + $0xc8] sm:$0xff]
    %v4103 = vld [vmem:[#allocation7 + $0xd0] sm:$0xff]
    %v4104 = vld [vmem:[#allocation7 + $0xd8] sm:$0xff]
    %v4105 = vld [vmem:[#allocation7 + $0xe0] sm:$0xff]
    %v4106 = vld [vmem:[#allocation7 + $0xe8] sm:$0xff]
    %v4107 = vld [vmem:[#allocation7 + $0xf0] sm:$0xff]
    %v4108 = vld [vmem:[#allocation7 + $0xf8] sm:$0xff]
    %v4109 = vld [vmem:[#allocation7 + $0x100] sm:$0xff]
    %v4110 = vld [vmem:[#allocation7 + $0x108] sm:$0xff]
    %v4111 = vld [vmem:[#allocation7 + $0x110] sm:$0xff]
    %v4112 = vld [vmem:[#allocation7 + $0x118] sm:$0xff]
    %v4113 = vld [vmem:[#allocation7 + $0x120] sm:$0xff]
    %v4114 = vld [vmem:[#allocation7 + $0x128] sm:$0xff]
    %v4115 = vld [vmem:[#allocation7 + $0x130] sm:$0xff]
    %v4116 = vld [vmem:[#allocation7 + $0x138] sm:$0xff]
    %v4117 = vld [vmem:[#allocation7 + $0x140] sm:$0xff]
    %v4118 = vld [vmem:[#allocation7 + $0x148] sm:$0xff]
    %v4119 = vld [vmem:[#allocation7 + $0x150] sm:$0xff]
    %v4120 = vld [vmem:[#allocation7 + $0x158] sm:$0xff]
    %v4121 = vld [vmem:[#allocation7 + $0x160] sm:$0xff]
    %v4122 = vld [vmem:[#allocation7 + $0x168] sm:$0xff]
    %v4123 = vld [vmem:[#allocation7 + $0x170] sm:$0xff]
    %v4124 = vld [vmem:[#allocation7 + $0x178] sm:$0xff]
    %v4125 = vld [vmem:[#allocation7 + $0x180] sm:$0xff]
    %v4126 = vld [vmem:[#allocation7 + $0x188] sm:$0xff]
    %v4127 = vld [vmem:[#allocation7 + $0x190] sm:$0xff]
    %v4128 = vld [vmem:[#allocation7 + $0x198] sm:$0xff]
    %v4129 = vld [vmem:[#allocation7 + $0x1a0] sm:$0xff]
    %v4130 = vld [vmem:[#allocation7 + $0x1a8] sm:$0xff]
    %v4131 = vld [vmem:[#allocation7 + $0x1b0] sm:$0xff]
    %v4132 = vld [vmem:[#allocation7 + $0x1b8] sm:$0xff]
    %v4133 = vld [vmem:[#allocation7 + $0x1c0] sm:$0xff]
    %v4134 = vld [vmem:[#allocation7 + $0x1c8] sm:$0xff]
    %v4135 = vld [vmem:[#allocation7 + $0x1d0] sm:$0xff]
    %v4136 = vld [vmem:[#allocation7 + $0x1d8] sm:$0xff]
    %v4137 = vld [vmem:[#allocation7 + $0x1e0] sm:$0xff]
    %v4138 = vld [vmem:[#allocation7 + $0x1e8] sm:$0xff]
    %v4139 = vld [vmem:[#allocation7 + $0x1f0] sm:$0xff]
    %v4140 = vld [vmem:[#allocation7 + $0x1f8] sm:$0xff]
    %v4141 = vld [vmem:[#allocation7 + $0x200] sm:$0xff]
    %v4142 = vld [vmem:[#allocation7 + $0x208] sm:$0xff]
    %v4143 = vld [vmem:[#allocation7 + $0x210] sm:$0xff]
    %v4144 = vld [vmem:[#allocation7 + $0x218] sm:$0xff]
    %v4145 = vld [vmem:[#allocation7 + $0x220] sm:$0xff]
    %v4146 = vld [vmem:[#allocation7 + $0x228] sm:$0xff]
    %v4147 = vld [vmem:[#allocation7 + $0x230] sm:$0xff]
    %v4148 = vld [vmem:[#allocation7 + $0x238] sm:$0xff]
    %v4149 = vld [vmem:[#allocation7 + $0x240] sm:$0xff]
    %v4150 = vld [vmem:[#allocation7 + $0x248] sm:$0xff]
    %v4151 = vld [vmem:[#allocation7 + $0x250] sm:$0xff]
    %v4152 = vld [vmem:[#allocation7 + $0x258] sm:$0xff]
    %v4153 = vld [vmem:[#allocation7 + $0x260] sm:$0xff]
    %v4154 = vld [vmem:[#allocation7 + $0x268] sm:$0xff]
    %v4155 = vld [vmem:[#allocation7 + $0x270] sm:$0xff]
    %v4156 = vld [vmem:[#allocation7 + $0x278] sm:$0xff]
    %v4157 = vld [vmem:[#allocation7 + $0x280] sm:$0xff]
    %v4158 = vld [vmem:[#allocation7 + $0x288] sm:$0xff]
    %v4159 = vld [vmem:[#allocation7 + $0x290] sm:$0xff]
    %v4160 = vld [vmem:[#allocation7 + $0x298] sm:$0xff]
    %v4161 = vld [vmem:[#allocation7 + $0x2a0] sm:$0xff]
    %v4162 = vld [vmem:[#allocation7 + $0x2a8] sm:$0xff]
    %v4163 = vld [vmem:[#allocation7 + $0x2b0] sm:$0xff]
    %v4164 = vld [vmem:[#allocation7 + $0x2b8] sm:$0xff]
    %v4165 = vld [vmem:[#allocation7 + $0x2c0] sm:$0xff]
    %v4166 = vld [vmem:[#allocation7 + $0x2c8] sm:$0xff]
    %v4167 = vld [vmem:[#allocation7 + $0x2d0] sm:$0xff]
    %v4168 = vld [vmem:[#allocation7 + $0x2d8] sm:$0xff]
    %v4169 = vld [vmem:[#allocation7 + $0x2e0] sm:$0xff]
    %v4170 = vld [vmem:[#allocation7 + $0x2e8] sm:$0xff]
    %v4171 = vld [vmem:[#allocation7 + $0x2f0] sm:$0xff]
    %v4172 = vld [vmem:[#allocation7 + $0x2f8] sm:$0xff]
    %v4173 = vld [vmem:[#allocation7 + $0x300] sm:$0xff]
    %v4174 = vld [vmem:[#allocation7 + $0x308] sm:$0xff]
    %v4175 = vld [vmem:[#allocation7 + $0x310] sm:$0xff]
    %v4176 = vld [vmem:[#allocation7 + $0x318] sm:$0xff]
    %v4177 = vld [vmem:[#allocation7 + $0x320] sm:$0xff]
    %v4178 = vld [vmem:[#allocation7 + $0x328] sm:$0xff]
    %v4179 = vld [vmem:[#allocation7 + $0x330] sm:$0xff]
    %v4180 = vld [vmem:[#allocation7 + $0x338] sm:$0xff]
    %v4181 = vld [vmem:[#allocation7 + $0x340] sm:$0xff]
    %v4182 = vld [vmem:[#allocation7 + $0x348] sm:$0xff]
    %v4183 = vld [vmem:[#allocation7 + $0x350] sm:$0xff]
    %v4184 = vld [vmem:[#allocation7 + $0x358] sm:$0xff]
    %v4185 = vld [vmem:[#allocation7 + $0x360] sm:$0xff]
    %v4186 = vld [vmem:[#allocation7 + $0x368] sm:$0xff]
    %v4187 = vld [vmem:[#allocation7 + $0x370] sm:$0xff]
    %v4188 = vld [vmem:[#allocation7 + $0x378] sm:$0xff]
    %v4189 = vld [vmem:[#allocation7 + $0x380] sm:$0xff]
    %v4190 = vld [vmem:[#allocation7 + $0x388] sm:$0xff]
    %v4191 = vld [vmem:[#allocation7 + $0x390] sm:$0xff]
    %v4192 = vld [vmem:[#allocation7 + $0x398] sm:$0xff]
    %v4193 = vld [vmem:[#allocation7 + $0x3a0] sm:$0xff]
    %v4194 = vld [vmem:[#allocation7 + $0x3a8] sm:$0xff]
    %v4195 = vld [vmem:[#allocation7 + $0x3b0] sm:$0xff]
    %v4196 = vld [vmem:[#allocation7 + $0x3b8] sm:$0xff]
    %v4197 = vld [vmem:[#allocation7 + $0x3c0] sm:$0xff]
    %v4198 = vld [vmem:[#allocation7 + $0x3c8] sm:$0xff]
    %v4199 = vld [vmem:[#allocation7 + $0x3d0] sm:$0xff]
    %v4200 = vld [vmem:[#allocation7 + $0x3d8] sm:$0xff]
    %v4201 = vld [vmem:[#allocation7 + $0x3e0] sm:$0xff]
    %v4202 = vld [vmem:[#allocation7 + $0x3e8] sm:$0xff]
    %v4203 = vld [vmem:[#allocation7 + $0x3f0] sm:$0xff]
    %v4204 = vld [vmem:[#allocation7 + $0x3f8] sm:$0xff]
    %v4205 = vld [vmem:[#allocation7 + $0x400] sm:$0xff]
    %v4206 = vld [vmem:[#allocation7 + $0x408] sm:$0xff]
    %v4207 = vld [vmem:[#allocation7 + $0x410] sm:$0xff]
    %v4208 = vld [vmem:[#allocation7 + $0x418] sm:$0xff]
    %v4209 = vld [vmem:[#allocation7 + $0x420] sm:$0xff]
    %v4210 = vld [vmem:[#allocation7 + $0x428] sm:$0xff]
    %v4211 = vld [vmem:[#allocation7 + $0x430] sm:$0xff]
    %v4212 = vld [vmem:[#allocation7 + $0x438] sm:$0xff]
    %v4213 = vld [vmem:[#allocation7 + $0x440] sm:$0xff]
    %v4214 = vld [vmem:[#allocation7 + $0x448] sm:$0xff]
    %v4215 = vld [vmem:[#allocation7 + $0x450] sm:$0xff]
    %v4216 = vld [vmem:[#allocation7 + $0x458] sm:$0xff]
    %v4217 = vld [vmem:[#allocation7 + $0x460] sm:$0xff]
    %v4218 = vld [vmem:[#allocation7 + $0x468] sm:$0xff]
    %v4219 = vld [vmem:[#allocation7 + $0x470] sm:$0xff]
    %v4220 = vld [vmem:[#allocation7 + $0x478] sm:$0xff]
    %v4221 = vld [vmem:[#allocation7 + $0x480] sm:$0xff]
    %v4222 = vld [vmem:[#allocation7 + $0x488] sm:$0xff]
    %v4223 = vld [vmem:[#allocation7 + $0x490] sm:$0xff]
    %v4224 = vld [vmem:[#allocation7 + $0x498] sm:$0xff]
    %v4225 = vld [vmem:[#allocation7 + $0x4a0] sm:$0xff]
    %v4226 = vld [vmem:[#allocation7 + $0x4a8] sm:$0xff]
    %v4227 = vld [vmem:[#allocation7 + $0x4b0] sm:$0xff]
    %v4228 = vld [vmem:[#allocation7 + $0x4b8] sm:$0xff]
    %v4229 = vld [vmem:[#allocation7 + $0x4c0] sm:$0xff]
    %v4230 = vld [vmem:[#allocation7 + $0x4c8] sm:$0xff]
    %v4231 = vld [vmem:[#allocation7 + $0x4d0] sm:$0xff]
    %v4232 = vld [vmem:[#allocation7 + $0x4d8] sm:$0xff]
    %v4233 = vld [vmem:[#allocation7 + $0x4e0] sm:$0xff]
    %v4234 = vld [vmem:[#allocation7 + $0x4e8] sm:$0xff]
    %v4235 = vld [vmem:[#allocation7 + $0x4f0] sm:$0xff]
    %v4236 = vld [vmem:[#allocation7 + $0x4f8] sm:$0xff]
    %v4237 = vld [vmem:[#allocation7 + $0x500] sm:$0xff]
    %v4238 = vld [vmem:[#allocation7 + $0x508] sm:$0xff]
    %v4239 = vld [vmem:[#allocation7 + $0x510] sm:$0xff]
    %v4240 = vld [vmem:[#allocation7 + $0x518] sm:$0xff]
    %v4241 = vld [vmem:[#allocation7 + $0x520] sm:$0xff]
    %v4242 = vld [vmem:[#allocation7 + $0x528] sm:$0xff]
    %v4243 = vld [vmem:[#allocation7 + $0x530] sm:$0xff]
    %v4244 = vld [vmem:[#allocation7 + $0x538] sm:$0xff]
    %v4245 = vld [vmem:[#allocation7 + $0x540] sm:$0xff]
    %v4246 = vld [vmem:[#allocation7 + $0x548] sm:$0xff]
    %v4247 = vld [vmem:[#allocation7 + $0x550] sm:$0xff]
    %v4248 = vld [vmem:[#allocation7 + $0x558] sm:$0xff]
    %v4249 = vld [vmem:[#allocation7 + $0x560] sm:$0xff]
    %v4250 = vld [vmem:[#allocation7 + $0x568] sm:$0xff]
    %v4251 = vld [vmem:[#allocation7 + $0x570] sm:$0xff]
    %v4252 = vld [vmem:[#allocation7 + $0x578] sm:$0xff]
    %v4253 = vld [vmem:[#allocation7 + $0x580] sm:$0xff]
    %v4254 = vld [vmem:[#allocation7 + $0x588] sm:$0xff]
    %v4255 = vld [vmem:[#allocation7 + $0x590] sm:$0xff]
    %v4256 = vld [vmem:[#allocation7 + $0x598] sm:$0xff]
    %v4257 = vld [vmem:[#allocation7 + $0x5a0] sm:$0xff]
    %v4258 = vld [vmem:[#allocation7 + $0x5a8] sm:$0xff]
    %v4259 = vld [vmem:[#allocation7 + $0x5b0] sm:$0xff]
    %v4260 = vld [vmem:[#allocation7 + $0x5b8] sm:$0xff]
    %v4261 = vld [vmem:[#allocation7 + $0x5c0] sm:$0xff]
    %v4262 = vld [vmem:[#allocation7 + $0x5c8] sm:$0xff]
    %v4263 = vld [vmem:[#allocation7 + $0x5d0] sm:$0xff]
    %v4264 = vld [vmem:[#allocation7 + $0x5d8] sm:$0xff]
    %v4265 = vld [vmem:[#allocation7 + $0x5e0] sm:$0xff]
    %v4266 = vld [vmem:[#allocation7 + $0x5e8] sm:$0xff]
    %v4267 = vld [vmem:[#allocation7 + $0x5f0] sm:$0xff]
    %v4268 = vld [vmem:[#allocation7 + $0x5f8] sm:$0xff]
    %v4269 = vld [vmem:[#allocation7 + $0x600] sm:$0xff]
    %v4270 = vld [vmem:[#allocation7 + $0x608] sm:$0xff]
    %v4271 = vld [vmem:[#allocation7 + $0x610] sm:$0xff]
    %v4272 = vld [vmem:[#allocation7 + $0x618] sm:$0xff]
    %v4273 = vld [vmem:[#allocation7 + $0x620] sm:$0xff]
    %v4274 = vld [vmem:[#allocation7 + $0x628] sm:$0xff]
    %v4275 = vld [vmem:[#allocation7 + $0x630] sm:$0xff]
    %v4276 = vld [vmem:[#allocation7 + $0x638] sm:$0xff]
    %v4277 = vld [vmem:[#allocation7 + $0x640] sm:$0xff]
    %v4278 = vld [vmem:[#allocation7 + $0x648] sm:$0xff]
    %v4279 = vld [vmem:[#allocation7 + $0x650] sm:$0xff]
    %v4280 = vld [vmem:[#allocation7 + $0x658] sm:$0xff]
    %v4281 = vld [vmem:[#allocation7 + $0x660] sm:$0xff]
    %v4282 = vld [vmem:[#allocation7 + $0x668] sm:$0xff]
    %v4283 = vld [vmem:[#allocation7 + $0x670] sm:$0xff]
    %v4284 = vld [vmem:[#allocation7 + $0x678] sm:$0xff]
    %v4285 = vld [vmem:[#allocation7 + $0x680] sm:$0xff]
    %v4286 = vld [vmem:[#allocation7 + $0x688] sm:$0xff]
    %v4287 = vld [vmem:[#allocation7 + $0x690] sm:$0xff]
    %v4288 = vld [vmem:[#allocation7 + $0x698] sm:$0xff]
    %v4289 = vld [vmem:[#allocation7 + $0x6a0] sm:$0xff]
    %v4290 = vld [vmem:[#allocation7 + $0x6a8] sm:$0xff]
    %v4291 = vld [vmem:[#allocation7 + $0x6b0] sm:$0xff]
    %v4292 = vld [vmem:[#allocation7 + $0x6b8] sm:$0xff]
    %v4293 = vld [vmem:[#allocation7 + $0x6c0] sm:$0xff]
    %v4294 = vld [vmem:[#allocation7 + $0x6c8] sm:$0xff]
    %v4295 = vld [vmem:[#allocation7 + $0x6d0] sm:$0xff]
    %v4296 = vld [vmem:[#allocation7 + $0x6d8] sm:$0xff]
    %v4297 = vld [vmem:[#allocation7 + $0x6e0] sm:$0xff]
    %v4298 = vld [vmem:[#allocation7 + $0x6e8] sm:$0xff]
    %v4299 = vld [vmem:[#allocation7 + $0x6f0] sm:$0xff]
    %v4300 = vld [vmem:[#allocation7 + $0x6f8] sm:$0xff]
    %v4301 = vld [vmem:[#allocation7 + $0x700] sm:$0xff]
    %v4302 = vld [vmem:[#allocation7 + $0x708] sm:$0xff]
    %v4303 = vld [vmem:[#allocation7 + $0x710] sm:$0xff]
    %v4304 = vld [vmem:[#allocation7 + $0x718] sm:$0xff]
    %v4305 = vld [vmem:[#allocation7 + $0x720] sm:$0xff]
    %v4306 = vld [vmem:[#allocation7 + $0x728] sm:$0xff]
    %v4307 = vld [vmem:[#allocation7 + $0x730] sm:$0xff]
    %v4308 = vld [vmem:[#allocation7 + $0x738] sm:$0xff]
    %v4309 = vld [vmem:[#allocation7 + $0x740] sm:$0xff]
    %v4310 = vld [vmem:[#allocation7 + $0x748] sm:$0xff]
    %v4311 = vld [vmem:[#allocation7 + $0x750] sm:$0xff]
    %v4312 = vld [vmem:[#allocation7 + $0x758] sm:$0xff]
    %v4313 = vld [vmem:[#allocation7 + $0x760] sm:$0xff]
    %v4314 = vld [vmem:[#allocation7 + $0x768] sm:$0xff]
    %v4315 = vld [vmem:[#allocation7 + $0x770] sm:$0xff]
    %v4316 = vld [vmem:[#allocation7 + $0x778] sm:$0xff]
    %v4317 = vld [vmem:[#allocation7 + $0x780] sm:$0xff]
    %v4318 = vld [vmem:[#allocation7 + $0x788] sm:$0xff]
    %v4319 = vld [vmem:[#allocation7 + $0x790] sm:$0xff]
    %v4320 = vld [vmem:[#allocation7 + $0x798] sm:$0xff]
    %v4321 = vld [vmem:[#allocation7 + $0x7a0] sm:$0xff]
    %v4322 = vld [vmem:[#allocation7 + $0x7a8] sm:$0xff]
    %v4323 = vld [vmem:[#allocation7 + $0x7b0] sm:$0xff]
    %v4324 = vld [vmem:[#allocation7 + $0x7b8] sm:$0xff]
    %v4325 = vld [vmem:[#allocation7 + $0x7c0] sm:$0xff]
    %v4326 = vld [vmem:[#allocation7 + $0x7c8] sm:$0xff]
    %v4327 = vld [vmem:[#allocation7 + $0x7d0] sm:$0xff]
    %v4328 = vld [vmem:[#allocation7 + $0x7d8] sm:$0xff]
    %v4329 = vld [vmem:[#allocation7 + $0x7e0] sm:$0xff]
    %v4330 = vld [vmem:[#allocation7 + $0x7e8] sm:$0xff]
    %v4331 = vld [vmem:[#allocation7 + $0x7f0] sm:$0xff]
    %v4332 = vld [vmem:[#allocation7 + $0x7f8] sm:$0xff]
    %v4333 = vld [vmem:[#allocation9] sm:$0xf]
    %v4335 = vlaneseq
    %v4336 = vshrl.u32 %v4335, 7
    %v4337 = vsub.s32 0, %v4336
    %v4338 = vrot.slane %v4333, %v4337
    %v4339 = vlaneseq
    %v4340 = vshrl.u32 %v4339, 7
    %v4341 = vsub.s32 1, %v4340
    %v4342 = vrot.slane %v4333, %v4341
    %v4343 = vlaneseq
    %v4344 = vshrl.u32 %v4343, 7
    %v4345 = vsub.s32 2, %v4344
    %v4346 = vrot.slane %v4333, %v4345
    %v4347 = vlaneseq
    %v4348 = vshrl.u32 %v4347, 7
    %v4349 = vsub.s32 3, %v4348
    %v4350 = vrot.slane %v4333, %v4349
    %v4611 = vunpack.c.l.b16 %v4077
    %v4612 = vunpack.c.h.b16 %v4077
    %v4613 = vunpack.c.l.b16 %v4078
    %v4614 = vunpack.c.h.b16 %v4078
    %v4615 = vunpack.c.l.b16 %v4079
    %v4616 = vunpack.c.h.b16 %v4079
    %v4617 = vunpack.c.l.b16 %v4080
    %v4618 = vunpack.c.h.b16 %v4080
    %v4619 = vunpack.c.l.b16 %v4081
    %v4620 = vunpack.c.h.b16 %v4081
    %v4621 = vunpack.c.l.b16 %v4082
    %v4622 = vunpack.c.h.b16 %v4082
    %v4623 = vunpack.c.l.b16 %v4083
    %v4624 = vunpack.c.h.b16 %v4083
    %v4625 = vunpack.c.l.b16 %v4084
    %v4626 = vunpack.c.h.b16 %v4084
    %v4627 = vunpack.c.l.b16 %v4085
    %v4628 = vunpack.c.h.b16 %v4085
    %v4629 = vunpack.c.l.b16 %v4086
    %v4630 = vunpack.c.h.b16 %v4086
    %v4631 = vunpack.c.l.b16 %v4087
    %v4632 = vunpack.c.h.b16 %v4087
    %v4633 = vunpack.c.l.b16 %v4088
    %v4634 = vunpack.c.h.b16 %v4088
    %v4635 = vunpack.c.l.b16 %v4089
    %v4636 = vunpack.c.h.b16 %v4089
    %v4637 = vunpack.c.l.b16 %v4090
    %v4638 = vunpack.c.h.b16 %v4090
    %v4639 = vunpack.c.l.b16 %v4091
    %v4640 = vunpack.c.h.b16 %v4091
    %v4641 = vunpack.c.l.b16 %v4092
    %v4642 = vunpack.c.h.b16 %v4092
    %v4643 = vunpack.c.l.b16 %v4093
    %v4644 = vunpack.c.h.b16 %v4093
    %v4645 = vunpack.c.l.b16 %v4094
    %v4646 = vunpack.c.h.b16 %v4094
    %v4647 = vunpack.c.l.b16 %v4095
    %v4648 = vunpack.c.h.b16 %v4095
    %v4649 = vunpack.c.l.b16 %v4096
    %v4650 = vunpack.c.h.b16 %v4096
    %v4651 = vunpack.c.l.b16 %v4097
    %v4652 = vunpack.c.h.b16 %v4097
    %v4653 = vunpack.c.l.b16 %v4098
    %v4654 = vunpack.c.h.b16 %v4098
    %v4655 = vunpack.c.l.b16 %v4099
    %v4656 = vunpack.c.h.b16 %v4099
    %v4657 = vunpack.c.l.b16 %v4100
    %v4658 = vunpack.c.h.b16 %v4100
    %v4659 = vunpack.c.l.b16 %v4101
    %v4660 = vunpack.c.h.b16 %v4101
    %v4661 = vunpack.c.l.b16 %v4102
    %v4662 = vunpack.c.h.b16 %v4102
    %v4663 = vunpack.c.l.b16 %v4103
    %v4664 = vunpack.c.h.b16 %v4103
    %v4665 = vunpack.c.l.b16 %v4104
    %v4666 = vunpack.c.h.b16 %v4104
    %v4667 = vunpack.c.l.b16 %v4105
    %v4668 = vunpack.c.h.b16 %v4105
    %v4669 = vunpack.c.l.b16 %v4106
    %v4670 = vunpack.c.h.b16 %v4106
    %v4671 = vunpack.c.l.b16 %v4107
    %v4672 = vunpack.c.h.b16 %v4107
    %v4673 = vunpack.c.l.b16 %v4108
    %v4674 = vunpack.c.h.b16 %v4108
    %v4675 = vunpack.c.l.b16 %v4109
    %v4676 = vunpack.c.h.b16 %v4109
    %v4677 = vunpack.c.l.b16 %v4110
    %v4678 = vunpack.c.h.b16 %v4110
    %v4679 = vunpack.c.l.b16 %v4111
    %v4680 = vunpack.c.h.b16 %v4111
    %v4681 = vunpack.c.l.b16 %v4112
    %v4682 = vunpack.c.h.b16 %v4112
    %v4683 = vunpack.c.l.b16 %v4113
    %v4684 = vunpack.c.h.b16 %v4113
    %v4685 = vunpack.c.l.b16 %v4114
    %v4686 = vunpack.c.h.b16 %v4114
    %v4687 = vunpack.c.l.b16 %v4115
    %v4688 = vunpack.c.h.b16 %v4115
    %v4689 = vunpack.c.l.b16 %v4116
    %v4690 = vunpack.c.h.b16 %v4116
    %v4691 = vunpack.c.l.b16 %v4117
    %v4692 = vunpack.c.h.b16 %v4117
    %v4693 = vunpack.c.l.b16 %v4118
    %v4694 = vunpack.c.h.b16 %v4118
    %v4695 = vunpack.c.l.b16 %v4119
    %v4696 = vunpack.c.h.b16 %v4119
    %v4697 = vunpack.c.l.b16 %v4120
    %v4698 = vunpack.c.h.b16 %v4120
    %v4699 = vunpack.c.l.b16 %v4121
    %v4700 = vunpack.c.h.b16 %v4121
    %v4701 = vunpack.c.l.b16 %v4122
    %v4702 = vunpack.c.h.b16 %v4122
    %v4703 = vunpack.c.l.b16 %v4123
    %v4704 = vunpack.c.h.b16 %v4123
    %v4705 = vunpack.c.l.b16 %v4124
    %v4706 = vunpack.c.h.b16 %v4124
    %v4707 = vunpack.c.l.b16 %v4125
    %v4708 = vunpack.c.h.b16 %v4125
    %v4709 = vunpack.c.l.b16 %v4126
    %v4710 = vunpack.c.h.b16 %v4126
    %v4711 = vunpack.c.l.b16 %v4127
    %v4712 = vunpack.c.h.b16 %v4127
    %v4713 = vunpack.c.l.b16 %v4128
    %v4714 = vunpack.c.h.b16 %v4128
    %v4715 = vunpack.c.l.b16 %v4129
    %v4716 = vunpack.c.h.b16 %v4129
    %v4717 = vunpack.c.l.b16 %v4130
    %v4718 = vunpack.c.h.b16 %v4130
    %v4719 = vunpack.c.l.b16 %v4131
    %v4720 = vunpack.c.h.b16 %v4131
    %v4721 = vunpack.c.l.b16 %v4132
    %v4722 = vunpack.c.h.b16 %v4132
    %v4723 = vunpack.c.l.b16 %v4133
    %v4724 = vunpack.c.h.b16 %v4133
    %v4725 = vunpack.c.l.b16 %v4134
    %v4726 = vunpack.c.h.b16 %v4134
    %v4727 = vunpack.c.l.b16 %v4135
    %v4728 = vunpack.c.h.b16 %v4135
    %v4729 = vunpack.c.l.b16 %v4136
    %v4730 = vunpack.c.h.b16 %v4136
    %v4731 = vunpack.c.l.b16 %v4137
    %v4732 = vunpack.c.h.b16 %v4137
    %v4733 = vunpack.c.l.b16 %v4138
    %v4734 = vunpack.c.h.b16 %v4138
    %v4735 = vunpack.c.l.b16 %v4139
    %v4736 = vunpack.c.h.b16 %v4139
    %v4737 = vunpack.c.l.b16 %v4140
    %v4738 = vunpack.c.h.b16 %v4140
    %v4739 = vunpack.c.l.b16 %v4141
    %v4740 = vunpack.c.h.b16 %v4141
    %v4741 = vunpack.c.l.b16 %v4142
    %v4742 = vunpack.c.h.b16 %v4142
    %v4743 = vunpack.c.l.b16 %v4143
    %v4744 = vunpack.c.h.b16 %v4143
    %v4745 = vunpack.c.l.b16 %v4144
    %v4746 = vunpack.c.h.b16 %v4144
    %v4747 = vunpack.c.l.b16 %v4145
    %v4748 = vunpack.c.h.b16 %v4145
    %v4749 = vunpack.c.l.b16 %v4146
    %v4750 = vunpack.c.h.b16 %v4146
    %v4751 = vunpack.c.l.b16 %v4147
    %v4752 = vunpack.c.h.b16 %v4147
    %v4753 = vunpack.c.l.b16 %v4148
    %v4754 = vunpack.c.h.b16 %v4148
    %v4755 = vunpack.c.l.b16 %v4149
    %v4756 = vunpack.c.h.b16 %v4149
    %v4757 = vunpack.c.l.b16 %v4150
    %v4758 = vunpack.c.h.b16 %v4150
    %v4759 = vunpack.c.l.b16 %v4151
    %v4760 = vunpack.c.h.b16 %v4151
    %v4761 = vunpack.c.l.b16 %v4152
    %v4762 = vunpack.c.h.b16 %v4152
    %v4763 = vunpack.c.l.b16 %v4153
    %v4764 = vunpack.c.h.b16 %v4153
    %v4765 = vunpack.c.l.b16 %v4154
    %v4766 = vunpack.c.h.b16 %v4154
    %v4767 = vunpack.c.l.b16 %v4155
    %v4768 = vunpack.c.h.b16 %v4155
    %v4769 = vunpack.c.l.b16 %v4156
    %v4770 = vunpack.c.h.b16 %v4156
    %v4771 = vunpack.c.l.b16 %v4157
    %v4772 = vunpack.c.h.b16 %v4157
    %v4773 = vunpack.c.l.b16 %v4158
    %v4774 = vunpack.c.h.b16 %v4158
    %v4775 = vunpack.c.l.b16 %v4159
    %v4776 = vunpack.c.h.b16 %v4159
    %v4777 = vunpack.c.l.b16 %v4160
    %v4778 = vunpack.c.h.b16 %v4160
    %v4779 = vunpack.c.l.b16 %v4161
    %v4780 = vunpack.c.h.b16 %v4161
    %v4781 = vunpack.c.l.b16 %v4162
    %v4782 = vunpack.c.h.b16 %v4162
    %v4783 = vunpack.c.l.b16 %v4163
    %v4784 = vunpack.c.h.b16 %v4163
    %v4785 = vunpack.c.l.b16 %v4164
    %v4786 = vunpack.c.h.b16 %v4164
    %v4787 = vunpack.c.l.b16 %v4165
    %v4788 = vunpack.c.h.b16 %v4165
    %v4789 = vunpack.c.l.b16 %v4166
    %v4790 = vunpack.c.h.b16 %v4166
    %v4791 = vunpack.c.l.b16 %v4167
    %v4792 = vunpack.c.h.b16 %v4167
    %v4793 = vunpack.c.l.b16 %v4168
    %v4794 = vunpack.c.h.b16 %v4168
    %v4795 = vunpack.c.l.b16 %v4169
    %v4796 = vunpack.c.h.b16 %v4169
    %v4797 = vunpack.c.l.b16 %v4170
    %v4798 = vunpack.c.h.b16 %v4170
    %v4799 = vunpack.c.l.b16 %v4171
    %v4800 = vunpack.c.h.b16 %v4171
    %v4801 = vunpack.c.l.b16 %v4172
    %v4802 = vunpack.c.h.b16 %v4172
    %v4803 = vunpack.c.l.b16 %v4173
    %v4804 = vunpack.c.h.b16 %v4173
    %v4805 = vunpack.c.l.b16 %v4174
    %v4806 = vunpack.c.h.b16 %v4174
    %v4807 = vunpack.c.l.b16 %v4175
    %v4808 = vunpack.c.h.b16 %v4175
    %v4809 = vunpack.c.l.b16 %v4176
    %v4810 = vunpack.c.h.b16 %v4176
    %v4811 = vunpack.c.l.b16 %v4177
    %v4812 = vunpack.c.h.b16 %v4177
    %v4813 = vunpack.c.l.b16 %v4178
    %v4814 = vunpack.c.h.b16 %v4178
    %v4815 = vunpack.c.l.b16 %v4179
    %v4816 = vunpack.c.h.b16 %v4179
    %v4817 = vunpack.c.l.b16 %v4180
    %v4818 = vunpack.c.h.b16 %v4180
    %v4819 = vunpack.c.l.b16 %v4181
    %v4820 = vunpack.c.h.b16 %v4181
    %v4821 = vunpack.c.l.b16 %v4182
    %v4822 = vunpack.c.h.b16 %v4182
    %v4823 = vunpack.c.l.b16 %v4183
    %v4824 = vunpack.c.h.b16 %v4183
    %v4825 = vunpack.c.l.b16 %v4184
    %v4826 = vunpack.c.h.b16 %v4184
    %v4827 = vunpack.c.l.b16 %v4185
    %v4828 = vunpack.c.h.b16 %v4185
    %v4829 = vunpack.c.l.b16 %v4186
    %v4830 = vunpack.c.h.b16 %v4186
    %v4831 = vunpack.c.l.b16 %v4187
    %v4832 = vunpack.c.h.b16 %v4187
    %v4833 = vunpack.c.l.b16 %v4188
    %v4834 = vunpack.c.h.b16 %v4188
    %v4835 = vunpack.c.l.b16 %v4189
    %v4836 = vunpack.c.h.b16 %v4189
    %v4837 = vunpack.c.l.b16 %v4190
    %v4838 = vunpack.c.h.b16 %v4190
    %v4839 = vunpack.c.l.b16 %v4191
    %v4840 = vunpack.c.h.b16 %v4191
    %v4841 = vunpack.c.l.b16 %v4192
    %v4842 = vunpack.c.h.b16 %v4192
    %v4843 = vunpack.c.l.b16 %v4193
    %v4844 = vunpack.c.h.b16 %v4193
    %v4845 = vunpack.c.l.b16 %v4194
    %v4846 = vunpack.c.h.b16 %v4194
    %v4847 = vunpack.c.l.b16 %v4195
    %v4848 = vunpack.c.h.b16 %v4195
    %v4849 = vunpack.c.l.b16 %v4196
    %v4850 = vunpack.c.h.b16 %v4196
    %v4851 = vunpack.c.l.b16 %v4197
    %v4852 = vunpack.c.h.b16 %v4197
    %v4853 = vunpack.c.l.b16 %v4198
    %v4854 = vunpack.c.h.b16 %v4198
    %v4855 = vunpack.c.l.b16 %v4199
    %v4856 = vunpack.c.h.b16 %v4199
    %v4857 = vunpack.c.l.b16 %v4200
    %v4858 = vunpack.c.h.b16 %v4200
    %v4859 = vunpack.c.l.b16 %v4201
    %v4860 = vunpack.c.h.b16 %v4201
    %v4861 = vunpack.c.l.b16 %v4202
    %v4862 = vunpack.c.h.b16 %v4202
    %v4863 = vunpack.c.l.b16 %v4203
    %v4864 = vunpack.c.h.b16 %v4203
    %v4865 = vunpack.c.l.b16 %v4204
    %v4866 = vunpack.c.h.b16 %v4204
    %v4867 = vunpack.c.l.b16 %v4205
    %v4868 = vunpack.c.h.b16 %v4205
    %v4869 = vunpack.c.l.b16 %v4206
    %v4870 = vunpack.c.h.b16 %v4206
    %v4871 = vunpack.c.l.b16 %v4207
    %v4872 = vunpack.c.h.b16 %v4207
    %v4873 = vunpack.c.l.b16 %v4208
    %v4874 = vunpack.c.h.b16 %v4208
    %v4875 = vunpack.c.l.b16 %v4209
    %v4876 = vunpack.c.h.b16 %v4209
    %v4877 = vunpack.c.l.b16 %v4210
    %v4878 = vunpack.c.h.b16 %v4210
    %v4879 = vunpack.c.l.b16 %v4211
    %v4880 = vunpack.c.h.b16 %v4211
    %v4881 = vunpack.c.l.b16 %v4212
    %v4882 = vunpack.c.h.b16 %v4212
    %v4883 = vunpack.c.l.b16 %v4213
    %v4884 = vunpack.c.h.b16 %v4213
    %v4885 = vunpack.c.l.b16 %v4214
    %v4886 = vunpack.c.h.b16 %v4214
    %v4887 = vunpack.c.l.b16 %v4215
    %v4888 = vunpack.c.h.b16 %v4215
    %v4889 = vunpack.c.l.b16 %v4216
    %v4890 = vunpack.c.h.b16 %v4216
    %v4891 = vunpack.c.l.b16 %v4217
    %v4892 = vunpack.c.h.b16 %v4217
    %v4893 = vunpack.c.l.b16 %v4218
    %v4894 = vunpack.c.h.b16 %v4218
    %v4895 = vunpack.c.l.b16 %v4219
    %v4896 = vunpack.c.h.b16 %v4219
    %v4897 = vunpack.c.l.b16 %v4220
    %v4898 = vunpack.c.h.b16 %v4220
    %v4899 = vunpack.c.l.b16 %v4221
    %v4900 = vunpack.c.h.b16 %v4221
    %v4901 = vunpack.c.l.b16 %v4222
    %v4902 = vunpack.c.h.b16 %v4222
    %v4903 = vunpack.c.l.b16 %v4223
    %v4904 = vunpack.c.h.b16 %v4223
    %v4905 = vunpack.c.l.b16 %v4224
    %v4906 = vunpack.c.h.b16 %v4224
    %v4907 = vunpack.c.l.b16 %v4225
    %v4908 = vunpack.c.h.b16 %v4225
    %v4909 = vunpack.c.l.b16 %v4226
    %v4910 = vunpack.c.h.b16 %v4226
    %v4911 = vunpack.c.l.b16 %v4227
    %v4912 = vunpack.c.h.b16 %v4227
    %v4913 = vunpack.c.l.b16 %v4228
    %v4914 = vunpack.c.h.b16 %v4228
    %v4915 = vunpack.c.l.b16 %v4229
    %v4916 = vunpack.c.h.b16 %v4229
    %v4917 = vunpack.c.l.b16 %v4230
    %v4918 = vunpack.c.h.b16 %v4230
    %v4919 = vunpack.c.l.b16 %v4231
    %v4920 = vunpack.c.h.b16 %v4231
    %v4921 = vunpack.c.l.b16 %v4232
    %v4922 = vunpack.c.h.b16 %v4232
    %v4923 = vunpack.c.l.b16 %v4233
    %v4924 = vunpack.c.h.b16 %v4233
    %v4925 = vunpack.c.l.b16 %v4234
    %v4926 = vunpack.c.h.b16 %v4234
    %v4927 = vunpack.c.l.b16 %v4235
    %v4928 = vunpack.c.h.b16 %v4235
    %v4929 = vunpack.c.l.b16 %v4236
    %v4930 = vunpack.c.h.b16 %v4236
    %v4931 = vunpack.c.l.b16 %v4237
    %v4932 = vunpack.c.h.b16 %v4237
    %v4933 = vunpack.c.l.b16 %v4238
    %v4934 = vunpack.c.h.b16 %v4238
    %v4935 = vunpack.c.l.b16 %v4239
    %v4936 = vunpack.c.h.b16 %v4239
    %v4937 = vunpack.c.l.b16 %v4240
    %v4938 = vunpack.c.h.b16 %v4240
    %v4939 = vunpack.c.l.b16 %v4241
    %v4940 = vunpack.c.h.b16 %v4241
    %v4941 = vunpack.c.l.b16 %v4242
    %v4942 = vunpack.c.h.b16 %v4242
    %v4943 = vunpack.c.l.b16 %v4243
    %v4944 = vunpack.c.h.b16 %v4243
    %v4945 = vunpack.c.l.b16 %v4244
    %v4946 = vunpack.c.h.b16 %v4244
    %v4947 = vunpack.c.l.b16 %v4245
    %v4948 = vunpack.c.h.b16 %v4245
    %v4949 = vunpack.c.l.b16 %v4246
    %v4950 = vunpack.c.h.b16 %v4246
    %v4951 = vunpack.c.l.b16 %v4247
    %v4952 = vunpack.c.h.b16 %v4247
    %v4953 = vunpack.c.l.b16 %v4248
    %v4954 = vunpack.c.h.b16 %v4248
    %v4955 = vunpack.c.l.b16 %v4249
    %v4956 = vunpack.c.h.b16 %v4249
    %v4957 = vunpack.c.l.b16 %v4250
    %v4958 = vunpack.c.h.b16 %v4250
    %v4959 = vunpack.c.l.b16 %v4251
    %v4960 = vunpack.c.h.b16 %v4251
    %v4961 = vunpack.c.l.b16 %v4252
    %v4962 = vunpack.c.h.b16 %v4252
    %v4963 = vunpack.c.l.b16 %v4253
    %v4964 = vunpack.c.h.b16 %v4253
    %v4965 = vunpack.c.l.b16 %v4254
    %v4966 = vunpack.c.h.b16 %v4254
    %v4967 = vunpack.c.l.b16 %v4255
    %v4968 = vunpack.c.h.b16 %v4255
    %v4969 = vunpack.c.l.b16 %v4256
    %v4970 = vunpack.c.h.b16 %v4256
    %v4971 = vunpack.c.l.b16 %v4257
    %v4972 = vunpack.c.h.b16 %v4257
    %v4973 = vunpack.c.l.b16 %v4258
    %v4974 = vunpack.c.h.b16 %v4258
    %v4975 = vunpack.c.l.b16 %v4259
    %v4976 = vunpack.c.h.b16 %v4259
    %v4977 = vunpack.c.l.b16 %v4260
    %v4978 = vunpack.c.h.b16 %v4260
    %v4979 = vunpack.c.l.b16 %v4261
    %v4980 = vunpack.c.h.b16 %v4261
    %v4981 = vunpack.c.l.b16 %v4262
    %v4982 = vunpack.c.h.b16 %v4262
    %v4983 = vunpack.c.l.b16 %v4263
    %v4984 = vunpack.c.h.b16 %v4263
    %v4985 = vunpack.c.l.b16 %v4264
    %v4986 = vunpack.c.h.b16 %v4264
    %v4987 = vunpack.c.l.b16 %v4265
    %v4988 = vunpack.c.h.b16 %v4265
    %v4989 = vunpack.c.l.b16 %v4266
    %v4990 = vunpack.c.h.b16 %v4266
    %v4991 = vunpack.c.l.b16 %v4267
    %v4992 = vunpack.c.h.b16 %v4267
    %v4993 = vunpack.c.l.b16 %v4268
    %v4994 = vunpack.c.h.b16 %v4268
    %v4995 = vunpack.c.l.b16 %v4269
    %v4996 = vunpack.c.h.b16 %v4269
    %v4997 = vunpack.c.l.b16 %v4270
    %v4998 = vunpack.c.h.b16 %v4270
    %v4999 = vunpack.c.l.b16 %v4271
    %v5000 = vunpack.c.h.b16 %v4271
    %v5001 = vunpack.c.l.b16 %v4272
    %v5002 = vunpack.c.h.b16 %v4272
    %v5003 = vunpack.c.l.b16 %v4273
    %v5004 = vunpack.c.h.b16 %v4273
    %v5005 = vunpack.c.l.b16 %v4274
    %v5006 = vunpack.c.h.b16 %v4274
    %v5007 = vunpack.c.l.b16 %v4275
    %v5008 = vunpack.c.h.b16 %v4275
    %v5009 = vunpack.c.l.b16 %v4276
    %v5010 = vunpack.c.h.b16 %v4276
    %v5011 = vunpack.c.l.b16 %v4277
    %v5012 = vunpack.c.h.b16 %v4277
    %v5013 = vunpack.c.l.b16 %v4278
    %v5014 = vunpack.c.h.b16 %v4278
    %v5015 = vunpack.c.l.b16 %v4279
    %v5016 = vunpack.c.h.b16 %v4279
    %v5017 = vunpack.c.l.b16 %v4280
    %v5018 = vunpack.c.h.b16 %v4280
    %v5019 = vunpack.c.l.b16 %v4281
    %v5020 = vunpack.c.h.b16 %v4281
    %v5021 = vunpack.c.l.b16 %v4282
    %v5022 = vunpack.c.h.b16 %v4282
    %v5023 = vunpack.c.l.b16 %v4283
    %v5024 = vunpack.c.h.b16 %v4283
    %v5025 = vunpack.c.l.b16 %v4284
    %v5026 = vunpack.c.h.b16 %v4284
    %v5027 = vunpack.c.l.b16 %v4285
    %v5028 = vunpack.c.h.b16 %v4285
    %v5029 = vunpack.c.l.b16 %v4286
    %v5030 = vunpack.c.h.b16 %v4286
    %v5031 = vunpack.c.l.b16 %v4287
    %v5032 = vunpack.c.h.b16 %v4287
    %v5033 = vunpack.c.l.b16 %v4288
    %v5034 = vunpack.c.h.b16 %v4288
    %v5035 = vunpack.c.l.b16 %v4289
    %v5036 = vunpack.c.h.b16 %v4289
    %v5037 = vunpack.c.l.b16 %v4290
    %v5038 = vunpack.c.h.b16 %v4290
    %v5039 = vunpack.c.l.b16 %v4291
    %v5040 = vunpack.c.h.b16 %v4291
    %v5041 = vunpack.c.l.b16 %v4292
    %v5042 = vunpack.c.h.b16 %v4292
    %v5043 = vunpack.c.l.b16 %v4293
    %v5044 = vunpack.c.h.b16 %v4293
    %v5045 = vunpack.c.l.b16 %v4294
    %v5046 = vunpack.c.h.b16 %v4294
    %v5047 = vunpack.c.l.b16 %v4295
    %v5048 = vunpack.c.h.b16 %v4295
    %v5049 = vunpack.c.l.b16 %v4296
    %v5050 = vunpack.c.h.b16 %v4296
    %v5051 = vunpack.c.l.b16 %v4297
    %v5052 = vunpack.c.h.b16 %v4297
    %v5053 = vunpack.c.l.b16 %v4298
    %v5054 = vunpack.c.h.b16 %v4298
    %v5055 = vunpack.c.l.b16 %v4299
    %v5056 = vunpack.c.h.b16 %v4299
    %v5057 = vunpack.c.l.b16 %v4300
    %v5058 = vunpack.c.h.b16 %v4300
    %v5059 = vunpack.c.l.b16 %v4301
    %v5060 = vunpack.c.h.b16 %v4301
    %v5061 = vunpack.c.l.b16 %v4302
    %v5062 = vunpack.c.h.b16 %v4302
    %v5063 = vunpack.c.l.b16 %v4303
    %v5064 = vunpack.c.h.b16 %v4303
    %v5065 = vunpack.c.l.b16 %v4304
    %v5066 = vunpack.c.h.b16 %v4304
    %v5067 = vunpack.c.l.b16 %v4305
    %v5068 = vunpack.c.h.b16 %v4305
    %v5069 = vunpack.c.l.b16 %v4306
    %v5070 = vunpack.c.h.b16 %v4306
    %v5071 = vunpack.c.l.b16 %v4307
    %v5072 = vunpack.c.h.b16 %v4307
    %v5073 = vunpack.c.l.b16 %v4308
    %v5074 = vunpack.c.h.b16 %v4308
    %v5075 = vunpack.c.l.b16 %v4309
    %v5076 = vunpack.c.h.b16 %v4309
    %v5077 = vunpack.c.l.b16 %v4310
    %v5078 = vunpack.c.h.b16 %v4310
    %v5079 = vunpack.c.l.b16 %v4311
    %v5080 = vunpack.c.h.b16 %v4311
    %v5081 = vunpack.c.l.b16 %v4312
    %v5082 = vunpack.c.h.b16 %v4312
    %v5083 = vunpack.c.l.b16 %v4313
    %v5084 = vunpack.c.h.b16 %v4313
    %v5085 = vunpack.c.l.b16 %v4314
    %v5086 = vunpack.c.h.b16 %v4314
    %v5087 = vunpack.c.l.b16 %v4315
    %v5088 = vunpack.c.h.b16 %v4315
    %v5089 = vunpack.c.l.b16 %v4316
    %v5090 = vunpack.c.h.b16 %v4316
    %v5091 = vunpack.c.l.b16 %v4317
    %v5092 = vunpack.c.h.b16 %v4317
    %v5093 = vunpack.c.l.b16 %v4318
    %v5094 = vunpack.c.h.b16 %v4318
    %v5095 = vunpack.c.l.b16 %v4319
    %v5096 = vunpack.c.h.b16 %v4319
    %v5097 = vunpack.c.l.b16 %v4320
    %v5098 = vunpack.c.h.b16 %v4320
    %v5099 = vunpack.c.l.b16 %v4321
    %v5100 = vunpack.c.h.b16 %v4321
    %v5101 = vunpack.c.l.b16 %v4322
    %v5102 = vunpack.c.h.b16 %v4322
    %v5103 = vunpack.c.l.b16 %v4323
    %v5104 = vunpack.c.h.b16 %v4323
    %v5105 = vunpack.c.l.b16 %v4324
    %v5106 = vunpack.c.h.b16 %v4324
    %v5107 = vunpack.c.l.b16 %v4325
    %v5108 = vunpack.c.h.b16 %v4325
    %v5109 = vunpack.c.l.b16 %v4326
    %v5110 = vunpack.c.h.b16 %v4326
    %v5111 = vunpack.c.l.b16 %v4327
    %v5112 = vunpack.c.h.b16 %v4327
    %v5113 = vunpack.c.l.b16 %v4328
    %v5114 = vunpack.c.h.b16 %v4328
    %v5115 = vunpack.c.l.b16 %v4329
    %v5116 = vunpack.c.h.b16 %v4329
    %v5117 = vunpack.c.l.b16 %v4330
    %v5118 = vunpack.c.h.b16 %v4330
    %v5119 = vunpack.c.l.b16 %v4331
    %v5120 = vunpack.c.h.b16 %v4331
    %v5121 = vunpack.c.l.b16 %v4332
    %v5122 = vunpack.c.h.b16 %v4332
    %v5123 = vpack.c.b16 %v4615, %v4611
    %v5124 = vpack.c.b16 %v4616, %v4612
    %v5125 = vpack.c.b16 %v4617, %v4613
    %v5126 = vpack.c.b16 %v4618, %v4614
    %v5127 = vpack.c.b16 %v4623, %v4619
    %v5128 = vpack.c.b16 %v4624, %v4620
    %v5129 = vpack.c.b16 %v4625, %v4621
    %v5130 = vpack.c.b16 %v4626, %v4622
    %v5131 = vpack.c.b16 %v4631, %v4627
    %v5132 = vpack.c.b16 %v4632, %v4628
    %v5133 = vpack.c.b16 %v4633, %v4629
    %v5134 = vpack.c.b16 %v4634, %v4630
    %v5135 = vpack.c.b16 %v4639, %v4635
    %v5136 = vpack.c.b16 %v4640, %v4636
    %v5137 = vpack.c.b16 %v4641, %v4637
    %v5138 = vpack.c.b16 %v4642, %v4638
    %v5139 = vpack.c.b16 %v4647, %v4643
    %v5140 = vpack.c.b16 %v4648, %v4644
    %v5141 = vpack.c.b16 %v4649, %v4645
    %v5142 = vpack.c.b16 %v4650, %v4646
    %v5143 = vpack.c.b16 %v4655, %v4651
    %v5144 = vpack.c.b16 %v4656, %v4652
    %v5145 = vpack.c.b16 %v4657, %v4653
    %v5146 = vpack.c.b16 %v4658, %v4654
    %v5147 = vpack.c.b16 %v4663, %v4659
    %v5148 = vpack.c.b16 %v4664, %v4660
    %v5149 = vpack.c.b16 %v4665, %v4661
    %v5150 = vpack.c.b16 %v4666, %v4662
    %v5151 = vpack.c.b16 %v4671, %v4667
    %v5152 = vpack.c.b16 %v4672, %v4668
    %v5153 = vpack.c.b16 %v4673, %v4669
    %v5154 = vpack.c.b16 %v4674, %v4670
    %v5155 = vpack.c.b16 %v4679, %v4675
    %v5156 = vpack.c.b16 %v4680, %v4676
    %v5157 = vpack.c.b16 %v4681, %v4677
    %v5158 = vpack.c.b16 %v4682, %v4678
    %v5159 = vpack.c.b16 %v4687, %v4683
    %v5160 = vpack.c.b16 %v4688, %v4684
    %v5161 = vpack.c.b16 %v4689, %v4685
    %v5162 = vpack.c.b16 %v4690, %v4686
    %v5163 = vpack.c.b16 %v4695, %v4691
    %v5164 = vpack.c.b16 %v4696, %v4692
    %v5165 = vpack.c.b16 %v4697, %v4693
    %v5166 = vpack.c.b16 %v4698, %v4694
    %v5167 = vpack.c.b16 %v4703, %v4699
    %v5168 = vpack.c.b16 %v4704, %v4700
    %v5169 = vpack.c.b16 %v4705, %v4701
    %v5170 = vpack.c.b16 %v4706, %v4702
    %v5171 = vpack.c.b16 %v4711, %v4707
    %v5172 = vpack.c.b16 %v4712, %v4708
    %v5173 = vpack.c.b16 %v4713, %v4709
    %v5174 = vpack.c.b16 %v4714, %v4710
    %v5175 = vpack.c.b16 %v4719, %v4715
    %v5176 = vpack.c.b16 %v4720, %v4716
    %v5177 = vpack.c.b16 %v4721, %v4717
    %v5178 = vpack.c.b16 %v4722, %v4718
    %v5179 = vpack.c.b16 %v4727, %v4723
    %v5180 = vpack.c.b16 %v4728, %v4724
    %v5181 = vpack.c.b16 %v4729, %v4725
    %v5182 = vpack.c.b16 %v4730, %v4726
    %v5183 = vpack.c.b16 %v4735, %v4731
    %v5184 = vpack.c.b16 %v4736, %v4732
    %v5185 = vpack.c.b16 %v4737, %v4733
    %v5186 = vpack.c.b16 %v4738, %v4734
    %v5187 = vpack.c.b16 %v4743, %v4739
    %v5188 = vpack.c.b16 %v4744, %v4740
    %v5189 = vpack.c.b16 %v4745, %v4741
    %v5190 = vpack.c.b16 %v4746, %v4742
    %v5191 = vpack.c.b16 %v4751, %v4747
    %v5192 = vpack.c.b16 %v4752, %v4748
    %v5193 = vpack.c.b16 %v4753, %v4749
    %v5194 = vpack.c.b16 %v4754, %v4750
    %v5195 = vpack.c.b16 %v4759, %v4755
    %v5196 = vpack.c.b16 %v4760, %v4756
    %v5197 = vpack.c.b16 %v4761, %v4757
    %v5198 = vpack.c.b16 %v4762, %v4758
    %v5199 = vpack.c.b16 %v4767, %v4763
    %v5200 = vpack.c.b16 %v4768, %v4764
    %v5201 = vpack.c.b16 %v4769, %v4765
    %v5202 = vpack.c.b16 %v4770, %v4766
    %v5203 = vpack.c.b16 %v4775, %v4771
    %v5204 = vpack.c.b16 %v4776, %v4772
    %v5205 = vpack.c.b16 %v4777, %v4773
    %v5206 = vpack.c.b16 %v4778, %v4774
    %v5207 = vpack.c.b16 %v4783, %v4779
    %v5208 = vpack.c.b16 %v4784, %v4780
    %v5209 = vpack.c.b16 %v4785, %v4781
    %v5210 = vpack.c.b16 %v4786, %v4782
    %v5211 = vpack.c.b16 %v4791, %v4787
    %v5212 = vpack.c.b16 %v4792, %v4788
    %v5213 = vpack.c.b16 %v4793, %v4789
    %v5214 = vpack.c.b16 %v4794, %v4790
    %v5215 = vpack.c.b16 %v4799, %v4795
    %v5216 = vpack.c.b16 %v4800, %v4796
    %v5217 = vpack.c.b16 %v4801, %v4797
    %v5218 = vpack.c.b16 %v4802, %v4798
    %v5219 = vpack.c.b16 %v4807, %v4803
    %v5220 = vpack.c.b16 %v4808, %v4804
    %v5221 = vpack.c.b16 %v4809, %v4805
    %v5222 = vpack.c.b16 %v4810, %v4806
    %v5223 = vpack.c.b16 %v4815, %v4811
    %v5224 = vpack.c.b16 %v4816, %v4812
    %v5225 = vpack.c.b16 %v4817, %v4813
    %v5226 = vpack.c.b16 %v4818, %v4814
    %v5227 = vpack.c.b16 %v4823, %v4819
    %v5228 = vpack.c.b16 %v4824, %v4820
    %v5229 = vpack.c.b16 %v4825, %v4821
    %v5230 = vpack.c.b16 %v4826, %v4822
    %v5231 = vpack.c.b16 %v4831, %v4827
    %v5232 = vpack.c.b16 %v4832, %v4828
    %v5233 = vpack.c.b16 %v4833, %v4829
    %v5234 = vpack.c.b16 %v4834, %v4830
    %v5235 = vpack.c.b16 %v4839, %v4835
    %v5236 = vpack.c.b16 %v4840, %v4836
    %v5237 = vpack.c.b16 %v4841, %v4837
    %v5238 = vpack.c.b16 %v4842, %v4838
    %v5239 = vpack.c.b16 %v4847, %v4843
    %v5240 = vpack.c.b16 %v4848, %v4844
    %v5241 = vpack.c.b16 %v4849, %v4845
    %v5242 = vpack.c.b16 %v4850, %v4846
    %v5243 = vpack.c.b16 %v4855, %v4851
    %v5244 = vpack.c.b16 %v4856, %v4852
    %v5245 = vpack.c.b16 %v4857, %v4853
    %v5246 = vpack.c.b16 %v4858, %v4854
    %v5247 = vpack.c.b16 %v4863, %v4859
    %v5248 = vpack.c.b16 %v4864, %v4860
    %v5249 = vpack.c.b16 %v4865, %v4861
    %v5250 = vpack.c.b16 %v4866, %v4862
    %v5251 = vpack.c.b16 %v4871, %v4867
    %v5252 = vpack.c.b16 %v4872, %v4868
    %v5253 = vpack.c.b16 %v4873, %v4869
    %v5254 = vpack.c.b16 %v4874, %v4870
    %v5255 = vpack.c.b16 %v4879, %v4875
    %v5256 = vpack.c.b16 %v4880, %v4876
    %v5257 = vpack.c.b16 %v4881, %v4877
    %v5258 = vpack.c.b16 %v4882, %v4878
    %v5259 = vpack.c.b16 %v4887, %v4883
    %v5260 = vpack.c.b16 %v4888, %v4884
    %v5261 = vpack.c.b16 %v4889, %v4885
    %v5262 = vpack.c.b16 %v4890, %v4886
    %v5263 = vpack.c.b16 %v4895, %v4891
    %v5264 = vpack.c.b16 %v4896, %v4892
    %v5265 = vpack.c.b16 %v4897, %v4893
    %v5266 = vpack.c.b16 %v4898, %v4894
    %v5267 = vpack.c.b16 %v4903, %v4899
    %v5268 = vpack.c.b16 %v4904, %v4900
    %v5269 = vpack.c.b16 %v4905, %v4901
    %v5270 = vpack.c.b16 %v4906, %v4902
    %v5271 = vpack.c.b16 %v4911, %v4907
    %v5272 = vpack.c.b16 %v4912, %v4908
    %v5273 = vpack.c.b16 %v4913, %v4909
    %v5274 = vpack.c.b16 %v4914, %v4910
    %v5275 = vpack.c.b16 %v4919, %v4915
    %v5276 = vpack.c.b16 %v4920, %v4916
    %v5277 = vpack.c.b16 %v4921, %v4917
    %v5278 = vpack.c.b16 %v4922, %v4918
    %v5279 = vpack.c.b16 %v4927, %v4923
    %v5280 = vpack.c.b16 %v4928, %v4924
    %v5281 = vpack.c.b16 %v4929, %v4925
    %v5282 = vpack.c.b16 %v4930, %v4926
    %v5283 = vpack.c.b16 %v4935, %v4931
    %v5284 = vpack.c.b16 %v4936, %v4932
    %v5285 = vpack.c.b16 %v4937, %v4933
    %v5286 = vpack.c.b16 %v4938, %v4934
    %v5287 = vpack.c.b16 %v4943, %v4939
    %v5288 = vpack.c.b16 %v4944, %v4940
    %v5289 = vpack.c.b16 %v4945, %v4941
    %v5290 = vpack.c.b16 %v4946, %v4942
    %v5291 = vpack.c.b16 %v4951, %v4947
    %v5292 = vpack.c.b16 %v4952, %v4948
    %v5293 = vpack.c.b16 %v4953, %v4949
    %v5294 = vpack.c.b16 %v4954, %v4950
    %v5295 = vpack.c.b16 %v4959, %v4955
    %v5296 = vpack.c.b16 %v4960, %v4956
    %v5297 = vpack.c.b16 %v4961, %v4957
    %v5298 = vpack.c.b16 %v4962, %v4958
    %v5299 = vpack.c.b16 %v4967, %v4963
    %v5300 = vpack.c.b16 %v4968, %v4964
    %v5301 = vpack.c.b16 %v4969, %v4965
    %v5302 = vpack.c.b16 %v4970, %v4966
    %v5303 = vpack.c.b16 %v4975, %v4971
    %v5304 = vpack.c.b16 %v4976, %v4972
    %v5305 = vpack.c.b16 %v4977, %v4973
    %v5306 = vpack.c.b16 %v4978, %v4974
    %v5307 = vpack.c.b16 %v4983, %v4979
    %v5308 = vpack.c.b16 %v4984, %v4980
    %v5309 = vpack.c.b16 %v4985, %v4981
    %v5310 = vpack.c.b16 %v4986, %v4982
    %v5311 = vpack.c.b16 %v4991, %v4987
    %v5312 = vpack.c.b16 %v4992, %v4988
    %v5313 = vpack.c.b16 %v4993, %v4989
    %v5314 = vpack.c.b16 %v4994, %v4990
    %v5315 = vpack.c.b16 %v4999, %v4995
    %v5316 = vpack.c.b16 %v5000, %v4996
    %v5317 = vpack.c.b16 %v5001, %v4997
    %v5318 = vpack.c.b16 %v5002, %v4998
    %v5319 = vpack.c.b16 %v5007, %v5003
    %v5320 = vpack.c.b16 %v5008, %v5004
    %v5321 = vpack.c.b16 %v5009, %v5005
    %v5322 = vpack.c.b16 %v5010, %v5006
    %v5323 = vpack.c.b16 %v5015, %v5011
    %v5324 = vpack.c.b16 %v5016, %v5012
    %v5325 = vpack.c.b16 %v5017, %v5013
    %v5326 = vpack.c.b16 %v5018, %v5014
    %v5327 = vpack.c.b16 %v5023, %v5019
    %v5328 = vpack.c.b16 %v5024, %v5020
    %v5329 = vpack.c.b16 %v5025, %v5021
    %v5330 = vpack.c.b16 %v5026, %v5022
    %v5331 = vpack.c.b16 %v5031, %v5027
    %v5332 = vpack.c.b16 %v5032, %v5028
    %v5333 = vpack.c.b16 %v5033, %v5029
    %v5334 = vpack.c.b16 %v5034, %v5030
    %v5335 = vpack.c.b16 %v5039, %v5035
    %v5336 = vpack.c.b16 %v5040, %v5036
    %v5337 = vpack.c.b16 %v5041, %v5037
    %v5338 = vpack.c.b16 %v5042, %v5038
    %v5339 = vpack.c.b16 %v5047, %v5043
    %v5340 = vpack.c.b16 %v5048, %v5044
    %v5341 = vpack.c.b16 %v5049, %v5045
    %v5342 = vpack.c.b16 %v5050, %v5046
    %v5343 = vpack.c.b16 %v5055, %v5051
    %v5344 = vpack.c.b16 %v5056, %v5052
    %v5345 = vpack.c.b16 %v5057, %v5053
    %v5346 = vpack.c.b16 %v5058, %v5054
    %v5347 = vpack.c.b16 %v5063, %v5059
    %v5348 = vpack.c.b16 %v5064, %v5060
    %v5349 = vpack.c.b16 %v5065, %v5061
    %v5350 = vpack.c.b16 %v5066, %v5062
    %v5351 = vpack.c.b16 %v5071, %v5067
    %v5352 = vpack.c.b16 %v5072, %v5068
    %v5353 = vpack.c.b16 %v5073, %v5069
    %v5354 = vpack.c.b16 %v5074, %v5070
    %v5355 = vpack.c.b16 %v5079, %v5075
    %v5356 = vpack.c.b16 %v5080, %v5076
    %v5357 = vpack.c.b16 %v5081, %v5077
    %v5358 = vpack.c.b16 %v5082, %v5078
    %v5359 = vpack.c.b16 %v5087, %v5083
    %v5360 = vpack.c.b16 %v5088, %v5084
    %v5361 = vpack.c.b16 %v5089, %v5085
    %v5362 = vpack.c.b16 %v5090, %v5086
    %v5363 = vpack.c.b16 %v5095, %v5091
    %v5364 = vpack.c.b16 %v5096, %v5092
    %v5365 = vpack.c.b16 %v5097, %v5093
    %v5366 = vpack.c.b16 %v5098, %v5094
    %v5367 = vpack.c.b16 %v5103, %v5099
    %v5368 = vpack.c.b16 %v5104, %v5100
    %v5369 = vpack.c.b16 %v5105, %v5101
    %v5370 = vpack.c.b16 %v5106, %v5102
    %v5371 = vpack.c.b16 %v5111, %v5107
    %v5372 = vpack.c.b16 %v5112, %v5108
    %v5373 = vpack.c.b16 %v5113, %v5109
    %v5374 = vpack.c.b16 %v5114, %v5110
    %v5375 = vpack.c.b16 %v5119, %v5115
    %v5376 = vpack.c.b16 %v5120, %v5116
    %v5377 = vpack.c.b16 %v5121, %v5117
    %v5378 = vpack.c.b16 %v5122, %v5118
    %5635 = vmatprep.subr.bf16.mxu0 %v5124
    %5636 = vmatpush1.bf16.msra.mxu0 %v5123
    %5637 = vmatprep.subr.bf16.mxu0 %v5128
    %5638 = vmatpush1.bf16.msra.mxu0 %v5127
    %5639 = vmatprep.subr.bf16.mxu0 %v5132
    %5640 = vmatpush1.bf16.msra.mxu0 %v5131
    %5641 = vmatprep.subr.bf16.mxu0 %v5136
    %5642 = vmatpush1.bf16.msra.mxu0 %v5135
    %5643 = vmatprep.subr.bf16.mxu0 %v5140
    %5644 = vmatpush1.bf16.msra.mxu0 %v5139
    %5645 = vmatprep.subr.bf16.mxu0 %v5144
    %5646 = vmatpush1.bf16.msra.mxu0 %v5143
    %5647 = vmatprep.subr.bf16.mxu0 %v5148
    %5648 = vmatpush1.bf16.msra.mxu0 %v5147
    %5649 = vmatprep.subr.bf16.mxu0 %v5152
    %5650 = vmatpush1.bf16.msra.mxu0 %v5151
    %5651 = vmatprep.subr.bf16.mxu0 %v5156
    %5652 = vmatpush1.bf16.msra.mxu0 %v5155
    %5653 = vmatprep.subr.bf16.mxu0 %v5160
    %5654 = vmatpush1.bf16.msra.mxu0 %v5159
    %5655 = vmatprep.subr.bf16.mxu0 %v5164
    %5656 = vmatpush1.bf16.msra.mxu0 %v5163
    %5657 = vmatprep.subr.bf16.mxu0 %v5168
    %5658 = vmatpush1.bf16.msra.mxu0 %v5167
    %5659 = vmatprep.subr.bf16.mxu0 %v5172
    %5660 = vmatpush1.bf16.msra.mxu0 %v5171
    %5661 = vmatprep.subr.bf16.mxu0 %v5176
    %5662 = vmatpush1.bf16.msra.mxu0 %v5175
    %5663 = vmatprep.subr.bf16.mxu0 %v5180
    %5664 = vmatpush1.bf16.msra.mxu0 %v5179
    %5665 = vmatprep.subr.bf16.mxu0 %v5184
    %5666 = vmatpush1.bf16.msra.mxu0 %v5183
    %5667 = vmatprep.mubr.bf16.mxu0 %v4070
    %5668 = vmatmul.mubr.bf16.gmra.mrb[0].mxu0 %v4069
    %v5669 = vpop.f32.mrb[0].mxu0
    %v5670 = vadd.f32 %v4338, %v5669
    %v5671 = vpop.f32.mrb[0].mxu0
    %v5672 = vadd.f32 %v4342, %v5671
    %v5673 = vpop.f32.mrb[0].mxu0
    %v5674 = vpop.f32.mrb[0].mxu0
    %5675 = vdwg.mxu0
    %5676 = vmatprep.subr.bf16.mxu0 %v5188
    %5677 = vmatpush1.bf16.msra.mxu0 %v5187
    %5678 = vmatprep.subr.bf16.mxu0 %v5192
    %5679 = vmatpush1.bf16.msra.mxu0 %v5191
    %5680 = vmatprep.subr.bf16.mxu0 %v5196
    %5681 = vmatpush1.bf16.msra.mxu0 %v5195
    %5682 = vmatprep.subr.bf16.mxu0 %v5200
    %5683 = vmatpush1.bf16.msra.mxu0 %v5199
    %5684 = vmatprep.subr.bf16.mxu0 %v5204
    %5685 = vmatpush1.bf16.msra.mxu0 %v5203
    %5686 = vmatprep.subr.bf16.mxu0 %v5208
    %5687 = vmatpush1.bf16.msra.mxu0 %v5207
    %5688 = vmatprep.subr.bf16.mxu0 %v5212
    %5689 = vmatpush1.bf16.msra.mxu0 %v5211
    %5690 = vmatprep.subr.bf16.mxu0 %v5216
    %5691 = vmatpush1.bf16.msra.mxu0 %v5215
    %5692 = vmatprep.subr.bf16.mxu0 %v5220
    %5693 = vmatpush1.bf16.msra.mxu0 %v5219
    %5694 = vmatprep.subr.bf16.mxu0 %v5224
    %5695 = vmatpush1.bf16.msra.mxu0 %v5223
    %5696 = vmatprep.subr.bf16.mxu0 %v5228
    %5697 = vmatpush1.bf16.msra.mxu0 %v5227
    %5698 = vmatprep.subr.bf16.mxu0 %v5232
    %5699 = vmatpush1.bf16.msra.mxu0 %v5231
    %5700 = vmatprep.subr.bf16.mxu0 %v5236
    %5701 = vmatpush1.bf16.msra.mxu0 %v5235
    %5702 = vmatprep.subr.bf16.mxu0 %v5240
    %5703 = vmatpush1.bf16.msra.mxu0 %v5239
    %5704 = vmatprep.subr.bf16.mxu0 %v5244
    %5705 = vmatpush1.bf16.msra.mxu0 %v5243
    %5706 = vmatprep.subr.bf16.mxu0 %v5248
    %5707 = vmatpush1.bf16.msra.mxu0 %v5247
    %5708 = vmatprep.mubr.bf16.mxu0 %v4072
    %5709 = vmatmul.mubr.bf16.gmra.mrb[0].mxu0 %v4071
    %v5710 = vpop.f32.mrb[0].mxu0
    %v5711 = vadd.f32 %v5670, %v5710
    %v5712 = vpop.f32.mrb[0].mxu0
    %v5713 = vadd.f32 %v5672, %v5712
    %v5714 = vpop.f32.mrb[0].mxu0
    %v5715 = vpop.f32.mrb[0].mxu0
    %5716 = vdwg.mxu0
    %5717 = vmatprep.subr.bf16.mxu0 %v5252
    %5718 = vmatpush1.bf16.msra.mxu0 %v5251
    %5719 = vmatprep.subr.bf16.mxu0 %v5256
    %5720 = vmatpush1.bf16.msra.mxu0 %v5255
    %5721 = vmatprep.subr.bf16.mxu0 %v5260
    %5722 = vmatpush1.bf16.msra.mxu0 %v5259
    %5723 = vmatprep.subr.bf16.mxu0 %v5264
    %5724 = vmatpush1.bf16.msra.mxu0 %v5263
    %5725 = vmatprep.subr.bf16.mxu0 %v5268
    %5726 = vmatpush1.bf16.msra.mxu0 %v5267
    %5727 = vmatprep.subr.bf16.mxu0 %v5272
    %5728 = vmatpush1.bf16.msra.mxu0 %v5271
    %5729 = vmatprep.subr.bf16.mxu0 %v5276
    %5730 = vmatpush1.bf16.msra.mxu0 %v5275
    %5731 = vmatprep.subr.bf16.mxu0 %v5280
    %5732 = vmatpush1.bf16.msra.mxu0 %v5279
    %5733 = vmatprep.subr.bf16.mxu0 %v5284
    %5734 = vmatpush1.bf16.msra.mxu0 %v5283
    %5735 = vmatprep.subr.bf16.mxu0 %v5288
    %5736 = vmatpush1.bf16.msra.mxu0 %v5287
    %5737 = vmatprep.subr.bf16.mxu0 %v5292
    %5738 = vmatpush1.bf16.msra.mxu0 %v5291
    %5739 = vmatprep.subr.bf16.mxu0 %v5296
    %5740 = vmatpush1.bf16.msra.mxu0 %v5295
    %5741 = vmatprep.subr.bf16.mxu0 %v5300
    %5742 = vmatpush1.bf16.msra.mxu0 %v5299
    %5743 = vmatprep.subr.bf16.mxu0 %v5304
    %5744 = vmatpush1.bf16.msra.mxu0 %v5303
    %5745 = vmatprep.subr.bf16.mxu0 %v5308
    %5746 = vmatpush1.bf16.msra.mxu0 %v5307
    %5747 = vmatprep.subr.bf16.mxu0 %v5312
    %5748 = vmatpush1.bf16.msra.mxu0 %v5311
    %5749 = vmatprep.mubr.bf16.mxu0 %v4074
    %5750 = vmatmul.mubr.bf16.gmra.mrb[0].mxu0 %v4073
    %v5751 = vpop.f32.mrb[0].mxu0
    %v5752 = vadd.f32 %v5711, %v5751
    %v5753 = vpop.f32.mrb[0].mxu0
    %v5754 = vadd.f32 %v5713, %v5753
    %v5755 = vpop.f32.mrb[0].mxu0
    %v5756 = vpop.f32.mrb[0].mxu0
    %5757 = vdwg.mxu0
    %5758 = vmatprep.subr.bf16.mxu0 %v5316
    %5759 = vmatpush1.bf16.msra.mxu0 %v5315
    %5760 = vmatprep.subr.bf16.mxu0 %v5320
    %5761 = vmatpush1.bf16.msra.mxu0 %v5319
    %5762 = vmatprep.subr.bf16.mxu0 %v5324
    %5763 = vmatpush1.bf16.msra.mxu0 %v5323
    %5764 = vmatprep.subr.bf16.mxu0 %v5328
    %5765 = vmatpush1.bf16.msra.mxu0 %v5327
    %5766 = vmatprep.subr.bf16.mxu0 %v5332
    %5767 = vmatpush1.bf16.msra.mxu0 %v5331
    %5768 = vmatprep.subr.bf16.mxu0 %v5336
    %5769 = vmatpush1.bf16.msra.mxu0 %v5335
    %5770 = vmatprep.subr.bf16.mxu0 %v5340
    %5771 = vmatpush1.bf16.msra.mxu0 %v5339
    %5772 = vmatprep.subr.bf16.mxu0 %v5344
    %5773 = vmatpush1.bf16.msra.mxu0 %v5343
    %5774 = vmatprep.subr.bf16.mxu0 %v5348
    %5775 = vmatpush1.bf16.msra.mxu0 %v5347
    %5776 = vmatprep.subr.bf16.mxu0 %v5352
    %5777 = vmatpush1.bf16.msra.mxu0 %v5351
    %5778 = vmatprep.subr.bf16.mxu0 %v5356
    %5779 = vmatpush1.bf16.msra.mxu0 %v5355
    %5780 = vmatprep.subr.bf16.mxu0 %v5360
    %5781 = vmatpush1.bf16.msra.mxu0 %v5359
    %5782 = vmatprep.subr.bf16.mxu0 %v5364
    %5783 = vmatpush1.bf16.msra.mxu0 %v5363
    %5784 = vmatprep.subr.bf16.mxu0 %v5368
    %5785 = vmatpush1.bf16.msra.mxu0 %v5367
    %5786 = vmatprep.subr.bf16.mxu0 %v5372
    %5787 = vmatpush1.bf16.msra.mxu0 %v5371
    %5788 = vmatprep.subr.bf16.mxu0 %v5376
    %5789 = vmatpush1.bf16.msra.mxu0 %v5375
    %5790 = vmatprep.mubr.bf16.mxu0 %v4076
    %5791 = vmatmul.mubr.bf16.gmra.mrb[0].mxu0 %v4075
    %v5792 = vpop.f32.mrb[0].mxu0
    %v5793 = vadd.f32 %v5752, %v5792
    %v5794 = vpop.f32.mrb[0].mxu0
    %v5795 = vadd.f32 %v5754, %v5794
    %v5796 = vpop.f32.mrb[0].mxu0
    %v5797 = vpop.f32.mrb[0].mxu0
    %5798 = vdwg.mxu0
    %5799 = vmatprep.subr.bf16.mxu0 %v5126
    %5800 = vmatpush1.bf16.msra.mxu0 %v5125
    %5801 = vmatprep.subr.bf16.mxu0 %v5130
    %5802 = vmatpush1.bf16.msra.mxu0 %v5129
    %5803 = vmatprep.subr.bf16.mxu0 %v5134
    %5804 = vmatpush1.bf16.msra.mxu0 %v5133
    %5805 = vmatprep.subr.bf16.mxu0 %v5138
    %5806 = vmatpush1.bf16.msra.mxu0 %v5137
    %5807 = vmatprep.subr.bf16.mxu0 %v5142
    %5808 = vmatpush1.bf16.msra.mxu0 %v5141
    %5809 = vmatprep.subr.bf16.mxu0 %v5146
    %5810 = vmatpush1.bf16.msra.mxu0 %v5145
    %5811 = vmatprep.subr.bf16.mxu0 %v5150
    %5812 = vmatpush1.bf16.msra.mxu0 %v5149
    %5813 = vmatprep.subr.bf16.mxu0 %v5154
    %5814 = vmatpush1.bf16.msra.mxu0 %v5153
    %5815 = vmatprep.subr.bf16.mxu0 %v5158
    %5816 = vmatpush1.bf16.msra.mxu0 %v5157
    %5817 = vmatprep.subr.bf16.mxu0 %v5162
    %5818 = vmatpush1.bf16.msra.mxu0 %v5161
    %5819 = vmatprep.subr.bf16.mxu0 %v5166
    %5820 = vmatpush1.bf16.msra.mxu0 %v5165
    %5821 = vmatprep.subr.bf16.mxu0 %v5170
    %5822 = vmatpush1.bf16.msra.mxu0 %v5169
    %5823 = vmatprep.subr.bf16.mxu0 %v5174
    %5824 = vmatpush1.bf16.msra.mxu0 %v5173
    %5825 = vmatprep.subr.bf16.mxu0 %v5178
    %5826 = vmatpush1.bf16.msra.mxu0 %v5177
    %5827 = vmatprep.subr.bf16.mxu0 %v5182
    %5828 = vmatpush1.bf16.msra.mxu0 %v5181
    %5829 = vmatprep.subr.bf16.mxu0 %v5186
    %5830 = vmatpush1.bf16.msra.mxu0 %v5185
    %5831 = vmatprep.mubr.bf16.mxu0 %v4070
    %5832 = vmatmul.mubr.bf16.gmra.mrb[0].mxu0 %v4069
    %v5833 = vpop.f32.mrb[0].mxu0
    %v5834 = vadd.f32 %v4346, %v5833
    %v5835 = vpop.f32.mrb[0].mxu0
    %v5836 = vadd.f32 %v4350, %v5835
    %v5837 = vpop.f32.mrb[0].mxu0
    %v5838 = vpop.f32.mrb[0].mxu0
    %5839 = vdwg.mxu0
    %5840 = vmatprep.subr.bf16.mxu0 %v5190
    %5841 = vmatpush1.bf16.msra.mxu0 %v5189
    %5842 = vmatprep.subr.bf16.mxu0 %v5194
    %5843 = vmatpush1.bf16.msra.mxu0 %v5193
    %5844 = vmatprep.subr.bf16.mxu0 %v5198
    %5845 = vmatpush1.bf16.msra.mxu0 %v5197
    %5846 = vmatprep.subr.bf16.mxu0 %v5202
    %5847 = vmatpush1.bf16.msra.mxu0 %v5201
    %5848 = vmatprep.subr.bf16.mxu0 %v5206
    %5849 = vmatpush1.bf16.msra.mxu0 %v5205
    %5850 = vmatprep.subr.bf16.mxu0 %v5210
    %5851 = vmatpush1.bf16.msra.mxu0 %v5209
    %5852 = vmatprep.subr.bf16.mxu0 %v5214
    %5853 = vmatpush1.bf16.msra.mxu0 %v5213
    %5854 = vmatprep.subr.bf16.mxu0 %v5218
    %5855 = vmatpush1.bf16.msra.mxu0 %v5217
    %5856 = vmatprep.subr.bf16.mxu0 %v5222
    %5857 = vmatpush1.bf16.msra.mxu0 %v5221
    %5858 = vmatprep.subr.bf16.mxu0 %v5226
    %5859 = vmatpush1.bf16.msra.mxu0 %v5225
    %5860 = vmatprep.subr.bf16.mxu0 %v5230
    %5861 = vmatpush1.bf16.msra.mxu0 %v5229
    %5862 = vmatprep.subr.bf16.mxu0 %v5234
    %5863 = vmatpush1.bf16.msra.mxu0 %v5233
    %5864 = vmatprep.subr.bf16.mxu0 %v5238
    %5865 = vmatpush1.bf16.msra.mxu0 %v5237
    %5866 = vmatprep.subr.bf16.mxu0 %v5242
    %5867 = vmatpush1.bf16.msra.mxu0 %v5241
    %5868 = vmatprep.subr.bf16.mxu0 %v5246
    %5869 = vmatpush1.bf16.msra.mxu0 %v5245
    %5870 = vmatprep.subr.bf16.mxu0 %v5250
    %5871 = vmatpush1.bf16.msra.mxu0 %v5249
    %5872 = vmatprep.mubr.bf16.mxu0 %v4072
    %5873 = vmatmul.mubr.bf16.gmra.mrb[0].mxu0 %v4071
    %v5874 = vpop.f32.mrb[0].mxu0
    %v5875 = vadd.f32 %v5834, %v5874
    %v5876 = vpop.f32.mrb[0].mxu0
    %v5877 = vadd.f32 %v5836, %v5876
    %v5878 = vpop.f32.mrb[0].mxu0
    %v5879 = vpop.f32.mrb[0].mxu0
    %5880 = vdwg.mxu0
    %5881 = vmatprep.subr.bf16.mxu0 %v5254
    %5882 = vmatpush1.bf16.msra.mxu0 %v5253
    %5883 = vmatprep.subr.bf16.mxu0 %v5258
    %5884 = vmatpush1.bf16.msra.mxu0 %v5257
    %5885 = vmatprep.subr.bf16.mxu0 %v5262
    %5886 = vmatpush1.bf16.msra.mxu0 %v5261
    %5887 = vmatprep.subr.bf16.mxu0 %v5266
    %5888 = vmatpush1.bf16.msra.mxu0 %v5265
    %5889 = vmatprep.subr.bf16.mxu0 %v5270
    %5890 = vmatpush1.bf16.msra.mxu0 %v5269
    %5891 = vmatprep.subr.bf16.mxu0 %v5274
    %5892 = vmatpush1.bf16.msra.mxu0 %v5273
    %5893 = vmatprep.subr.bf16.mxu0 %v5278
    %5894 = vmatpush1.bf16.msra.mxu0 %v5277
    %5895 = vmatprep.subr.bf16.mxu0 %v5282
    %5896 = vmatpush1.bf16.msra.mxu0 %v5281
    %5897 = vmatprep.subr.bf16.mxu0 %v5286
    %5898 = vmatpush1.bf16.msra.mxu0 %v5285
    %5899 = vmatprep.subr.bf16.mxu0 %v5290
    %5900 = vmatpush1.bf16.msra.mxu0 %v5289
    %5901 = vmatprep.subr.bf16.mxu0 %v5294
    %5902 = vmatpush1.bf16.msra.mxu0 %v5293
    %5903 = vmatprep.subr.bf16.mxu0 %v5298
    %5904 = vmatpush1.bf16.msra.mxu0 %v5297
    %5905 = vmatprep.subr.bf16.mxu0 %v5302
    %5906 = vmatpush1.bf16.msra.mxu0 %v5301
    %5907 = vmatprep.subr.bf16.mxu0 %v5306
    %5908 = vmatpush1.bf16.msra.mxu0 %v5305
    %5909 = vmatprep.subr.bf16.mxu0 %v5310
    %5910 = vmatpush1.bf16.msra.mxu0 %v5309
    %5911 = vmatprep.subr.bf16.mxu0 %v5314
    %5912 = vmatpush1.bf16.msra.mxu0 %v5313
    %5913 = vmatprep.mubr.bf16.mxu0 %v4074
    %5914 = vmatmul.mubr.bf16.gmra.mrb[0].mxu0 %v4073
    %v5915 = vpop.f32.mrb[0].mxu0
    %v5916 = vadd.f32 %v5875, %v5915
    %v5917 = vpop.f32.mrb[0].mxu0
    %v5918 = vadd.f32 %v5877, %v5917
    %v5919 = vpop.f32.mrb[0].mxu0
    %v5920 = vpop.f32.mrb[0].mxu0
    %5921 = vdwg.mxu0
    %5922 = vmatprep.subr.bf16.mxu0 %v5318
    %5923 = vmatpush1.bf16.msra.mxu0 %v5317
    %5924 = vmatprep.subr.bf16.mxu0 %v5322
    %5925 = vmatpush1.bf16.msra.mxu0 %v5321
    %5926 = vmatprep.subr.bf16.mxu0 %v5326
    %5927 = vmatpush1.bf16.msra.mxu0 %v5325
    %5928 = vmatprep.subr.bf16.mxu0 %v5330
    %5929 = vmatpush1.bf16.msra.mxu0 %v5329
    %5930 = vmatprep.subr.bf16.mxu0 %v5334
    %5931 = vmatpush1.bf16.msra.mxu0 %v5333
    %5932 = vmatprep.subr.bf16.mxu0 %v5338
    %5933 = vmatpush1.bf16.msra.mxu0 %v5337
    %5934 = vmatprep.subr.bf16.mxu0 %v5342
    %5935 = vmatpush1.bf16.msra.mxu0 %v5341
    %5936 = vmatprep.subr.bf16.mxu0 %v5346
    %5937 = vmatpush1.bf16.msra.mxu0 %v5345
    %5938 = vmatprep.subr.bf16.mxu0 %v5350
    %5939 = vmatpush1.bf16.msra.mxu0 %v5349
    %5940 = vmatprep.subr.bf16.mxu0 %v5354
    %5941 = vmatpush1.bf16.msra.mxu0 %v5353
    %5942 = vmatprep.subr.bf16.mxu0 %v5358
    %5943 = vmatpush1.bf16.msra.mxu0 %v5357
    %5944 = vmatprep.subr.bf16.mxu0 %v5362
    %5945 = vmatpush1.bf16.msra.mxu0 %v5361
    %5946 = vmatprep.subr.bf16.mxu0 %v5366
    %5947 = vmatpush1.bf16.msra.mxu0 %v5365
    %5948 = vmatprep.subr.bf16.mxu0 %v5370
    %5949 = vmatpush1.bf16.msra.mxu0 %v5369
    %5950 = vmatprep.subr.bf16.mxu0 %v5374
    %5951 = vmatpush1.bf16.msra.mxu0 %v5373
    %5952 = vmatprep.subr.bf16.mxu0 %v5378
    %5953 = vmatpush1.bf16.msra.mxu0 %v5377
    %5954 = vmatprep.mubr.bf16.mxu0 %v4076
    %5955 = vmatmul.mubr.bf16.gmra.mrb[0].mxu0 %v4075
    %v5956 = vpop.f32.mrb[0].mxu0
    %v5957 = vadd.f32 %v5916, %v5956
    %v5958 = vpop.f32.mrb[0].mxu0
    %v5959 = vadd.f32 %v5918, %v5958
    %v5960 = vpop.f32.mrb[0].mxu0
    %v5961 = vpop.f32.mrb[0].mxu0
    %5962 = vdwg.mxu0
    %vm5963 = vcmp.gt.f32.partialorder %v5793, 0.0
    %vm5964 = vcmp.gt.f32.partialorder %v5795, 0.0
    %vm5965 = vcmp.gt.f32.partialorder %v5957, 0.0
    %vm5966 = vcmp.gt.f32.partialorder %v5959, 0.0
    %v5967 = vmul.f32 %v5793, 0.2
    %v5968 = vmul.f32 %v5795, 0.2
    %v5969 = vmul.f32 %v5957, 0.2
    %v5970 = vmul.f32 %v5959, 0.2
    %v5971 = vsel %vm5963, %v5793, %v5967
    %v5972 = vsel %vm5964, %v5795, %v5968
    %v5973 = vsel %vm5965, %v5957, %v5969
    %v5974 = vsel %vm5966, %v5959, %v5970
    %v5975 = vpack.c.bf16 %v5971, %v5971
    %v5976 = vpack.c.bf16 %v5972, %v5972
    %v5977 = vpack.c.bf16 %v5973, %v5973
    %v5978 = vpack.c.bf16 %v5974, %v5974
    %v5979 = vld [vmem:[%s6] sm:$0xf]
    %v5980 = vld [vmem:[%s6 + $0x4] sm:$0xf]
    %v5981 = vld [vmem:[%s6 + $0x8] sm:$0xf]
    %v5982 = vld [vmem:[%s6 + $0xc] sm:$0xf]
    %v5983 = vld [vmem:[%s6 + $0x10] sm:$0xf]
    %v5984 = vld [vmem:[%s6 + $0x14] sm:$0xf]
    %v5985 = vld [vmem:[%s6 + $0x18] sm:$0xf]
    %v5986 = vld [vmem:[%s6 + $0x1c] sm:$0xf]
    %v5987 = vld [vmem:[%s6 + $0x20] sm:$0xf]
    %v5988 = vld [vmem:[%s6 + $0x24] sm:$0xf]
    %v5989 = vld [vmem:[%s6 + $0x28] sm:$0xf]
    %v5990 = vld [vmem:[%s6 + $0x2c] sm:$0xf]
    %v5991 = vld [vmem:[%s6 + $0x30] sm:$0xf]
    %v5992 = vld [vmem:[%s6 + $0x34] sm:$0xf]
    %v5993 = vld [vmem:[%s6 + $0x38] sm:$0xf]
    %v5994 = vld [vmem:[%s6 + $0x3c] sm:$0xf]
    %v5995 = vld [vmem:[%s6 + $0x40] sm:$0xf]
    %v5996 = vld [vmem:[%s6 + $0x44] sm:$0xf]
    %v5997 = vld [vmem:[%s6 + $0x48] sm:$0xf]
    %v5998 = vld [vmem:[%s6 + $0x4c] sm:$0xf]
    %v5999 = vld [vmem:[%s6 + $0x50] sm:$0xf]
    %v6000 = vld [vmem:[%s6 + $0x54] sm:$0xf]
    %v6001 = vld [vmem:[%s6 + $0x58] sm:$0xf]
    %v6002 = vld [vmem:[%s6 + $0x5c] sm:$0xf]
    %v6003 = vld [vmem:[%s6 + $0x60] sm:$0xf]
    %v6004 = vld [vmem:[%s6 + $0x64] sm:$0xf]
    %v6005 = vld [vmem:[%s6 + $0x68] sm:$0xf]
    %v6006 = vld [vmem:[%s6 + $0x6c] sm:$0xf]
    %v6007 = vld [vmem:[%s6 + $0x70] sm:$0xf]
    %v6008 = vld [vmem:[%s6 + $0x74] sm:$0xf]
    %v6009 = vld [vmem:[%s6 + $0x78] sm:$0xf]
    %v6010 = vld [vmem:[%s6 + $0x7c] sm:$0xf]
    %v6011 = vld [vmem:[%s6 + $0x80] sm:$0xf]
    %v6012 = vld [vmem:[%s6 + $0x84] sm:$0xf]
    %v6013 = vld [vmem:[%s6 + $0x88] sm:$0xf]
    %v6014 = vld [vmem:[%s6 + $0x8c] sm:$0xf]
    %v6015 = vld [vmem:[%s6 + $0x90] sm:$0xf]
    %v6016 = vld [vmem:[%s6 + $0x94] sm:$0xf]
    %v6017 = vld [vmem:[%s6 + $0x98] sm:$0xf]
    %v6018 = vld [vmem:[%s6 + $0x9c] sm:$0xf]
    %v6019 = vld [vmem:[%s6 + $0xa0] sm:$0xf]
    %v6020 = vld [vmem:[%s6 + $0xa4] sm:$0xf]
    %v6021 = vld [vmem:[%s6 + $0xa8] sm:$0xf]
    %v6022 = vld [vmem:[%s6 + $0xac] sm:$0xf]
    %v6023 = vld [vmem:[%s6 + $0xb0] sm:$0xf]
    %v6024 = vld [vmem:[%s6 + $0xb4] sm:$0xf]
    %v6025 = vld [vmem:[%s6 + $0xb8] sm:$0xf]
    %v6026 = vld [vmem:[%s6 + $0xbc] sm:$0xf]
    %v6027 = vld [vmem:[%s6 + $0xc0] sm:$0xf]
    %v6028 = vld [vmem:[%s6 + $0xc4] sm:$0xf]
    %v6029 = vld [vmem:[%s6 + $0xc8] sm:$0xf]
    %v6030 = vld [vmem:[%s6 + $0xcc] sm:$0xf]
    %v6031 = vld [vmem:[%s6 + $0xd0] sm:$0xf]
    %v6032 = vld [vmem:[%s6 + $0xd4] sm:$0xf]
    %v6033 = vld [vmem:[%s6 + $0xd8] sm:$0xf]
    %v6034 = vld [vmem:[%s6 + $0xdc] sm:$0xf]
    %v6035 = vld [vmem:[%s6 + $0xe0] sm:$0xf]
    %v6036 = vld [vmem:[%s6 + $0xe4] sm:$0xf]
    %v6037 = vld [vmem:[%s6 + $0xe8] sm:$0xf]
    %v6038 = vld [vmem:[%s6 + $0xec] sm:$0xf]
    %v6039 = vld [vmem:[%s6 + $0xf0] sm:$0xf]
    %v6040 = vld [vmem:[%s6 + $0xf4] sm:$0xf]
    %v6041 = vld [vmem:[%s6 + $0xf8] sm:$0xf]
    %v6042 = vld [vmem:[%s6 + $0xfc] sm:$0xf]
    %v6043 = vld [vmem:[#allocation10] sm:$0x1]
    %v6045 = vlaneseq
    %v6046 = vshrl.u32 %v6045, 7
    %v6047 = vsub.s32 0, %v6046
    %v6048 = vrot.slane %v6043, %v6047
    %v6114 = vunpack.c.l.b16 %v5979
    %v6115 = vunpack.c.l.b16 %v5980
    %v6116 = vunpack.c.l.b16 %v5981
    %v6117 = vunpack.c.l.b16 %v5982
    %v6118 = vunpack.c.l.b16 %v5983
    %v6119 = vunpack.c.l.b16 %v5984
    %v6120 = vunpack.c.l.b16 %v5985
    %v6121 = vunpack.c.l.b16 %v5986
    %v6122 = vunpack.c.l.b16 %v5987
    %v6123 = vunpack.c.l.b16 %v5988
    %v6124 = vunpack.c.l.b16 %v5989
    %v6125 = vunpack.c.l.b16 %v5990
    %v6126 = vunpack.c.l.b16 %v5991
    %v6127 = vunpack.c.l.b16 %v5992
    %v6128 = vunpack.c.l.b16 %v5993
    %v6129 = vunpack.c.l.b16 %v5994
    %v6130 = vunpack.c.l.b16 %v5995
    %v6131 = vunpack.c.l.b16 %v5996
    %v6132 = vunpack.c.l.b16 %v5997
    %v6133 = vunpack.c.l.b16 %v5998
    %v6134 = vunpack.c.l.b16 %v5999
    %v6135 = vunpack.c.l.b16 %v6000
    %v6136 = vunpack.c.l.b16 %v6001
    %v6137 = vunpack.c.l.b16 %v6002
    %v6138 = vunpack.c.l.b16 %v6003
    %v6139 = vunpack.c.l.b16 %v6004
    %v6140 = vunpack.c.l.b16 %v6005
    %v6141 = vunpack.c.l.b16 %v6006
    %v6142 = vunpack.c.l.b16 %v6007
    %v6143 = vunpack.c.l.b16 %v6008
    %v6144 = vunpack.c.l.b16 %v6009
    %v6145 = vunpack.c.l.b16 %v6010
    %v6146 = vunpack.c.l.b16 %v6011
    %v6147 = vunpack.c.l.b16 %v6012
    %v6148 = vunpack.c.l.b16 %v6013
    %v6149 = vunpack.c.l.b16 %v6014
    %v6150 = vunpack.c.l.b16 %v6015
    %v6151 = vunpack.c.l.b16 %v6016
    %v6152 = vunpack.c.l.b16 %v6017
    %v6153 = vunpack.c.l.b16 %v6018
    %v6154 = vunpack.c.l.b16 %v6019
    %v6155 = vunpack.c.l.b16 %v6020
    %v6156 = vunpack.c.l.b16 %v6021
    %v6157 = vunpack.c.l.b16 %v6022
    %v6158 = vunpack.c.l.b16 %v6023
    %v6159 = vunpack.c.l.b16 %v6024
    %v6160 = vunpack.c.l.b16 %v6025
    %v6161 = vunpack.c.l.b16 %v6026
    %v6162 = vunpack.c.l.b16 %v6027
    %v6163 = vunpack.c.l.b16 %v6028
    %v6164 = vunpack.c.l.b16 %v6029
    %v6165 = vunpack.c.l.b16 %v6030
    %v6166 = vunpack.c.l.b16 %v6031
    %v6167 = vunpack.c.l.b16 %v6032
    %v6168 = vunpack.c.l.b16 %v6033
    %v6169 = vunpack.c.l.b16 %v6034
    %v6170 = vunpack.c.l.b16 %v6035
    %v6171 = vunpack.c.l.b16 %v6036
    %v6172 = vunpack.c.l.b16 %v6037
    %v6173 = vunpack.c.l.b16 %v6038
    %v6174 = vunpack.c.l.b16 %v6039
    %v6175 = vunpack.c.l.b16 %v6040
    %v6176 = vunpack.c.l.b16 %v6041
    %v6177 = vunpack.c.l.b16 %v6042
    %v6178 = vpack.c.b16 %v6115, %v6114
    %v6179 = vpack.c.b16 %v6117, %v6116
    %v6180 = vpack.c.b16 %v6119, %v6118
    %v6181 = vpack.c.b16 %v6121, %v6120
    %v6182 = vpack.c.b16 %v6123, %v6122
    %v6183 = vpack.c.b16 %v6125, %v6124
    %v6184 = vpack.c.b16 %v6127, %v6126
    %v6185 = vpack.c.b16 %v6129, %v6128
    %v6186 = vpack.c.b16 %v6131, %v6130
    %v6187 = vpack.c.b16 %v6133, %v6132
    %v6188 = vpack.c.b16 %v6135, %v6134
    %v6189 = vpack.c.b16 %v6137, %v6136
    %v6190 = vpack.c.b16 %v6139, %v6138
    %v6191 = vpack.c.b16 %v6141, %v6140
    %v6192 = vpack.c.b16 %v6143, %v6142
    %v6193 = vpack.c.b16 %v6145, %v6144
    %v6194 = vpack.c.b16 %v6147, %v6146
    %v6195 = vpack.c.b16 %v6149, %v6148
    %v6196 = vpack.c.b16 %v6151, %v6150
    %v6197 = vpack.c.b16 %v6153, %v6152
    %v6198 = vpack.c.b16 %v6155, %v6154
    %v6199 = vpack.c.b16 %v6157, %v6156
    %v6200 = vpack.c.b16 %v6159, %v6158
    %v6201 = vpack.c.b16 %v6161, %v6160
    %v6202 = vpack.c.b16 %v6163, %v6162
    %v6203 = vpack.c.b16 %v6165, %v6164
    %v6204 = vpack.c.b16 %v6167, %v6166
    %v6205 = vpack.c.b16 %v6169, %v6168
    %v6206 = vpack.c.b16 %v6171, %v6170
    %v6207 = vpack.c.b16 %v6173, %v6172
    %v6208 = vpack.c.b16 %v6175, %v6174
    %v6209 = vpack.c.b16 %v6177, %v6176
    %6242 = vmatprep.subr.bf16.mxu0 0
    %6243 = vmatpush1.bf16.msra.mxu0 %v6178
    %6244 = vmatprep.subr.bf16.mxu0 0
    %6245 = vmatpush1.bf16.msra.mxu0 %v6179
    %6246 = vmatprep.subr.bf16.mxu0 0
    %6247 = vmatpush1.bf16.msra.mxu0 %v6180
    %6248 = vmatprep.subr.bf16.mxu0 0
    %6249 = vmatpush1.bf16.msra.mxu0 %v6181
    %6250 = vmatprep.subr.bf16.mxu0 0
    %6251 = vmatpush1.bf16.msra.mxu0 %v6182
    %6252 = vmatprep.subr.bf16.mxu0 0
    %6253 = vmatpush1.bf16.msra.mxu0 %v6183
    %6254 = vmatprep.subr.bf16.mxu0 0
    %6255 = vmatpush1.bf16.msra.mxu0 %v6184
    %6256 = vmatprep.subr.bf16.mxu0 0
    %6257 = vmatpush1.bf16.msra.mxu0 %v6185
    %6258 = vmatprep.subr.bf16.mxu0 0
    %6259 = vmatpush1.bf16.msra.mxu0 %v6186
    %6260 = vmatprep.subr.bf16.mxu0 0
    %6261 = vmatpush1.bf16.msra.mxu0 %v6187
    %6262 = vmatprep.subr.bf16.mxu0 0
    %6263 = vmatpush1.bf16.msra.mxu0 %v6188
    %6264 = vmatprep.subr.bf16.mxu0 0
    %6265 = vmatpush1.bf16.msra.mxu0 %v6189
    %6266 = vmatprep.subr.bf16.mxu0 0
    %6267 = vmatpush1.bf16.msra.mxu0 %v6190
    %6268 = vmatprep.subr.bf16.mxu0 0
    %6269 = vmatpush1.bf16.msra.mxu0 %v6191
    %6270 = vmatprep.subr.bf16.mxu0 0
    %6271 = vmatpush1.bf16.msra.mxu0 %v6192
    %6272 = vmatprep.subr.bf16.mxu0 0
    %6273 = vmatpush1.bf16.msra.mxu0 %v6193
    %6274 = vmatprep.mubr.bf16.mxu0 %v5976
    %6275 = vmatmul.mubr.bf16.gmra.mrb[0].mxu0 %v5975
    %v6276 = vpop.f32.mrb[0].mxu0
    %v6277 = vadd.f32 %v6048, %v6276
    %v6278 = vpop.f32.mrb[0].mxu0
    %v6279 = vpop.f32.mrb[0].mxu0
    %v6280 = vpop.f32.mrb[0].mxu0
    %6281 = vdwg.mxu0
    %6282 = vmatprep.subr.bf16.mxu0 0
    %6283 = vmatpush1.bf16.msra.mxu0 %v6194
    %6284 = vmatprep.subr.bf16.mxu0 0
    %6285 = vmatpush1.bf16.msra.mxu0 %v6195
    %6286 = vmatprep.subr.bf16.mxu0 0
    %6287 = vmatpush1.bf16.msra.mxu0 %v6196
    %6288 = vmatprep.subr.bf16.mxu0 0
    %6289 = vmatpush1.bf16.msra.mxu0 %v6197
    %6290 = vmatprep.subr.bf16.mxu0 0
    %6291 = vmatpush1.bf16.msra.mxu0 %v6198
    %6292 = vmatprep.subr.bf16.mxu0 0
    %6293 = vmatpush1.bf16.msra.mxu0 %v6199
    %6294 = vmatprep.subr.bf16.mxu0 0
    %6295 = vmatpush1.bf16.msra.mxu0 %v6200
    %6296 = vmatprep.subr.bf16.mxu0 0
    %6297 = vmatpush1.bf16.msra.mxu0 %v6201
    %6298 = vmatprep.subr.bf16.mxu0 0
    %6299 = vmatpush1.bf16.msra.mxu0 %v6202
    %6300 = vmatprep.subr.bf16.mxu0 0
    %6301 = vmatpush1.bf16.msra.mxu0 %v6203
    %6302 = vmatprep.subr.bf16.mxu0 0
    %6303 = vmatpush1.bf16.msra.mxu0 %v6204
    %6304 = vmatprep.subr.bf16.mxu0 0
    %6305 = vmatpush1.bf16.msra.mxu0 %v6205
    %6306 = vmatprep.subr.bf16.mxu0 0
    %6307 = vmatpush1.bf16.msra.mxu0 %v6206
    %6308 = vmatprep.subr.bf16.mxu0 0
    %6309 = vmatpush1.bf16.msra.mxu0 %v6207
    %6310 = vmatprep.subr.bf16.mxu0 0
    %6311 = vmatpush1.bf16.msra.mxu0 %v6208
    %6312 = vmatprep.subr.bf16.mxu0 0
    %6313 = vmatpush1.bf16.msra.mxu0 %v6209
    %6314 = vmatprep.mubr.bf16.mxu0 %v5978
    %6315 = vmatmul.mubr.bf16.gmra.mrb[0].mxu0 %v5977
    %v6316 = vpop.f32.mrb[0].mxu0
    %v6317 = vadd.f32 %v6277, %v6316
    %v6318 = vpop.f32.mrb[0].mxu0
    %v6319 = vpop.f32.mrb[0].mxu0
    %v6320 = vpop.f32.mrb[0].mxu0
    %6321 = vdwg.mxu0
    %v6322 = vld [vmem:[%s8] sm:$0xf]
    %v6323 = vld [vmem:[%s8 + $0x4] sm:$0xf]
    %v6324 = vld [vmem:[%s8 + $0x8] sm:$0xf]
    %v6325 = vld [vmem:[%s8 + $0xc] sm:$0xf]
    %v6326 = vld [vmem:[%s8 + $0x10] sm:$0xf]
    %v6327 = vld [vmem:[%s8 + $0x14] sm:$0xf]
    %v6328 = vld [vmem:[%s8 + $0x18] sm:$0xf]
    %v6329 = vld [vmem:[%s8 + $0x1c] sm:$0xf]
    %v6330 = vld [vmem:[%s8 + $0x20] sm:$0xf]
    %v6331 = vld [vmem:[%s8 + $0x24] sm:$0xf]
    %v6332 = vld [vmem:[%s8 + $0x28] sm:$0xf]
    %v6333 = vld [vmem:[%s8 + $0x2c] sm:$0xf]
    %v6334 = vld [vmem:[%s8 + $0x30] sm:$0xf]
    %v6335 = vld [vmem:[%s8 + $0x34] sm:$0xf]
    %v6336 = vld [vmem:[%s8 + $0x38] sm:$0xf]
    %v6337 = vld [vmem:[%s8 + $0x3c] sm:$0xf]
    %v6338 = vld [vmem:[%s8 + $0x40] sm:$0xf]
    %v6339 = vld [vmem:[%s8 + $0x44] sm:$0xf]
    %v6340 = vld [vmem:[%s8 + $0x48] sm:$0xf]
    %v6341 = vld [vmem:[%s8 + $0x4c] sm:$0xf]
    %v6342 = vld [vmem:[%s8 + $0x50] sm:$0xf]
    %v6343 = vld [vmem:[%s8 + $0x54] sm:$0xf]
    %v6344 = vld [vmem:[%s8 + $0x58] sm:$0xf]
    %v6345 = vld [vmem:[%s8 + $0x5c] sm:$0xf]
    %v6346 = vld [vmem:[%s8 + $0x60] sm:$0xf]
    %v6347 = vld [vmem:[%s8 + $0x64] sm:$0xf]
    %v6348 = vld [vmem:[%s8 + $0x68] sm:$0xf]
    %v6349 = vld [vmem:[%s8 + $0x6c] sm:$0xf]
    %v6350 = vld [vmem:[%s8 + $0x70] sm:$0xf]
    %v6351 = vld [vmem:[%s8 + $0x74] sm:$0xf]
    %v6352 = vld [vmem:[%s8 + $0x78] sm:$0xf]
    %v6353 = vld [vmem:[%s8 + $0x7c] sm:$0xf]
    %v6354 = vld [vmem:[%s8 + $0x80] sm:$0xf]
    %v6355 = vld [vmem:[%s8 + $0x84] sm:$0xf]
    %v6356 = vld [vmem:[%s8 + $0x88] sm:$0xf]
    %v6357 = vld [vmem:[%s8 + $0x8c] sm:$0xf]
    %v6358 = vld [vmem:[%s8 + $0x90] sm:$0xf]
    %v6359 = vld [vmem:[%s8 + $0x94] sm:$0xf]
    %v6360 = vld [vmem:[%s8 + $0x98] sm:$0xf]
    %v6361 = vld [vmem:[%s8 + $0x9c] sm:$0xf]
    %v6362 = vld [vmem:[%s8 + $0xa0] sm:$0xf]
    %v6363 = vld [vmem:[%s8 + $0xa4] sm:$0xf]
    %v6364 = vld [vmem:[%s8 + $0xa8] sm:$0xf]
    %v6365 = vld [vmem:[%s8 + $0xac] sm:$0xf]
    %v6366 = vld [vmem:[%s8 + $0xb0] sm:$0xf]
    %v6367 = vld [vmem:[%s8 + $0xb4] sm:$0xf]
    %v6368 = vld [vmem:[%s8 + $0xb8] sm:$0xf]
    %v6369 = vld [vmem:[%s8 + $0xbc] sm:$0xf]
    %v6370 = vld [vmem:[%s8 + $0xc0] sm:$0xf]
    %v6371 = vld [vmem:[%s8 + $0xc4] sm:$0xf]
    %v6372 = vld [vmem:[%s8 + $0xc8] sm:$0xf]
    %v6373 = vld [vmem:[%s8 + $0xcc] sm:$0xf]
    %v6374 = vld [vmem:[%s8 + $0xd0] sm:$0xf]
    %v6375 = vld [vmem:[%s8 + $0xd4] sm:$0xf]
    %v6376 = vld [vmem:[%s8 + $0xd8] sm:$0xf]
    %v6377 = vld [vmem:[%s8 + $0xdc] sm:$0xf]
    %v6378 = vld [vmem:[%s8 + $0xe0] sm:$0xf]
    %v6379 = vld [vmem:[%s8 + $0xe4] sm:$0xf]
    %v6380 = vld [vmem:[%s8 + $0xe8] sm:$0xf]
    %v6381 = vld [vmem:[%s8 + $0xec] sm:$0xf]
    %v6382 = vld [vmem:[%s8 + $0xf0] sm:$0xf]
    %v6383 = vld [vmem:[%s8 + $0xf4] sm:$0xf]
    %v6384 = vld [vmem:[%s8 + $0xf8] sm:$0xf]
    %v6385 = vld [vmem:[%s8 + $0xfc] sm:$0xf]
    %v6386 = vld [vmem:[#allocation12] sm:$0x1]
    %v6388 = vlaneseq
    %v6389 = vshrl.u32 %v6388, 7
    %v6390 = vsub.s32 0, %v6389
    %v6391 = vrot.slane %v6386, %v6390
    %v6457 = vunpack.c.l.b16 %v6322
    %v6458 = vunpack.c.l.b16 %v6323
    %v6459 = vunpack.c.l.b16 %v6324
    %v6460 = vunpack.c.l.b16 %v6325
    %v6461 = vunpack.c.l.b16 %v6326
    %v6462 = vunpack.c.l.b16 %v6327
    %v6463 = vunpack.c.l.b16 %v6328
    %v6464 = vunpack.c.l.b16 %v6329
    %v6465 = vunpack.c.l.b16 %v6330
    %v6466 = vunpack.c.l.b16 %v6331
    %v6467 = vunpack.c.l.b16 %v6332
    %v6468 = vunpack.c.l.b16 %v6333
    %v6469 = vunpack.c.l.b16 %v6334
    %v6470 = vunpack.c.l.b16 %v6335
    %v6471 = vunpack.c.l.b16 %v6336
    %v6472 = vunpack.c.l.b16 %v6337
    %v6473 = vunpack.c.l.b16 %v6338
    %v6474 = vunpack.c.l.b16 %v6339
    %v6475 = vunpack.c.l.b16 %v6340
    %v6476 = vunpack.c.l.b16 %v6341
    %v6477 = vunpack.c.l.b16 %v6342
    %v6478 = vunpack.c.l.b16 %v6343
    %v6479 = vunpack.c.l.b16 %v6344
    %v6480 = vunpack.c.l.b16 %v6345
    %v6481 = vunpack.c.l.b16 %v6346
    %v6482 = vunpack.c.l.b16 %v6347
    %v6483 = vunpack.c.l.b16 %v6348
    %v6484 = vunpack.c.l.b16 %v6349
    %v6485 = vunpack.c.l.b16 %v6350
    %v6486 = vunpack.c.l.b16 %v6351
    %v6487 = vunpack.c.l.b16 %v6352
    %v6488 = vunpack.c.l.b16 %v6353
    %v6489 = vunpack.c.l.b16 %v6354
    %v6490 = vunpack.c.l.b16 %v6355
    %v6491 = vunpack.c.l.b16 %v6356
    %v6492 = vunpack.c.l.b16 %v6357
    %v6493 = vunpack.c.l.b16 %v6358
    %v6494 = vunpack.c.l.b16 %v6359
    %v6495 = vunpack.c.l.b16 %v6360
    %v6496 = vunpack.c.l.b16 %v6361
    %v6497 = vunpack.c.l.b16 %v6362
    %v6498 = vunpack.c.l.b16 %v6363
    %v6499 = vunpack.c.l.b16 %v6364
    %v6500 = vunpack.c.l.b16 %v6365
    %v6501 = vunpack.c.l.b16 %v6366
    %v6502 = vunpack.c.l.b16 %v6367
    %v6503 = vunpack.c.l.b16 %v6368
    %v6504 = vunpack.c.l.b16 %v6369
    %v6505 = vunpack.c.l.b16 %v6370
    %v6506 = vunpack.c.l.b16 %v6371
    %v6507 = vunpack.c.l.b16 %v6372
    %v6508 = vunpack.c.l.b16 %v6373
    %v6509 = vunpack.c.l.b16 %v6374
    %v6510 = vunpack.c.l.b16 %v6375
    %v6511 = vunpack.c.l.b16 %v6376
    %v6512 = vunpack.c.l.b16 %v6377
    %v6513 = vunpack.c.l.b16 %v6378
    %v6514 = vunpack.c.l.b16 %v6379
    %v6515 = vunpack.c.l.b16 %v6380
    %v6516 = vunpack.c.l.b16 %v6381
    %v6517 = vunpack.c.l.b16 %v6382
    %v6518 = vunpack.c.l.b16 %v6383
    %v6519 = vunpack.c.l.b16 %v6384
    %v6520 = vunpack.c.l.b16 %v6385
    %v6521 = vpack.c.b16 %v6458, %v6457
    %v6522 = vpack.c.b16 %v6460, %v6459
    %v6523 = vpack.c.b16 %v6462, %v6461
    %v6524 = vpack.c.b16 %v6464, %v6463
    %v6525 = vpack.c.b16 %v6466, %v6465
    %v6526 = vpack.c.b16 %v6468, %v6467
    %v6527 = vpack.c.b16 %v6470, %v6469
    %v6528 = vpack.c.b16 %v6472, %v6471
    %v6529 = vpack.c.b16 %v6474, %v6473
    %v6530 = vpack.c.b16 %v6476, %v6475
    %v6531 = vpack.c.b16 %v6478, %v6477
    %v6532 = vpack.c.b16 %v6480, %v6479
    %v6533 = vpack.c.b16 %v6482, %v6481
    %v6534 = vpack.c.b16 %v6484, %v6483
    %v6535 = vpack.c.b16 %v6486, %v6485
    %v6536 = vpack.c.b16 %v6488, %v6487
    %v6537 = vpack.c.b16 %v6490, %v6489
    %v6538 = vpack.c.b16 %v6492, %v6491
    %v6539 = vpack.c.b16 %v6494, %v6493
    %v6540 = vpack.c.b16 %v6496, %v6495
    %v6541 = vpack.c.b16 %v6498, %v6497
    %v6542 = vpack.c.b16 %v6500, %v6499
    %v6543 = vpack.c.b16 %v6502, %v6501
    %v6544 = vpack.c.b16 %v6504, %v6503
    %v6545 = vpack.c.b16 %v6506, %v6505
    %v6546 = vpack.c.b16 %v6508, %v6507
    %v6547 = vpack.c.b16 %v6510, %v6509
    %v6548 = vpack.c.b16 %v6512, %v6511
    %v6549 = vpack.c.b16 %v6514, %v6513
    %v6550 = vpack.c.b16 %v6516, %v6515
    %v6551 = vpack.c.b16 %v6518, %v6517
    %v6552 = vpack.c.b16 %v6520, %v6519
    %6585 = vmatprep.subr.bf16.mxu0 0
    %6586 = vmatpush1.bf16.msra.mxu0 %v6521
    %6587 = vmatprep.subr.bf16.mxu0 0
    %6588 = vmatpush1.bf16.msra.mxu0 %v6522
    %6589 = vmatprep.subr.bf16.mxu0 0
    %6590 = vmatpush1.bf16.msra.mxu0 %v6523
    %6591 = vmatprep.subr.bf16.mxu0 0
    %6592 = vmatpush1.bf16.msra.mxu0 %v6524
    %6593 = vmatprep.subr.bf16.mxu0 0
    %6594 = vmatpush1.bf16.msra.mxu0 %v6525
    %6595 = vmatprep.subr.bf16.mxu0 0
    %6596 = vmatpush1.bf16.msra.mxu0 %v6526
    %6597 = vmatprep.subr.bf16.mxu0 0
    %6598 = vmatpush1.bf16.msra.mxu0 %v6527
    %6599 = vmatprep.subr.bf16.mxu0 0
    %6600 = vmatpush1.bf16.msra.mxu0 %v6528
    %6601 = vmatprep.subr.bf16.mxu0 0
    %6602 = vmatpush1.bf16.msra.mxu0 %v6529
    %6603 = vmatprep.subr.bf16.mxu0 0
    %6604 = vmatpush1.bf16.msra.mxu0 %v6530
    %6605 = vmatprep.subr.bf16.mxu0 0
    %6606 = vmatpush1.bf16.msra.mxu0 %v6531
    %6607 = vmatprep.subr.bf16.mxu0 0
    %6608 = vmatpush1.bf16.msra.mxu0 %v6532
    %6609 = vmatprep.subr.bf16.mxu0 0
    %6610 = vmatpush1.bf16.msra.mxu0 %v6533
    %6611 = vmatprep.subr.bf16.mxu0 0
    %6612 = vmatpush1.bf16.msra.mxu0 %v6534
    %6613 = vmatprep.subr.bf16.mxu0 0
    %6614 = vmatpush1.bf16.msra.mxu0 %v6535
    %6615 = vmatprep.subr.bf16.mxu0 0
    %6616 = vmatpush1.bf16.msra.mxu0 %v6536
    %6617 = vmatprep.mubr.bf16.mxu0 %v5976
    %6618 = vmatmul.mubr.bf16.gmra.mrb[0].mxu0 %v5975
    %v6619 = vpop.f32.mrb[0].mxu0
    %v6620 = vadd.f32 %v6391, %v6619
    %v6621 = vpop.f32.mrb[0].mxu0
    %v6622 = vpop.f32.mrb[0].mxu0
    %v6623 = vpop.f32.mrb[0].mxu0
    %6624 = vdwg.mxu0
    %6625 = vmatprep.subr.bf16.mxu0 0
    %6626 = vmatpush1.bf16.msra.mxu0 %v6537
    %6627 = vmatprep.subr.bf16.mxu0 0
    %6628 = vmatpush1.bf16.msra.mxu0 %v6538
    %6629 = vmatprep.subr.bf16.mxu0 0
    %6630 = vmatpush1.bf16.msra.mxu0 %v6539
    %6631 = vmatprep.subr.bf16.mxu0 0
    %6632 = vmatpush1.bf16.msra.mxu0 %v6540
    %6633 = vmatprep.subr.bf16.mxu0 0
    %6634 = vmatpush1.bf16.msra.mxu0 %v6541
    %6635 = vmatprep.subr.bf16.mxu0 0
    %6636 = vmatpush1.bf16.msra.mxu0 %v6542
    %6637 = vmatprep.subr.bf16.mxu0 0
    %6638 = vmatpush1.bf16.msra.mxu0 %v6543
    %6639 = vmatprep.subr.bf16.mxu0 0
    %6640 = vmatpush1.bf16.msra.mxu0 %v6544
    %6641 = vmatprep.subr.bf16.mxu0 0
    %6642 = vmatpush1.bf16.msra.mxu0 %v6545
    %6643 = vmatprep.subr.bf16.mxu0 0
    %6644 = vmatpush1.bf16.msra.mxu0 %v6546
    %6645 = vmatprep.subr.bf16.mxu0 0
    %6646 = vmatpush1.bf16.msra.mxu0 %v6547
    %6647 = vmatprep.subr.bf16.mxu0 0
    %6648 = vmatpush1.bf16.msra.mxu0 %v6548
    %6649 = vmatprep.subr.bf16.mxu0 0
    %6650 = vmatpush1.bf16.msra.mxu0 %v6549
    %6651 = vmatprep.subr.bf16.mxu0 0
    %6652 = vmatpush1.bf16.msra.mxu0 %v6550
    %6653 = vmatprep.subr.bf16.mxu0 0
    %6654 = vmatpush1.bf16.msra.mxu0 %v6551
    %6655 = vmatprep.subr.bf16.mxu0 0
    %6656 = vmatpush1.bf16.msra.mxu0 %v6552
    %6657 = vmatprep.mubr.bf16.mxu0 %v5978
    %6658 = vmatmul.mubr.bf16.gmra.mrb[0].mxu0 %v5977
    %v6659 = vpop.f32.mrb[0].mxu0
    %v6660 = vadd.f32 %v6620, %v6659
    %v6661 = vpop.f32.mrb[0].mxu0
    %v6662 = vpop.f32.mrb[0].mxu0
    %v6663 = vpop.f32.mrb[0].mxu0
    %6664 = vdwg.mxu0
    %v6665 = vld [vmem:[#allocation2] sm:$0x3]
    %v6666 = vmul.f32 %v6660, 0.5
    %v6667 = vmul.f32 %v6666, 1.442695
    %v6668 = vpow.pop %v6667
    %v6669 = vmul.f32 %v6665, %v6668
    %v6670 = vadd.f32 %v6317, %v6669
    %v6671 = vpack.c.bf16 %v6670, %v6670
    %v6672 = vld [vmem:[#allocation13] sm:$0xff]
    %v6673 = vld [vmem:[#allocation13 + $0x8] sm:$0xff]
    %v6674 = vld [vmem:[#allocation13 + $0x10] sm:$0xff]
    %v6675 = vld [vmem:[#allocation13 + $0x18] sm:$0xff]
    %v6676 = vld [vmem:[#allocation13 + $0x20] sm:$0xff]
    %v6677 = vld [vmem:[#allocation13 + $0x28] sm:$0xff]
    %v6678 = vld [vmem:[#allocation13 + $0x30] sm:$0xff]
    %v6679 = vld [vmem:[#allocation13 + $0x38] sm:$0xff]
    %v6680 = vld [vmem:[#allocation15] sm:$0xf]
    %v6682 = vlaneseq
    %v6683 = vshrl.u32 %v6682, 7
    %v6684 = vsub.s32 0, %v6683
    %v6685 = vrot.slane %v6680, %v6684
    %v6686 = vlaneseq
    %v6687 = vshrl.u32 %v6686, 7
    %v6688 = vsub.s32 1, %v6687
    %v6689 = vrot.slane %v6680, %v6688
    %v6690 = vlaneseq
    %v6691 = vshrl.u32 %v6690, 7
    %v6692 = vsub.s32 2, %v6691
    %v6693 = vrot.slane %v6680, %v6692
    %v6694 = vlaneseq
    %v6695 = vshrl.u32 %v6694, 7
    %v6696 = vsub.s32 3, %v6695
    %v6697 = vrot.slane %v6680, %v6696
    %v6710 = vunpack.c.l.b16 %v6672
    %v6711 = vunpack.c.h.b16 %v6672
    %v6712 = vunpack.c.l.b16 %v6673
    %v6713 = vunpack.c.h.b16 %v6673
    %v6714 = vunpack.c.l.b16 %v6674
    %v6715 = vunpack.c.h.b16 %v6674
    %v6716 = vunpack.c.l.b16 %v6675
    %v6717 = vunpack.c.h.b16 %v6675
    %v6718 = vunpack.c.l.b16 %v6676
    %v6719 = vunpack.c.h.b16 %v6676
    %v6720 = vunpack.c.l.b16 %v6677
    %v6721 = vunpack.c.h.b16 %v6677
    %v6722 = vunpack.c.l.b16 %v6678
    %v6723 = vunpack.c.h.b16 %v6678
    %v6724 = vunpack.c.l.b16 %v6679
    %v6725 = vunpack.c.h.b16 %v6679
    %v6726 = vpack.c.b16 %v6714, %v6710
    %v6727 = vpack.c.b16 %v6715, %v6711
    %v6728 = vpack.c.b16 %v6716, %v6712
    %v6729 = vpack.c.b16 %v6717, %v6713
    %v6730 = vpack.c.b16 %v6722, %v6718
    %v6731 = vpack.c.b16 %v6723, %v6719
    %v6732 = vpack.c.b16 %v6724, %v6720
    %v6733 = vpack.c.b16 %v6725, %v6721
    %vm6742 = vcmask 261120
    %v6744 = vsel %vm6742, %v6671, 0
    %6746 = vmatprep.subr.bf16.mxu0 %v6727
    %6747 = vmatpush1.bf16.msra.mxu0 %v6726
    %6748 = vmatprep.subr.bf16.mxu0 %v6731
    %6749 = vmatpush1.bf16.msra.mxu0 %v6730
    %6750 = vmatprep.subr.bf16.mxu0 0
    %6751 = vmatpush1.bf16.msra.mxu0 0
    %6752 = vmatprep.subr.bf16.mxu0 0
    %6753 = vmatpush1.bf16.msra.mxu0 0
    %6754 = vmatprep.subr.bf16.mxu0 0
    %6755 = vmatpush1.bf16.msra.mxu0 0
    %6756 = vmatprep.subr.bf16.mxu0 0
    %6757 = vmatpush1.bf16.msra.mxu0 0
    %6758 = vmatprep.subr.bf16.mxu0 0
    %6759 = vmatpush1.bf16.msra.mxu0 0
    %6760 = vmatprep.subr.bf16.mxu0 0
    %6761 = vmatpush1.bf16.msra.mxu0 0
    %6762 = vmatprep.subr.bf16.mxu0 0
    %6763 = vmatpush1.bf16.msra.mxu0 0
    %6764 = vmatprep.subr.bf16.mxu0 0
    %6765 = vmatpush1.bf16.msra.mxu0 0
    %6766 = vmatprep.subr.bf16.mxu0 0
    %6767 = vmatpush1.bf16.msra.mxu0 0
    %6768 = vmatprep.subr.bf16.mxu0 0
    %6769 = vmatpush1.bf16.msra.mxu0 0
    %6770 = vmatprep.subr.bf16.mxu0 0
    %6771 = vmatpush1.bf16.msra.mxu0 0
    %6772 = vmatprep.subr.bf16.mxu0 0
    %6773 = vmatpush1.bf16.msra.mxu0 0
    %6774 = vmatprep.subr.bf16.mxu0 0
    %6775 = vmatpush1.bf16.msra.mxu0 0
    %6776 = vmatprep.subr.bf16.mxu0 0
    %6777 = vmatpush1.bf16.msra.mxu0 0
    %6778 = vmatprep.mubr.bf16.mxu0 0
    %6779 = vmatmul.mubr.bf16.gmra.mrb[0].mxu0 %v6744
    %v6780 = vpop.f32.mrb[0].mxu0
    %v6781 = vadd.f32 %v6685, %v6780
    %v6782 = vpop.f32.mrb[0].mxu0
    %v6783 = vadd.f32 %v6689, %v6782
    %v6784 = vpop.f32.mrb[0].mxu0
    %v6785 = vpop.f32.mrb[0].mxu0
    %6786 = vdwg.mxu0
    %6787 = vmatprep.subr.bf16.mxu0 %v6729
    %6788 = vmatpush1.bf16.msra.mxu0 %v6728
    %6789 = vmatprep.subr.bf16.mxu0 %v6733
    %6790 = vmatpush1.bf16.msra.mxu0 %v6732
    %6791 = vmatprep.subr.bf16.mxu0 0
    %6792 = vmatpush1.bf16.msra.mxu0 0
    %6793 = vmatprep.subr.bf16.mxu0 0
    %6794 = vmatpush1.bf16.msra.mxu0 0
    %6795 = vmatprep.subr.bf16.mxu0 0
    %6796 = vmatpush1.bf16.msra.mxu0 0
    %6797 = vmatprep.subr.bf16.mxu0 0
    %6798 = vmatpush1.bf16.msra.mxu0 0
    %6799 = vmatprep.subr.bf16.mxu0 0
    %6800 = vmatpush1.bf16.msra.mxu0 0
    %6801 = vmatprep.subr.bf16.mxu0 0
    %6802 = vmatpush1.bf16.msra.mxu0 0
    %6803 = vmatprep.subr.bf16.mxu0 0
    %6804 = vmatpush1.bf16.msra.mxu0 0
    %6805 = vmatprep.subr.bf16.mxu0 0
    %6806 = vmatpush1.bf16.msra.mxu0 0
    %6807 = vmatprep.subr.bf16.mxu0 0
    %6808 = vmatpush1.bf16.msra.mxu0 0
    %6809 = vmatprep.subr.bf16.mxu0 0
    %6810 = vmatpush1.bf16.msra.mxu0 0
    %6811 = vmatprep.subr.bf16.mxu0 0
    %6812 = vmatpush1.bf16.msra.mxu0 0
    %6813 = vmatprep.subr.bf16.mxu0 0
    %6814 = vmatpush1.bf16.msra.mxu0 0
    %6815 = vmatprep.subr.bf16.mxu0 0
    %6816 = vmatpush1.bf16.msra.mxu0 0
    %6817 = vmatprep.subr.bf16.mxu0 0
    %6818 = vmatpush1.bf16.msra.mxu0 0
    %6819 = vmatprep.mubr.bf16.mxu0 0
    %6820 = vmatmul.mubr.bf16.gmra.mrb[0].mxu0 %v6744
    %v6821 = vpop.f32.mrb[0].mxu0
    %v6822 = vadd.f32 %v6693, %v6821
    %v6823 = vpop.f32.mrb[0].mxu0
    %v6824 = vadd.f32 %v6697, %v6823
    %v6825 = vpop.f32.mrb[0].mxu0
    %v6826 = vpop.f32.mrb[0].mxu0
    %6827 = vdwg.mxu0
    %v6828 = vmax.f32 %v6781, 0.0
    %v6829 = vmax.f32 %v6783, 0.0
    %v6830 = vmax.f32 %v6822, 0.0
    %v6831 = vmax.f32 %v6824, 0.0
    %v6832 = vpack.c.bf16 %v6828, %v6828
    %v6833 = vpack.c.bf16 %v6829, %v6829
    %v6834 = vpack.c.bf16 %v6830, %v6830
    %v6835 = vpack.c.bf16 %v6831, %v6831
    %v6836 = vld [vmem:[#allocation16] sm:$0xff]
    %v6837 = vld [vmem:[#allocation16 + $0x8] sm:$0xff]
    %v6838 = vld [vmem:[#allocation16 + $0x10] sm:$0xff]
    %v6839 = vld [vmem:[#allocation16 + $0x18] sm:$0xff]
    %v6840 = vld [vmem:[#allocation16 + $0x20] sm:$0xff]
    %v6841 = vld [vmem:[#allocation16 + $0x28] sm:$0xff]
    %v6842 = vld [vmem:[#allocation16 + $0x30] sm:$0xff]
    %v6843 = vld [vmem:[#allocation16 + $0x38] sm:$0xff]
    %v6844 = vld [vmem:[#allocation16 + $0x40] sm:$0xff]
    %v6845 = vld [vmem:[#allocation16 + $0x48] sm:$0xff]
    %v6846 = vld [vmem:[#allocation16 + $0x50] sm:$0xff]
    %v6847 = vld [vmem:[#allocation16 + $0x58] sm:$0xff]
    %v6848 = vld [vmem:[#allocation16 + $0x60] sm:$0xff]
    %v6849 = vld [vmem:[#allocation16 + $0x68] sm:$0xff]
    %v6850 = vld [vmem:[#allocation16 + $0x70] sm:$0xff]
    %v6851 = vld [vmem:[#allocation16 + $0x78] sm:$0xff]
    %v6852 = vld [vmem:[#allocation16 + $0x80] sm:$0xff]
    %v6853 = vld [vmem:[#allocation16 + $0x88] sm:$0xff]
    %v6854 = vld [vmem:[#allocation16 + $0x90] sm:$0xff]
    %v6855 = vld [vmem:[#allocation16 + $0x98] sm:$0xff]
    %v6856 = vld [vmem:[#allocation16 + $0xa0] sm:$0xff]
    %v6857 = vld [vmem:[#allocation16 + $0xa8] sm:$0xff]
    %v6858 = vld [vmem:[#allocation16 + $0xb0] sm:$0xff]
    %v6859 = vld [vmem:[#allocation16 + $0xb8] sm:$0xff]
    %v6860 = vld [vmem:[#allocation16 + $0xc0] sm:$0xff]
    %v6861 = vld [vmem:[#allocation16 + $0xc8] sm:$0xff]
    %v6862 = vld [vmem:[#allocation16 + $0xd0] sm:$0xff]
    %v6863 = vld [vmem:[#allocation16 + $0xd8] sm:$0xff]
    %v6864 = vld [vmem:[#allocation16 + $0xe0] sm:$0xff]
    %v6865 = vld [vmem:[#allocation16 + $0xe8] sm:$0xff]
    %v6866 = vld [vmem:[#allocation16 + $0xf0] sm:$0xff]
    %v6867 = vld [vmem:[#allocation16 + $0xf8] sm:$0xff]
    %v6868 = vld [vmem:[#allocation16 + $0x100] sm:$0xff]
    %v6869 = vld [vmem:[#allocation16 + $0x108] sm:$0xff]
    %v6870 = vld [vmem:[#allocation16 + $0x110] sm:$0xff]
    %v6871 = vld [vmem:[#allocation16 + $0x118] sm:$0xff]
    %v6872 = vld [vmem:[#allocation16 + $0x120] sm:$0xff]
    %v6873 = vld [vmem:[#allocation16 + $0x128] sm:$0xff]
    %v6874 = vld [vmem:[#allocation16 + $0x130] sm:$0xff]
    %v6875 = vld [vmem:[#allocation16 + $0x138] sm:$0xff]
    %v6876 = vld [vmem:[#allocation16 + $0x140] sm:$0xff]
    %v6877 = vld [vmem:[#allocation16 + $0x148] sm:$0xff]
    %v6878 = vld [vmem:[#allocation16 + $0x150] sm:$0xff]
    %v6879 = vld [vmem:[#allocation16 + $0x158] sm:$0xff]
    %v6880 = vld [vmem:[#allocation16 + $0x160] sm:$0xff]
    %v6881 = vld [vmem:[#allocation16 + $0x168] sm:$0xff]
    %v6882 = vld [vmem:[#allocation16 + $0x170] sm:$0xff]
    %v6883 = vld [vmem:[#allocation16 + $0x178] sm:$0xff]
    %v6884 = vld [vmem:[#allocation16 + $0x180] sm:$0xff]
    %v6885 = vld [vmem:[#allocation16 + $0x188] sm:$0xff]
    %v6886 = vld [vmem:[#allocation16 + $0x190] sm:$0xff]
    %v6887 = vld [vmem:[#allocation16 + $0x198] sm:$0xff]
    %v6888 = vld [vmem:[#allocation16 + $0x1a0] sm:$0xff]
    %v6889 = vld [vmem:[#allocation16 + $0x1a8] sm:$0xff]
    %v6890 = vld [vmem:[#allocation16 + $0x1b0] sm:$0xff]
    %v6891 = vld [vmem:[#allocation16 + $0x1b8] sm:$0xff]
    %v6892 = vld [vmem:[#allocation16 + $0x1c0] sm:$0xff]
    %v6893 = vld [vmem:[#allocation16 + $0x1c8] sm:$0xff]
    %v6894 = vld [vmem:[#allocation16 + $0x1d0] sm:$0xff]
    %v6895 = vld [vmem:[#allocation16 + $0x1d8] sm:$0xff]
    %v6896 = vld [vmem:[#allocation16 + $0x1e0] sm:$0xff]
    %v6897 = vld [vmem:[#allocation16 + $0x1e8] sm:$0xff]
    %v6898 = vld [vmem:[#allocation16 + $0x1f0] sm:$0xff]
    %v6899 = vld [vmem:[#allocation16 + $0x1f8] sm:$0xff]
    %v6900 = vld [vmem:[#allocation16 + $0x200] sm:$0xff]
    %v6901 = vld [vmem:[#allocation16 + $0x208] sm:$0xff]
    %v6902 = vld [vmem:[#allocation16 + $0x210] sm:$0xff]
    %v6903 = vld [vmem:[#allocation16 + $0x218] sm:$0xff]
    %v6904 = vld [vmem:[#allocation16 + $0x220] sm:$0xff]
    %v6905 = vld [vmem:[#allocation16 + $0x228] sm:$0xff]
    %v6906 = vld [vmem:[#allocation16 + $0x230] sm:$0xff]
    %v6907 = vld [vmem:[#allocation16 + $0x238] sm:$0xff]
    %v6908 = vld [vmem:[#allocation16 + $0x240] sm:$0xff]
    %v6909 = vld [vmem:[#allocation16 + $0x248] sm:$0xff]
    %v6910 = vld [vmem:[#allocation16 + $0x250] sm:$0xff]
    %v6911 = vld [vmem:[#allocation16 + $0x258] sm:$0xff]
    %v6912 = vld [vmem:[#allocation16 + $0x260] sm:$0xff]
    %v6913 = vld [vmem:[#allocation16 + $0x268] sm:$0xff]
    %v6914 = vld [vmem:[#allocation16 + $0x270] sm:$0xff]
    %v6915 = vld [vmem:[#allocation16 + $0x278] sm:$0xff]
    %v6916 = vld [vmem:[#allocation16 + $0x280] sm:$0xff]
    %v6917 = vld [vmem:[#allocation16 + $0x288] sm:$0xff]
    %v6918 = vld [vmem:[#allocation16 + $0x290] sm:$0xff]
    %v6919 = vld [vmem:[#allocation16 + $0x298] sm:$0xff]
    %v6920 = vld [vmem:[#allocation16 + $0x2a0] sm:$0xff]
    %v6921 = vld [vmem:[#allocation16 + $0x2a8] sm:$0xff]
    %v6922 = vld [vmem:[#allocation16 + $0x2b0] sm:$0xff]
    %v6923 = vld [vmem:[#allocation16 + $0x2b8] sm:$0xff]
    %v6924 = vld [vmem:[#allocation16 + $0x2c0] sm:$0xff]
    %v6925 = vld [vmem:[#allocation16 + $0x2c8] sm:$0xff]
    %v6926 = vld [vmem:[#allocation16 + $0x2d0] sm:$0xff]
    %v6927 = vld [vmem:[#allocation16 + $0x2d8] sm:$0xff]
    %v6928 = vld [vmem:[#allocation16 + $0x2e0] sm:$0xff]
    %v6929 = vld [vmem:[#allocation16 + $0x2e8] sm:$0xff]
    %v6930 = vld [vmem:[#allocation16 + $0x2f0] sm:$0xff]
    %v6931 = vld [vmem:[#allocation16 + $0x2f8] sm:$0xff]
    %v6932 = vld [vmem:[#allocation16 + $0x300] sm:$0xff]
    %v6933 = vld [vmem:[#allocation16 + $0x308] sm:$0xff]
    %v6934 = vld [vmem:[#allocation16 + $0x310] sm:$0xff]
    %v6935 = vld [vmem:[#allocation16 + $0x318] sm:$0xff]
    %v6936 = vld [vmem:[#allocation16 + $0x320] sm:$0xff]
    %v6937 = vld [vmem:[#allocation16 + $0x328] sm:$0xff]
    %v6938 = vld [vmem:[#allocation16 + $0x330] sm:$0xff]
    %v6939 = vld [vmem:[#allocation16 + $0x338] sm:$0xff]
    %v6940 = vld [vmem:[#allocation16 + $0x340] sm:$0xff]
    %v6941 = vld [vmem:[#allocation16 + $0x348] sm:$0xff]
    %v6942 = vld [vmem:[#allocation16 + $0x350] sm:$0xff]
    %v6943 = vld [vmem:[#allocation16 + $0x358] sm:$0xff]
    %v6944 = vld [vmem:[#allocation16 + $0x360] sm:$0xff]
    %v6945 = vld [vmem:[#allocation16 + $0x368] sm:$0xff]
    %v6946 = vld [vmem:[#allocation16 + $0x370] sm:$0xff]
    %v6947 = vld [vmem:[#allocation16 + $0x378] sm:$0xff]
    %v6948 = vld [vmem:[#allocation16 + $0x380] sm:$0xff]
    %v6949 = vld [vmem:[#allocation16 + $0x388] sm:$0xff]
    %v6950 = vld [vmem:[#allocation16 + $0x390] sm:$0xff]
    %v6951 = vld [vmem:[#allocation16 + $0x398] sm:$0xff]
    %v6952 = vld [vmem:[#allocation16 + $0x3a0] sm:$0xff]
    %v6953 = vld [vmem:[#allocation16 + $0x3a8] sm:$0xff]
    %v6954 = vld [vmem:[#allocation16 + $0x3b0] sm:$0xff]
    %v6955 = vld [vmem:[#allocation16 + $0x3b8] sm:$0xff]
    %v6956 = vld [vmem:[#allocation16 + $0x3c0] sm:$0xff]
    %v6957 = vld [vmem:[#allocation16 + $0x3c8] sm:$0xff]
    %v6958 = vld [vmem:[#allocation16 + $0x3d0] sm:$0xff]
    %v6959 = vld [vmem:[#allocation16 + $0x3d8] sm:$0xff]
    %v6960 = vld [vmem:[#allocation16 + $0x3e0] sm:$0xff]
    %v6961 = vld [vmem:[#allocation16 + $0x3e8] sm:$0xff]
    %v6962 = vld [vmem:[#allocation16 + $0x3f0] sm:$0xff]
    %v6963 = vld [vmem:[#allocation16 + $0x3f8] sm:$0xff]
    %v6964 = vld [vmem:[#allocation16 + $0x400] sm:$0xff]
    %v6965 = vld [vmem:[#allocation16 + $0x408] sm:$0xff]
    %v6966 = vld [vmem:[#allocation16 + $0x410] sm:$0xff]
    %v6967 = vld [vmem:[#allocation16 + $0x418] sm:$0xff]
    %v6968 = vld [vmem:[#allocation16 + $0x420] sm:$0xff]
    %v6969 = vld [vmem:[#allocation16 + $0x428] sm:$0xff]
    %v6970 = vld [vmem:[#allocation16 + $0x430] sm:$0xff]
    %v6971 = vld [vmem:[#allocation16 + $0x438] sm:$0xff]
    %v6972 = vld [vmem:[#allocation16 + $0x440] sm:$0xff]
    %v6973 = vld [vmem:[#allocation16 + $0x448] sm:$0xff]
    %v6974 = vld [vmem:[#allocation16 + $0x450] sm:$0xff]
    %v6975 = vld [vmem:[#allocation16 + $0x458] sm:$0xff]
    %v6976 = vld [vmem:[#allocation16 + $0x460] sm:$0xff]
    %v6977 = vld [vmem:[#allocation16 + $0x468] sm:$0xff]
    %v6978 = vld [vmem:[#allocation16 + $0x470] sm:$0xff]
    %v6979 = vld [vmem:[#allocation16 + $0x478] sm:$0xff]
    %v6980 = vld [vmem:[#allocation16 + $0x480] sm:$0xff]
    %v6981 = vld [vmem:[#allocation16 + $0x488] sm:$0xff]
    %v6982 = vld [vmem:[#allocation16 + $0x490] sm:$0xff]
    %v6983 = vld [vmem:[#allocation16 + $0x498] sm:$0xff]
    %v6984 = vld [vmem:[#allocation16 + $0x4a0] sm:$0xff]
    %v6985 = vld [vmem:[#allocation16 + $0x4a8] sm:$0xff]
    %v6986 = vld [vmem:[#allocation16 + $0x4b0] sm:$0xff]
    %v6987 = vld [vmem:[#allocation16 + $0x4b8] sm:$0xff]
    %v6988 = vld [vmem:[#allocation16 + $0x4c0] sm:$0xff]
    %v6989 = vld [vmem:[#allocation16 + $0x4c8] sm:$0xff]
    %v6990 = vld [vmem:[#allocation16 + $0x4d0] sm:$0xff]
    %v6991 = vld [vmem:[#allocation16 + $0x4d8] sm:$0xff]
    %v6992 = vld [vmem:[#allocation16 + $0x4e0] sm:$0xff]
    %v6993 = vld [vmem:[#allocation16 + $0x4e8] sm:$0xff]
    %v6994 = vld [vmem:[#allocation16 + $0x4f0] sm:$0xff]
    %v6995 = vld [vmem:[#allocation16 + $0x4f8] sm:$0xff]
    %v6996 = vld [vmem:[#allocation16 + $0x500] sm:$0xff]
    %v6997 = vld [vmem:[#allocation16 + $0x508] sm:$0xff]
    %v6998 = vld [vmem:[#allocation16 + $0x510] sm:$0xff]
    %v6999 = vld [vmem:[#allocation16 + $0x518] sm:$0xff]
    %v7000 = vld [vmem:[#allocation16 + $0x520] sm:$0xff]
    %v7001 = vld [vmem:[#allocation16 + $0x528] sm:$0xff]
    %v7002 = vld [vmem:[#allocation16 + $0x530] sm:$0xff]
    %v7003 = vld [vmem:[#allocation16 + $0x538] sm:$0xff]
    %v7004 = vld [vmem:[#allocation16 + $0x540] sm:$0xff]
    %v7005 = vld [vmem:[#allocation16 + $0x548] sm:$0xff]
    %v7006 = vld [vmem:[#allocation16 + $0x550] sm:$0xff]
    %v7007 = vld [vmem:[#allocation16 + $0x558] sm:$0xff]
    %v7008 = vld [vmem:[#allocation16 + $0x560] sm:$0xff]
    %v7009 = vld [vmem:[#allocation16 + $0x568] sm:$0xff]
    %v7010 = vld [vmem:[#allocation16 + $0x570] sm:$0xff]
    %v7011 = vld [vmem:[#allocation16 + $0x578] sm:$0xff]
    %v7012 = vld [vmem:[#allocation16 + $0x580] sm:$0xff]
    %v7013 = vld [vmem:[#allocation16 + $0x588] sm:$0xff]
    %v7014 = vld [vmem:[#allocation16 + $0x590] sm:$0xff]
    %v7015 = vld [vmem:[#allocation16 + $0x598] sm:$0xff]
    %v7016 = vld [vmem:[#allocation16 + $0x5a0] sm:$0xff]
    %v7017 = vld [vmem:[#allocation16 + $0x5a8] sm:$0xff]
    %v7018 = vld [vmem:[#allocation16 + $0x5b0] sm:$0xff]
    %v7019 = vld [vmem:[#allocation16 + $0x5b8] sm:$0xff]
    %v7020 = vld [vmem:[#allocation16 + $0x5c0] sm:$0xff]
    %v7021 = vld [vmem:[#allocation16 + $0x5c8] sm:$0xff]
    %v7022 = vld [vmem:[#allocation16 + $0x5d0] sm:$0xff]
    %v7023 = vld [vmem:[#allocation16 + $0x5d8] sm:$0xff]
    %v7024 = vld [vmem:[#allocation16 + $0x5e0] sm:$0xff]
    %v7025 = vld [vmem:[#allocation16 + $0x5e8] sm:$0xff]
    %v7026 = vld [vmem:[#allocation16 + $0x5f0] sm:$0xff]
    %v7027 = vld [vmem:[#allocation16 + $0x5f8] sm:$0xff]
    %v7028 = vld [vmem:[#allocation16 + $0x600] sm:$0xff]
    %v7029 = vld [vmem:[#allocation16 + $0x608] sm:$0xff]
    %v7030 = vld [vmem:[#allocation16 + $0x610] sm:$0xff]
    %v7031 = vld [vmem:[#allocation16 + $0x618] sm:$0xff]
    %v7032 = vld [vmem:[#allocation16 + $0x620] sm:$0xff]
    %v7033 = vld [vmem:[#allocation16 + $0x628] sm:$0xff]
    %v7034 = vld [vmem:[#allocation16 + $0x630] sm:$0xff]
    %v7035 = vld [vmem:[#allocation16 + $0x638] sm:$0xff]
    %v7036 = vld [vmem:[#allocation16 + $0x640] sm:$0xff]
    %v7037 = vld [vmem:[#allocation16 + $0x648] sm:$0xff]
    %v7038 = vld [vmem:[#allocation16 + $0x650] sm:$0xff]
    %v7039 = vld [vmem:[#allocation16 + $0x658] sm:$0xff]
    %v7040 = vld [vmem:[#allocation16 + $0x660] sm:$0xff]
    %v7041 = vld [vmem:[#allocation16 + $0x668] sm:$0xff]
    %v7042 = vld [vmem:[#allocation16 + $0x670] sm:$0xff]
    %v7043 = vld [vmem:[#allocation16 + $0x678] sm:$0xff]
    %v7044 = vld [vmem:[#allocation16 + $0x680] sm:$0xff]
    %v7045 = vld [vmem:[#allocation16 + $0x688] sm:$0xff]
    %v7046 = vld [vmem:[#allocation16 + $0x690] sm:$0xff]
    %v7047 = vld [vmem:[#allocation16 + $0x698] sm:$0xff]
    %v7048 = vld [vmem:[#allocation16 + $0x6a0] sm:$0xff]
    %v7049 = vld [vmem:[#allocation16 + $0x6a8] sm:$0xff]
    %v7050 = vld [vmem:[#allocation16 + $0x6b0] sm:$0xff]
    %v7051 = vld [vmem:[#allocation16 + $0x6b8] sm:$0xff]
    %v7052 = vld [vmem:[#allocation16 + $0x6c0] sm:$0xff]
    %v7053 = vld [vmem:[#allocation16 + $0x6c8] sm:$0xff]
    %v7054 = vld [vmem:[#allocation16 + $0x6d0] sm:$0xff]
    %v7055 = vld [vmem:[#allocation16 + $0x6d8] sm:$0xff]
    %v7056 = vld [vmem:[#allocation16 + $0x6e0] sm:$0xff]
    %v7057 = vld [vmem:[#allocation16 + $0x6e8] sm:$0xff]
    %v7058 = vld [vmem:[#allocation16 + $0x6f0] sm:$0xff]
    %v7059 = vld [vmem:[#allocation16 + $0x6f8] sm:$0xff]
    %v7060 = vld [vmem:[#allocation16 + $0x700] sm:$0xff]
    %v7061 = vld [vmem:[#allocation16 + $0x708] sm:$0xff]
    %v7062 = vld [vmem:[#allocation16 + $0x710] sm:$0xff]
    %v7063 = vld [vmem:[#allocation16 + $0x718] sm:$0xff]
    %v7064 = vld [vmem:[#allocation16 + $0x720] sm:$0xff]
    %v7065 = vld [vmem:[#allocation16 + $0x728] sm:$0xff]
    %v7066 = vld [vmem:[#allocation16 + $0x730] sm:$0xff]
    %v7067 = vld [vmem:[#allocation16 + $0x738] sm:$0xff]
    %v7068 = vld [vmem:[#allocation16 + $0x740] sm:$0xff]
    %v7069 = vld [vmem:[#allocation16 + $0x748] sm:$0xff]
    %v7070 = vld [vmem:[#allocation16 + $0x750] sm:$0xff]
    %v7071 = vld [vmem:[#allocation16 + $0x758] sm:$0xff]
    %v7072 = vld [vmem:[#allocation16 + $0x760] sm:$0xff]
    %v7073 = vld [vmem:[#allocation16 + $0x768] sm:$0xff]
    %v7074 = vld [vmem:[#allocation16 + $0x770] sm:$0xff]
    %v7075 = vld [vmem:[#allocation16 + $0x778] sm:$0xff]
    %v7076 = vld [vmem:[#allocation16 + $0x780] sm:$0xff]
    %v7077 = vld [vmem:[#allocation16 + $0x788] sm:$0xff]
    %v7078 = vld [vmem:[#allocation16 + $0x790] sm:$0xff]
    %v7079 = vld [vmem:[#allocation16 + $0x798] sm:$0xff]
    %v7080 = vld [vmem:[#allocation16 + $0x7a0] sm:$0xff]
    %v7081 = vld [vmem:[#allocation16 + $0x7a8] sm:$0xff]
    %v7082 = vld [vmem:[#allocation16 + $0x7b0] sm:$0xff]
    %v7083 = vld [vmem:[#allocation16 + $0x7b8] sm:$0xff]
    %v7084 = vld [vmem:[#allocation16 + $0x7c0] sm:$0xff]
    %v7085 = vld [vmem:[#allocation16 + $0x7c8] sm:$0xff]
    %v7086 = vld [vmem:[#allocation16 + $0x7d0] sm:$0xff]
    %v7087 = vld [vmem:[#allocation16 + $0x7d8] sm:$0xff]
    %v7088 = vld [vmem:[#allocation16 + $0x7e0] sm:$0xff]
    %v7089 = vld [vmem:[#allocation16 + $0x7e8] sm:$0xff]
    %v7090 = vld [vmem:[#allocation16 + $0x7f0] sm:$0xff]
    %v7091 = vld [vmem:[#allocation16 + $0x7f8] sm:$0xff]
    %v7092 = vld [vmem:[#allocation18] sm:$0xff]
    %v7094 = vlaneseq
    %v7095 = vshrl.u32 %v7094, 7
    %v7096 = vsub.s32 0, %v7095
    %v7097 = vrot.slane %v7092, %v7096
    %v7098 = vlaneseq
    %v7099 = vshrl.u32 %v7098, 7
    %v7100 = vsub.s32 1, %v7099
    %v7101 = vrot.slane %v7092, %v7100
    %v7102 = vlaneseq
    %v7103 = vshrl.u32 %v7102, 7
    %v7104 = vsub.s32 2, %v7103
    %v7105 = vrot.slane %v7092, %v7104
    %v7106 = vlaneseq
    %v7107 = vshrl.u32 %v7106, 7
    %v7108 = vsub.s32 3, %v7107
    %v7109 = vrot.slane %v7092, %v7108
    %v7110 = vlaneseq
    %v7111 = vshrl.u32 %v7110, 7
    %v7112 = vsub.s32 4, %v7111
    %v7113 = vrot.slane %v7092, %v7112
    %v7114 = vlaneseq
    %v7115 = vshrl.u32 %v7114, 7
    %v7116 = vsub.s32 5, %v7115
    %v7117 = vrot.slane %v7092, %v7116
    %v7118 = vlaneseq
    %v7119 = vshrl.u32 %v7118, 7
    %v7120 = vsub.s32 6, %v7119
    %v7121 = vrot.slane %v7092, %v7120
    %v7122 = vlaneseq
    %v7123 = vshrl.u32 %v7122, 7
    %v7124 = vsub.s32 7, %v7123
    %v7125 = vrot.slane %v7092, %v7124
    %v7390 = vunpack.c.l.b16 %v6836
    %v7391 = vunpack.c.h.b16 %v6836
    %v7392 = vunpack.c.l.b16 %v6837
    %v7393 = vunpack.c.h.b16 %v6837
    %v7394 = vunpack.c.l.b16 %v6838
    %v7395 = vunpack.c.h.b16 %v6838
    %v7396 = vunpack.c.l.b16 %v6839
    %v7397 = vunpack.c.h.b16 %v6839
    %v7398 = vunpack.c.l.b16 %v6840
    %v7399 = vunpack.c.h.b16 %v6840
    %v7400 = vunpack.c.l.b16 %v6841
    %v7401 = vunpack.c.h.b16 %v6841
    %v7402 = vunpack.c.l.b16 %v6842
    %v7403 = vunpack.c.h.b16 %v6842
    %v7404 = vunpack.c.l.b16 %v6843
    %v7405 = vunpack.c.h.b16 %v6843
    %v7406 = vunpack.c.l.b16 %v6844
    %v7407 = vunpack.c.h.b16 %v6844
    %v7408 = vunpack.c.l.b16 %v6845
    %v7409 = vunpack.c.h.b16 %v6845
    %v7410 = vunpack.c.l.b16 %v6846
    %v7411 = vunpack.c.h.b16 %v6846
    %v7412 = vunpack.c.l.b16 %v6847
    %v7413 = vunpack.c.h.b16 %v6847
    %v7414 = vunpack.c.l.b16 %v6848
    %v7415 = vunpack.c.h.b16 %v6848
    %v7416 = vunpack.c.l.b16 %v6849
    %v7417 = vunpack.c.h.b16 %v6849
    %v7418 = vunpack.c.l.b16 %v6850
    %v7419 = vunpack.c.h.b16 %v6850
    %v7420 = vunpack.c.l.b16 %v6851
    %v7421 = vunpack.c.h.b16 %v6851
    %v7422 = vunpack.c.l.b16 %v6852
    %v7423 = vunpack.c.h.b16 %v6852
    %v7424 = vunpack.c.l.b16 %v6853
    %v7425 = vunpack.c.h.b16 %v6853
    %v7426 = vunpack.c.l.b16 %v6854
    %v7427 = vunpack.c.h.b16 %v6854
    %v7428 = vunpack.c.l.b16 %v6855
    %v7429 = vunpack.c.h.b16 %v6855
    %v7430 = vunpack.c.l.b16 %v6856
    %v7431 = vunpack.c.h.b16 %v6856
    %v7432 = vunpack.c.l.b16 %v6857
    %v7433 = vunpack.c.h.b16 %v6857
    %v7434 = vunpack.c.l.b16 %v6858
    %v7435 = vunpack.c.h.b16 %v6858
    %v7436 = vunpack.c.l.b16 %v6859
    %v7437 = vunpack.c.h.b16 %v6859
    %v7438 = vunpack.c.l.b16 %v6860
    %v7439 = vunpack.c.h.b16 %v6860
    %v7440 = vunpack.c.l.b16 %v6861
    %v7441 = vunpack.c.h.b16 %v6861
    %v7442 = vunpack.c.l.b16 %v6862
    %v7443 = vunpack.c.h.b16 %v6862
    %v7444 = vunpack.c.l.b16 %v6863
    %v7445 = vunpack.c.h.b16 %v6863
    %v7446 = vunpack.c.l.b16 %v6864
    %v7447 = vunpack.c.h.b16 %v6864
    %v7448 = vunpack.c.l.b16 %v6865
    %v7449 = vunpack.c.h.b16 %v6865
    %v7450 = vunpack.c.l.b16 %v6866
    %v7451 = vunpack.c.h.b16 %v6866
    %v7452 = vunpack.c.l.b16 %v6867
    %v7453 = vunpack.c.h.b16 %v6867
    %v7454 = vunpack.c.l.b16 %v6868
    %v7455 = vunpack.c.h.b16 %v6868
    %v7456 = vunpack.c.l.b16 %v6869
    %v7457 = vunpack.c.h.b16 %v6869
    %v7458 = vunpack.c.l.b16 %v6870
    %v7459 = vunpack.c.h.b16 %v6870
    %v7460 = vunpack.c.l.b16 %v6871
    %v7461 = vunpack.c.h.b16 %v6871
    %v7462 = vunpack.c.l.b16 %v6872
    %v7463 = vunpack.c.h.b16 %v6872
    %v7464 = vunpack.c.l.b16 %v6873
    %v7465 = vunpack.c.h.b16 %v6873
    %v7466 = vunpack.c.l.b16 %v6874
    %v7467 = vunpack.c.h.b16 %v6874
    %v7468 = vunpack.c.l.b16 %v6875
    %v7469 = vunpack.c.h.b16 %v6875
    %v7470 = vunpack.c.l.b16 %v6876
    %v7471 = vunpack.c.h.b16 %v6876
    %v7472 = vunpack.c.l.b16 %v6877
    %v7473 = vunpack.c.h.b16 %v6877
    %v7474 = vunpack.c.l.b16 %v6878
    %v7475 = vunpack.c.h.b16 %v6878
    %v7476 = vunpack.c.l.b16 %v6879
    %v7477 = vunpack.c.h.b16 %v6879
    %v7478 = vunpack.c.l.b16 %v6880
    %v7479 = vunpack.c.h.b16 %v6880
    %v7480 = vunpack.c.l.b16 %v6881
    %v7481 = vunpack.c.h.b16 %v6881
    %v7482 = vunpack.c.l.b16 %v6882
    %v7483 = vunpack.c.h.b16 %v6882
    %v7484 = vunpack.c.l.b16 %v6883
    %v7485 = vunpack.c.h.b16 %v6883
    %v7486 = vunpack.c.l.b16 %v6884
    %v7487 = vunpack.c.h.b16 %v6884
    %v7488 = vunpack.c.l.b16 %v6885
    %v7489 = vunpack.c.h.b16 %v6885
    %v7490 = vunpack.c.l.b16 %v6886
    %v7491 = vunpack.c.h.b16 %v6886
    %v7492 = vunpack.c.l.b16 %v6887
    %v7493 = vunpack.c.h.b16 %v6887
    %v7494 = vunpack.c.l.b16 %v6888
    %v7495 = vunpack.c.h.b16 %v6888
    %v7496 = vunpack.c.l.b16 %v6889
    %v7497 = vunpack.c.h.b16 %v6889
    %v7498 = vunpack.c.l.b16 %v6890
    %v7499 = vunpack.c.h.b16 %v6890
    %v7500 = vunpack.c.l.b16 %v6891
    %v7501 = vunpack.c.h.b16 %v6891
    %v7502 = vunpack.c.l.b16 %v6892
    %v7503 = vunpack.c.h.b16 %v6892
    %v7504 = vunpack.c.l.b16 %v6893
    %v7505 = vunpack.c.h.b16 %v6893
    %v7506 = vunpack.c.l.b16 %v6894
    %v7507 = vunpack.c.h.b16 %v6894
    %v7508 = vunpack.c.l.b16 %v6895
    %v7509 = vunpack.c.h.b16 %v6895
    %v7510 = vunpack.c.l.b16 %v6896
    %v7511 = vunpack.c.h.b16 %v6896
    %v7512 = vunpack.c.l.b16 %v6897
    %v7513 = vunpack.c.h.b16 %v6897
    %v7514 = vunpack.c.l.b16 %v6898
    %v7515 = vunpack.c.h.b16 %v6898
    %v7516 = vunpack.c.l.b16 %v6899
    %v7517 = vunpack.c.h.b16 %v6899
    %v7518 = vunpack.c.l.b16 %v6900
    %v7519 = vunpack.c.h.b16 %v6900
    %v7520 = vunpack.c.l.b16 %v6901
    %v7521 = vunpack.c.h.b16 %v6901
    %v7522 = vunpack.c.l.b16 %v6902
    %v7523 = vunpack.c.h.b16 %v6902
    %v7524 = vunpack.c.l.b16 %v6903
    %v7525 = vunpack.c.h.b16 %v6903
    %v7526 = vunpack.c.l.b16 %v6904
    %v7527 = vunpack.c.h.b16 %v6904
    %v7528 = vunpack.c.l.b16 %v6905
    %v7529 = vunpack.c.h.b16 %v6905
    %v7530 = vunpack.c.l.b16 %v6906
    %v7531 = vunpack.c.h.b16 %v6906
    %v7532 = vunpack.c.l.b16 %v6907
    %v7533 = vunpack.c.h.b16 %v6907
    %v7534 = vunpack.c.l.b16 %v6908
    %v7535 = vunpack.c.h.b16 %v6908
    %v7536 = vunpack.c.l.b16 %v6909
    %v7537 = vunpack.c.h.b16 %v6909
    %v7538 = vunpack.c.l.b16 %v6910
    %v7539 = vunpack.c.h.b16 %v6910
    %v7540 = vunpack.c.l.b16 %v6911
    %v7541 = vunpack.c.h.b16 %v6911
    %v7542 = vunpack.c.l.b16 %v6912
    %v7543 = vunpack.c.h.b16 %v6912
    %v7544 = vunpack.c.l.b16 %v6913
    %v7545 = vunpack.c.h.b16 %v6913
    %v7546 = vunpack.c.l.b16 %v6914
    %v7547 = vunpack.c.h.b16 %v6914
    %v7548 = vunpack.c.l.b16 %v6915
    %v7549 = vunpack.c.h.b16 %v6915
    %v7550 = vunpack.c.l.b16 %v6916
    %v7551 = vunpack.c.h.b16 %v6916
    %v7552 = vunpack.c.l.b16 %v6917
    %v7553 = vunpack.c.h.b16 %v6917
    %v7554 = vunpack.c.l.b16 %v6918
    %v7555 = vunpack.c.h.b16 %v6918
    %v7556 = vunpack.c.l.b16 %v6919
    %v7557 = vunpack.c.h.b16 %v6919
    %v7558 = vunpack.c.l.b16 %v6920
    %v7559 = vunpack.c.h.b16 %v6920
    %v7560 = vunpack.c.l.b16 %v6921
    %v7561 = vunpack.c.h.b16 %v6921
    %v7562 = vunpack.c.l.b16 %v6922
    %v7563 = vunpack.c.h.b16 %v6922
    %v7564 = vunpack.c.l.b16 %v6923
    %v7565 = vunpack.c.h.b16 %v6923
    %v7566 = vunpack.c.l.b16 %v6924
    %v7567 = vunpack.c.h.b16 %v6924
    %v7568 = vunpack.c.l.b16 %v6925
    %v7569 = vunpack.c.h.b16 %v6925
    %v7570 = vunpack.c.l.b16 %v6926
    %v7571 = vunpack.c.h.b16 %v6926
    %v7572 = vunpack.c.l.b16 %v6927
    %v7573 = vunpack.c.h.b16 %v6927
    %v7574 = vunpack.c.l.b16 %v6928
    %v7575 = vunpack.c.h.b16 %v6928
    %v7576 = vunpack.c.l.b16 %v6929
    %v7577 = vunpack.c.h.b16 %v6929
    %v7578 = vunpack.c.l.b16 %v6930
    %v7579 = vunpack.c.h.b16 %v6930
    %v7580 = vunpack.c.l.b16 %v6931
    %v7581 = vunpack.c.h.b16 %v6931
    %v7582 = vunpack.c.l.b16 %v6932
    %v7583 = vunpack.c.h.b16 %v6932
    %v7584 = vunpack.c.l.b16 %v6933
    %v7585 = vunpack.c.h.b16 %v6933
    %v7586 = vunpack.c.l.b16 %v6934
    %v7587 = vunpack.c.h.b16 %v6934
    %v7588 = vunpack.c.l.b16 %v6935
    %v7589 = vunpack.c.h.b16 %v6935
    %v7590 = vunpack.c.l.b16 %v6936
    %v7591 = vunpack.c.h.b16 %v6936
    %v7592 = vunpack.c.l.b16 %v6937
    %v7593 = vunpack.c.h.b16 %v6937
    %v7594 = vunpack.c.l.b16 %v6938
    %v7595 = vunpack.c.h.b16 %v6938
    %v7596 = vunpack.c.l.b16 %v6939
    %v7597 = vunpack.c.h.b16 %v6939
    %v7598 = vunpack.c.l.b16 %v6940
    %v7599 = vunpack.c.h.b16 %v6940
    %v7600 = vunpack.c.l.b16 %v6941
    %v7601 = vunpack.c.h.b16 %v6941
    %v7602 = vunpack.c.l.b16 %v6942
    %v7603 = vunpack.c.h.b16 %v6942
    %v7604 = vunpack.c.l.b16 %v6943
    %v7605 = vunpack.c.h.b16 %v6943
    %v7606 = vunpack.c.l.b16 %v6944
    %v7607 = vunpack.c.h.b16 %v6944
    %v7608 = vunpack.c.l.b16 %v6945
    %v7609 = vunpack.c.h.b16 %v6945
    %v7610 = vunpack.c.l.b16 %v6946
    %v7611 = vunpack.c.h.b16 %v6946
    %v7612 = vunpack.c.l.b16 %v6947
    %v7613 = vunpack.c.h.b16 %v6947
    %v7614 = vunpack.c.l.b16 %v6948
    %v7615 = vunpack.c.h.b16 %v6948
    %v7616 = vunpack.c.l.b16 %v6949
    %v7617 = vunpack.c.h.b16 %v6949
    %v7618 = vunpack.c.l.b16 %v6950
    %v7619 = vunpack.c.h.b16 %v6950
    %v7620 = vunpack.c.l.b16 %v6951
    %v7621 = vunpack.c.h.b16 %v6951
    %v7622 = vunpack.c.l.b16 %v6952
    %v7623 = vunpack.c.h.b16 %v6952
    %v7624 = vunpack.c.l.b16 %v6953
    %v7625 = vunpack.c.h.b16 %v6953
    %v7626 = vunpack.c.l.b16 %v6954
    %v7627 = vunpack.c.h.b16 %v6954
    %v7628 = vunpack.c.l.b16 %v6955
    %v7629 = vunpack.c.h.b16 %v6955
    %v7630 = vunpack.c.l.b16 %v6956
    %v7631 = vunpack.c.h.b16 %v6956
    %v7632 = vunpack.c.l.b16 %v6957
    %v7633 = vunpack.c.h.b16 %v6957
    %v7634 = vunpack.c.l.b16 %v6958
    %v7635 = vunpack.c.h.b16 %v6958
    %v7636 = vunpack.c.l.b16 %v6959
    %v7637 = vunpack.c.h.b16 %v6959
    %v7638 = vunpack.c.l.b16 %v6960
    %v7639 = vunpack.c.h.b16 %v6960
    %v7640 = vunpack.c.l.b16 %v6961
    %v7641 = vunpack.c.h.b16 %v6961
    %v7642 = vunpack.c.l.b16 %v6962
    %v7643 = vunpack.c.h.b16 %v6962
    %v7644 = vunpack.c.l.b16 %v6963
    %v7645 = vunpack.c.h.b16 %v6963
    %v7646 = vunpack.c.l.b16 %v6964
    %v7647 = vunpack.c.h.b16 %v6964
    %v7648 = vunpack.c.l.b16 %v6965
    %v7649 = vunpack.c.h.b16 %v6965
    %v7650 = vunpack.c.l.b16 %v6966
    %v7651 = vunpack.c.h.b16 %v6966
    %v7652 = vunpack.c.l.b16 %v6967
    %v7653 = vunpack.c.h.b16 %v6967
    %v7654 = vunpack.c.l.b16 %v6968
    %v7655 = vunpack.c.h.b16 %v6968
    %v7656 = vunpack.c.l.b16 %v6969
    %v7657 = vunpack.c.h.b16 %v6969
    %v7658 = vunpack.c.l.b16 %v6970
    %v7659 = vunpack.c.h.b16 %v6970
    %v7660 = vunpack.c.l.b16 %v6971
    %v7661 = vunpack.c.h.b16 %v6971
    %v7662 = vunpack.c.l.b16 %v6972
    %v7663 = vunpack.c.h.b16 %v6972
    %v7664 = vunpack.c.l.b16 %v6973
    %v7665 = vunpack.c.h.b16 %v6973
    %v7666 = vunpack.c.l.b16 %v6974
    %v7667 = vunpack.c.h.b16 %v6974
    %v7668 = vunpack.c.l.b16 %v6975
    %v7669 = vunpack.c.h.b16 %v6975
    %v7670 = vunpack.c.l.b16 %v6976
    %v7671 = vunpack.c.h.b16 %v6976
    %v7672 = vunpack.c.l.b16 %v6977
    %v7673 = vunpack.c.h.b16 %v6977
    %v7674 = vunpack.c.l.b16 %v6978
    %v7675 = vunpack.c.h.b16 %v6978
    %v7676 = vunpack.c.l.b16 %v6979
    %v7677 = vunpack.c.h.b16 %v6979
    %v7678 = vunpack.c.l.b16 %v6980
    %v7679 = vunpack.c.h.b16 %v6980
    %v7680 = vunpack.c.l.b16 %v6981
    %v7681 = vunpack.c.h.b16 %v6981
    %v7682 = vunpack.c.l.b16 %v6982
    %v7683 = vunpack.c.h.b16 %v6982
    %v7684 = vunpack.c.l.b16 %v6983
    %v7685 = vunpack.c.h.b16 %v6983
    %v7686 = vunpack.c.l.b16 %v6984
    %v7687 = vunpack.c.h.b16 %v6984
    %v7688 = vunpack.c.l.b16 %v6985
    %v7689 = vunpack.c.h.b16 %v6985
    %v7690 = vunpack.c.l.b16 %v6986
    %v7691 = vunpack.c.h.b16 %v6986
    %v7692 = vunpack.c.l.b16 %v6987
    %v7693 = vunpack.c.h.b16 %v6987
    %v7694 = vunpack.c.l.b16 %v6988
    %v7695 = vunpack.c.h.b16 %v6988
    %v7696 = vunpack.c.l.b16 %v6989
    %v7697 = vunpack.c.h.b16 %v6989
    %v7698 = vunpack.c.l.b16 %v6990
    %v7699 = vunpack.c.h.b16 %v6990
    %v7700 = vunpack.c.l.b16 %v6991
    %v7701 = vunpack.c.h.b16 %v6991
    %v7702 = vunpack.c.l.b16 %v6992
    %v7703 = vunpack.c.h.b16 %v6992
    %v7704 = vunpack.c.l.b16 %v6993
    %v7705 = vunpack.c.h.b16 %v6993
    %v7706 = vunpack.c.l.b16 %v6994
    %v7707 = vunpack.c.h.b16 %v6994
    %v7708 = vunpack.c.l.b16 %v6995
    %v7709 = vunpack.c.h.b16 %v6995
    %v7710 = vunpack.c.l.b16 %v6996
    %v7711 = vunpack.c.h.b16 %v6996
    %v7712 = vunpack.c.l.b16 %v6997
    %v7713 = vunpack.c.h.b16 %v6997
    %v7714 = vunpack.c.l.b16 %v6998
    %v7715 = vunpack.c.h.b16 %v6998
    %v7716 = vunpack.c.l.b16 %v6999
    %v7717 = vunpack.c.h.b16 %v6999
    %v7718 = vunpack.c.l.b16 %v7000
    %v7719 = vunpack.c.h.b16 %v7000
    %v7720 = vunpack.c.l.b16 %v7001
    %v7721 = vunpack.c.h.b16 %v7001
    %v7722 = vunpack.c.l.b16 %v7002
    %v7723 = vunpack.c.h.b16 %v7002
    %v7724 = vunpack.c.l.b16 %v7003
    %v7725 = vunpack.c.h.b16 %v7003
    %v7726 = vunpack.c.l.b16 %v7004
    %v7727 = vunpack.c.h.b16 %v7004
    %v7728 = vunpack.c.l.b16 %v7005
    %v7729 = vunpack.c.h.b16 %v7005
    %v7730 = vunpack.c.l.b16 %v7006
    %v7731 = vunpack.c.h.b16 %v7006
    %v7732 = vunpack.c.l.b16 %v7007
    %v7733 = vunpack.c.h.b16 %v7007
    %v7734 = vunpack.c.l.b16 %v7008
    %v7735 = vunpack.c.h.b16 %v7008
    %v7736 = vunpack.c.l.b16 %v7009
    %v7737 = vunpack.c.h.b16 %v7009
    %v7738 = vunpack.c.l.b16 %v7010
    %v7739 = vunpack.c.h.b16 %v7010
    %v7740 = vunpack.c.l.b16 %v7011
    %v7741 = vunpack.c.h.b16 %v7011
    %v7742 = vunpack.c.l.b16 %v7012
    %v7743 = vunpack.c.h.b16 %v7012
    %v7744 = vunpack.c.l.b16 %v7013
    %v7745 = vunpack.c.h.b16 %v7013
    %v7746 = vunpack.c.l.b16 %v7014
    %v7747 = vunpack.c.h.b16 %v7014
    %v7748 = vunpack.c.l.b16 %v7015
    %v7749 = vunpack.c.h.b16 %v7015
    %v7750 = vunpack.c.l.b16 %v7016
    %v7751 = vunpack.c.h.b16 %v7016
    %v7752 = vunpack.c.l.b16 %v7017
    %v7753 = vunpack.c.h.b16 %v7017
    %v7754 = vunpack.c.l.b16 %v7018
    %v7755 = vunpack.c.h.b16 %v7018
    %v7756 = vunpack.c.l.b16 %v7019
    %v7757 = vunpack.c.h.b16 %v7019
    %v7758 = vunpack.c.l.b16 %v7020
    %v7759 = vunpack.c.h.b16 %v7020
    %v7760 = vunpack.c.l.b16 %v7021
    %v7761 = vunpack.c.h.b16 %v7021
    %v7762 = vunpack.c.l.b16 %v7022
    %v7763 = vunpack.c.h.b16 %v7022
    %v7764 = vunpack.c.l.b16 %v7023
    %v7765 = vunpack.c.h.b16 %v7023
    %v7766 = vunpack.c.l.b16 %v7024
    %v7767 = vunpack.c.h.b16 %v7024
    %v7768 = vunpack.c.l.b16 %v7025
    %v7769 = vunpack.c.h.b16 %v7025
    %v7770 = vunpack.c.l.b16 %v7026
    %v7771 = vunpack.c.h.b16 %v7026
    %v7772 = vunpack.c.l.b16 %v7027
    %v7773 = vunpack.c.h.b16 %v7027
    %v7774 = vunpack.c.l.b16 %v7028
    %v7775 = vunpack.c.h.b16 %v7028
    %v7776 = vunpack.c.l.b16 %v7029
    %v7777 = vunpack.c.h.b16 %v7029
    %v7778 = vunpack.c.l.b16 %v7030
    %v7779 = vunpack.c.h.b16 %v7030
    %v7780 = vunpack.c.l.b16 %v7031
    %v7781 = vunpack.c.h.b16 %v7031
    %v7782 = vunpack.c.l.b16 %v7032
    %v7783 = vunpack.c.h.b16 %v7032
    %v7784 = vunpack.c.l.b16 %v7033
    %v7785 = vunpack.c.h.b16 %v7033
    %v7786 = vunpack.c.l.b16 %v7034
    %v7787 = vunpack.c.h.b16 %v7034
    %v7788 = vunpack.c.l.b16 %v7035
    %v7789 = vunpack.c.h.b16 %v7035
    %v7790 = vunpack.c.l.b16 %v7036
    %v7791 = vunpack.c.h.b16 %v7036
    %v7792 = vunpack.c.l.b16 %v7037
    %v7793 = vunpack.c.h.b16 %v7037
    %v7794 = vunpack.c.l.b16 %v7038
    %v7795 = vunpack.c.h.b16 %v7038
    %v7796 = vunpack.c.l.b16 %v7039
    %v7797 = vunpack.c.h.b16 %v7039
    %v7798 = vunpack.c.l.b16 %v7040
    %v7799 = vunpack.c.h.b16 %v7040
    %v7800 = vunpack.c.l.b16 %v7041
    %v7801 = vunpack.c.h.b16 %v7041
    %v7802 = vunpack.c.l.b16 %v7042
    %v7803 = vunpack.c.h.b16 %v7042
    %v7804 = vunpack.c.l.b16 %v7043
    %v7805 = vunpack.c.h.b16 %v7043
    %v7806 = vunpack.c.l.b16 %v7044
    %v7807 = vunpack.c.h.b16 %v7044
    %v7808 = vunpack.c.l.b16 %v7045
    %v7809 = vunpack.c.h.b16 %v7045
    %v7810 = vunpack.c.l.b16 %v7046
    %v7811 = vunpack.c.h.b16 %v7046
    %v7812 = vunpack.c.l.b16 %v7047
    %v7813 = vunpack.c.h.b16 %v7047
    %v7814 = vunpack.c.l.b16 %v7048
    %v7815 = vunpack.c.h.b16 %v7048
    %v7816 = vunpack.c.l.b16 %v7049
    %v7817 = vunpack.c.h.b16 %v7049
    %v7818 = vunpack.c.l.b16 %v7050
    %v7819 = vunpack.c.h.b16 %v7050
    %v7820 = vunpack.c.l.b16 %v7051
    %v7821 = vunpack.c.h.b16 %v7051
    %v7822 = vunpack.c.l.b16 %v7052
    %v7823 = vunpack.c.h.b16 %v7052
    %v7824 = vunpack.c.l.b16 %v7053
    %v7825 = vunpack.c.h.b16 %v7053
    %v7826 = vunpack.c.l.b16 %v7054
    %v7827 = vunpack.c.h.b16 %v7054
    %v7828 = vunpack.c.l.b16 %v7055
    %v7829 = vunpack.c.h.b16 %v7055
    %v7830 = vunpack.c.l.b16 %v7056
    %v7831 = vunpack.c.h.b16 %v7056
    %v7832 = vunpack.c.l.b16 %v7057
    %v7833 = vunpack.c.h.b16 %v7057
    %v7834 = vunpack.c.l.b16 %v7058
    %v7835 = vunpack.c.h.b16 %v7058
    %v7836 = vunpack.c.l.b16 %v7059
    %v7837 = vunpack.c.h.b16 %v7059
    %v7838 = vunpack.c.l.b16 %v7060
    %v7839 = vunpack.c.h.b16 %v7060
    %v7840 = vunpack.c.l.b16 %v7061
    %v7841 = vunpack.c.h.b16 %v7061
    %v7842 = vunpack.c.l.b16 %v7062
    %v7843 = vunpack.c.h.b16 %v7062
    %v7844 = vunpack.c.l.b16 %v7063
    %v7845 = vunpack.c.h.b16 %v7063
    %v7846 = vunpack.c.l.b16 %v7064
    %v7847 = vunpack.c.h.b16 %v7064
    %v7848 = vunpack.c.l.b16 %v7065
    %v7849 = vunpack.c.h.b16 %v7065
    %v7850 = vunpack.c.l.b16 %v7066
    %v7851 = vunpack.c.h.b16 %v7066
    %v7852 = vunpack.c.l.b16 %v7067
    %v7853 = vunpack.c.h.b16 %v7067
    %v7854 = vunpack.c.l.b16 %v7068
    %v7855 = vunpack.c.h.b16 %v7068
    %v7856 = vunpack.c.l.b16 %v7069
    %v7857 = vunpack.c.h.b16 %v7069
    %v7858 = vunpack.c.l.b16 %v7070
    %v7859 = vunpack.c.h.b16 %v7070
    %v7860 = vunpack.c.l.b16 %v7071
    %v7861 = vunpack.c.h.b16 %v7071
    %v7862 = vunpack.c.l.b16 %v7072
    %v7863 = vunpack.c.h.b16 %v7072
    %v7864 = vunpack.c.l.b16 %v7073
    %v7865 = vunpack.c.h.b16 %v7073
    %v7866 = vunpack.c.l.b16 %v7074
    %v7867 = vunpack.c.h.b16 %v7074
    %v7868 = vunpack.c.l.b16 %v7075
    %v7869 = vunpack.c.h.b16 %v7075
    %v7870 = vunpack.c.l.b16 %v7076
    %v7871 = vunpack.c.h.b16 %v7076
    %v7872 = vunpack.c.l.b16 %v7077
    %v7873 = vunpack.c.h.b16 %v7077
    %v7874 = vunpack.c.l.b16 %v7078
    %v7875 = vunpack.c.h.b16 %v7078
    %v7876 = vunpack.c.l.b16 %v7079
    %v7877 = vunpack.c.h.b16 %v7079
    %v7878 = vunpack.c.l.b16 %v7080
    %v7879 = vunpack.c.h.b16 %v7080
    %v7880 = vunpack.c.l.b16 %v7081
    %v7881 = vunpack.c.h.b16 %v7081
    %v7882 = vunpack.c.l.b16 %v7082
    %v7883 = vunpack.c.h.b16 %v7082
    %v7884 = vunpack.c.l.b16 %v7083
    %v7885 = vunpack.c.h.b16 %v7083
    %v7886 = vunpack.c.l.b16 %v7084
    %v7887 = vunpack.c.h.b16 %v7084
    %v7888 = vunpack.c.l.b16 %v7085
    %v7889 = vunpack.c.h.b16 %v7085
    %v7890 = vunpack.c.l.b16 %v7086
    %v7891 = vunpack.c.h.b16 %v7086
    %v7892 = vunpack.c.l.b16 %v7087
    %v7893 = vunpack.c.h.b16 %v7087
    %v7894 = vunpack.c.l.b16 %v7088
    %v7895 = vunpack.c.h.b16 %v7088
    %v7896 = vunpack.c.l.b16 %v7089
    %v7897 = vunpack.c.h.b16 %v7089
    %v7898 = vunpack.c.l.b16 %v7090
    %v7899 = vunpack.c.h.b16 %v7090
    %v7900 = vunpack.c.l.b16 %v7091
    %v7901 = vunpack.c.h.b16 %v7091
    %v7902 = vpack.c.b16 %v7398, %v7390
    %v7903 = vpack.c.b16 %v7399, %v7391
    %v7904 = vpack.c.b16 %v7400, %v7392
    %v7905 = vpack.c.b16 %v7401, %v7393
    %v7906 = vpack.c.b16 %v7402, %v7394
    %v7907 = vpack.c.b16 %v7403, %v7395
    %v7908 = vpack.c.b16 %v7404, %v7396
    %v7909 = vpack.c.b16 %v7405, %v7397
    %v7910 = vpack.c.b16 %v7414, %v7406
    %v7911 = vpack.c.b16 %v7415, %v7407
    %v7912 = vpack.c.b16 %v7416, %v7408
    %v7913 = vpack.c.b16 %v7417, %v7409
    %v7914 = vpack.c.b16 %v7418, %v7410
    %v7915 = vpack.c.b16 %v7419, %v7411
    %v7916 = vpack.c.b16 %v7420, %v7412
    %v7917 = vpack.c.b16 %v7421, %v7413
    %v7918 = vpack.c.b16 %v7430, %v7422
    %v7919 = vpack.c.b16 %v7431, %v7423
    %v7920 = vpack.c.b16 %v7432, %v7424
    %v7921 = vpack.c.b16 %v7433, %v7425
    %v7922 = vpack.c.b16 %v7434, %v7426
    %v7923 = vpack.c.b16 %v7435, %v7427
    %v7924 = vpack.c.b16 %v7436, %v7428
    %v7925 = vpack.c.b16 %v7437, %v7429
    %v7926 = vpack.c.b16 %v7446, %v7438
    %v7927 = vpack.c.b16 %v7447, %v7439
    %v7928 = vpack.c.b16 %v7448, %v7440
    %v7929 = vpack.c.b16 %v7449, %v7441
    %v7930 = vpack.c.b16 %v7450, %v7442
    %v7931 = vpack.c.b16 %v7451, %v7443
    %v7932 = vpack.c.b16 %v7452, %v7444
    %v7933 = vpack.c.b16 %v7453, %v7445
    %v7934 = vpack.c.b16 %v7462, %v7454
    %v7935 = vpack.c.b16 %v7463, %v7455
    %v7936 = vpack.c.b16 %v7464, %v7456
    %v7937 = vpack.c.b16 %v7465, %v7457
    %v7938 = vpack.c.b16 %v7466, %v7458
    %v7939 = vpack.c.b16 %v7467, %v7459
    %v7940 = vpack.c.b16 %v7468, %v7460
    %v7941 = vpack.c.b16 %v7469, %v7461
    %v7942 = vpack.c.b16 %v7478, %v7470
    %v7943 = vpack.c.b16 %v7479, %v7471
    %v7944 = vpack.c.b16 %v7480, %v7472
    %v7945 = vpack.c.b16 %v7481, %v7473
    %v7946 = vpack.c.b16 %v7482, %v7474
    %v7947 = vpack.c.b16 %v7483, %v7475
    %v7948 = vpack.c.b16 %v7484, %v7476
    %v7949 = vpack.c.b16 %v7485, %v7477
    %v7950 = vpack.c.b16 %v7494, %v7486
    %v7951 = vpack.c.b16 %v7495, %v7487
    %v7952 = vpack.c.b16 %v7496, %v7488
    %v7953 = vpack.c.b16 %v7497, %v7489
    %v7954 = vpack.c.b16 %v7498, %v7490
    %v7955 = vpack.c.b16 %v7499, %v7491
    %v7956 = vpack.c.b16 %v7500, %v7492
    %v7957 = vpack.c.b16 %v7501, %v7493
    %v7958 = vpack.c.b16 %v7510, %v7502
    %v7959 = vpack.c.b16 %v7511, %v7503
    %v7960 = vpack.c.b16 %v7512, %v7504
    %v7961 = vpack.c.b16 %v7513, %v7505
    %v7962 = vpack.c.b16 %v7514, %v7506
    %v7963 = vpack.c.b16 %v7515, %v7507
    %v7964 = vpack.c.b16 %v7516, %v7508
    %v7965 = vpack.c.b16 %v7517, %v7509
    %v7966 = vpack.c.b16 %v7526, %v7518
    %v7967 = vpack.c.b16 %v7527, %v7519
    %v7968 = vpack.c.b16 %v7528, %v7520
    %v7969 = vpack.c.b16 %v7529, %v7521
    %v7970 = vpack.c.b16 %v7530, %v7522
    %v7971 = vpack.c.b16 %v7531, %v7523
    %v7972 = vpack.c.b16 %v7532, %v7524
    %v7973 = vpack.c.b16 %v7533, %v7525
    %v7974 = vpack.c.b16 %v7542, %v7534
    %v7975 = vpack.c.b16 %v7543, %v7535
    %v7976 = vpack.c.b16 %v7544, %v7536
    %v7977 = vpack.c.b16 %v7545, %v7537
    %v7978 = vpack.c.b16 %v7546, %v7538
    %v7979 = vpack.c.b16 %v7547, %v7539
    %v7980 = vpack.c.b16 %v7548, %v7540
    %v7981 = vpack.c.b16 %v7549, %v7541
    %v7982 = vpack.c.b16 %v7558, %v7550
    %v7983 = vpack.c.b16 %v7559, %v7551
    %v7984 = vpack.c.b16 %v7560, %v7552
    %v7985 = vpack.c.b16 %v7561, %v7553
    %v7986 = vpack.c.b16 %v7562, %v7554
    %v7987 = vpack.c.b16 %v7563, %v7555
    %v7988 = vpack.c.b16 %v7564, %v7556
    %v7989 = vpack.c.b16 %v7565, %v7557
    %v7990 = vpack.c.b16 %v7574, %v7566
    %v7991 = vpack.c.b16 %v7575, %v7567
    %v7992 = vpack.c.b16 %v7576, %v7568
    %v7993 = vpack.c.b16 %v7577, %v7569
    %v7994 = vpack.c.b16 %v7578, %v7570
    %v7995 = vpack.c.b16 %v7579, %v7571
    %v7996 = vpack.c.b16 %v7580, %v7572
    %v7997 = vpack.c.b16 %v7581, %v7573
    %v7998 = vpack.c.b16 %v7590, %v7582
    %v7999 = vpack.c.b16 %v7591, %v7583
    %v8000 = vpack.c.b16 %v7592, %v7584
    %v8001 = vpack.c.b16 %v7593, %v7585
    %v8002 = vpack.c.b16 %v7594, %v7586
    %v8003 = vpack.c.b16 %v7595, %v7587
    %v8004 = vpack.c.b16 %v7596, %v7588
    %v8005 = vpack.c.b16 %v7597, %v7589
    %v8006 = vpack.c.b16 %v7606, %v7598
    %v8007 = vpack.c.b16 %v7607, %v7599
    %v8008 = vpack.c.b16 %v7608, %v7600
    %v8009 = vpack.c.b16 %v7609, %v7601
    %v8010 = vpack.c.b16 %v7610, %v7602
    %v8011 = vpack.c.b16 %v7611, %v7603
    %v8012 = vpack.c.b16 %v7612, %v7604
    %v8013 = vpack.c.b16 %v7613, %v7605
    %v8014 = vpack.c.b16 %v7622, %v7614
    %v8015 = vpack.c.b16 %v7623, %v7615
    %v8016 = vpack.c.b16 %v7624, %v7616
    %v8017 = vpack.c.b16 %v7625, %v7617
    %v8018 = vpack.c.b16 %v7626, %v7618
    %v8019 = vpack.c.b16 %v7627, %v7619
    %v8020 = vpack.c.b16 %v7628, %v7620
    %v8021 = vpack.c.b16 %v7629, %v7621
    %v8022 = vpack.c.b16 %v7638, %v7630
    %v8023 = vpack.c.b16 %v7639, %v7631
    %v8024 = vpack.c.b16 %v7640, %v7632
    %v8025 = vpack.c.b16 %v7641, %v7633
    %v8026 = vpack.c.b16 %v7642, %v7634
    %v8027 = vpack.c.b16 %v7643, %v7635
    %v8028 = vpack.c.b16 %v7644, %v7636
    %v8029 = vpack.c.b16 %v7645, %v7637
    %v8030 = vpack.c.b16 %v7654, %v7646
    %v8031 = vpack.c.b16 %v7655, %v7647
    %v8032 = vpack.c.b16 %v7656, %v7648
    %v8033 = vpack.c.b16 %v7657, %v7649
    %v8034 = vpack.c.b16 %v7658, %v7650
    %v8035 = vpack.c.b16 %v7659, %v7651
    %v8036 = vpack.c.b16 %v7660, %v7652
    %v8037 = vpack.c.b16 %v7661, %v7653
    %v8038 = vpack.c.b16 %v7670, %v7662
    %v8039 = vpack.c.b16 %v7671, %v7663
    %v8040 = vpack.c.b16 %v7672, %v7664
    %v8041 = vpack.c.b16 %v7673, %v7665
    %v8042 = vpack.c.b16 %v7674, %v7666
    %v8043 = vpack.c.b16 %v7675, %v7667
    %v8044 = vpack.c.b16 %v7676, %v7668
    %v8045 = vpack.c.b16 %v7677, %v7669
    %v8046 = vpack.c.b16 %v7686, %v7678
    %v8047 = vpack.c.b16 %v7687, %v7679
    %v8048 = vpack.c.b16 %v7688, %v7680
    %v8049 = vpack.c.b16 %v7689, %v7681
    %v8050 = vpack.c.b16 %v7690, %v7682
    %v8051 = vpack.c.b16 %v7691, %v7683
    %v8052 = vpack.c.b16 %v7692, %v7684
    %v8053 = vpack.c.b16 %v7693, %v7685
    %v8054 = vpack.c.b16 %v7702, %v7694
    %v8055 = vpack.c.b16 %v7703, %v7695
    %v8056 = vpack.c.b16 %v7704, %v7696
    %v8057 = vpack.c.b16 %v7705, %v7697
    %v8058 = vpack.c.b16 %v7706, %v7698
    %v8059 = vpack.c.b16 %v7707, %v7699
    %v8060 = vpack.c.b16 %v7708, %v7700
    %v8061 = vpack.c.b16 %v7709, %v7701
    %v8062 = vpack.c.b16 %v7718, %v7710
    %v8063 = vpack.c.b16 %v7719, %v7711
    %v8064 = vpack.c.b16 %v7720, %v7712
    %v8065 = vpack.c.b16 %v7721, %v7713
    %v8066 = vpack.c.b16 %v7722, %v7714
    %v8067 = vpack.c.b16 %v7723, %v7715
    %v8068 = vpack.c.b16 %v7724, %v7716
    %v8069 = vpack.c.b16 %v7725, %v7717
    %v8070 = vpack.c.b16 %v7734, %v7726
    %v8071 = vpack.c.b16 %v7735, %v7727
    %v8072 = vpack.c.b16 %v7736, %v7728
    %v8073 = vpack.c.b16 %v7737, %v7729
    %v8074 = vpack.c.b16 %v7738, %v7730
    %v8075 = vpack.c.b16 %v7739, %v7731
    %v8076 = vpack.c.b16 %v7740, %v7732
    %v8077 = vpack.c.b16 %v7741, %v7733
    %v8078 = vpack.c.b16 %v7750, %v7742
    %v8079 = vpack.c.b16 %v7751, %v7743
    %v8080 = vpack.c.b16 %v7752, %v7744
    %v8081 = vpack.c.b16 %v7753, %v7745
    %v8082 = vpack.c.b16 %v7754, %v7746
    %v8083 = vpack.c.b16 %v7755, %v7747
    %v8084 = vpack.c.b16 %v7756, %v7748
    %v8085 = vpack.c.b16 %v7757, %v7749
    %v8086 = vpack.c.b16 %v7766, %v7758
    %v8087 = vpack.c.b16 %v7767, %v7759
    %v8088 = vpack.c.b16 %v7768, %v7760
    %v8089 = vpack.c.b16 %v7769, %v7761
    %v8090 = vpack.c.b16 %v7770, %v7762
    %v8091 = vpack.c.b16 %v7771, %v7763
    %v8092 = vpack.c.b16 %v7772, %v7764
    %v8093 = vpack.c.b16 %v7773, %v7765
    %v8094 = vpack.c.b16 %v7782, %v7774
    %v8095 = vpack.c.b16 %v7783, %v7775
    %v8096 = vpack.c.b16 %v7784, %v7776
    %v8097 = vpack.c.b16 %v7785, %v7777
    %v8098 = vpack.c.b16 %v7786, %v7778
    %v8099 = vpack.c.b16 %v7787, %v7779
    %v8100 = vpack.c.b16 %v7788, %v7780
    %v8101 = vpack.c.b16 %v7789, %v7781
    %v8102 = vpack.c.b16 %v7798, %v7790
    %v8103 = vpack.c.b16 %v7799, %v7791
    %v8104 = vpack.c.b16 %v7800, %v7792
    %v8105 = vpack.c.b16 %v7801, %v7793
    %v8106 = vpack.c.b16 %v7802, %v7794
    %v8107 = vpack.c.b16 %v7803, %v7795
    %v8108 = vpack.c.b16 %v7804, %v7796
    %v8109 = vpack.c.b16 %v7805, %v7797
    %v8110 = vpack.c.b16 %v7814, %v7806
    %v8111 = vpack.c.b16 %v7815, %v7807
    %v8112 = vpack.c.b16 %v7816, %v7808
    %v8113 = vpack.c.b16 %v7817, %v7809
    %v8114 = vpack.c.b16 %v7818, %v7810
    %v8115 = vpack.c.b16 %v7819, %v7811
    %v8116 = vpack.c.b16 %v7820, %v7812
    %v8117 = vpack.c.b16 %v7821, %v7813
    %v8118 = vpack.c.b16 %v7830, %v7822
    %v8119 = vpack.c.b16 %v7831, %v7823
    %v8120 = vpack.c.b16 %v7832, %v7824
    %v8121 = vpack.c.b16 %v7833, %v7825
    %v8122 = vpack.c.b16 %v7834, %v7826
    %v8123 = vpack.c.b16 %v7835, %v7827
    %v8124 = vpack.c.b16 %v7836, %v7828
    %v8125 = vpack.c.b16 %v7837, %v7829
    %v8126 = vpack.c.b16 %v7846, %v7838
    %v8127 = vpack.c.b16 %v7847, %v7839
    %v8128 = vpack.c.b16 %v7848, %v7840
    %v8129 = vpack.c.b16 %v7849, %v7841
    %v8130 = vpack.c.b16 %v7850, %v7842
    %v8131 = vpack.c.b16 %v7851, %v7843
    %v8132 = vpack.c.b16 %v7852, %v7844
    %v8133 = vpack.c.b16 %v7853, %v7845
    %v8134 = vpack.c.b16 %v7862, %v7854
    %v8135 = vpack.c.b16 %v7863, %v7855
    %v8136 = vpack.c.b16 %v7864, %v7856
    %v8137 = vpack.c.b16 %v7865, %v7857
    %v8138 = vpack.c.b16 %v7866, %v7858
    %v8139 = vpack.c.b16 %v7867, %v7859
    %v8140 = vpack.c.b16 %v7868, %v7860
    %v8141 = vpack.c.b16 %v7869, %v7861
    %v8142 = vpack.c.b16 %v7878, %v7870
    %v8143 = vpack.c.b16 %v7879, %v7871
    %v8144 = vpack.c.b16 %v7880, %v7872
    %v8145 = vpack.c.b16 %v7881, %v7873
    %v8146 = vpack.c.b16 %v7882, %v7874
    %v8147 = vpack.c.b16 %v7883, %v7875
    %v8148 = vpack.c.b16 %v7884, %v7876
    %v8149 = vpack.c.b16 %v7885, %v7877
    %v8150 = vpack.c.b16 %v7894, %v7886
    %v8151 = vpack.c.b16 %v7895, %v7887
    %v8152 = vpack.c.b16 %v7896, %v7888
    %v8153 = vpack.c.b16 %v7897, %v7889
    %v8154 = vpack.c.b16 %v7898, %v7890
    %v8155 = vpack.c.b16 %v7899, %v7891
    %v8156 = vpack.c.b16 %v7900, %v7892
    %v8157 = vpack.c.b16 %v7901, %v7893
    %8414 = vmatprep.subr.bf16.mxu0 %v7903
    %8415 = vmatpush1.bf16.msra.mxu0 %v7902
    %8416 = vmatprep.subr.bf16.mxu0 %v7911
    %8417 = vmatpush1.bf16.msra.mxu0 %v7910
    %8418 = vmatprep.subr.bf16.mxu0 %v7919
    %8419 = vmatpush1.bf16.msra.mxu0 %v7918
    %8420 = vmatprep.subr.bf16.mxu0 %v7927
    %8421 = vmatpush1.bf16.msra.mxu0 %v7926
    %8422 = vmatprep.subr.bf16.mxu0 %v7935
    %8423 = vmatpush1.bf16.msra.mxu0 %v7934
    %8424 = vmatprep.subr.bf16.mxu0 %v7943
    %8425 = vmatpush1.bf16.msra.mxu0 %v7942
    %8426 = vmatprep.subr.bf16.mxu0 %v7951
    %8427 = vmatpush1.bf16.msra.mxu0 %v7950
    %8428 = vmatprep.subr.bf16.mxu0 %v7959
    %8429 = vmatpush1.bf16.msra.mxu0 %v7958
    %8430 = vmatprep.subr.bf16.mxu0 %v7967
    %8431 = vmatpush1.bf16.msra.mxu0 %v7966
    %8432 = vmatprep.subr.bf16.mxu0 %v7975
    %8433 = vmatpush1.bf16.msra.mxu0 %v7974
    %8434 = vmatprep.subr.bf16.mxu0 %v7983
    %8435 = vmatpush1.bf16.msra.mxu0 %v7982
    %8436 = vmatprep.subr.bf16.mxu0 %v7991
    %8437 = vmatpush1.bf16.msra.mxu0 %v7990
    %8438 = vmatprep.subr.bf16.mxu0 %v7999
    %8439 = vmatpush1.bf16.msra.mxu0 %v7998
    %8440 = vmatprep.subr.bf16.mxu0 %v8007
    %8441 = vmatpush1.bf16.msra.mxu0 %v8006
    %8442 = vmatprep.subr.bf16.mxu0 %v8015
    %8443 = vmatpush1.bf16.msra.mxu0 %v8014
    %8444 = vmatprep.subr.bf16.mxu0 %v8023
    %8445 = vmatpush1.bf16.msra.mxu0 %v8022
    %8446 = vmatprep.mubr.bf16.mxu0 %v6833
    %8447 = vmatmul.mubr.bf16.gmra.mrb[0].mxu0 %v6832
    %v8448 = vpop.f32.mrb[0].mxu0
    %v8449 = vadd.f32 %v7097, %v8448
    %v8450 = vpop.f32.mrb[0].mxu0
    %v8451 = vadd.f32 %v7101, %v8450
    %v8452 = vpop.f32.mrb[0].mxu0
    %v8453 = vpop.f32.mrb[0].mxu0
    %8454 = vdwg.mxu0
    %8455 = vmatprep.subr.bf16.mxu0 %v8031
    %8456 = vmatpush1.bf16.msra.mxu0 %v8030
    %8457 = vmatprep.subr.bf16.mxu0 %v8039
    %8458 = vmatpush1.bf16.msra.mxu0 %v8038
    %8459 = vmatprep.subr.bf16.mxu0 %v8047
    %8460 = vmatpush1.bf16.msra.mxu0 %v8046
    %8461 = vmatprep.subr.bf16.mxu0 %v8055
    %8462 = vmatpush1.bf16.msra.mxu0 %v8054
    %8463 = vmatprep.subr.bf16.mxu0 %v8063
    %8464 = vmatpush1.bf16.msra.mxu0 %v8062
    %8465 = vmatprep.subr.bf16.mxu0 %v8071
    %8466 = vmatpush1.bf16.msra.mxu0 %v8070
    %8467 = vmatprep.subr.bf16.mxu0 %v8079
    %8468 = vmatpush1.bf16.msra.mxu0 %v8078
    %8469 = vmatprep.subr.bf16.mxu0 %v8087
    %8470 = vmatpush1.bf16.msra.mxu0 %v8086
    %8471 = vmatprep.subr.bf16.mxu0 %v8095
    %8472 = vmatpush1.bf16.msra.mxu0 %v8094
    %8473 = vmatprep.subr.bf16.mxu0 %v8103
    %8474 = vmatpush1.bf16.msra.mxu0 %v8102
    %8475 = vmatprep.subr.bf16.mxu0 %v8111
    %8476 = vmatpush1.bf16.msra.mxu0 %v8110
    %8477 = vmatprep.subr.bf16.mxu0 %v8119
    %8478 = vmatpush1.bf16.msra.mxu0 %v8118
    %8479 = vmatprep.subr.bf16.mxu0 %v8127
    %8480 = vmatpush1.bf16.msra.mxu0 %v8126
    %8481 = vmatprep.subr.bf16.mxu0 %v8135
    %8482 = vmatpush1.bf16.msra.mxu0 %v8134
    %8483 = vmatprep.subr.bf16.mxu0 %v8143
    %8484 = vmatpush1.bf16.msra.mxu0 %v8142
    %8485 = vmatprep.subr.bf16.mxu0 %v8151
    %8486 = vmatpush1.bf16.msra.mxu0 %v8150
    %8487 = vmatprep.mubr.bf16.mxu0 %v6835
    %8488 = vmatmul.mubr.bf16.gmra.mrb[0].mxu0 %v6834
    %v8489 = vpop.f32.mrb[0].mxu0
    %v8490 = vadd.f32 %v8449, %v8489
    %v8491 = vpop.f32.mrb[0].mxu0
    %v8492 = vadd.f32 %v8451, %v8491
    %v8493 = vpop.f32.mrb[0].mxu0
    %v8494 = vpop.f32.mrb[0].mxu0
    %8495 = vdwg.mxu0
    %8496 = vmatprep.subr.bf16.mxu0 %v7905
    %8497 = vmatpush1.bf16.msra.mxu0 %v7904
    %8498 = vmatprep.subr.bf16.mxu0 %v7913
    %8499 = vmatpush1.bf16.msra.mxu0 %v7912
    %8500 = vmatprep.subr.bf16.mxu0 %v7921
    %8501 = vmatpush1.bf16.msra.mxu0 %v7920
    %8502 = vmatprep.subr.bf16.mxu0 %v7929
    %8503 = vmatpush1.bf16.msra.mxu0 %v7928
    %8504 = vmatprep.subr.bf16.mxu0 %v7937
    %8505 = vmatpush1.bf16.msra.mxu0 %v7936
    %8506 = vmatprep.subr.bf16.mxu0 %v7945
    %8507 = vmatpush1.bf16.msra.mxu0 %v7944
    %8508 = vmatprep.subr.bf16.mxu0 %v7953
    %8509 = vmatpush1.bf16.msra.mxu0 %v7952
    %8510 = vmatprep.subr.bf16.mxu0 %v7961
    %8511 = vmatpush1.bf16.msra.mxu0 %v7960
    %8512 = vmatprep.subr.bf16.mxu0 %v7969
    %8513 = vmatpush1.bf16.msra.mxu0 %v7968
    %8514 = vmatprep.subr.bf16.mxu0 %v7977
    %8515 = vmatpush1.bf16.msra.mxu0 %v7976
    %8516 = vmatprep.subr.bf16.mxu0 %v7985
    %8517 = vmatpush1.bf16.msra.mxu0 %v7984
    %8518 = vmatprep.subr.bf16.mxu0 %v7993
    %8519 = vmatpush1.bf16.msra.mxu0 %v7992
    %8520 = vmatprep.subr.bf16.mxu0 %v8001
    %8521 = vmatpush1.bf16.msra.mxu0 %v8000
    %8522 = vmatprep.subr.bf16.mxu0 %v8009
    %8523 = vmatpush1.bf16.msra.mxu0 %v8008
    %8524 = vmatprep.subr.bf16.mxu0 %v8017
    %8525 = vmatpush1.bf16.msra.mxu0 %v8016
    %8526 = vmatprep.subr.bf16.mxu0 %v8025
    %8527 = vmatpush1.bf16.msra.mxu0 %v8024
    %8528 = vmatprep.mubr.bf16.mxu0 %v6833
    %8529 = vmatmul.mubr.bf16.gmra.mrb[0].mxu0 %v6832
    %v8530 = vpop.f32.mrb[0].mxu0
    %v8531 = vadd.f32 %v7105, %v8530
    %v8532 = vpop.f32.mrb[0].mxu0
    %v8533 = vadd.f32 %v7109, %v8532
    %v8534 = vpop.f32.mrb[0].mxu0
    %v8535 = vpop.f32.mrb[0].mxu0
    %8536 = vdwg.mxu0
    %8537 = vmatprep.subr.bf16.mxu0 %v8033
    %8538 = vmatpush1.bf16.msra.mxu0 %v8032
    %8539 = vmatprep.subr.bf16.mxu0 %v8041
    %8540 = vmatpush1.bf16.msra.mxu0 %v8040
    %8541 = vmatprep.subr.bf16.mxu0 %v8049
    %8542 = vmatpush1.bf16.msra.mxu0 %v8048
    %8543 = vmatprep.subr.bf16.mxu0 %v8057
    %8544 = vmatpush1.bf16.msra.mxu0 %v8056
    %8545 = vmatprep.subr.bf16.mxu0 %v8065
    %8546 = vmatpush1.bf16.msra.mxu0 %v8064
    %8547 = vmatprep.subr.bf16.mxu0 %v8073
    %8548 = vmatpush1.bf16.msra.mxu0 %v8072
    %8549 = vmatprep.subr.bf16.mxu0 %v8081
    %8550 = vmatpush1.bf16.msra.mxu0 %v8080
    %8551 = vmatprep.subr.bf16.mxu0 %v8089
    %8552 = vmatpush1.bf16.msra.mxu0 %v8088
    %8553 = vmatprep.subr.bf16.mxu0 %v8097
    %8554 = vmatpush1.bf16.msra.mxu0 %v8096
    %8555 = vmatprep.subr.bf16.mxu0 %v8105
    %8556 = vmatpush1.bf16.msra.mxu0 %v8104
    %8557 = vmatprep.subr.bf16.mxu0 %v8113
    %8558 = vmatpush1.bf16.msra.mxu0 %v8112
    %8559 = vmatprep.subr.bf16.mxu0 %v8121
    %8560 = vmatpush1.bf16.msra.mxu0 %v8120
    %8561 = vmatprep.subr.bf16.mxu0 %v8129
    %8562 = vmatpush1.bf16.msra.mxu0 %v8128
    %8563 = vmatprep.subr.bf16.mxu0 %v8137
    %8564 = vmatpush1.bf16.msra.mxu0 %v8136
    %8565 = vmatprep.subr.bf16.mxu0 %v8145
    %8566 = vmatpush1.bf16.msra.mxu0 %v8144
    %8567 = vmatprep.subr.bf16.mxu0 %v8153
    %8568 = vmatpush1.bf16.msra.mxu0 %v8152
    %8569 = vmatprep.mubr.bf16.mxu0 %v6835
    %8570 = vmatmul.mubr.bf16.gmra.mrb[0].mxu0 %v6834
    %v8571 = vpop.f32.mrb[0].mxu0
    %v8572 = vadd.f32 %v8531, %v8571
    %v8573 = vpop.f32.mrb[0].mxu0
    %v8574 = vadd.f32 %v8533, %v8573
    %v8575 = vpop.f32.mrb[0].mxu0
    %v8576 = vpop.f32.mrb[0].mxu0
    %8577 = vdwg.mxu0
    %8578 = vmatprep.subr.bf16.mxu0 %v7907
    %8579 = vmatpush1.bf16.msra.mxu0 %v7906
    %8580 = vmatprep.subr.bf16.mxu0 %v7915
    %8581 = vmatpush1.bf16.msra.mxu0 %v7914
    %8582 = vmatprep.subr.bf16.mxu0 %v7923
    %8583 = vmatpush1.bf16.msra.mxu0 %v7922
    %8584 = vmatprep.subr.bf16.mxu0 %v7931
    %8585 = vmatpush1.bf16.msra.mxu0 %v7930
    %8586 = vmatprep.subr.bf16.mxu0 %v7939
    %8587 = vmatpush1.bf16.msra.mxu0 %v7938
    %8588 = vmatprep.subr.bf16.mxu0 %v7947
    %8589 = vmatpush1.bf16.msra.mxu0 %v7946
    %8590 = vmatprep.subr.bf16.mxu0 %v7955
    %8591 = vmatpush1.bf16.msra.mxu0 %v7954
    %8592 = vmatprep.subr.bf16.mxu0 %v7963
    %8593 = vmatpush1.bf16.msra.mxu0 %v7962
    %8594 = vmatprep.subr.bf16.mxu0 %v7971
    %8595 = vmatpush1.bf16.msra.mxu0 %v7970
    %8596 = vmatprep.subr.bf16.mxu0 %v7979
    %8597 = vmatpush1.bf16.msra.mxu0 %v7978
    %8598 = vmatprep.subr.bf16.mxu0 %v7987
    %8599 = vmatpush1.bf16.msra.mxu0 %v7986
    %8600 = vmatprep.subr.bf16.mxu0 %v7995
    %8601 = vmatpush1.bf16.msra.mxu0 %v7994
    %8602 = vmatprep.subr.bf16.mxu0 %v8003
    %8603 = vmatpush1.bf16.msra.mxu0 %v8002
    %8604 = vmatprep.subr.bf16.mxu0 %v8011
    %8605 = vmatpush1.bf16.msra.mxu0 %v8010
    %8606 = vmatprep.subr.bf16.mxu0 %v8019
    %8607 = vmatpush1.bf16.msra.mxu0 %v8018
    %8608 = vmatprep.subr.bf16.mxu0 %v8027
    %8609 = vmatpush1.bf16.msra.mxu0 %v8026
    %8610 = vmatprep.mubr.bf16.mxu0 %v6833
    %8611 = vmatmul.mubr.bf16.gmra.mrb[0].mxu0 %v6832
    %v8612 = vpop.f32.mrb[0].mxu0
    %v8613 = vadd.f32 %v7113, %v8612
    %v8614 = vpop.f32.mrb[0].mxu0
    %v8615 = vadd.f32 %v7117, %v8614
    %v8616 = vpop.f32.mrb[0].mxu0
    %v8617 = vpop.f32.mrb[0].mxu0
    %8618 = vdwg.mxu0
    %8619 = vmatprep.subr.bf16.mxu0 %v8035
    %8620 = vmatpush1.bf16.msra.mxu0 %v8034
    %8621 = vmatprep.subr.bf16.mxu0 %v8043
    %8622 = vmatpush1.bf16.msra.mxu0 %v8042
    %8623 = vmatprep.subr.bf16.mxu0 %v8051
    %8624 = vmatpush1.bf16.msra.mxu0 %v8050
    %8625 = vmatprep.subr.bf16.mxu0 %v8059
    %8626 = vmatpush1.bf16.msra.mxu0 %v8058
    %8627 = vmatprep.subr.bf16.mxu0 %v8067
    %8628 = vmatpush1.bf16.msra.mxu0 %v8066
    %8629 = vmatprep.subr.bf16.mxu0 %v8075
    %8630 = vmatpush1.bf16.msra.mxu0 %v8074
    %8631 = vmatprep.subr.bf16.mxu0 %v8083
    %8632 = vmatpush1.bf16.msra.mxu0 %v8082
    %8633 = vmatprep.subr.bf16.mxu0 %v8091
    %8634 = vmatpush1.bf16.msra.mxu0 %v8090
    %8635 = vmatprep.subr.bf16.mxu0 %v8099
    %8636 = vmatpush1.bf16.msra.mxu0 %v8098
    %8637 = vmatprep.subr.bf16.mxu0 %v8107
    %8638 = vmatpush1.bf16.msra.mxu0 %v8106
    %8639 = vmatprep.subr.bf16.mxu0 %v8115
    %8640 = vmatpush1.bf16.msra.mxu0 %v8114
    %8641 = vmatprep.subr.bf16.mxu0 %v8123
    %8642 = vmatpush1.bf16.msra.mxu0 %v8122
    %8643 = vmatprep.subr.bf16.mxu0 %v8131
    %8644 = vmatpush1.bf16.msra.mxu0 %v8130
    %8645 = vmatprep.subr.bf16.mxu0 %v8139
    %8646 = vmatpush1.bf16.msra.mxu0 %v8138
    %8647 = vmatprep.subr.bf16.mxu0 %v8147
    %8648 = vmatpush1.bf16.msra.mxu0 %v8146
    %8649 = vmatprep.subr.bf16.mxu0 %v8155
    %8650 = vmatpush1.bf16.msra.mxu0 %v8154
    %8651 = vmatprep.mubr.bf16.mxu0 %v6835
    %8652 = vmatmul.mubr.bf16.gmra.mrb[0].mxu0 %v6834
    %v8653 = vpop.f32.mrb[0].mxu0
    %v8654 = vadd.f32 %v8613, %v8653
    %v8655 = vpop.f32.mrb[0].mxu0
    %v8656 = vadd.f32 %v8615, %v8655
    %v8657 = vpop.f32.mrb[0].mxu0
    %v8658 = vpop.f32.mrb[0].mxu0
    %8659 = vdwg.mxu0
    %8660 = vmatprep.subr.bf16.mxu0 %v7909
    %8661 = vmatpush1.bf16.msra.mxu0 %v7908
    %8662 = vmatprep.subr.bf16.mxu0 %v7917
    %8663 = vmatpush1.bf16.msra.mxu0 %v7916
    %8664 = vmatprep.subr.bf16.mxu0 %v7925
    %8665 = vmatpush1.bf16.msra.mxu0 %v7924
    %8666 = vmatprep.subr.bf16.mxu0 %v7933
    %8667 = vmatpush1.bf16.msra.mxu0 %v7932
    %8668 = vmatprep.subr.bf16.mxu0 %v7941
    %8669 = vmatpush1.bf16.msra.mxu0 %v7940
    %8670 = vmatprep.subr.bf16.mxu0 %v7949
    %8671 = vmatpush1.bf16.msra.mxu0 %v7948
    %8672 = vmatprep.subr.bf16.mxu0 %v7957
    %8673 = vmatpush1.bf16.msra.mxu0 %v7956
    %8674 = vmatprep.subr.bf16.mxu0 %v7965
    %8675 = vmatpush1.bf16.msra.mxu0 %v7964
    %8676 = vmatprep.subr.bf16.mxu0 %v7973
    %8677 = vmatpush1.bf16.msra.mxu0 %v7972
    %8678 = vmatprep.subr.bf16.mxu0 %v7981
    %8679 = vmatpush1.bf16.msra.mxu0 %v7980
    %8680 = vmatprep.subr.bf16.mxu0 %v7989
    %8681 = vmatpush1.bf16.msra.mxu0 %v7988
    %8682 = vmatprep.subr.bf16.mxu0 %v7997
    %8683 = vmatpush1.bf16.msra.mxu0 %v7996
    %8684 = vmatprep.subr.bf16.mxu0 %v8005
    %8685 = vmatpush1.bf16.msra.mxu0 %v8004
    %8686 = vmatprep.subr.bf16.mxu0 %v8013
    %8687 = vmatpush1.bf16.msra.mxu0 %v8012
    %8688 = vmatprep.subr.bf16.mxu0 %v8021
    %8689 = vmatpush1.bf16.msra.mxu0 %v8020
    %8690 = vmatprep.subr.bf16.mxu0 %v8029
    %8691 = vmatpush1.bf16.msra.mxu0 %v8028
    %8692 = vmatprep.mubr.bf16.mxu0 %v6833
    %8693 = vmatmul.mubr.bf16.gmra.mrb[0].mxu0 %v6832
    %v8694 = vpop.f32.mrb[0].mxu0
    %v8695 = vadd.f32 %v7121, %v8694
    %v8696 = vpop.f32.mrb[0].mxu0
    %v8697 = vadd.f32 %v7125, %v8696
    %v8698 = vpop.f32.mrb[0].mxu0
    %v8699 = vpop.f32.mrb[0].mxu0
    %8700 = vdwg.mxu0
    %8701 = vmatprep.subr.bf16.mxu0 %v8037
    %8702 = vmatpush1.bf16.msra.mxu0 %v8036
    %8703 = vmatprep.subr.bf16.mxu0 %v8045
    %8704 = vmatpush1.bf16.msra.mxu0 %v8044
    %8705 = vmatprep.subr.bf16.mxu0 %v8053
    %8706 = vmatpush1.bf16.msra.mxu0 %v8052
    %8707 = vmatprep.subr.bf16.mxu0 %v8061
    %8708 = vmatpush1.bf16.msra.mxu0 %v8060
    %8709 = vmatprep.subr.bf16.mxu0 %v8069
    %8710 = vmatpush1.bf16.msra.mxu0 %v8068
    %8711 = vmatprep.subr.bf16.mxu0 %v8077
    %8712 = vmatpush1.bf16.msra.mxu0 %v8076
    %8713 = vmatprep.subr.bf16.mxu0 %v8085
    %8714 = vmatpush1.bf16.msra.mxu0 %v8084
    %8715 = vmatprep.subr.bf16.mxu0 %v8093
    %8716 = vmatpush1.bf16.msra.mxu0 %v8092
    %8717 = vmatprep.subr.bf16.mxu0 %v8101
    %8718 = vmatpush1.bf16.msra.mxu0 %v8100
    %8719 = vmatprep.subr.bf16.mxu0 %v8109
    %8720 = vmatpush1.bf16.msra.mxu0 %v8108
    %8721 = vmatprep.subr.bf16.mxu0 %v8117
    %8722 = vmatpush1.bf16.msra.mxu0 %v8116
    %8723 = vmatprep.subr.bf16.mxu0 %v8125
    %8724 = vmatpush1.bf16.msra.mxu0 %v8124
    %8725 = vmatprep.subr.bf16.mxu0 %v8133
    %8726 = vmatpush1.bf16.msra.mxu0 %v8132
    %8727 = vmatprep.subr.bf16.mxu0 %v8141
    %8728 = vmatpush1.bf16.msra.mxu0 %v8140
    %8729 = vmatprep.subr.bf16.mxu0 %v8149
    %8730 = vmatpush1.bf16.msra.mxu0 %v8148
    %8731 = vmatprep.subr.bf16.mxu0 %v8157
    %8732 = vmatpush1.bf16.msra.mxu0 %v8156
    %8733 = vmatprep.mubr.bf16.mxu0 %v6835
    %8734 = vmatmul.mubr.bf16.gmra.mrb[0].mxu0 %v6834
    %v8735 = vpop.f32.mrb[0].mxu0
    %v8736 = vadd.f32 %v8695, %v8735
    %v8737 = vpop.f32.mrb[0].mxu0
    %v8738 = vadd.f32 %v8697, %v8737
    %v8739 = vpop.f32.mrb[0].mxu0
    %v8740 = vpop.f32.mrb[0].mxu0
    %8741 = vdwg.mxu0
    %v8742 = vmax.f32 %v8490, 0.0
    %v8743 = vmax.f32 %v8492, 0.0
    %v8744 = vmax.f32 %v8572, 0.0
    %v8745 = vmax.f32 %v8574, 0.0
    %v8746 = vmax.f32 %v8654, 0.0
    %v8747 = vmax.f32 %v8656, 0.0
    %v8748 = vmax.f32 %v8736, 0.0
    %v8749 = vmax.f32 %v8738, 0.0
    %v8750 = vpack.c.bf16 %v8742, %v8742
    %v8751 = vpack.c.bf16 %v8743, %v8743
    %v8752 = vpack.c.bf16 %v8744, %v8744
    %v8753 = vpack.c.bf16 %v8745, %v8745
    %v8754 = vpack.c.bf16 %v8746, %v8746
    %v8755 = vpack.c.bf16 %v8747, %v8747
    %v8756 = vpack.c.bf16 %v8748, %v8748
    %v8757 = vpack.c.bf16 %v8749, %v8749
    %v8758 = vld [vmem:[#allocation19] sm:$0xff]
    %v8759 = vld [vmem:[#allocation19 + $0x8] sm:$0xff]
    %v8760 = vld [vmem:[#allocation19 + $0x10] sm:$0xff]
    %v8761 = vld [vmem:[#allocation19 + $0x18] sm:$0xff]
    %v8762 = vld [vmem:[#allocation19 + $0x20] sm:$0xff]
    %v8763 = vld [vmem:[#allocation19 + $0x28] sm:$0xff]
    %v8764 = vld [vmem:[#allocation19 + $0x30] sm:$0xff]
    %v8765 = vld [vmem:[#allocation19 + $0x38] sm:$0xff]
    %v8766 = vld [vmem:[#allocation19 + $0x40] sm:$0xff]
    %v8767 = vld [vmem:[#allocation19 + $0x48] sm:$0xff]
    %v8768 = vld [vmem:[#allocation19 + $0x50] sm:$0xff]
    %v8769 = vld [vmem:[#allocation19 + $0x58] sm:$0xff]
    %v8770 = vld [vmem:[#allocation19 + $0x60] sm:$0xff]
    %v8771 = vld [vmem:[#allocation19 + $0x68] sm:$0xff]
    %v8772 = vld [vmem:[#allocation19 + $0x70] sm:$0xff]
    %v8773 = vld [vmem:[#allocation19 + $0x78] sm:$0xff]
    %v8774 = vld [vmem:[#allocation19 + $0x80] sm:$0xff]
    %v8775 = vld [vmem:[#allocation19 + $0x88] sm:$0xff]
    %v8776 = vld [vmem:[#allocation19 + $0x90] sm:$0xff]
    %v8777 = vld [vmem:[#allocation19 + $0x98] sm:$0xff]
    %v8778 = vld [vmem:[#allocation19 + $0xa0] sm:$0xff]
    %v8779 = vld [vmem:[#allocation19 + $0xa8] sm:$0xff]
    %v8780 = vld [vmem:[#allocation19 + $0xb0] sm:$0xff]
    %v8781 = vld [vmem:[#allocation19 + $0xb8] sm:$0xff]
    %v8782 = vld [vmem:[#allocation19 + $0xc0] sm:$0xff]
    %v8783 = vld [vmem:[#allocation19 + $0xc8] sm:$0xff]
    %v8784 = vld [vmem:[#allocation19 + $0xd0] sm:$0xff]
    %v8785 = vld [vmem:[#allocation19 + $0xd8] sm:$0xff]
    %v8786 = vld [vmem:[#allocation19 + $0xe0] sm:$0xff]
    %v8787 = vld [vmem:[#allocation19 + $0xe8] sm:$0xff]
    %v8788 = vld [vmem:[#allocation19 + $0xf0] sm:$0xff]
    %v8789 = vld [vmem:[#allocation19 + $0xf8] sm:$0xff]
    %v8790 = vld [vmem:[#allocation19 + $0x100] sm:$0xff]
    %v8791 = vld [vmem:[#allocation19 + $0x108] sm:$0xff]
    %v8792 = vld [vmem:[#allocation19 + $0x110] sm:$0xff]
    %v8793 = vld [vmem:[#allocation19 + $0x118] sm:$0xff]
    %v8794 = vld [vmem:[#allocation19 + $0x120] sm:$0xff]
    %v8795 = vld [vmem:[#allocation19 + $0x128] sm:$0xff]
    %v8796 = vld [vmem:[#allocation19 + $0x130] sm:$0xff]
    %v8797 = vld [vmem:[#allocation19 + $0x138] sm:$0xff]
    %v8798 = vld [vmem:[#allocation19 + $0x140] sm:$0xff]
    %v8799 = vld [vmem:[#allocation19 + $0x148] sm:$0xff]
    %v8800 = vld [vmem:[#allocation19 + $0x150] sm:$0xff]
    %v8801 = vld [vmem:[#allocation19 + $0x158] sm:$0xff]
    %v8802 = vld [vmem:[#allocation19 + $0x160] sm:$0xff]
    %v8803 = vld [vmem:[#allocation19 + $0x168] sm:$0xff]
    %v8804 = vld [vmem:[#allocation19 + $0x170] sm:$0xff]
    %v8805 = vld [vmem:[#allocation19 + $0x178] sm:$0xff]
    %v8806 = vld [vmem:[#allocation19 + $0x180] sm:$0xff]
    %v8807 = vld [vmem:[#allocation19 + $0x188] sm:$0xff]
    %v8808 = vld [vmem:[#allocation19 + $0x190] sm:$0xff]
    %v8809 = vld [vmem:[#allocation19 + $0x198] sm:$0xff]
    %v8810 = vld [vmem:[#allocation19 + $0x1a0] sm:$0xff]
    %v8811 = vld [vmem:[#allocation19 + $0x1a8] sm:$0xff]
    %v8812 = vld [vmem:[#allocation19 + $0x1b0] sm:$0xff]
    %v8813 = vld [vmem:[#allocation19 + $0x1b8] sm:$0xff]
    %v8814 = vld [vmem:[#allocation19 + $0x1c0] sm:$0xff]
    %v8815 = vld [vmem:[#allocation19 + $0x1c8] sm:$0xff]
    %v8816 = vld [vmem:[#allocation19 + $0x1d0] sm:$0xff]
    %v8817 = vld [vmem:[#allocation19 + $0x1d8] sm:$0xff]
    %v8818 = vld [vmem:[#allocation19 + $0x1e0] sm:$0xff]
    %v8819 = vld [vmem:[#allocation19 + $0x1e8] sm:$0xff]
    %v8820 = vld [vmem:[#allocation19 + $0x1f0] sm:$0xff]
    %v8821 = vld [vmem:[#allocation19 + $0x1f8] sm:$0xff]
    %v8822 = vld [vmem:[#allocation19 + $0x200] sm:$0xff]
    %v8823 = vld [vmem:[#allocation19 + $0x208] sm:$0xff]
    %v8824 = vld [vmem:[#allocation19 + $0x210] sm:$0xff]
    %v8825 = vld [vmem:[#allocation19 + $0x218] sm:$0xff]
    %v8826 = vld [vmem:[#allocation19 + $0x220] sm:$0xff]
    %v8827 = vld [vmem:[#allocation19 + $0x228] sm:$0xff]
    %v8828 = vld [vmem:[#allocation19 + $0x230] sm:$0xff]
    %v8829 = vld [vmem:[#allocation19 + $0x238] sm:$0xff]
    %v8830 = vld [vmem:[#allocation19 + $0x240] sm:$0xff]
    %v8831 = vld [vmem:[#allocation19 + $0x248] sm:$0xff]
    %v8832 = vld [vmem:[#allocation19 + $0x250] sm:$0xff]
    %v8833 = vld [vmem:[#allocation19 + $0x258] sm:$0xff]
    %v8834 = vld [vmem:[#allocation19 + $0x260] sm:$0xff]
    %v8835 = vld [vmem:[#allocation19 + $0x268] sm:$0xff]
    %v8836 = vld [vmem:[#allocation19 + $0x270] sm:$0xff]
    %v8837 = vld [vmem:[#allocation19 + $0x278] sm:$0xff]
    %v8838 = vld [vmem:[#allocation19 + $0x280] sm:$0xff]
    %v8839 = vld [vmem:[#allocation19 + $0x288] sm:$0xff]
    %v8840 = vld [vmem:[#allocation19 + $0x290] sm:$0xff]
    %v8841 = vld [vmem:[#allocation19 + $0x298] sm:$0xff]
    %v8842 = vld [vmem:[#allocation19 + $0x2a0] sm:$0xff]
    %v8843 = vld [vmem:[#allocation19 + $0x2a8] sm:$0xff]
    %v8844 = vld [vmem:[#allocation19 + $0x2b0] sm:$0xff]
    %v8845 = vld [vmem:[#allocation19 + $0x2b8] sm:$0xff]
    %v8846 = vld [vmem:[#allocation19 + $0x2c0] sm:$0xff]
    %v8847 = vld [vmem:[#allocation19 + $0x2c8] sm:$0xff]
    %v8848 = vld [vmem:[#allocation19 + $0x2d0] sm:$0xff]
    %v8849 = vld [vmem:[#allocation19 + $0x2d8] sm:$0xff]
    %v8850 = vld [vmem:[#allocation19 + $0x2e0] sm:$0xff]
    %v8851 = vld [vmem:[#allocation19 + $0x2e8] sm:$0xff]
    %v8852 = vld [vmem:[#allocation19 + $0x2f0] sm:$0xff]
    %v8853 = vld [vmem:[#allocation19 + $0x2f8] sm:$0xff]
    %v8854 = vld [vmem:[#allocation19 + $0x300] sm:$0xff]
    %v8855 = vld [vmem:[#allocation19 + $0x308] sm:$0xff]
    %v8856 = vld [vmem:[#allocation19 + $0x310] sm:$0xff]
    %v8857 = vld [vmem:[#allocation19 + $0x318] sm:$0xff]
    %v8858 = vld [vmem:[#allocation19 + $0x320] sm:$0xff]
    %v8859 = vld [vmem:[#allocation19 + $0x328] sm:$0xff]
    %v8860 = vld [vmem:[#allocation19 + $0x330] sm:$0xff]
    %v8861 = vld [vmem:[#allocation19 + $0x338] sm:$0xff]
    %v8862 = vld [vmem:[#allocation19 + $0x340] sm:$0xff]
    %v8863 = vld [vmem:[#allocation19 + $0x348] sm:$0xff]
    %v8864 = vld [vmem:[#allocation19 + $0x350] sm:$0xff]
    %v8865 = vld [vmem:[#allocation19 + $0x358] sm:$0xff]
    %v8866 = vld [vmem:[#allocation19 + $0x360] sm:$0xff]
    %v8867 = vld [vmem:[#allocation19 + $0x368] sm:$0xff]
    %v8868 = vld [vmem:[#allocation19 + $0x370] sm:$0xff]
    %v8869 = vld [vmem:[#allocation19 + $0x378] sm:$0xff]
    %v8870 = vld [vmem:[#allocation19 + $0x380] sm:$0xff]
    %v8871 = vld [vmem:[#allocation19 + $0x388] sm:$0xff]
    %v8872 = vld [vmem:[#allocation19 + $0x390] sm:$0xff]
    %v8873 = vld [vmem:[#allocation19 + $0x398] sm:$0xff]
    %v8874 = vld [vmem:[#allocation19 + $0x3a0] sm:$0xff]
    %v8875 = vld [vmem:[#allocation19 + $0x3a8] sm:$0xff]
    %v8876 = vld [vmem:[#allocation19 + $0x3b0] sm:$0xff]
    %v8877 = vld [vmem:[#allocation19 + $0x3b8] sm:$0xff]
    %v8878 = vld [vmem:[#allocation19 + $0x3c0] sm:$0xff]
    %v8879 = vld [vmem:[#allocation19 + $0x3c8] sm:$0xff]
    %v8880 = vld [vmem:[#allocation19 + $0x3d0] sm:$0xff]
    %v8881 = vld [vmem:[#allocation19 + $0x3d8] sm:$0xff]
    %v8882 = vld [vmem:[#allocation19 + $0x3e0] sm:$0xff]
    %v8883 = vld [vmem:[#allocation19 + $0x3e8] sm:$0xff]
    %v8884 = vld [vmem:[#allocation19 + $0x3f0] sm:$0xff]
    %v8885 = vld [vmem:[#allocation19 + $0x3f8] sm:$0xff]
    %v8886 = vld [vmem:[#allocation19 + $0x400] sm:$0xff]
    %v8887 = vld [vmem:[#allocation19 + $0x408] sm:$0xff]
    %v8888 = vld [vmem:[#allocation19 + $0x410] sm:$0xff]
    %v8889 = vld [vmem:[#allocation19 + $0x418] sm:$0xff]
    %v8890 = vld [vmem:[#allocation19 + $0x420] sm:$0xff]
    %v8891 = vld [vmem:[#allocation19 + $0x428] sm:$0xff]
    %v8892 = vld [vmem:[#allocation19 + $0x430] sm:$0xff]
    %v8893 = vld [vmem:[#allocation19 + $0x438] sm:$0xff]
    %v8894 = vld [vmem:[#allocation19 + $0x440] sm:$0xff]
    %v8895 = vld [vmem:[#allocation19 + $0x448] sm:$0xff]
    %v8896 = vld [vmem:[#allocation19 + $0x450] sm:$0xff]
    %v8897 = vld [vmem:[#allocation19 + $0x458] sm:$0xff]
    %v8898 = vld [vmem:[#allocation19 + $0x460] sm:$0xff]
    %v8899 = vld [vmem:[#allocation19 + $0x468] sm:$0xff]
    %v8900 = vld [vmem:[#allocation19 + $0x470] sm:$0xff]
    %v8901 = vld [vmem:[#allocation19 + $0x478] sm:$0xff]
    %v8902 = vld [vmem:[#allocation19 + $0x480] sm:$0xff]
    %v8903 = vld [vmem:[#allocation19 + $0x488] sm:$0xff]
    %v8904 = vld [vmem:[#allocation19 + $0x490] sm:$0xff]
    %v8905 = vld [vmem:[#allocation19 + $0x498] sm:$0xff]
    %v8906 = vld [vmem:[#allocation19 + $0x4a0] sm:$0xff]
    %v8907 = vld [vmem:[#allocation19 + $0x4a8] sm:$0xff]
    %v8908 = vld [vmem:[#allocation19 + $0x4b0] sm:$0xff]
    %v8909 = vld [vmem:[#allocation19 + $0x4b8] sm:$0xff]
    %v8910 = vld [vmem:[#allocation19 + $0x4c0] sm:$0xff]
    %v8911 = vld [vmem:[#allocation19 + $0x4c8] sm:$0xff]
    %v8912 = vld [vmem:[#allocation19 + $0x4d0] sm:$0xff]
    %v8913 = vld [vmem:[#allocation19 + $0x4d8] sm:$0xff]
    %v8914 = vld [vmem:[#allocation19 + $0x4e0] sm:$0xff]
    %v8915 = vld [vmem:[#allocation19 + $0x4e8] sm:$0xff]
    %v8916 = vld [vmem:[#allocation19 + $0x4f0] sm:$0xff]
    %v8917 = vld [vmem:[#allocation19 + $0x4f8] sm:$0xff]
    %v8918 = vld [vmem:[#allocation19 + $0x500] sm:$0xff]
    %v8919 = vld [vmem:[#allocation19 + $0x508] sm:$0xff]
    %v8920 = vld [vmem:[#allocation19 + $0x510] sm:$0xff]
    %v8921 = vld [vmem:[#allocation19 + $0x518] sm:$0xff]
    %v8922 = vld [vmem:[#allocation19 + $0x520] sm:$0xff]
    %v8923 = vld [vmem:[#allocation19 + $0x528] sm:$0xff]
    %v8924 = vld [vmem:[#allocation19 + $0x530] sm:$0xff]
    %v8925 = vld [vmem:[#allocation19 + $0x538] sm:$0xff]
    %v8926 = vld [vmem:[#allocation19 + $0x540] sm:$0xff]
    %v8927 = vld [vmem:[#allocation19 + $0x548] sm:$0xff]
    %v8928 = vld [vmem:[#allocation19 + $0x550] sm:$0xff]
    %v8929 = vld [vmem:[#allocation19 + $0x558] sm:$0xff]
    %v8930 = vld [vmem:[#allocation19 + $0x560] sm:$0xff]
    %v8931 = vld [vmem:[#allocation19 + $0x568] sm:$0xff]
    %v8932 = vld [vmem:[#allocation19 + $0x570] sm:$0xff]
    %v8933 = vld [vmem:[#allocation19 + $0x578] sm:$0xff]
    %v8934 = vld [vmem:[#allocation19 + $0x580] sm:$0xff]
    %v8935 = vld [vmem:[#allocation19 + $0x588] sm:$0xff]
    %v8936 = vld [vmem:[#allocation19 + $0x590] sm:$0xff]
    %v8937 = vld [vmem:[#allocation19 + $0x598] sm:$0xff]
    %v8938 = vld [vmem:[#allocation19 + $0x5a0] sm:$0xff]
    %v8939 = vld [vmem:[#allocation19 + $0x5a8] sm:$0xff]
    %v8940 = vld [vmem:[#allocation19 + $0x5b0] sm:$0xff]
    %v8941 = vld [vmem:[#allocation19 + $0x5b8] sm:$0xff]
    %v8942 = vld [vmem:[#allocation19 + $0x5c0] sm:$0xff]
    %v8943 = vld [vmem:[#allocation19 + $0x5c8] sm:$0xff]
    %v8944 = vld [vmem:[#allocation19 + $0x5d0] sm:$0xff]
    %v8945 = vld [vmem:[#allocation19 + $0x5d8] sm:$0xff]
    %v8946 = vld [vmem:[#allocation19 + $0x5e0] sm:$0xff]
    %v8947 = vld [vmem:[#allocation19 + $0x5e8] sm:$0xff]
    %v8948 = vld [vmem:[#allocation19 + $0x5f0] sm:$0xff]
    %v8949 = vld [vmem:[#allocation19 + $0x5f8] sm:$0xff]
    %v8950 = vld [vmem:[#allocation19 + $0x600] sm:$0xff]
    %v8951 = vld [vmem:[#allocation19 + $0x608] sm:$0xff]
    %v8952 = vld [vmem:[#allocation19 + $0x610] sm:$0xff]
    %v8953 = vld [vmem:[#allocation19 + $0x618] sm:$0xff]
    %v8954 = vld [vmem:[#allocation19 + $0x620] sm:$0xff]
    %v8955 = vld [vmem:[#allocation19 + $0x628] sm:$0xff]
    %v8956 = vld [vmem:[#allocation19 + $0x630] sm:$0xff]
    %v8957 = vld [vmem:[#allocation19 + $0x638] sm:$0xff]
    %v8958 = vld [vmem:[#allocation19 + $0x640] sm:$0xff]
    %v8959 = vld [vmem:[#allocation19 + $0x648] sm:$0xff]
    %v8960 = vld [vmem:[#allocation19 + $0x650] sm:$0xff]
    %v8961 = vld [vmem:[#allocation19 + $0x658] sm:$0xff]
    %v8962 = vld [vmem:[#allocation19 + $0x660] sm:$0xff]
    %v8963 = vld [vmem:[#allocation19 + $0x668] sm:$0xff]
    %v8964 = vld [vmem:[#allocation19 + $0x670] sm:$0xff]
    %v8965 = vld [vmem:[#allocation19 + $0x678] sm:$0xff]
    %v8966 = vld [vmem:[#allocation19 + $0x680] sm:$0xff]
    %v8967 = vld [vmem:[#allocation19 + $0x688] sm:$0xff]
    %v8968 = vld [vmem:[#allocation19 + $0x690] sm:$0xff]
    %v8969 = vld [vmem:[#allocation19 + $0x698] sm:$0xff]
    %v8970 = vld [vmem:[#allocation19 + $0x6a0] sm:$0xff]
    %v8971 = vld [vmem:[#allocation19 + $0x6a8] sm:$0xff]
    %v8972 = vld [vmem:[#allocation19 + $0x6b0] sm:$0xff]
    %v8973 = vld [vmem:[#allocation19 + $0x6b8] sm:$0xff]
    %v8974 = vld [vmem:[#allocation19 + $0x6c0] sm:$0xff]
    %v8975 = vld [vmem:[#allocation19 + $0x6c8] sm:$0xff]
    %v8976 = vld [vmem:[#allocation19 + $0x6d0] sm:$0xff]
    %v8977 = vld [vmem:[#allocation19 + $0x6d8] sm:$0xff]
    %v8978 = vld [vmem:[#allocation19 + $0x6e0] sm:$0xff]
    %v8979 = vld [vmem:[#allocation19 + $0x6e8] sm:$0xff]
    %v8980 = vld [vmem:[#allocation19 + $0x6f0] sm:$0xff]
    %v8981 = vld [vmem:[#allocation19 + $0x6f8] sm:$0xff]
    %v8982 = vld [vmem:[#allocation19 + $0x700] sm:$0xff]
    %v8983 = vld [vmem:[#allocation19 + $0x708] sm:$0xff]
    %v8984 = vld [vmem:[#allocation19 + $0x710] sm:$0xff]
    %v8985 = vld [vmem:[#allocation19 + $0x718] sm:$0xff]
    %v8986 = vld [vmem:[#allocation19 + $0x720] sm:$0xff]
    %v8987 = vld [vmem:[#allocation19 + $0x728] sm:$0xff]
    %v8988 = vld [vmem:[#allocation19 + $0x730] sm:$0xff]
    %v8989 = vld [vmem:[#allocation19 + $0x738] sm:$0xff]
    %v8990 = vld [vmem:[#allocation19 + $0x740] sm:$0xff]
    %v8991 = vld [vmem:[#allocation19 + $0x748] sm:$0xff]
    %v8992 = vld [vmem:[#allocation19 + $0x750] sm:$0xff]
    %v8993 = vld [vmem:[#allocation19 + $0x758] sm:$0xff]
    %v8994 = vld [vmem:[#allocation19 + $0x760] sm:$0xff]
    %v8995 = vld [vmem:[#allocation19 + $0x768] sm:$0xff]
    %v8996 = vld [vmem:[#allocation19 + $0x770] sm:$0xff]
    %v8997 = vld [vmem:[#allocation19 + $0x778] sm:$0xff]
    %v8998 = vld [vmem:[#allocation19 + $0x780] sm:$0xff]
    %v8999 = vld [vmem:[#allocation19 + $0x788] sm:$0xff]
    %v9000 = vld [vmem:[#allocation19 + $0x790] sm:$0xff]
    %v9001 = vld [vmem:[#allocation19 + $0x798] sm:$0xff]
    %v9002 = vld [vmem:[#allocation19 + $0x7a0] sm:$0xff]
    %v9003 = vld [vmem:[#allocation19 + $0x7a8] sm:$0xff]
    %v9004 = vld [vmem:[#allocation19 + $0x7b0] sm:$0xff]
    %v9005 = vld [vmem:[#allocation19 + $0x7b8] sm:$0xff]
    %v9006 = vld [vmem:[#allocation19 + $0x7c0] sm:$0xff]
    %v9007 = vld [vmem:[#allocation19 + $0x7c8] sm:$0xff]
    %v9008 = vld [vmem:[#allocation19 + $0x7d0] sm:$0xff]
    %v9009 = vld [vmem:[#allocation19 + $0x7d8] sm:$0xff]
    %v9010 = vld [vmem:[#allocation19 + $0x7e0] sm:$0xff]
    %v9011 = vld [vmem:[#allocation19 + $0x7e8] sm:$0xff]
    %v9012 = vld [vmem:[#allocation19 + $0x7f0] sm:$0xff]
    %v9013 = vld [vmem:[#allocation19 + $0x7f8] sm:$0xff]
    %v9014 = vld [vmem:[#allocation19 + $0x800] sm:$0xff]
    %v9015 = vld [vmem:[#allocation19 + $0x808] sm:$0xff]
    %v9016 = vld [vmem:[#allocation19 + $0x810] sm:$0xff]
    %v9017 = vld [vmem:[#allocation19 + $0x818] sm:$0xff]
    %v9018 = vld [vmem:[#allocation19 + $0x820] sm:$0xff]
    %v9019 = vld [vmem:[#allocation19 + $0x828] sm:$0xff]
    %v9020 = vld [vmem:[#allocation19 + $0x830] sm:$0xff]
    %v9021 = vld [vmem:[#allocation19 + $0x838] sm:$0xff]
    %v9022 = vld [vmem:[#allocation19 + $0x840] sm:$0xff]
    %v9023 = vld [vmem:[#allocation19 + $0x848] sm:$0xff]
    %v9024 = vld [vmem:[#allocation19 + $0x850] sm:$0xff]
    %v9025 = vld [vmem:[#allocation19 + $0x858] sm:$0xff]
    %v9026 = vld [vmem:[#allocation19 + $0x860] sm:$0xff]
    %v9027 = vld [vmem:[#allocation19 + $0x868] sm:$0xff]
    %v9028 = vld [vmem:[#allocation19 + $0x870] sm:$0xff]
    %v9029 = vld [vmem:[#allocation19 + $0x878] sm:$0xff]
    %v9030 = vld [vmem:[#allocation19 + $0x880] sm:$0xff]
    %v9031 = vld [vmem:[#allocation19 + $0x888] sm:$0xff]
    %v9032 = vld [vmem:[#allocation19 + $0x890] sm:$0xff]
    %v9033 = vld [vmem:[#allocation19 + $0x898] sm:$0xff]
    %v9034 = vld [vmem:[#allocation19 + $0x8a0] sm:$0xff]
    %v9035 = vld [vmem:[#allocation19 + $0x8a8] sm:$0xff]
    %v9036 = vld [vmem:[#allocation19 + $0x8b0] sm:$0xff]
    %v9037 = vld [vmem:[#allocation19 + $0x8b8] sm:$0xff]
    %v9038 = vld [vmem:[#allocation19 + $0x8c0] sm:$0xff]
    %v9039 = vld [vmem:[#allocation19 + $0x8c8] sm:$0xff]
    %v9040 = vld [vmem:[#allocation19 + $0x8d0] sm:$0xff]
    %v9041 = vld [vmem:[#allocation19 + $0x8d8] sm:$0xff]
    %v9042 = vld [vmem:[#allocation19 + $0x8e0] sm:$0xff]
    %v9043 = vld [vmem:[#allocation19 + $0x8e8] sm:$0xff]
    %v9044 = vld [vmem:[#allocation19 + $0x8f0] sm:$0xff]
    %v9045 = vld [vmem:[#allocation19 + $0x8f8] sm:$0xff]
    %v9046 = vld [vmem:[#allocation19 + $0x900] sm:$0xff]
    %v9047 = vld [vmem:[#allocation19 + $0x908] sm:$0xff]
    %v9048 = vld [vmem:[#allocation19 + $0x910] sm:$0xff]
    %v9049 = vld [vmem:[#allocation19 + $0x918] sm:$0xff]
    %v9050 = vld [vmem:[#allocation19 + $0x920] sm:$0xff]
    %v9051 = vld [vmem:[#allocation19 + $0x928] sm:$0xff]
    %v9052 = vld [vmem:[#allocation19 + $0x930] sm:$0xff]
    %v9053 = vld [vmem:[#allocation19 + $0x938] sm:$0xff]
    %v9054 = vld [vmem:[#allocation19 + $0x940] sm:$0xff]
    %v9055 = vld [vmem:[#allocation19 + $0x948] sm:$0xff]
    %v9056 = vld [vmem:[#allocation19 + $0x950] sm:$0xff]
    %v9057 = vld [vmem:[#allocation19 + $0x958] sm:$0xff]
    %v9058 = vld [vmem:[#allocation19 + $0x960] sm:$0xff]
    %v9059 = vld [vmem:[#allocation19 + $0x968] sm:$0xff]
    %v9060 = vld [vmem:[#allocation19 + $0x970] sm:$0xff]
    %v9061 = vld [vmem:[#allocation19 + $0x978] sm:$0xff]
    %v9062 = vld [vmem:[#allocation19 + $0x980] sm:$0xff]
    %v9063 = vld [vmem:[#allocation19 + $0x988] sm:$0xff]
    %v9064 = vld [vmem:[#allocation19 + $0x990] sm:$0xff]
    %v9065 = vld [vmem:[#allocation19 + $0x998] sm:$0xff]
    %v9066 = vld [vmem:[#allocation19 + $0x9a0] sm:$0xff]
    %v9067 = vld [vmem:[#allocation19 + $0x9a8] sm:$0xff]
    %v9068 = vld [vmem:[#allocation19 + $0x9b0] sm:$0xff]
    %v9069 = vld [vmem:[#allocation19 + $0x9b8] sm:$0xff]
    %v9070 = vld [vmem:[#allocation19 + $0x9c0] sm:$0xff]
    %v9071 = vld [vmem:[#allocation19 + $0x9c8] sm:$0xff]
    %v9072 = vld [vmem:[#allocation19 + $0x9d0] sm:$0xff]
    %v9073 = vld [vmem:[#allocation19 + $0x9d8] sm:$0xff]
    %v9074 = vld [vmem:[#allocation19 + $0x9e0] sm:$0xff]
    %v9075 = vld [vmem:[#allocation19 + $0x9e8] sm:$0xff]
    %v9076 = vld [vmem:[#allocation19 + $0x9f0] sm:$0xff]
    %v9077 = vld [vmem:[#allocation19 + $0x9f8] sm:$0xff]
    %v9078 = vld [vmem:[#allocation19 + $0xa00] sm:$0xff]
    %v9079 = vld [vmem:[#allocation19 + $0xa08] sm:$0xff]
    %v9080 = vld [vmem:[#allocation19 + $0xa10] sm:$0xff]
    %v9081 = vld [vmem:[#allocation19 + $0xa18] sm:$0xff]
    %v9082 = vld [vmem:[#allocation19 + $0xa20] sm:$0xff]
    %v9083 = vld [vmem:[#allocation19 + $0xa28] sm:$0xff]
    %v9084 = vld [vmem:[#allocation19 + $0xa30] sm:$0xff]
    %v9085 = vld [vmem:[#allocation19 + $0xa38] sm:$0xff]
    %v9086 = vld [vmem:[#allocation19 + $0xa40] sm:$0xff]
    %v9087 = vld [vmem:[#allocation19 + $0xa48] sm:$0xff]
    %v9088 = vld [vmem:[#allocation19 + $0xa50] sm:$0xff]
    %v9089 = vld [vmem:[#allocation19 + $0xa58] sm:$0xff]
    %v9090 = vld [vmem:[#allocation19 + $0xa60] sm:$0xff]
    %v9091 = vld [vmem:[#allocation19 + $0xa68] sm:$0xff]
    %v9092 = vld [vmem:[#allocation19 + $0xa70] sm:$0xff]
    %v9093 = vld [vmem:[#allocation19 + $0xa78] sm:$0xff]
    %v9094 = vld [vmem:[#allocation19 + $0xa80] sm:$0xff]
    %v9095 = vld [vmem:[#allocation19 + $0xa88] sm:$0xff]
    %v9096 = vld [vmem:[#allocation19 + $0xa90] sm:$0xff]
    %v9097 = vld [vmem:[#allocation19 + $0xa98] sm:$0xff]
    %v9098 = vld [vmem:[#allocation19 + $0xaa0] sm:$0xff]
    %v9099 = vld [vmem:[#allocation19 + $0xaa8] sm:$0xff]
    %v9100 = vld [vmem:[#allocation19 + $0xab0] sm:$0xff]
    %v9101 = vld [vmem:[#allocation19 + $0xab8] sm:$0xff]
    %v9102 = vld [vmem:[#allocation19 + $0xac0] sm:$0xff]
    %v9103 = vld [vmem:[#allocation19 + $0xac8] sm:$0xff]
    %v9104 = vld [vmem:[#allocation19 + $0xad0] sm:$0xff]
    %v9105 = vld [vmem:[#allocation19 + $0xad8] sm:$0xff]
    %v9106 = vld [vmem:[#allocation19 + $0xae0] sm:$0xff]
    %v9107 = vld [vmem:[#allocation19 + $0xae8] sm:$0xff]
    %v9108 = vld [vmem:[#allocation19 + $0xaf0] sm:$0xff]
    %v9109 = vld [vmem:[#allocation19 + $0xaf8] sm:$0xff]
    %v9110 = vld [vmem:[#allocation19 + $0xb00] sm:$0xff]
    %v9111 = vld [vmem:[#allocation19 + $0xb08] sm:$0xff]
    %v9112 = vld [vmem:[#allocation19 + $0xb10] sm:$0xff]
    %v9113 = vld [vmem:[#allocation19 + $0xb18] sm:$0xff]
    %v9114 = vld [vmem:[#allocation19 + $0xb20] sm:$0xff]
    %v9115 = vld [vmem:[#allocation19 + $0xb28] sm:$0xff]
    %v9116 = vld [vmem:[#allocation19 + $0xb30] sm:$0xff]
    %v9117 = vld [vmem:[#allocation19 + $0xb38] sm:$0xff]
    %v9118 = vld [vmem:[#allocation19 + $0xb40] sm:$0xff]
    %v9119 = vld [vmem:[#allocation19 + $0xb48] sm:$0xff]
    %v9120 = vld [vmem:[#allocation19 + $0xb50] sm:$0xff]
    %v9121 = vld [vmem:[#allocation19 + $0xb58] sm:$0xff]
    %v9122 = vld [vmem:[#allocation19 + $0xb60] sm:$0xff]
    %v9123 = vld [vmem:[#allocation19 + $0xb68] sm:$0xff]
    %v9124 = vld [vmem:[#allocation19 + $0xb70] sm:$0xff]
    %v9125 = vld [vmem:[#allocation19 + $0xb78] sm:$0xff]
    %v9126 = vld [vmem:[#allocation19 + $0xb80] sm:$0xff]
    %v9127 = vld [vmem:[#allocation19 + $0xb88] sm:$0xff]
    %v9128 = vld [vmem:[#allocation19 + $0xb90] sm:$0xff]
    %v9129 = vld [vmem:[#allocation19 + $0xb98] sm:$0xff]
    %v9130 = vld [vmem:[#allocation19 + $0xba0] sm:$0xff]
    %v9131 = vld [vmem:[#allocation19 + $0xba8] sm:$0xff]
    %v9132 = vld [vmem:[#allocation19 + $0xbb0] sm:$0xff]
    %v9133 = vld [vmem:[#allocation19 + $0xbb8] sm:$0xff]
    %v9134 = vld [vmem:[#allocation19 + $0xbc0] sm:$0xff]
    %v9135 = vld [vmem:[#allocation19 + $0xbc8] sm:$0xff]
    %v9136 = vld [vmem:[#allocation19 + $0xbd0] sm:$0xff]
    %v9137 = vld [vmem:[#allocation19 + $0xbd8] sm:$0xff]
    %v9138 = vld [vmem:[#allocation19 + $0xbe0] sm:$0xff]
    %v9139 = vld [vmem:[#allocation19 + $0xbe8] sm:$0xff]
    %v9140 = vld [vmem:[#allocation19 + $0xbf0] sm:$0xff]
    %v9141 = vld [vmem:[#allocation19 + $0xbf8] sm:$0xff]
    %v9142 = vld [vmem:[#allocation19 + $0xc00] sm:$0xff]
    %v9143 = vld [vmem:[#allocation19 + $0xc08] sm:$0xff]
    %v9144 = vld [vmem:[#allocation19 + $0xc10] sm:$0xff]
    %v9145 = vld [vmem:[#allocation19 + $0xc18] sm:$0xff]
    %v9146 = vld [vmem:[#allocation19 + $0xc20] sm:$0xff]
    %v9147 = vld [vmem:[#allocation19 + $0xc28] sm:$0xff]
    %v9148 = vld [vmem:[#allocation19 + $0xc30] sm:$0xff]
    %v9149 = vld [vmem:[#allocation19 + $0xc38] sm:$0xff]
    %v9150 = vld [vmem:[#allocation19 + $0xc40] sm:$0xff]
    %v9151 = vld [vmem:[#allocation19 + $0xc48] sm:$0xff]
    %v9152 = vld [vmem:[#allocation19 + $0xc50] sm:$0xff]
    %v9153 = vld [vmem:[#allocation19 + $0xc58] sm:$0xff]
    %v9154 = vld [vmem:[#allocation19 + $0xc60] sm:$0xff]
    %v9155 = vld [vmem:[#allocation19 + $0xc68] sm:$0xff]
    %v9156 = vld [vmem:[#allocation19 + $0xc70] sm:$0xff]
    %v9157 = vld [vmem:[#allocation19 + $0xc78] sm:$0xff]
    %v9158 = vld [vmem:[#allocation19 + $0xc80] sm:$0xff]
    %v9159 = vld [vmem:[#allocation19 + $0xc88] sm:$0xff]
    %v9160 = vld [vmem:[#allocation19 + $0xc90] sm:$0xff]
    %v9161 = vld [vmem:[#allocation19 + $0xc98] sm:$0xff]
    %v9162 = vld [vmem:[#allocation19 + $0xca0] sm:$0xff]
    %v9163 = vld [vmem:[#allocation19 + $0xca8] sm:$0xff]
    %v9164 = vld [vmem:[#allocation19 + $0xcb0] sm:$0xff]
    %v9165 = vld [vmem:[#allocation19 + $0xcb8] sm:$0xff]
    %v9166 = vld [vmem:[#allocation19 + $0xcc0] sm:$0xff]
    %v9167 = vld [vmem:[#allocation19 + $0xcc8] sm:$0xff]
    %v9168 = vld [vmem:[#allocation19 + $0xcd0] sm:$0xff]
    %v9169 = vld [vmem:[#allocation19 + $0xcd8] sm:$0xff]
    %v9170 = vld [vmem:[#allocation19 + $0xce0] sm:$0xff]
    %v9171 = vld [vmem:[#allocation19 + $0xce8] sm:$0xff]
    %v9172 = vld [vmem:[#allocation19 + $0xcf0] sm:$0xff]
    %v9173 = vld [vmem:[#allocation19 + $0xcf8] sm:$0xff]
    %v9174 = vld [vmem:[#allocation19 + $0xd00] sm:$0xff]
    %v9175 = vld [vmem:[#allocation19 + $0xd08] sm:$0xff]
    %v9176 = vld [vmem:[#allocation19 + $0xd10] sm:$0xff]
    %v9177 = vld [vmem:[#allocation19 + $0xd18] sm:$0xff]
    %v9178 = vld [vmem:[#allocation19 + $0xd20] sm:$0xff]
    %v9179 = vld [vmem:[#allocation19 + $0xd28] sm:$0xff]
    %v9180 = vld [vmem:[#allocation19 + $0xd30] sm:$0xff]
    %v9181 = vld [vmem:[#allocation19 + $0xd38] sm:$0xff]
    %v9182 = vld [vmem:[#allocation19 + $0xd40] sm:$0xff]
    %v9183 = vld [vmem:[#allocation19 + $0xd48] sm:$0xff]
    %v9184 = vld [vmem:[#allocation19 + $0xd50] sm:$0xff]
    %v9185 = vld [vmem:[#allocation19 + $0xd58] sm:$0xff]
    %v9186 = vld [vmem:[#allocation19 + $0xd60] sm:$0xff]
    %v9187 = vld [vmem:[#allocation19 + $0xd68] sm:$0xff]
    %v9188 = vld [vmem:[#allocation19 + $0xd70] sm:$0xff]
    %v9189 = vld [vmem:[#allocation19 + $0xd78] sm:$0xff]
    %v9190 = vld [vmem:[#allocation19 + $0xd80] sm:$0xff]
    %v9191 = vld [vmem:[#allocation19 + $0xd88] sm:$0xff]
    %v9192 = vld [vmem:[#allocation19 + $0xd90] sm:$0xff]
    %v9193 = vld [vmem:[#allocation19 + $0xd98] sm:$0xff]
    %v9194 = vld [vmem:[#allocation19 + $0xda0] sm:$0xff]
    %v9195 = vld [vmem:[#allocation19 + $0xda8] sm:$0xff]
    %v9196 = vld [vmem:[#allocation19 + $0xdb0] sm:$0xff]
    %v9197 = vld [vmem:[#allocation19 + $0xdb8] sm:$0xff]
    %v9198 = vld [vmem:[#allocation19 + $0xdc0] sm:$0xff]
    %v9199 = vld [vmem:[#allocation19 + $0xdc8] sm:$0xff]
    %v9200 = vld [vmem:[#allocation19 + $0xdd0] sm:$0xff]
    %v9201 = vld [vmem:[#allocation19 + $0xdd8] sm:$0xff]
    %v9202 = vld [vmem:[#allocation19 + $0xde0] sm:$0xff]
    %v9203 = vld [vmem:[#allocation19 + $0xde8] sm:$0xff]
    %v9204 = vld [vmem:[#allocation19 + $0xdf0] sm:$0xff]
    %v9205 = vld [vmem:[#allocation19 + $0xdf8] sm:$0xff]
    %v9206 = vld [vmem:[#allocation19 + $0xe00] sm:$0xff]
    %v9207 = vld [vmem:[#allocation19 + $0xe08] sm:$0xff]
    %v9208 = vld [vmem:[#allocation19 + $0xe10] sm:$0xff]
    %v9209 = vld [vmem:[#allocation19 + $0xe18] sm:$0xff]
    %v9210 = vld [vmem:[#allocation19 + $0xe20] sm:$0xff]
    %v9211 = vld [vmem:[#allocation19 + $0xe28] sm:$0xff]
    %v9212 = vld [vmem:[#allocation19 + $0xe30] sm:$0xff]
    %v9213 = vld [vmem:[#allocation19 + $0xe38] sm:$0xff]
    %v9214 = vld [vmem:[#allocation19 + $0xe40] sm:$0xff]
    %v9215 = vld [vmem:[#allocation19 + $0xe48] sm:$0xff]
    %v9216 = vld [vmem:[#allocation19 + $0xe50] sm:$0xff]
    %v9217 = vld [vmem:[#allocation19 + $0xe58] sm:$0xff]
    %v9218 = vld [vmem:[#allocation19 + $0xe60] sm:$0xff]
    %v9219 = vld [vmem:[#allocation19 + $0xe68] sm:$0xff]
    %v9220 = vld [vmem:[#allocation19 + $0xe70] sm:$0xff]
    %v9221 = vld [vmem:[#allocation19 + $0xe78] sm:$0xff]
    %v9222 = vld [vmem:[#allocation19 + $0xe80] sm:$0xff]
    %v9223 = vld [vmem:[#allocation19 + $0xe88] sm:$0xff]
    %v9224 = vld [vmem:[#allocation19 + $0xe90] sm:$0xff]
    %v9225 = vld [vmem:[#allocation19 + $0xe98] sm:$0xff]
    %v9226 = vld [vmem:[#allocation19 + $0xea0] sm:$0xff]
    %v9227 = vld [vmem:[#allocation19 + $0xea8] sm:$0xff]
    %v9228 = vld [vmem:[#allocation19 + $0xeb0] sm:$0xff]
    %v9229 = vld [vmem:[#allocation19 + $0xeb8] sm:$0xff]
    %v9230 = vld [vmem:[#allocation19 + $0xec0] sm:$0xff]
    %v9231 = vld [vmem:[#allocation19 + $0xec8] sm:$0xff]
    %v9232 = vld [vmem:[#allocation19 + $0xed0] sm:$0xff]
    %v9233 = vld [vmem:[#allocation19 + $0xed8] sm:$0xff]
    %v9234 = vld [vmem:[#allocation19 + $0xee0] sm:$0xff]
    %v9235 = vld [vmem:[#allocation19 + $0xee8] sm:$0xff]
    %v9236 = vld [vmem:[#allocation19 + $0xef0] sm:$0xff]
    %v9237 = vld [vmem:[#allocation19 + $0xef8] sm:$0xff]
    %v9238 = vld [vmem:[#allocation19 + $0xf00] sm:$0xff]
    %v9239 = vld [vmem:[#allocation19 + $0xf08] sm:$0xff]
    %v9240 = vld [vmem:[#allocation19 + $0xf10] sm:$0xff]
    %v9241 = vld [vmem:[#allocation19 + $0xf18] sm:$0xff]
    %v9242 = vld [vmem:[#allocation19 + $0xf20] sm:$0xff]
    %v9243 = vld [vmem:[#allocation19 + $0xf28] sm:$0xff]
    %v9244 = vld [vmem:[#allocation19 + $0xf30] sm:$0xff]
    %v9245 = vld [vmem:[#allocation19 + $0xf38] sm:$0xff]
    %v9246 = vld [vmem:[#allocation19 + $0xf40] sm:$0xff]
    %v9247 = vld [vmem:[#allocation19 + $0xf48] sm:$0xff]
    %v9248 = vld [vmem:[#allocation19 + $0xf50] sm:$0xff]
    %v9249 = vld [vmem:[#allocation19 + $0xf58] sm:$0xff]
    %v9250 = vld [vmem:[#allocation19 + $0xf60] sm:$0xff]
    %v9251 = vld [vmem:[#allocation19 + $0xf68] sm:$0xff]
    %v9252 = vld [vmem:[#allocation19 + $0xf70] sm:$0xff]
    %v9253 = vld [vmem:[#allocation19 + $0xf78] sm:$0xff]
    %v9254 = vld [vmem:[#allocation19 + $0xf80] sm:$0xff]
    %v9255 = vld [vmem:[#allocation19 + $0xf88] sm:$0xff]
    %v9256 = vld [vmem:[#allocation19 + $0xf90] sm:$0xff]
    %v9257 = vld [vmem:[#allocation19 + $0xf98] sm:$0xff]
    %v9258 = vld [vmem:[#allocation19 + $0xfa0] sm:$0xff]
    %v9259 = vld [vmem:[#allocation19 + $0xfa8] sm:$0xff]
    %v9260 = vld [vmem:[#allocation19 + $0xfb0] sm:$0xff]
    %v9261 = vld [vmem:[#allocation19 + $0xfb8] sm:$0xff]
    %v9262 = vld [vmem:[#allocation19 + $0xfc0] sm:$0xff]
    %v9263 = vld [vmem:[#allocation19 + $0xfc8] sm:$0xff]
    %v9264 = vld [vmem:[#allocation19 + $0xfd0] sm:$0xff]
    %v9265 = vld [vmem:[#allocation19 + $0xfd8] sm:$0xff]
    %v9266 = vld [vmem:[#allocation19 + $0xfe0] sm:$0xff]
    %v9267 = vld [vmem:[#allocation19 + $0xfe8] sm:$0xff]
    %v9268 = vld [vmem:[#allocation19 + $0xff0] sm:$0xff]
    %v9269 = vld [vmem:[#allocation19 + $0xff8] sm:$0xff]
    %v9270 = vld [vmem:[#allocation21] sm:$0xff]
    %v9272 = vlaneseq
    %v9273 = vshrl.u32 %v9272, 7
    %v9274 = vsub.s32 0, %v9273
    %v9275 = vrot.slane %v9270, %v9274
    %v9276 = vlaneseq
    %v9277 = vshrl.u32 %v9276, 7
    %v9278 = vsub.s32 1, %v9277
    %v9279 = vrot.slane %v9270, %v9278
    %v9280 = vlaneseq
    %v9281 = vshrl.u32 %v9280, 7
    %v9282 = vsub.s32 2, %v9281
    %v9283 = vrot.slane %v9270, %v9282
    %v9284 = vlaneseq
    %v9285 = vshrl.u32 %v9284, 7
    %v9286 = vsub.s32 3, %v9285
    %v9287 = vrot.slane %v9270, %v9286
    %v9288 = vlaneseq
    %v9289 = vshrl.u32 %v9288, 7
    %v9290 = vsub.s32 4, %v9289
    %v9291 = vrot.slane %v9270, %v9290
    %v9292 = vlaneseq
    %v9293 = vshrl.u32 %v9292, 7
    %v9294 = vsub.s32 5, %v9293
    %v9295 = vrot.slane %v9270, %v9294
    %v9296 = vlaneseq
    %v9297 = vshrl.u32 %v9296, 7
    %v9298 = vsub.s32 6, %v9297
    %v9299 = vrot.slane %v9270, %v9298
    %v9300 = vlaneseq
    %v9301 = vshrl.u32 %v9300, 7
    %v9302 = vsub.s32 7, %v9301
    %v9303 = vrot.slane %v9270, %v9302
    %v9824 = vunpack.c.l.b16 %v8758
    %v9825 = vunpack.c.h.b16 %v8758
    %v9826 = vunpack.c.l.b16 %v8759
    %v9827 = vunpack.c.h.b16 %v8759
    %v9828 = vunpack.c.l.b16 %v8760
    %v9829 = vunpack.c.h.b16 %v8760
    %v9830 = vunpack.c.l.b16 %v8761
    %v9831 = vunpack.c.h.b16 %v8761
    %v9832 = vunpack.c.l.b16 %v8762
    %v9833 = vunpack.c.h.b16 %v8762
    %v9834 = vunpack.c.l.b16 %v8763
    %v9835 = vunpack.c.h.b16 %v8763
    %v9836 = vunpack.c.l.b16 %v8764
    %v9837 = vunpack.c.h.b16 %v8764
    %v9838 = vunpack.c.l.b16 %v8765
    %v9839 = vunpack.c.h.b16 %v8765
    %v9840 = vunpack.c.l.b16 %v8766
    %v9841 = vunpack.c.h.b16 %v8766
    %v9842 = vunpack.c.l.b16 %v8767
    %v9843 = vunpack.c.h.b16 %v8767
    %v9844 = vunpack.c.l.b16 %v8768
    %v9845 = vunpack.c.h.b16 %v8768
    %v9846 = vunpack.c.l.b16 %v8769
    %v9847 = vunpack.c.h.b16 %v8769
    %v9848 = vunpack.c.l.b16 %v8770
    %v9849 = vunpack.c.h.b16 %v8770
    %v9850 = vunpack.c.l.b16 %v8771
    %v9851 = vunpack.c.h.b16 %v8771
    %v9852 = vunpack.c.l.b16 %v8772
    %v9853 = vunpack.c.h.b16 %v8772
    %v9854 = vunpack.c.l.b16 %v8773
    %v9855 = vunpack.c.h.b16 %v8773
    %v9856 = vunpack.c.l.b16 %v8774
    %v9857 = vunpack.c.h.b16 %v8774
    %v9858 = vunpack.c.l.b16 %v8775
    %v9859 = vunpack.c.h.b16 %v8775
    %v9860 = vunpack.c.l.b16 %v8776
    %v9861 = vunpack.c.h.b16 %v8776
    %v9862 = vunpack.c.l.b16 %v8777
    %v9863 = vunpack.c.h.b16 %v8777
    %v9864 = vunpack.c.l.b16 %v8778
    %v9865 = vunpack.c.h.b16 %v8778
    %v9866 = vunpack.c.l.b16 %v8779
    %v9867 = vunpack.c.h.b16 %v8779
    %v9868 = vunpack.c.l.b16 %v8780
    %v9869 = vunpack.c.h.b16 %v8780
    %v9870 = vunpack.c.l.b16 %v8781
    %v9871 = vunpack.c.h.b16 %v8781
    %v9872 = vunpack.c.l.b16 %v8782
    %v9873 = vunpack.c.h.b16 %v8782
    %v9874 = vunpack.c.l.b16 %v8783
    %v9875 = vunpack.c.h.b16 %v8783
    %v9876 = vunpack.c.l.b16 %v8784
    %v9877 = vunpack.c.h.b16 %v8784
    %v9878 = vunpack.c.l.b16 %v8785
    %v9879 = vunpack.c.h.b16 %v8785
    %v9880 = vunpack.c.l.b16 %v8786
    %v9881 = vunpack.c.h.b16 %v8786
    %v9882 = vunpack.c.l.b16 %v8787
    %v9883 = vunpack.c.h.b16 %v8787
    %v9884 = vunpack.c.l.b16 %v8788
    %v9885 = vunpack.c.h.b16 %v8788
    %v9886 = vunpack.c.l.b16 %v8789
    %v9887 = vunpack.c.h.b16 %v8789
    %v9888 = vunpack.c.l.b16 %v8790
    %v9889 = vunpack.c.h.b16 %v8790
    %v9890 = vunpack.c.l.b16 %v8791
    %v9891 = vunpack.c.h.b16 %v8791
    %v9892 = vunpack.c.l.b16 %v8792
    %v9893 = vunpack.c.h.b16 %v8792
    %v9894 = vunpack.c.l.b16 %v8793
    %v9895 = vunpack.c.h.b16 %v8793
    %v9896 = vunpack.c.l.b16 %v8794
    %v9897 = vunpack.c.h.b16 %v8794
    %v9898 = vunpack.c.l.b16 %v8795
    %v9899 = vunpack.c.h.b16 %v8795
    %v9900 = vunpack.c.l.b16 %v8796
    %v9901 = vunpack.c.h.b16 %v8796
    %v9902 = vunpack.c.l.b16 %v8797
    %v9903 = vunpack.c.h.b16 %v8797
    %v9904 = vunpack.c.l.b16 %v8798
    %v9905 = vunpack.c.h.b16 %v8798
    %v9906 = vunpack.c.l.b16 %v8799
    %v9907 = vunpack.c.h.b16 %v8799
    %v9908 = vunpack.c.l.b16 %v8800
    %v9909 = vunpack.c.h.b16 %v8800
    %v9910 = vunpack.c.l.b16 %v8801
    %v9911 = vunpack.c.h.b16 %v8801
    %v9912 = vunpack.c.l.b16 %v8802
    %v9913 = vunpack.c.h.b16 %v8802
    %v9914 = vunpack.c.l.b16 %v8803
    %v9915 = vunpack.c.h.b16 %v8803
    %v9916 = vunpack.c.l.b16 %v8804
    %v9917 = vunpack.c.h.b16 %v8804
    %v9918 = vunpack.c.l.b16 %v8805
    %v9919 = vunpack.c.h.b16 %v8805
    %v9920 = vunpack.c.l.b16 %v8806
    %v9921 = vunpack.c.h.b16 %v8806
    %v9922 = vunpack.c.l.b16 %v8807
    %v9923 = vunpack.c.h.b16 %v8807
    %v9924 = vunpack.c.l.b16 %v8808
    %v9925 = vunpack.c.h.b16 %v8808
    %v9926 = vunpack.c.l.b16 %v8809
    %v9927 = vunpack.c.h.b16 %v8809
    %v9928 = vunpack.c.l.b16 %v8810
    %v9929 = vunpack.c.h.b16 %v8810
    %v9930 = vunpack.c.l.b16 %v8811
    %v9931 = vunpack.c.h.b16 %v8811
    %v9932 = vunpack.c.l.b16 %v8812
    %v9933 = vunpack.c.h.b16 %v8812
    %v9934 = vunpack.c.l.b16 %v8813
    %v9935 = vunpack.c.h.b16 %v8813
    %v9936 = vunpack.c.l.b16 %v8814
    %v9937 = vunpack.c.h.b16 %v8814
    %v9938 = vunpack.c.l.b16 %v8815
    %v9939 = vunpack.c.h.b16 %v8815
    %v9940 = vunpack.c.l.b16 %v8816
    %v9941 = vunpack.c.h.b16 %v8816
    %v9942 = vunpack.c.l.b16 %v8817
    %v9943 = vunpack.c.h.b16 %v8817
    %v9944 = vunpack.c.l.b16 %v8818
    %v9945 = vunpack.c.h.b16 %v8818
    %v9946 = vunpack.c.l.b16 %v8819
    %v9947 = vunpack.c.h.b16 %v8819
    %v9948 = vunpack.c.l.b16 %v8820
    %v9949 = vunpack.c.h.b16 %v8820
    %v9950 = vunpack.c.l.b16 %v8821
    %v9951 = vunpack.c.h.b16 %v8821
    %v9952 = vunpack.c.l.b16 %v8822
    %v9953 = vunpack.c.h.b16 %v8822
    %v9954 = vunpack.c.l.b16 %v8823
    %v9955 = vunpack.c.h.b16 %v8823
    %v9956 = vunpack.c.l.b16 %v8824
    %v9957 = vunpack.c.h.b16 %v8824
    %v9958 = vunpack.c.l.b16 %v8825
    %v9959 = vunpack.c.h.b16 %v8825
    %v9960 = vunpack.c.l.b16 %v8826
    %v9961 = vunpack.c.h.b16 %v8826
    %v9962 = vunpack.c.l.b16 %v8827
    %v9963 = vunpack.c.h.b16 %v8827
    %v9964 = vunpack.c.l.b16 %v8828
    %v9965 = vunpack.c.h.b16 %v8828
    %v9966 = vunpack.c.l.b16 %v8829
    %v9967 = vunpack.c.h.b16 %v8829
    %v9968 = vunpack.c.l.b16 %v8830
    %v9969 = vunpack.c.h.b16 %v8830
    %v9970 = vunpack.c.l.b16 %v8831
    %v9971 = vunpack.c.h.b16 %v8831
    %v9972 = vunpack.c.l.b16 %v8832
    %v9973 = vunpack.c.h.b16 %v8832
    %v9974 = vunpack.c.l.b16 %v8833
    %v9975 = vunpack.c.h.b16 %v8833
    %v9976 = vunpack.c.l.b16 %v8834
    %v9977 = vunpack.c.h.b16 %v8834
    %v9978 = vunpack.c.l.b16 %v8835
    %v9979 = vunpack.c.h.b16 %v8835
    %v9980 = vunpack.c.l.b16 %v8836
    %v9981 = vunpack.c.h.b16 %v8836
    %v9982 = vunpack.c.l.b16 %v8837
    %v9983 = vunpack.c.h.b16 %v8837
    %v9984 = vunpack.c.l.b16 %v8838
    %v9985 = vunpack.c.h.b16 %v8838
    %v9986 = vunpack.c.l.b16 %v8839
    %v9987 = vunpack.c.h.b16 %v8839
    %v9988 = vunpack.c.l.b16 %v8840
    %v9989 = vunpack.c.h.b16 %v8840
    %v9990 = vunpack.c.l.b16 %v8841
    %v9991 = vunpack.c.h.b16 %v8841
    %v9992 = vunpack.c.l.b16 %v8842
    %v9993 = vunpack.c.h.b16 %v8842
    %v9994 = vunpack.c.l.b16 %v8843
    %v9995 = vunpack.c.h.b16 %v8843
    %v9996 = vunpack.c.l.b16 %v8844
    %v9997 = vunpack.c.h.b16 %v8844
    %v9998 = vunpack.c.l.b16 %v8845
    %v9999 = vunpack.c.h.b16 %v8845
    %v10000 = vunpack.c.l.b16 %v8846
    %v10001 = vunpack.c.h.b16 %v8846
    %v10002 = vunpack.c.l.b16 %v8847
    %v10003 = vunpack.c.h.b16 %v8847
    %v10004 = vunpack.c.l.b16 %v8848
    %v10005 = vunpack.c.h.b16 %v8848
    %v10006 = vunpack.c.l.b16 %v8849
    %v10007 = vunpack.c.h.b16 %v8849
    %v10008 = vunpack.c.l.b16 %v8850
    %v10009 = vunpack.c.h.b16 %v8850
    %v10010 = vunpack.c.l.b16 %v8851
    %v10011 = vunpack.c.h.b16 %v8851
    %v10012 = vunpack.c.l.b16 %v8852
    %v10013 = vunpack.c.h.b16 %v8852
    %v10014 = vunpack.c.l.b16 %v8853
    %v10015 = vunpack.c.h.b16 %v8853
    %v10016 = vunpack.c.l.b16 %v8854
    %v10017 = vunpack.c.h.b16 %v8854
    %v10018 = vunpack.c.l.b16 %v8855
    %v10019 = vunpack.c.h.b16 %v8855
    %v10020 = vunpack.c.l.b16 %v8856
    %v10021 = vunpack.c.h.b16 %v8856
    %v10022 = vunpack.c.l.b16 %v8857
    %v10023 = vunpack.c.h.b16 %v8857
    %v10024 = vunpack.c.l.b16 %v8858
    %v10025 = vunpack.c.h.b16 %v8858
    %v10026 = vunpack.c.l.b16 %v8859
    %v10027 = vunpack.c.h.b16 %v8859
    %v10028 = vunpack.c.l.b16 %v8860
    %v10029 = vunpack.c.h.b16 %v8860
    %v10030 = vunpack.c.l.b16 %v8861
    %v10031 = vunpack.c.h.b16 %v8861
    %v10032 = vunpack.c.l.b16 %v8862
    %v10033 = vunpack.c.h.b16 %v8862
    %v10034 = vunpack.c.l.b16 %v8863
    %v10035 = vunpack.c.h.b16 %v8863
    %v10036 = vunpack.c.l.b16 %v8864
    %v10037 = vunpack.c.h.b16 %v8864
    %v10038 = vunpack.c.l.b16 %v8865
    %v10039 = vunpack.c.h.b16 %v8865
    %v10040 = vunpack.c.l.b16 %v8866
    %v10041 = vunpack.c.h.b16 %v8866
    %v10042 = vunpack.c.l.b16 %v8867
    %v10043 = vunpack.c.h.b16 %v8867
    %v10044 = vunpack.c.l.b16 %v8868
    %v10045 = vunpack.c.h.b16 %v8868
    %v10046 = vunpack.c.l.b16 %v8869
    %v10047 = vunpack.c.h.b16 %v8869
    %v10048 = vunpack.c.l.b16 %v8870
    %v10049 = vunpack.c.h.b16 %v8870
    %v10050 = vunpack.c.l.b16 %v8871
    %v10051 = vunpack.c.h.b16 %v8871
    %v10052 = vunpack.c.l.b16 %v8872
    %v10053 = vunpack.c.h.b16 %v8872
    %v10054 = vunpack.c.l.b16 %v8873
    %v10055 = vunpack.c.h.b16 %v8873
    %v10056 = vunpack.c.l.b16 %v8874
    %v10057 = vunpack.c.h.b16 %v8874
    %v10058 = vunpack.c.l.b16 %v8875
    %v10059 = vunpack.c.h.b16 %v8875
    %v10060 = vunpack.c.l.b16 %v8876
    %v10061 = vunpack.c.h.b16 %v8876
    %v10062 = vunpack.c.l.b16 %v8877
    %v10063 = vunpack.c.h.b16 %v8877
    %v10064 = vunpack.c.l.b16 %v8878
    %v10065 = vunpack.c.h.b16 %v8878
    %v10066 = vunpack.c.l.b16 %v8879
    %v10067 = vunpack.c.h.b16 %v8879
    %v10068 = vunpack.c.l.b16 %v8880
    %v10069 = vunpack.c.h.b16 %v8880
    %v10070 = vunpack.c.l.b16 %v8881
    %v10071 = vunpack.c.h.b16 %v8881
    %v10072 = vunpack.c.l.b16 %v8882
    %v10073 = vunpack.c.h.b16 %v8882
    %v10074 = vunpack.c.l.b16 %v8883
    %v10075 = vunpack.c.h.b16 %v8883
    %v10076 = vunpack.c.l.b16 %v8884
    %v10077 = vunpack.c.h.b16 %v8884
    %v10078 = vunpack.c.l.b16 %v8885
    %v10079 = vunpack.c.h.b16 %v8885
    %v10080 = vunpack.c.l.b16 %v8886
    %v10081 = vunpack.c.h.b16 %v8886
    %v10082 = vunpack.c.l.b16 %v8887
    %v10083 = vunpack.c.h.b16 %v8887
    %v10084 = vunpack.c.l.b16 %v8888
    %v10085 = vunpack.c.h.b16 %v8888
    %v10086 = vunpack.c.l.b16 %v8889
    %v10087 = vunpack.c.h.b16 %v8889
    %v10088 = vunpack.c.l.b16 %v8890
    %v10089 = vunpack.c.h.b16 %v8890
    %v10090 = vunpack.c.l.b16 %v8891
    %v10091 = vunpack.c.h.b16 %v8891
    %v10092 = vunpack.c.l.b16 %v8892
    %v10093 = vunpack.c.h.b16 %v8892
    %v10094 = vunpack.c.l.b16 %v8893
    %v10095 = vunpack.c.h.b16 %v8893
    %v10096 = vunpack.c.l.b16 %v8894
    %v10097 = vunpack.c.h.b16 %v8894
    %v10098 = vunpack.c.l.b16 %v8895
    %v10099 = vunpack.c.h.b16 %v8895
    %v10100 = vunpack.c.l.b16 %v8896
    %v10101 = vunpack.c.h.b16 %v8896
    %v10102 = vunpack.c.l.b16 %v8897
    %v10103 = vunpack.c.h.b16 %v8897
    %v10104 = vunpack.c.l.b16 %v8898
    %v10105 = vunpack.c.h.b16 %v8898
    %v10106 = vunpack.c.l.b16 %v8899
    %v10107 = vunpack.c.h.b16 %v8899
    %v10108 = vunpack.c.l.b16 %v8900
    %v10109 = vunpack.c.h.b16 %v8900
    %v10110 = vunpack.c.l.b16 %v8901
    %v10111 = vunpack.c.h.b16 %v8901
    %v10112 = vunpack.c.l.b16 %v8902
    %v10113 = vunpack.c.h.b16 %v8902
    %v10114 = vunpack.c.l.b16 %v8903
    %v10115 = vunpack.c.h.b16 %v8903
    %v10116 = vunpack.c.l.b16 %v8904
    %v10117 = vunpack.c.h.b16 %v8904
    %v10118 = vunpack.c.l.b16 %v8905
    %v10119 = vunpack.c.h.b16 %v8905
    %v10120 = vunpack.c.l.b16 %v8906
    %v10121 = vunpack.c.h.b16 %v8906
    %v10122 = vunpack.c.l.b16 %v8907
    %v10123 = vunpack.c.h.b16 %v8907
    %v10124 = vunpack.c.l.b16 %v8908
    %v10125 = vunpack.c.h.b16 %v8908
    %v10126 = vunpack.c.l.b16 %v8909
    %v10127 = vunpack.c.h.b16 %v8909
    %v10128 = vunpack.c.l.b16 %v8910
    %v10129 = vunpack.c.h.b16 %v8910
    %v10130 = vunpack.c.l.b16 %v8911
    %v10131 = vunpack.c.h.b16 %v8911
    %v10132 = vunpack.c.l.b16 %v8912
    %v10133 = vunpack.c.h.b16 %v8912
    %v10134 = vunpack.c.l.b16 %v8913
    %v10135 = vunpack.c.h.b16 %v8913
    %v10136 = vunpack.c.l.b16 %v8914
    %v10137 = vunpack.c.h.b16 %v8914
    %v10138 = vunpack.c.l.b16 %v8915
    %v10139 = vunpack.c.h.b16 %v8915
    %v10140 = vunpack.c.l.b16 %v8916
    %v10141 = vunpack.c.h.b16 %v8916
    %v10142 = vunpack.c.l.b16 %v8917
    %v10143 = vunpack.c.h.b16 %v8917
    %v10144 = vunpack.c.l.b16 %v8918
    %v10145 = vunpack.c.h.b16 %v8918
    %v10146 = vunpack.c.l.b16 %v8919
    %v10147 = vunpack.c.h.b16 %v8919
    %v10148 = vunpack.c.l.b16 %v8920
    %v10149 = vunpack.c.h.b16 %v8920
    %v10150 = vunpack.c.l.b16 %v8921
    %v10151 = vunpack.c.h.b16 %v8921
    %v10152 = vunpack.c.l.b16 %v8922
    %v10153 = vunpack.c.h.b16 %v8922
    %v10154 = vunpack.c.l.b16 %v8923
    %v10155 = vunpack.c.h.b16 %v8923
    %v10156 = vunpack.c.l.b16 %v8924
    %v10157 = vunpack.c.h.b16 %v8924
    %v10158 = vunpack.c.l.b16 %v8925
    %v10159 = vunpack.c.h.b16 %v8925
    %v10160 = vunpack.c.l.b16 %v8926
    %v10161 = vunpack.c.h.b16 %v8926
    %v10162 = vunpack.c.l.b16 %v8927
    %v10163 = vunpack.c.h.b16 %v8927
    %v10164 = vunpack.c.l.b16 %v8928
    %v10165 = vunpack.c.h.b16 %v8928
    %v10166 = vunpack.c.l.b16 %v8929
    %v10167 = vunpack.c.h.b16 %v8929
    %v10168 = vunpack.c.l.b16 %v8930
    %v10169 = vunpack.c.h.b16 %v8930
    %v10170 = vunpack.c.l.b16 %v8931
    %v10171 = vunpack.c.h.b16 %v8931
    %v10172 = vunpack.c.l.b16 %v8932
    %v10173 = vunpack.c.h.b16 %v8932
    %v10174 = vunpack.c.l.b16 %v8933
    %v10175 = vunpack.c.h.b16 %v8933
    %v10176 = vunpack.c.l.b16 %v8934
    %v10177 = vunpack.c.h.b16 %v8934
    %v10178 = vunpack.c.l.b16 %v8935
    %v10179 = vunpack.c.h.b16 %v8935
    %v10180 = vunpack.c.l.b16 %v8936
    %v10181 = vunpack.c.h.b16 %v8936
    %v10182 = vunpack.c.l.b16 %v8937
    %v10183 = vunpack.c.h.b16 %v8937
    %v10184 = vunpack.c.l.b16 %v8938
    %v10185 = vunpack.c.h.b16 %v8938
    %v10186 = vunpack.c.l.b16 %v8939
    %v10187 = vunpack.c.h.b16 %v8939
    %v10188 = vunpack.c.l.b16 %v8940
    %v10189 = vunpack.c.h.b16 %v8940
    %v10190 = vunpack.c.l.b16 %v8941
    %v10191 = vunpack.c.h.b16 %v8941
    %v10192 = vunpack.c.l.b16 %v8942
    %v10193 = vunpack.c.h.b16 %v8942
    %v10194 = vunpack.c.l.b16 %v8943
    %v10195 = vunpack.c.h.b16 %v8943
    %v10196 = vunpack.c.l.b16 %v8944
    %v10197 = vunpack.c.h.b16 %v8944
    %v10198 = vunpack.c.l.b16 %v8945
    %v10199 = vunpack.c.h.b16 %v8945
    %v10200 = vunpack.c.l.b16 %v8946
    %v10201 = vunpack.c.h.b16 %v8946
    %v10202 = vunpack.c.l.b16 %v8947
    %v10203 = vunpack.c.h.b16 %v8947
    %v10204 = vunpack.c.l.b16 %v8948
    %v10205 = vunpack.c.h.b16 %v8948
    %v10206 = vunpack.c.l.b16 %v8949
    %v10207 = vunpack.c.h.b16 %v8949
    %v10208 = vunpack.c.l.b16 %v8950
    %v10209 = vunpack.c.h.b16 %v8950
    %v10210 = vunpack.c.l.b16 %v8951
    %v10211 = vunpack.c.h.b16 %v8951
    %v10212 = vunpack.c.l.b16 %v8952
    %v10213 = vunpack.c.h.b16 %v8952
    %v10214 = vunpack.c.l.b16 %v8953
    %v10215 = vunpack.c.h.b16 %v8953
    %v10216 = vunpack.c.l.b16 %v8954
    %v10217 = vunpack.c.h.b16 %v8954
    %v10218 = vunpack.c.l.b16 %v8955
    %v10219 = vunpack.c.h.b16 %v8955
    %v10220 = vunpack.c.l.b16 %v8956
    %v10221 = vunpack.c.h.b16 %v8956
    %v10222 = vunpack.c.l.b16 %v8957
    %v10223 = vunpack.c.h.b16 %v8957
    %v10224 = vunpack.c.l.b16 %v8958
    %v10225 = vunpack.c.h.b16 %v8958
    %v10226 = vunpack.c.l.b16 %v8959
    %v10227 = vunpack.c.h.b16 %v8959
    %v10228 = vunpack.c.l.b16 %v8960
    %v10229 = vunpack.c.h.b16 %v8960
    %v10230 = vunpack.c.l.b16 %v8961
    %v10231 = vunpack.c.h.b16 %v8961
    %v10232 = vunpack.c.l.b16 %v8962
    %v10233 = vunpack.c.h.b16 %v8962
    %v10234 = vunpack.c.l.b16 %v8963
    %v10235 = vunpack.c.h.b16 %v8963
    %v10236 = vunpack.c.l.b16 %v8964
    %v10237 = vunpack.c.h.b16 %v8964
    %v10238 = vunpack.c.l.b16 %v8965
    %v10239 = vunpack.c.h.b16 %v8965
    %v10240 = vunpack.c.l.b16 %v8966
    %v10241 = vunpack.c.h.b16 %v8966
    %v10242 = vunpack.c.l.b16 %v8967
    %v10243 = vunpack.c.h.b16 %v8967
    %v10244 = vunpack.c.l.b16 %v8968
    %v10245 = vunpack.c.h.b16 %v8968
    %v10246 = vunpack.c.l.b16 %v8969
    %v10247 = vunpack.c.h.b16 %v8969
    %v10248 = vunpack.c.l.b16 %v8970
    %v10249 = vunpack.c.h.b16 %v8970
    %v10250 = vunpack.c.l.b16 %v8971
    %v10251 = vunpack.c.h.b16 %v8971
    %v10252 = vunpack.c.l.b16 %v8972
    %v10253 = vunpack.c.h.b16 %v8972
    %v10254 = vunpack.c.l.b16 %v8973
    %v10255 = vunpack.c.h.b16 %v8973
    %v10256 = vunpack.c.l.b16 %v8974
    %v10257 = vunpack.c.h.b16 %v8974
    %v10258 = vunpack.c.l.b16 %v8975
    %v10259 = vunpack.c.h.b16 %v8975
    %v10260 = vunpack.c.l.b16 %v8976
    %v10261 = vunpack.c.h.b16 %v8976
    %v10262 = vunpack.c.l.b16 %v8977
    %v10263 = vunpack.c.h.b16 %v8977
    %v10264 = vunpack.c.l.b16 %v8978
    %v10265 = vunpack.c.h.b16 %v8978
    %v10266 = vunpack.c.l.b16 %v8979
    %v10267 = vunpack.c.h.b16 %v8979
    %v10268 = vunpack.c.l.b16 %v8980
    %v10269 = vunpack.c.h.b16 %v8980
    %v10270 = vunpack.c.l.b16 %v8981
    %v10271 = vunpack.c.h.b16 %v8981
    %v10272 = vunpack.c.l.b16 %v8982
    %v10273 = vunpack.c.h.b16 %v8982
    %v10274 = vunpack.c.l.b16 %v8983
    %v10275 = vunpack.c.h.b16 %v8983
    %v10276 = vunpack.c.l.b16 %v8984
    %v10277 = vunpack.c.h.b16 %v8984
    %v10278 = vunpack.c.l.b16 %v8985
    %v10279 = vunpack.c.h.b16 %v8985
    %v10280 = vunpack.c.l.b16 %v8986
    %v10281 = vunpack.c.h.b16 %v8986
    %v10282 = vunpack.c.l.b16 %v8987
    %v10283 = vunpack.c.h.b16 %v8987
    %v10284 = vunpack.c.l.b16 %v8988
    %v10285 = vunpack.c.h.b16 %v8988
    %v10286 = vunpack.c.l.b16 %v8989
    %v10287 = vunpack.c.h.b16 %v8989
    %v10288 = vunpack.c.l.b16 %v8990
    %v10289 = vunpack.c.h.b16 %v8990
    %v10290 = vunpack.c.l.b16 %v8991
    %v10291 = vunpack.c.h.b16 %v8991
    %v10292 = vunpack.c.l.b16 %v8992
    %v10293 = vunpack.c.h.b16 %v8992
    %v10294 = vunpack.c.l.b16 %v8993
    %v10295 = vunpack.c.h.b16 %v8993
    %v10296 = vunpack.c.l.b16 %v8994
    %v10297 = vunpack.c.h.b16 %v8994
    %v10298 = vunpack.c.l.b16 %v8995
    %v10299 = vunpack.c.h.b16 %v8995
    %v10300 = vunpack.c.l.b16 %v8996
    %v10301 = vunpack.c.h.b16 %v8996
    %v10302 = vunpack.c.l.b16 %v8997
    %v10303 = vunpack.c.h.b16 %v8997
    %v10304 = vunpack.c.l.b16 %v8998
    %v10305 = vunpack.c.h.b16 %v8998
    %v10306 = vunpack.c.l.b16 %v8999
    %v10307 = vunpack.c.h.b16 %v8999
    %v10308 = vunpack.c.l.b16 %v9000
    %v10309 = vunpack.c.h.b16 %v9000
    %v10310 = vunpack.c.l.b16 %v9001
    %v10311 = vunpack.c.h.b16 %v9001
    %v10312 = vunpack.c.l.b16 %v9002
    %v10313 = vunpack.c.h.b16 %v9002
    %v10314 = vunpack.c.l.b16 %v9003
    %v10315 = vunpack.c.h.b16 %v9003
    %v10316 = vunpack.c.l.b16 %v9004
    %v10317 = vunpack.c.h.b16 %v9004
    %v10318 = vunpack.c.l.b16 %v9005
    %v10319 = vunpack.c.h.b16 %v9005
    %v10320 = vunpack.c.l.b16 %v9006
    %v10321 = vunpack.c.h.b16 %v9006
    %v10322 = vunpack.c.l.b16 %v9007
    %v10323 = vunpack.c.h.b16 %v9007
    %v10324 = vunpack.c.l.b16 %v9008
    %v10325 = vunpack.c.h.b16 %v9008
    %v10326 = vunpack.c.l.b16 %v9009
    %v10327 = vunpack.c.h.b16 %v9009
    %v10328 = vunpack.c.l.b16 %v9010
    %v10329 = vunpack.c.h.b16 %v9010
    %v10330 = vunpack.c.l.b16 %v9011
    %v10331 = vunpack.c.h.b16 %v9011
    %v10332 = vunpack.c.l.b16 %v9012
    %v10333 = vunpack.c.h.b16 %v9012
    %v10334 = vunpack.c.l.b16 %v9013
    %v10335 = vunpack.c.h.b16 %v9013
    %v10336 = vunpack.c.l.b16 %v9014
    %v10337 = vunpack.c.h.b16 %v9014
    %v10338 = vunpack.c.l.b16 %v9015
    %v10339 = vunpack.c.h.b16 %v9015
    %v10340 = vunpack.c.l.b16 %v9016
    %v10341 = vunpack.c.h.b16 %v9016
    %v10342 = vunpack.c.l.b16 %v9017
    %v10343 = vunpack.c.h.b16 %v9017
    %v10344 = vunpack.c.l.b16 %v9018
    %v10345 = vunpack.c.h.b16 %v9018
    %v10346 = vunpack.c.l.b16 %v9019
    %v10347 = vunpack.c.h.b16 %v9019
    %v10348 = vunpack.c.l.b16 %v9020
    %v10349 = vunpack.c.h.b16 %v9020
    %v10350 = vunpack.c.l.b16 %v9021
    %v10351 = vunpack.c.h.b16 %v9021
    %v10352 = vunpack.c.l.b16 %v9022
    %v10353 = vunpack.c.h.b16 %v9022
    %v10354 = vunpack.c.l.b16 %v9023
    %v10355 = vunpack.c.h.b16 %v9023
    %v10356 = vunpack.c.l.b16 %v9024
    %v10357 = vunpack.c.h.b16 %v9024
    %v10358 = vunpack.c.l.b16 %v9025
    %v10359 = vunpack.c.h.b16 %v9025
    %v10360 = vunpack.c.l.b16 %v9026
    %v10361 = vunpack.c.h.b16 %v9026
    %v10362 = vunpack.c.l.b16 %v9027
    %v10363 = vunpack.c.h.b16 %v9027
    %v10364 = vunpack.c.l.b16 %v9028
    %v10365 = vunpack.c.h.b16 %v9028
    %v10366 = vunpack.c.l.b16 %v9029
    %v10367 = vunpack.c.h.b16 %v9029
    %v10368 = vunpack.c.l.b16 %v9030
    %v10369 = vunpack.c.h.b16 %v9030
    %v10370 = vunpack.c.l.b16 %v9031
    %v10371 = vunpack.c.h.b16 %v9031
    %v10372 = vunpack.c.l.b16 %v9032
    %v10373 = vunpack.c.h.b16 %v9032
    %v10374 = vunpack.c.l.b16 %v9033
    %v10375 = vunpack.c.h.b16 %v9033
    %v10376 = vunpack.c.l.b16 %v9034
    %v10377 = vunpack.c.h.b16 %v9034
    %v10378 = vunpack.c.l.b16 %v9035
    %v10379 = vunpack.c.h.b16 %v9035
    %v10380 = vunpack.c.l.b16 %v9036
    %v10381 = vunpack.c.h.b16 %v9036
    %v10382 = vunpack.c.l.b16 %v9037
    %v10383 = vunpack.c.h.b16 %v9037
    %v10384 = vunpack.c.l.b16 %v9038
    %v10385 = vunpack.c.h.b16 %v9038
    %v10386 = vunpack.c.l.b16 %v9039
    %v10387 = vunpack.c.h.b16 %v9039
    %v10388 = vunpack.c.l.b16 %v9040
    %v10389 = vunpack.c.h.b16 %v9040
    %v10390 = vunpack.c.l.b16 %v9041
    %v10391 = vunpack.c.h.b16 %v9041
    %v10392 = vunpack.c.l.b16 %v9042
    %v10393 = vunpack.c.h.b16 %v9042
    %v10394 = vunpack.c.l.b16 %v9043
    %v10395 = vunpack.c.h.b16 %v9043
    %v10396 = vunpack.c.l.b16 %v9044
    %v10397 = vunpack.c.h.b16 %v9044
    %v10398 = vunpack.c.l.b16 %v9045
    %v10399 = vunpack.c.h.b16 %v9045
    %v10400 = vunpack.c.l.b16 %v9046
    %v10401 = vunpack.c.h.b16 %v9046
    %v10402 = vunpack.c.l.b16 %v9047
    %v10403 = vunpack.c.h.b16 %v9047
    %v10404 = vunpack.c.l.b16 %v9048
    %v10405 = vunpack.c.h.b16 %v9048
    %v10406 = vunpack.c.l.b16 %v9049
    %v10407 = vunpack.c.h.b16 %v9049
    %v10408 = vunpack.c.l.b16 %v9050
    %v10409 = vunpack.c.h.b16 %v9050
    %v10410 = vunpack.c.l.b16 %v9051
    %v10411 = vunpack.c.h.b16 %v9051
    %v10412 = vunpack.c.l.b16 %v9052
    %v10413 = vunpack.c.h.b16 %v9052
    %v10414 = vunpack.c.l.b16 %v9053
    %v10415 = vunpack.c.h.b16 %v9053
    %v10416 = vunpack.c.l.b16 %v9054
    %v10417 = vunpack.c.h.b16 %v9054
    %v10418 = vunpack.c.l.b16 %v9055
    %v10419 = vunpack.c.h.b16 %v9055
    %v10420 = vunpack.c.l.b16 %v9056
    %v10421 = vunpack.c.h.b16 %v9056
    %v10422 = vunpack.c.l.b16 %v9057
    %v10423 = vunpack.c.h.b16 %v9057
    %v10424 = vunpack.c.l.b16 %v9058
    %v10425 = vunpack.c.h.b16 %v9058
    %v10426 = vunpack.c.l.b16 %v9059
    %v10427 = vunpack.c.h.b16 %v9059
    %v10428 = vunpack.c.l.b16 %v9060
    %v10429 = vunpack.c.h.b16 %v9060
    %v10430 = vunpack.c.l.b16 %v9061
    %v10431 = vunpack.c.h.b16 %v9061
    %v10432 = vunpack.c.l.b16 %v9062
    %v10433 = vunpack.c.h.b16 %v9062
    %v10434 = vunpack.c.l.b16 %v9063
    %v10435 = vunpack.c.h.b16 %v9063
    %v10436 = vunpack.c.l.b16 %v9064
    %v10437 = vunpack.c.h.b16 %v9064
    %v10438 = vunpack.c.l.b16 %v9065
    %v10439 = vunpack.c.h.b16 %v9065
    %v10440 = vunpack.c.l.b16 %v9066
    %v10441 = vunpack.c.h.b16 %v9066
    %v10442 = vunpack.c.l.b16 %v9067
    %v10443 = vunpack.c.h.b16 %v9067
    %v10444 = vunpack.c.l.b16 %v9068
    %v10445 = vunpack.c.h.b16 %v9068
    %v10446 = vunpack.c.l.b16 %v9069
    %v10447 = vunpack.c.h.b16 %v9069
    %v10448 = vunpack.c.l.b16 %v9070
    %v10449 = vunpack.c.h.b16 %v9070
    %v10450 = vunpack.c.l.b16 %v9071
    %v10451 = vunpack.c.h.b16 %v9071
    %v10452 = vunpack.c.l.b16 %v9072
    %v10453 = vunpack.c.h.b16 %v9072
    %v10454 = vunpack.c.l.b16 %v9073
    %v10455 = vunpack.c.h.b16 %v9073
    %v10456 = vunpack.c.l.b16 %v9074
    %v10457 = vunpack.c.h.b16 %v9074
    %v10458 = vunpack.c.l.b16 %v9075
    %v10459 = vunpack.c.h.b16 %v9075
    %v10460 = vunpack.c.l.b16 %v9076
    %v10461 = vunpack.c.h.b16 %v9076
    %v10462 = vunpack.c.l.b16 %v9077
    %v10463 = vunpack.c.h.b16 %v9077
    %v10464 = vunpack.c.l.b16 %v9078
    %v10465 = vunpack.c.h.b16 %v9078
    %v10466 = vunpack.c.l.b16 %v9079
    %v10467 = vunpack.c.h.b16 %v9079
    %v10468 = vunpack.c.l.b16 %v9080
    %v10469 = vunpack.c.h.b16 %v9080
    %v10470 = vunpack.c.l.b16 %v9081
    %v10471 = vunpack.c.h.b16 %v9081
    %v10472 = vunpack.c.l.b16 %v9082
    %v10473 = vunpack.c.h.b16 %v9082
    %v10474 = vunpack.c.l.b16 %v9083
    %v10475 = vunpack.c.h.b16 %v9083
    %v10476 = vunpack.c.l.b16 %v9084
    %v10477 = vunpack.c.h.b16 %v9084
    %v10478 = vunpack.c.l.b16 %v9085
    %v10479 = vunpack.c.h.b16 %v9085
    %v10480 = vunpack.c.l.b16 %v9086
    %v10481 = vunpack.c.h.b16 %v9086
    %v10482 = vunpack.c.l.b16 %v9087
    %v10483 = vunpack.c.h.b16 %v9087
    %v10484 = vunpack.c.l.b16 %v9088
    %v10485 = vunpack.c.h.b16 %v9088
    %v10486 = vunpack.c.l.b16 %v9089
    %v10487 = vunpack.c.h.b16 %v9089
    %v10488 = vunpack.c.l.b16 %v9090
    %v10489 = vunpack.c.h.b16 %v9090
    %v10490 = vunpack.c.l.b16 %v9091
    %v10491 = vunpack.c.h.b16 %v9091
    %v10492 = vunpack.c.l.b16 %v9092
    %v10493 = vunpack.c.h.b16 %v9092
    %v10494 = vunpack.c.l.b16 %v9093
    %v10495 = vunpack.c.h.b16 %v9093
    %v10496 = vunpack.c.l.b16 %v9094
    %v10497 = vunpack.c.h.b16 %v9094
    %v10498 = vunpack.c.l.b16 %v9095
    %v10499 = vunpack.c.h.b16 %v9095
    %v10500 = vunpack.c.l.b16 %v9096
    %v10501 = vunpack.c.h.b16 %v9096
    %v10502 = vunpack.c.l.b16 %v9097
    %v10503 = vunpack.c.h.b16 %v9097
    %v10504 = vunpack.c.l.b16 %v9098
    %v10505 = vunpack.c.h.b16 %v9098
    %v10506 = vunpack.c.l.b16 %v9099
    %v10507 = vunpack.c.h.b16 %v9099
    %v10508 = vunpack.c.l.b16 %v9100
    %v10509 = vunpack.c.h.b16 %v9100
    %v10510 = vunpack.c.l.b16 %v9101
    %v10511 = vunpack.c.h.b16 %v9101
    %v10512 = vunpack.c.l.b16 %v9102
    %v10513 = vunpack.c.h.b16 %v9102
    %v10514 = vunpack.c.l.b16 %v9103
    %v10515 = vunpack.c.h.b16 %v9103
    %v10516 = vunpack.c.l.b16 %v9104
    %v10517 = vunpack.c.h.b16 %v9104
    %v10518 = vunpack.c.l.b16 %v9105
    %v10519 = vunpack.c.h.b16 %v9105
    %v10520 = vunpack.c.l.b16 %v9106
    %v10521 = vunpack.c.h.b16 %v9106
    %v10522 = vunpack.c.l.b16 %v9107
    %v10523 = vunpack.c.h.b16 %v9107
    %v10524 = vunpack.c.l.b16 %v9108
    %v10525 = vunpack.c.h.b16 %v9108
    %v10526 = vunpack.c.l.b16 %v9109
    %v10527 = vunpack.c.h.b16 %v9109
    %v10528 = vunpack.c.l.b16 %v9110
    %v10529 = vunpack.c.h.b16 %v9110
    %v10530 = vunpack.c.l.b16 %v9111
    %v10531 = vunpack.c.h.b16 %v9111
    %v10532 = vunpack.c.l.b16 %v9112
    %v10533 = vunpack.c.h.b16 %v9112
    %v10534 = vunpack.c.l.b16 %v9113
    %v10535 = vunpack.c.h.b16 %v9113
    %v10536 = vunpack.c.l.b16 %v9114
    %v10537 = vunpack.c.h.b16 %v9114
    %v10538 = vunpack.c.l.b16 %v9115
    %v10539 = vunpack.c.h.b16 %v9115
    %v10540 = vunpack.c.l.b16 %v9116
    %v10541 = vunpack.c.h.b16 %v9116
    %v10542 = vunpack.c.l.b16 %v9117
    %v10543 = vunpack.c.h.b16 %v9117
    %v10544 = vunpack.c.l.b16 %v9118
    %v10545 = vunpack.c.h.b16 %v9118
    %v10546 = vunpack.c.l.b16 %v9119
    %v10547 = vunpack.c.h.b16 %v9119
    %v10548 = vunpack.c.l.b16 %v9120
    %v10549 = vunpack.c.h.b16 %v9120
    %v10550 = vunpack.c.l.b16 %v9121
    %v10551 = vunpack.c.h.b16 %v9121
    %v10552 = vunpack.c.l.b16 %v9122
    %v10553 = vunpack.c.h.b16 %v9122
    %v10554 = vunpack.c.l.b16 %v9123
    %v10555 = vunpack.c.h.b16 %v9123
    %v10556 = vunpack.c.l.b16 %v9124
    %v10557 = vunpack.c.h.b16 %v9124
    %v10558 = vunpack.c.l.b16 %v9125
    %v10559 = vunpack.c.h.b16 %v9125
    %v10560 = vunpack.c.l.b16 %v9126
    %v10561 = vunpack.c.h.b16 %v9126
    %v10562 = vunpack.c.l.b16 %v9127
    %v10563 = vunpack.c.h.b16 %v9127
    %v10564 = vunpack.c.l.b16 %v9128
    %v10565 = vunpack.c.h.b16 %v9128
    %v10566 = vunpack.c.l.b16 %v9129
    %v10567 = vunpack.c.h.b16 %v9129
    %v10568 = vunpack.c.l.b16 %v9130
    %v10569 = vunpack.c.h.b16 %v9130
    %v10570 = vunpack.c.l.b16 %v9131
    %v10571 = vunpack.c.h.b16 %v9131
    %v10572 = vunpack.c.l.b16 %v9132
    %v10573 = vunpack.c.h.b16 %v9132
    %v10574 = vunpack.c.l.b16 %v9133
    %v10575 = vunpack.c.h.b16 %v9133
    %v10576 = vunpack.c.l.b16 %v9134
    %v10577 = vunpack.c.h.b16 %v9134
    %v10578 = vunpack.c.l.b16 %v9135
    %v10579 = vunpack.c.h.b16 %v9135
    %v10580 = vunpack.c.l.b16 %v9136
    %v10581 = vunpack.c.h.b16 %v9136
    %v10582 = vunpack.c.l.b16 %v9137
    %v10583 = vunpack.c.h.b16 %v9137
    %v10584 = vunpack.c.l.b16 %v9138
    %v10585 = vunpack.c.h.b16 %v9138
    %v10586 = vunpack.c.l.b16 %v9139
    %v10587 = vunpack.c.h.b16 %v9139
    %v10588 = vunpack.c.l.b16 %v9140
    %v10589 = vunpack.c.h.b16 %v9140
    %v10590 = vunpack.c.l.b16 %v9141
    %v10591 = vunpack.c.h.b16 %v9141
    %v10592 = vunpack.c.l.b16 %v9142
    %v10593 = vunpack.c.h.b16 %v9142
    %v10594 = vunpack.c.l.b16 %v9143
    %v10595 = vunpack.c.h.b16 %v9143
    %v10596 = vunpack.c.l.b16 %v9144
    %v10597 = vunpack.c.h.b16 %v9144
    %v10598 = vunpack.c.l.b16 %v9145
    %v10599 = vunpack.c.h.b16 %v9145
    %v10600 = vunpack.c.l.b16 %v9146
    %v10601 = vunpack.c.h.b16 %v9146
    %v10602 = vunpack.c.l.b16 %v9147
    %v10603 = vunpack.c.h.b16 %v9147
    %v10604 = vunpack.c.l.b16 %v9148
    %v10605 = vunpack.c.h.b16 %v9148
    %v10606 = vunpack.c.l.b16 %v9149
    %v10607 = vunpack.c.h.b16 %v9149
    %v10608 = vunpack.c.l.b16 %v9150
    %v10609 = vunpack.c.h.b16 %v9150
    %v10610 = vunpack.c.l.b16 %v9151
    %v10611 = vunpack.c.h.b16 %v9151
    %v10612 = vunpack.c.l.b16 %v9152
    %v10613 = vunpack.c.h.b16 %v9152
    %v10614 = vunpack.c.l.b16 %v9153
    %v10615 = vunpack.c.h.b16 %v9153
    %v10616 = vunpack.c.l.b16 %v9154
    %v10617 = vunpack.c.h.b16 %v9154
    %v10618 = vunpack.c.l.b16 %v9155
    %v10619 = vunpack.c.h.b16 %v9155
    %v10620 = vunpack.c.l.b16 %v9156
    %v10621 = vunpack.c.h.b16 %v9156
    %v10622 = vunpack.c.l.b16 %v9157
    %v10623 = vunpack.c.h.b16 %v9157
    %v10624 = vunpack.c.l.b16 %v9158
    %v10625 = vunpack.c.h.b16 %v9158
    %v10626 = vunpack.c.l.b16 %v9159
    %v10627 = vunpack.c.h.b16 %v9159
    %v10628 = vunpack.c.l.b16 %v9160
    %v10629 = vunpack.c.h.b16 %v9160
    %v10630 = vunpack.c.l.b16 %v9161
    %v10631 = vunpack.c.h.b16 %v9161
    %v10632 = vunpack.c.l.b16 %v9162
    %v10633 = vunpack.c.h.b16 %v9162
    %v10634 = vunpack.c.l.b16 %v9163
    %v10635 = vunpack.c.h.b16 %v9163
    %v10636 = vunpack.c.l.b16 %v9164
    %v10637 = vunpack.c.h.b16 %v9164
    %v10638 = vunpack.c.l.b16 %v9165
    %v10639 = vunpack.c.h.b16 %v9165
    %v10640 = vunpack.c.l.b16 %v9166
    %v10641 = vunpack.c.h.b16 %v9166
    %v10642 = vunpack.c.l.b16 %v9167
    %v10643 = vunpack.c.h.b16 %v9167
    %v10644 = vunpack.c.l.b16 %v9168
    %v10645 = vunpack.c.h.b16 %v9168
    %v10646 = vunpack.c.l.b16 %v9169
    %v10647 = vunpack.c.h.b16 %v9169
    %v10648 = vunpack.c.l.b16 %v9170
    %v10649 = vunpack.c.h.b16 %v9170
    %v10650 = vunpack.c.l.b16 %v9171
    %v10651 = vunpack.c.h.b16 %v9171
    %v10652 = vunpack.c.l.b16 %v9172
    %v10653 = vunpack.c.h.b16 %v9172
    %v10654 = vunpack.c.l.b16 %v9173
    %v10655 = vunpack.c.h.b16 %v9173
    %v10656 = vunpack.c.l.b16 %v9174
    %v10657 = vunpack.c.h.b16 %v9174
    %v10658 = vunpack.c.l.b16 %v9175
    %v10659 = vunpack.c.h.b16 %v9175
    %v10660 = vunpack.c.l.b16 %v9176
    %v10661 = vunpack.c.h.b16 %v9176
    %v10662 = vunpack.c.l.b16 %v9177
    %v10663 = vunpack.c.h.b16 %v9177
    %v10664 = vunpack.c.l.b16 %v9178
    %v10665 = vunpack.c.h.b16 %v9178
    %v10666 = vunpack.c.l.b16 %v9179
    %v10667 = vunpack.c.h.b16 %v9179
    %v10668 = vunpack.c.l.b16 %v9180
    %v10669 = vunpack.c.h.b16 %v9180
    %v10670 = vunpack.c.l.b16 %v9181
    %v10671 = vunpack.c.h.b16 %v9181
    %v10672 = vunpack.c.l.b16 %v9182
    %v10673 = vunpack.c.h.b16 %v9182
    %v10674 = vunpack.c.l.b16 %v9183
    %v10675 = vunpack.c.h.b16 %v9183
    %v10676 = vunpack.c.l.b16 %v9184
    %v10677 = vunpack.c.h.b16 %v9184
    %v10678 = vunpack.c.l.b16 %v9185
    %v10679 = vunpack.c.h.b16 %v9185
    %v10680 = vunpack.c.l.b16 %v9186
    %v10681 = vunpack.c.h.b16 %v9186
    %v10682 = vunpack.c.l.b16 %v9187
    %v10683 = vunpack.c.h.b16 %v9187
    %v10684 = vunpack.c.l.b16 %v9188
    %v10685 = vunpack.c.h.b16 %v9188
    %v10686 = vunpack.c.l.b16 %v9189
    %v10687 = vunpack.c.h.b16 %v9189
    %v10688 = vunpack.c.l.b16 %v9190
    %v10689 = vunpack.c.h.b16 %v9190
    %v10690 = vunpack.c.l.b16 %v9191
    %v10691 = vunpack.c.h.b16 %v9191
    %v10692 = vunpack.c.l.b16 %v9192
    %v10693 = vunpack.c.h.b16 %v9192
    %v10694 = vunpack.c.l.b16 %v9193
    %v10695 = vunpack.c.h.b16 %v9193
    %v10696 = vunpack.c.l.b16 %v9194
    %v10697 = vunpack.c.h.b16 %v9194
    %v10698 = vunpack.c.l.b16 %v9195
    %v10699 = vunpack.c.h.b16 %v9195
    %v10700 = vunpack.c.l.b16 %v9196
    %v10701 = vunpack.c.h.b16 %v9196
    %v10702 = vunpack.c.l.b16 %v9197
    %v10703 = vunpack.c.h.b16 %v9197
    %v10704 = vunpack.c.l.b16 %v9198
    %v10705 = vunpack.c.h.b16 %v9198
    %v10706 = vunpack.c.l.b16 %v9199
    %v10707 = vunpack.c.h.b16 %v9199
    %v10708 = vunpack.c.l.b16 %v9200
    %v10709 = vunpack.c.h.b16 %v9200
    %v10710 = vunpack.c.l.b16 %v9201
    %v10711 = vunpack.c.h.b16 %v9201
    %v10712 = vunpack.c.l.b16 %v9202
    %v10713 = vunpack.c.h.b16 %v9202
    %v10714 = vunpack.c.l.b16 %v9203
    %v10715 = vunpack.c.h.b16 %v9203
    %v10716 = vunpack.c.l.b16 %v9204
    %v10717 = vunpack.c.h.b16 %v9204
    %v10718 = vunpack.c.l.b16 %v9205
    %v10719 = vunpack.c.h.b16 %v9205
    %v10720 = vunpack.c.l.b16 %v9206
    %v10721 = vunpack.c.h.b16 %v9206
    %v10722 = vunpack.c.l.b16 %v9207
    %v10723 = vunpack.c.h.b16 %v9207
    %v10724 = vunpack.c.l.b16 %v9208
    %v10725 = vunpack.c.h.b16 %v9208
    %v10726 = vunpack.c.l.b16 %v9209
    %v10727 = vunpack.c.h.b16 %v9209
    %v10728 = vunpack.c.l.b16 %v9210
    %v10729 = vunpack.c.h.b16 %v9210
    %v10730 = vunpack.c.l.b16 %v9211
    %v10731 = vunpack.c.h.b16 %v9211
    %v10732 = vunpack.c.l.b16 %v9212
    %v10733 = vunpack.c.h.b16 %v9212
    %v10734 = vunpack.c.l.b16 %v9213
    %v10735 = vunpack.c.h.b16 %v9213
    %v10736 = vunpack.c.l.b16 %v9214
    %v10737 = vunpack.c.h.b16 %v9214
    %v10738 = vunpack.c.l.b16 %v9215
    %v10739 = vunpack.c.h.b16 %v9215
    %v10740 = vunpack.c.l.b16 %v9216
    %v10741 = vunpack.c.h.b16 %v9216
    %v10742 = vunpack.c.l.b16 %v9217
    %v10743 = vunpack.c.h.b16 %v9217
    %v10744 = vunpack.c.l.b16 %v9218
    %v10745 = vunpack.c.h.b16 %v9218
    %v10746 = vunpack.c.l.b16 %v9219
    %v10747 = vunpack.c.h.b16 %v9219
    %v10748 = vunpack.c.l.b16 %v9220
    %v10749 = vunpack.c.h.b16 %v9220
    %v10750 = vunpack.c.l.b16 %v9221
    %v10751 = vunpack.c.h.b16 %v9221
    %v10752 = vunpack.c.l.b16 %v9222
    %v10753 = vunpack.c.h.b16 %v9222
    %v10754 = vunpack.c.l.b16 %v9223
    %v10755 = vunpack.c.h.b16 %v9223
    %v10756 = vunpack.c.l.b16 %v9224
    %v10757 = vunpack.c.h.b16 %v9224
    %v10758 = vunpack.c.l.b16 %v9225
    %v10759 = vunpack.c.h.b16 %v9225
    %v10760 = vunpack.c.l.b16 %v9226
    %v10761 = vunpack.c.h.b16 %v9226
    %v10762 = vunpack.c.l.b16 %v9227
    %v10763 = vunpack.c.h.b16 %v9227
    %v10764 = vunpack.c.l.b16 %v9228
    %v10765 = vunpack.c.h.b16 %v9228
    %v10766 = vunpack.c.l.b16 %v9229
    %v10767 = vunpack.c.h.b16 %v9229
    %v10768 = vunpack.c.l.b16 %v9230
    %v10769 = vunpack.c.h.b16 %v9230
    %v10770 = vunpack.c.l.b16 %v9231
    %v10771 = vunpack.c.h.b16 %v9231
    %v10772 = vunpack.c.l.b16 %v9232
    %v10773 = vunpack.c.h.b16 %v9232
    %v10774 = vunpack.c.l.b16 %v9233
    %v10775 = vunpack.c.h.b16 %v9233
    %v10776 = vunpack.c.l.b16 %v9234
    %v10777 = vunpack.c.h.b16 %v9234
    %v10778 = vunpack.c.l.b16 %v9235
    %v10779 = vunpack.c.h.b16 %v9235
    %v10780 = vunpack.c.l.b16 %v9236
    %v10781 = vunpack.c.h.b16 %v9236
    %v10782 = vunpack.c.l.b16 %v9237
    %v10783 = vunpack.c.h.b16 %v9237
    %v10784 = vunpack.c.l.b16 %v9238
    %v10785 = vunpack.c.h.b16 %v9238
    %v10786 = vunpack.c.l.b16 %v9239
    %v10787 = vunpack.c.h.b16 %v9239
    %v10788 = vunpack.c.l.b16 %v9240
    %v10789 = vunpack.c.h.b16 %v9240
    %v10790 = vunpack.c.l.b16 %v9241
    %v10791 = vunpack.c.h.b16 %v9241
    %v10792 = vunpack.c.l.b16 %v9242
    %v10793 = vunpack.c.h.b16 %v9242
    %v10794 = vunpack.c.l.b16 %v9243
    %v10795 = vunpack.c.h.b16 %v9243
    %v10796 = vunpack.c.l.b16 %v9244
    %v10797 = vunpack.c.h.b16 %v9244
    %v10798 = vunpack.c.l.b16 %v9245
    %v10799 = vunpack.c.h.b16 %v9245
    %v10800 = vunpack.c.l.b16 %v9246
    %v10801 = vunpack.c.h.b16 %v9246
    %v10802 = vunpack.c.l.b16 %v9247
    %v10803 = vunpack.c.h.b16 %v9247
    %v10804 = vunpack.c.l.b16 %v9248
    %v10805 = vunpack.c.h.b16 %v9248
    %v10806 = vunpack.c.l.b16 %v9249
    %v10807 = vunpack.c.h.b16 %v9249
    %v10808 = vunpack.c.l.b16 %v9250
    %v10809 = vunpack.c.h.b16 %v9250
    %v10810 = vunpack.c.l.b16 %v9251
    %v10811 = vunpack.c.h.b16 %v9251
    %v10812 = vunpack.c.l.b16 %v9252
    %v10813 = vunpack.c.h.b16 %v9252
    %v10814 = vunpack.c.l.b16 %v9253
    %v10815 = vunpack.c.h.b16 %v9253
    %v10816 = vunpack.c.l.b16 %v9254
    %v10817 = vunpack.c.h.b16 %v9254
    %v10818 = vunpack.c.l.b16 %v9255
    %v10819 = vunpack.c.h.b16 %v9255
    %v10820 = vunpack.c.l.b16 %v9256
    %v10821 = vunpack.c.h.b16 %v9256
    %v10822 = vunpack.c.l.b16 %v9257
    %v10823 = vunpack.c.h.b16 %v9257
    %v10824 = vunpack.c.l.b16 %v9258
    %v10825 = vunpack.c.h.b16 %v9258
    %v10826 = vunpack.c.l.b16 %v9259
    %v10827 = vunpack.c.h.b16 %v9259
    %v10828 = vunpack.c.l.b16 %v9260
    %v10829 = vunpack.c.h.b16 %v9260
    %v10830 = vunpack.c.l.b16 %v9261
    %v10831 = vunpack.c.h.b16 %v9261
    %v10832 = vunpack.c.l.b16 %v9262
    %v10833 = vunpack.c.h.b16 %v9262
    %v10834 = vunpack.c.l.b16 %v9263
    %v10835 = vunpack.c.h.b16 %v9263
    %v10836 = vunpack.c.l.b16 %v9264
    %v10837 = vunpack.c.h.b16 %v9264
    %v10838 = vunpack.c.l.b16 %v9265
    %v10839 = vunpack.c.h.b16 %v9265
    %v10840 = vunpack.c.l.b16 %v9266
    %v10841 = vunpack.c.h.b16 %v9266
    %v10842 = vunpack.c.l.b16 %v9267
    %v10843 = vunpack.c.h.b16 %v9267
    %v10844 = vunpack.c.l.b16 %v9268
    %v10845 = vunpack.c.h.b16 %v9268
    %v10846 = vunpack.c.l.b16 %v9269
    %v10847 = vunpack.c.h.b16 %v9269
    %v10848 = vpack.c.b16 %v9832, %v9824
    %v10849 = vpack.c.b16 %v9833, %v9825
    %v10850 = vpack.c.b16 %v9834, %v9826
    %v10851 = vpack.c.b16 %v9835, %v9827
    %v10852 = vpack.c.b16 %v9836, %v9828
    %v10853 = vpack.c.b16 %v9837, %v9829
    %v10854 = vpack.c.b16 %v9838, %v9830
    %v10855 = vpack.c.b16 %v9839, %v9831
    %v10856 = vpack.c.b16 %v9848, %v9840
    %v10857 = vpack.c.b16 %v9849, %v9841
    %v10858 = vpack.c.b16 %v9850, %v9842
    %v10859 = vpack.c.b16 %v9851, %v9843
    %v10860 = vpack.c.b16 %v9852, %v9844
    %v10861 = vpack.c.b16 %v9853, %v9845
    %v10862 = vpack.c.b16 %v9854, %v9846
    %v10863 = vpack.c.b16 %v9855, %v9847
    %v10864 = vpack.c.b16 %v9864, %v9856
    %v10865 = vpack.c.b16 %v9865, %v9857
    %v10866 = vpack.c.b16 %v9866, %v9858
    %v10867 = vpack.c.b16 %v9867, %v9859
    %v10868 = vpack.c.b16 %v9868, %v9860
    %v10869 = vpack.c.b16 %v9869, %v9861
    %v10870 = vpack.c.b16 %v9870, %v9862
    %v10871 = vpack.c.b16 %v9871, %v9863
    %v10872 = vpack.c.b16 %v9880, %v9872
    %v10873 = vpack.c.b16 %v9881, %v9873
    %v10874 = vpack.c.b16 %v9882, %v9874
    %v10875 = vpack.c.b16 %v9883, %v9875
    %v10876 = vpack.c.b16 %v9884, %v9876
    %v10877 = vpack.c.b16 %v9885, %v9877
    %v10878 = vpack.c.b16 %v9886, %v9878
    %v10879 = vpack.c.b16 %v9887, %v9879
    %v10880 = vpack.c.b16 %v9896, %v9888
    %v10881 = vpack.c.b16 %v9897, %v9889
    %v10882 = vpack.c.b16 %v9898, %v9890
    %v10883 = vpack.c.b16 %v9899, %v9891
    %v10884 = vpack.c.b16 %v9900, %v9892
    %v10885 = vpack.c.b16 %v9901, %v9893
    %v10886 = vpack.c.b16 %v9902, %v9894
    %v10887 = vpack.c.b16 %v9903, %v9895
    %v10888 = vpack.c.b16 %v9912, %v9904
    %v10889 = vpack.c.b16 %v9913, %v9905
    %v10890 = vpack.c.b16 %v9914, %v9906
    %v10891 = vpack.c.b16 %v9915, %v9907
    %v10892 = vpack.c.b16 %v9916, %v9908
    %v10893 = vpack.c.b16 %v9917, %v9909
    %v10894 = vpack.c.b16 %v9918, %v9910
    %v10895 = vpack.c.b16 %v9919, %v9911
    %v10896 = vpack.c.b16 %v9928, %v9920
    %v10897 = vpack.c.b16 %v9929, %v9921
    %v10898 = vpack.c.b16 %v9930, %v9922
    %v10899 = vpack.c.b16 %v9931, %v9923
    %v10900 = vpack.c.b16 %v9932, %v9924
    %v10901 = vpack.c.b16 %v9933, %v9925
    %v10902 = vpack.c.b16 %v9934, %v9926
    %v10903 = vpack.c.b16 %v9935, %v9927
    %v10904 = vpack.c.b16 %v9944, %v9936
    %v10905 = vpack.c.b16 %v9945, %v9937
    %v10906 = vpack.c.b16 %v9946, %v9938
    %v10907 = vpack.c.b16 %v9947, %v9939
    %v10908 = vpack.c.b16 %v9948, %v9940
    %v10909 = vpack.c.b16 %v9949, %v9941
    %v10910 = vpack.c.b16 %v9950, %v9942
    %v10911 = vpack.c.b16 %v9951, %v9943
    %v10912 = vpack.c.b16 %v9960, %v9952
    %v10913 = vpack.c.b16 %v9961, %v9953
    %v10914 = vpack.c.b16 %v9962, %v9954
    %v10915 = vpack.c.b16 %v9963, %v9955
    %v10916 = vpack.c.b16 %v9964, %v9956
    %v10917 = vpack.c.b16 %v9965, %v9957
    %v10918 = vpack.c.b16 %v9966, %v9958
    %v10919 = vpack.c.b16 %v9967, %v9959
    %v10920 = vpack.c.b16 %v9976, %v9968
    %v10921 = vpack.c.b16 %v9977, %v9969
    %v10922 = vpack.c.b16 %v9978, %v9970
    %v10923 = vpack.c.b16 %v9979, %v9971
    %v10924 = vpack.c.b16 %v9980, %v9972
    %v10925 = vpack.c.b16 %v9981, %v9973
    %v10926 = vpack.c.b16 %v9982, %v9974
    %v10927 = vpack.c.b16 %v9983, %v9975
    %v10928 = vpack.c.b16 %v9992, %v9984
    %v10929 = vpack.c.b16 %v9993, %v9985
    %v10930 = vpack.c.b16 %v9994, %v9986
    %v10931 = vpack.c.b16 %v9995, %v9987
    %v10932 = vpack.c.b16 %v9996, %v9988
    %v10933 = vpack.c.b16 %v9997, %v9989
    %v10934 = vpack.c.b16 %v9998, %v9990
    %v10935 = vpack.c.b16 %v9999, %v9991
    %v10936 = vpack.c.b16 %v10008, %v10000
    %v10937 = vpack.c.b16 %v10009, %v10001
    %v10938 = vpack.c.b16 %v10010, %v10002
    %v10939 = vpack.c.b16 %v10011, %v10003
    %v10940 = vpack.c.b16 %v10012, %v10004
    %v10941 = vpack.c.b16 %v10013, %v10005
    %v10942 = vpack.c.b16 %v10014, %v10006
    %v10943 = vpack.c.b16 %v10015, %v10007
    %v10944 = vpack.c.b16 %v10024, %v10016
    %v10945 = vpack.c.b16 %v10025, %v10017
    %v10946 = vpack.c.b16 %v10026, %v10018
    %v10947 = vpack.c.b16 %v10027, %v10019
    %v10948 = vpack.c.b16 %v10028, %v10020
    %v10949 = vpack.c.b16 %v10029, %v10021
    %v10950 = vpack.c.b16 %v10030, %v10022
    %v10951 = vpack.c.b16 %v10031, %v10023
    %v10952 = vpack.c.b16 %v10040, %v10032
    %v10953 = vpack.c.b16 %v10041, %v10033
    %v10954 = vpack.c.b16 %v10042, %v10034
    %v10955 = vpack.c.b16 %v10043, %v10035
    %v10956 = vpack.c.b16 %v10044, %v10036
    %v10957 = vpack.c.b16 %v10045, %v10037
    %v10958 = vpack.c.b16 %v10046, %v10038
    %v10959 = vpack.c.b16 %v10047, %v10039
    %v10960 = vpack.c.b16 %v10056, %v10048
    %v10961 = vpack.c.b16 %v10057, %v10049
    %v10962 = vpack.c.b16 %v10058, %v10050
    %v10963 = vpack.c.b16 %v10059, %v10051
    %v10964 = vpack.c.b16 %v10060, %v10052
    %v10965 = vpack.c.b16 %v10061, %v10053
    %v10966 = vpack.c.b16 %v10062, %v10054
    %v10967 = vpack.c.b16 %v10063, %v10055
    %v10968 = vpack.c.b16 %v10072, %v10064
    %v10969 = vpack.c.b16 %v10073, %v10065
    %v10970 = vpack.c.b16 %v10074, %v10066
    %v10971 = vpack.c.b16 %v10075, %v10067
    %v10972 = vpack.c.b16 %v10076, %v10068
    %v10973 = vpack.c.b16 %v10077, %v10069
    %v10974 = vpack.c.b16 %v10078, %v10070
    %v10975 = vpack.c.b16 %v10079, %v10071
    %v10976 = vpack.c.b16 %v10088, %v10080
    %v10977 = vpack.c.b16 %v10089, %v10081
    %v10978 = vpack.c.b16 %v10090, %v10082
    %v10979 = vpack.c.b16 %v10091, %v10083
    %v10980 = vpack.c.b16 %v10092, %v10084
    %v10981 = vpack.c.b16 %v10093, %v10085
    %v10982 = vpack.c.b16 %v10094, %v10086
    %v10983 = vpack.c.b16 %v10095, %v10087
    %v10984 = vpack.c.b16 %v10104, %v10096
    %v10985 = vpack.c.b16 %v10105, %v10097
    %v10986 = vpack.c.b16 %v10106, %v10098
    %v10987 = vpack.c.b16 %v10107, %v10099
    %v10988 = vpack.c.b16 %v10108, %v10100
    %v10989 = vpack.c.b16 %v10109, %v10101
    %v10990 = vpack.c.b16 %v10110, %v10102
    %v10991 = vpack.c.b16 %v10111, %v10103
    %v10992 = vpack.c.b16 %v10120, %v10112
    %v10993 = vpack.c.b16 %v10121, %v10113
    %v10994 = vpack.c.b16 %v10122, %v10114
    %v10995 = vpack.c.b16 %v10123, %v10115
    %v10996 = vpack.c.b16 %v10124, %v10116
    %v10997 = vpack.c.b16 %v10125, %v10117
    %v10998 = vpack.c.b16 %v10126, %v10118
    %v10999 = vpack.c.b16 %v10127, %v10119
    %v11000 = vpack.c.b16 %v10136, %v10128
    %v11001 = vpack.c.b16 %v10137, %v10129
    %v11002 = vpack.c.b16 %v10138, %v10130
    %v11003 = vpack.c.b16 %v10139, %v10131
    %v11004 = vpack.c.b16 %v10140, %v10132
    %v11005 = vpack.c.b16 %v10141, %v10133
    %v11006 = vpack.c.b16 %v10142, %v10134
    %v11007 = vpack.c.b16 %v10143, %v10135
    %v11008 = vpack.c.b16 %v10152, %v10144
    %v11009 = vpack.c.b16 %v10153, %v10145
    %v11010 = vpack.c.b16 %v10154, %v10146
    %v11011 = vpack.c.b16 %v10155, %v10147
    %v11012 = vpack.c.b16 %v10156, %v10148
    %v11013 = vpack.c.b16 %v10157, %v10149
    %v11014 = vpack.c.b16 %v10158, %v10150
    %v11015 = vpack.c.b16 %v10159, %v10151
    %v11016 = vpack.c.b16 %v10168, %v10160
    %v11017 = vpack.c.b16 %v10169, %v10161
    %v11018 = vpack.c.b16 %v10170, %v10162
    %v11019 = vpack.c.b16 %v10171, %v10163
    %v11020 = vpack.c.b16 %v10172, %v10164
    %v11021 = vpack.c.b16 %v10173, %v10165
    %v11022 = vpack.c.b16 %v10174, %v10166
    %v11023 = vpack.c.b16 %v10175, %v10167
    %v11024 = vpack.c.b16 %v10184, %v10176
    %v11025 = vpack.c.b16 %v10185, %v10177
    %v11026 = vpack.c.b16 %v10186, %v10178
    %v11027 = vpack.c.b16 %v10187, %v10179
    %v11028 = vpack.c.b16 %v10188, %v10180
    %v11029 = vpack.c.b16 %v10189, %v10181
    %v11030 = vpack.c.b16 %v10190, %v10182
    %v11031 = vpack.c.b16 %v10191, %v10183
    %v11032 = vpack.c.b16 %v10200, %v10192
    %v11033 = vpack.c.b16 %v10201, %v10193
    %v11034 = vpack.c.b16 %v10202, %v10194
    %v11035 = vpack.c.b16 %v10203, %v10195
    %v11036 = vpack.c.b16 %v10204, %v10196
    %v11037 = vpack.c.b16 %v10205, %v10197
    %v11038 = vpack.c.b16 %v10206, %v10198
    %v11039 = vpack.c.b16 %v10207, %v10199
    %v11040 = vpack.c.b16 %v10216, %v10208
    %v11041 = vpack.c.b16 %v10217, %v10209
    %v11042 = vpack.c.b16 %v10218, %v10210
    %v11043 = vpack.c.b16 %v10219, %v10211
    %v11044 = vpack.c.b16 %v10220, %v10212
    %v11045 = vpack.c.b16 %v10221, %v10213
    %v11046 = vpack.c.b16 %v10222, %v10214
    %v11047 = vpack.c.b16 %v10223, %v10215
    %v11048 = vpack.c.b16 %v10232, %v10224
    %v11049 = vpack.c.b16 %v10233, %v10225
    %v11050 = vpack.c.b16 %v10234, %v10226
    %v11051 = vpack.c.b16 %v10235, %v10227
    %v11052 = vpack.c.b16 %v10236, %v10228
    %v11053 = vpack.c.b16 %v10237, %v10229
    %v11054 = vpack.c.b16 %v10238, %v10230
    %v11055 = vpack.c.b16 %v10239, %v10231
    %v11056 = vpack.c.b16 %v10248, %v10240
    %v11057 = vpack.c.b16 %v10249, %v10241
    %v11058 = vpack.c.b16 %v10250, %v10242
    %v11059 = vpack.c.b16 %v10251, %v10243
    %v11060 = vpack.c.b16 %v10252, %v10244
    %v11061 = vpack.c.b16 %v10253, %v10245
    %v11062 = vpack.c.b16 %v10254, %v10246
    %v11063 = vpack.c.b16 %v10255, %v10247
    %v11064 = vpack.c.b16 %v10264, %v10256
    %v11065 = vpack.c.b16 %v10265, %v10257
    %v11066 = vpack.c.b16 %v10266, %v10258
    %v11067 = vpack.c.b16 %v10267, %v10259
    %v11068 = vpack.c.b16 %v10268, %v10260
    %v11069 = vpack.c.b16 %v10269, %v10261
    %v11070 = vpack.c.b16 %v10270, %v10262
    %v11071 = vpack.c.b16 %v10271, %v10263
    %v11072 = vpack.c.b16 %v10280, %v10272
    %v11073 = vpack.c.b16 %v10281, %v10273
    %v11074 = vpack.c.b16 %v10282, %v10274
    %v11075 = vpack.c.b16 %v10283, %v10275
    %v11076 = vpack.c.b16 %v10284, %v10276
    %v11077 = vpack.c.b16 %v10285, %v10277
    %v11078 = vpack.c.b16 %v10286, %v10278
    %v11079 = vpack.c.b16 %v10287, %v10279
    %v11080 = vpack.c.b16 %v10296, %v10288
    %v11081 = vpack.c.b16 %v10297, %v10289
    %v11082 = vpack.c.b16 %v10298, %v10290
    %v11083 = vpack.c.b16 %v10299, %v10291
    %v11084 = vpack.c.b16 %v10300, %v10292
    %v11085 = vpack.c.b16 %v10301, %v10293
    %v11086 = vpack.c.b16 %v10302, %v10294
    %v11087 = vpack.c.b16 %v10303, %v10295
    %v11088 = vpack.c.b16 %v10312, %v10304
    %v11089 = vpack.c.b16 %v10313, %v10305
    %v11090 = vpack.c.b16 %v10314, %v10306
    %v11091 = vpack.c.b16 %v10315, %v10307
    %v11092 = vpack.c.b16 %v10316, %v10308
    %v11093 = vpack.c.b16 %v10317, %v10309
    %v11094 = vpack.c.b16 %v10318, %v10310
    %v11095 = vpack.c.b16 %v10319, %v10311
    %v11096 = vpack.c.b16 %v10328, %v10320
    %v11097 = vpack.c.b16 %v10329, %v10321
    %v11098 = vpack.c.b16 %v10330, %v10322
    %v11099 = vpack.c.b16 %v10331, %v10323
    %v11100 = vpack.c.b16 %v10332, %v10324
    %v11101 = vpack.c.b16 %v10333, %v10325
    %v11102 = vpack.c.b16 %v10334, %v10326
    %v11103 = vpack.c.b16 %v10335, %v10327
    %v11104 = vpack.c.b16 %v10344, %v10336
    %v11105 = vpack.c.b16 %v10345, %v10337
    %v11106 = vpack.c.b16 %v10346, %v10338
    %v11107 = vpack.c.b16 %v10347, %v10339
    %v11108 = vpack.c.b16 %v10348, %v10340
    %v11109 = vpack.c.b16 %v10349, %v10341
    %v11110 = vpack.c.b16 %v10350, %v10342
    %v11111 = vpack.c.b16 %v10351, %v10343
    %v11112 = vpack.c.b16 %v10360, %v10352
    %v11113 = vpack.c.b16 %v10361, %v10353
    %v11114 = vpack.c.b16 %v10362, %v10354
    %v11115 = vpack.c.b16 %v10363, %v10355
    %v11116 = vpack.c.b16 %v10364, %v10356
    %v11117 = vpack.c.b16 %v10365, %v10357
    %v11118 = vpack.c.b16 %v10366, %v10358
    %v11119 = vpack.c.b16 %v10367, %v10359
    %v11120 = vpack.c.b16 %v10376, %v10368
    %v11121 = vpack.c.b16 %v10377, %v10369
    %v11122 = vpack.c.b16 %v10378, %v10370
    %v11123 = vpack.c.b16 %v10379, %v10371
    %v11124 = vpack.c.b16 %v10380, %v10372
    %v11125 = vpack.c.b16 %v10381, %v10373
    %v11126 = vpack.c.b16 %v10382, %v10374
    %v11127 = vpack.c.b16 %v10383, %v10375
    %v11128 = vpack.c.b16 %v10392, %v10384
    %v11129 = vpack.c.b16 %v10393, %v10385
    %v11130 = vpack.c.b16 %v10394, %v10386
    %v11131 = vpack.c.b16 %v10395, %v10387
    %v11132 = vpack.c.b16 %v10396, %v10388
    %v11133 = vpack.c.b16 %v10397, %v10389
    %v11134 = vpack.c.b16 %v10398, %v10390
    %v11135 = vpack.c.b16 %v10399, %v10391
    %v11136 = vpack.c.b16 %v10408, %v10400
    %v11137 = vpack.c.b16 %v10409, %v10401
    %v11138 = vpack.c.b16 %v10410, %v10402
    %v11139 = vpack.c.b16 %v10411, %v10403
    %v11140 = vpack.c.b16 %v10412, %v10404
    %v11141 = vpack.c.b16 %v10413, %v10405
    %v11142 = vpack.c.b16 %v10414, %v10406
    %v11143 = vpack.c.b16 %v10415, %v10407
    %v11144 = vpack.c.b16 %v10424, %v10416
    %v11145 = vpack.c.b16 %v10425, %v10417
    %v11146 = vpack.c.b16 %v10426, %v10418
    %v11147 = vpack.c.b16 %v10427, %v10419
    %v11148 = vpack.c.b16 %v10428, %v10420
    %v11149 = vpack.c.b16 %v10429, %v10421
    %v11150 = vpack.c.b16 %v10430, %v10422
    %v11151 = vpack.c.b16 %v10431, %v10423
    %v11152 = vpack.c.b16 %v10440, %v10432
    %v11153 = vpack.c.b16 %v10441, %v10433
    %v11154 = vpack.c.b16 %v10442, %v10434
    %v11155 = vpack.c.b16 %v10443, %v10435
    %v11156 = vpack.c.b16 %v10444, %v10436
    %v11157 = vpack.c.b16 %v10445, %v10437
    %v11158 = vpack.c.b16 %v10446, %v10438
    %v11159 = vpack.c.b16 %v10447, %v10439
    %v11160 = vpack.c.b16 %v10456, %v10448
    %v11161 = vpack.c.b16 %v10457, %v10449
    %v11162 = vpack.c.b16 %v10458, %v10450
    %v11163 = vpack.c.b16 %v10459, %v10451
    %v11164 = vpack.c.b16 %v10460, %v10452
    %v11165 = vpack.c.b16 %v10461, %v10453
    %v11166 = vpack.c.b16 %v10462, %v10454
    %v11167 = vpack.c.b16 %v10463, %v10455
    %v11168 = vpack.c.b16 %v10472, %v10464
    %v11169 = vpack.c.b16 %v10473, %v10465
    %v11170 = vpack.c.b16 %v10474, %v10466
    %v11171 = vpack.c.b16 %v10475, %v10467
    %v11172 = vpack.c.b16 %v10476, %v10468
    %v11173 = vpack.c.b16 %v10477, %v10469
    %v11174 = vpack.c.b16 %v10478, %v10470
    %v11175 = vpack.c.b16 %v10479, %v10471
    %v11176 = vpack.c.b16 %v10488, %v10480
    %v11177 = vpack.c.b16 %v10489, %v10481
    %v11178 = vpack.c.b16 %v10490, %v10482
    %v11179 = vpack.c.b16 %v10491, %v10483
    %v11180 = vpack.c.b16 %v10492, %v10484
    %v11181 = vpack.c.b16 %v10493, %v10485
    %v11182 = vpack.c.b16 %v10494, %v10486
    %v11183 = vpack.c.b16 %v10495, %v10487
    %v11184 = vpack.c.b16 %v10504, %v10496
    %v11185 = vpack.c.b16 %v10505, %v10497
    %v11186 = vpack.c.b16 %v10506, %v10498
    %v11187 = vpack.c.b16 %v10507, %v10499
    %v11188 = vpack.c.b16 %v10508, %v10500
    %v11189 = vpack.c.b16 %v10509, %v10501
    %v11190 = vpack.c.b16 %v10510, %v10502
    %v11191 = vpack.c.b16 %v10511, %v10503
    %v11192 = vpack.c.b16 %v10520, %v10512
    %v11193 = vpack.c.b16 %v10521, %v10513
    %v11194 = vpack.c.b16 %v10522, %v10514
    %v11195 = vpack.c.b16 %v10523, %v10515
    %v11196 = vpack.c.b16 %v10524, %v10516
    %v11197 = vpack.c.b16 %v10525, %v10517
    %v11198 = vpack.c.b16 %v10526, %v10518
    %v11199 = vpack.c.b16 %v10527, %v10519
    %v11200 = vpack.c.b16 %v10536, %v10528
    %v11201 = vpack.c.b16 %v10537, %v10529
    %v11202 = vpack.c.b16 %v10538, %v10530
    %v11203 = vpack.c.b16 %v10539, %v10531
    %v11204 = vpack.c.b16 %v10540, %v10532
    %v11205 = vpack.c.b16 %v10541, %v10533
    %v11206 = vpack.c.b16 %v10542, %v10534
    %v11207 = vpack.c.b16 %v10543, %v10535
    %v11208 = vpack.c.b16 %v10552, %v10544
    %v11209 = vpack.c.b16 %v10553, %v10545
    %v11210 = vpack.c.b16 %v10554, %v10546
    %v11211 = vpack.c.b16 %v10555, %v10547
    %v11212 = vpack.c.b16 %v10556, %v10548
    %v11213 = vpack.c.b16 %v10557, %v10549
    %v11214 = vpack.c.b16 %v10558, %v10550
    %v11215 = vpack.c.b16 %v10559, %v10551
    %v11216 = vpack.c.b16 %v10568, %v10560
    %v11217 = vpack.c.b16 %v10569, %v10561
    %v11218 = vpack.c.b16 %v10570, %v10562
    %v11219 = vpack.c.b16 %v10571, %v10563
    %v11220 = vpack.c.b16 %v10572, %v10564
    %v11221 = vpack.c.b16 %v10573, %v10565
    %v11222 = vpack.c.b16 %v10574, %v10566
    %v11223 = vpack.c.b16 %v10575, %v10567
    %v11224 = vpack.c.b16 %v10584, %v10576
    %v11225 = vpack.c.b16 %v10585, %v10577
    %v11226 = vpack.c.b16 %v10586, %v10578
    %v11227 = vpack.c.b16 %v10587, %v10579
    %v11228 = vpack.c.b16 %v10588, %v10580
    %v11229 = vpack.c.b16 %v10589, %v10581
    %v11230 = vpack.c.b16 %v10590, %v10582
    %v11231 = vpack.c.b16 %v10591, %v10583
    %v11232 = vpack.c.b16 %v10600, %v10592
    %v11233 = vpack.c.b16 %v10601, %v10593
    %v11234 = vpack.c.b16 %v10602, %v10594
    %v11235 = vpack.c.b16 %v10603, %v10595
    %v11236 = vpack.c.b16 %v10604, %v10596
    %v11237 = vpack.c.b16 %v10605, %v10597
    %v11238 = vpack.c.b16 %v10606, %v10598
    %v11239 = vpack.c.b16 %v10607, %v10599
    %v11240 = vpack.c.b16 %v10616, %v10608
    %v11241 = vpack.c.b16 %v10617, %v10609
    %v11242 = vpack.c.b16 %v10618, %v10610
    %v11243 = vpack.c.b16 %v10619, %v10611
    %v11244 = vpack.c.b16 %v10620, %v10612
    %v11245 = vpack.c.b16 %v10621, %v10613
    %v11246 = vpack.c.b16 %v10622, %v10614
    %v11247 = vpack.c.b16 %v10623, %v10615
    %v11248 = vpack.c.b16 %v10632, %v10624
    %v11249 = vpack.c.b16 %v10633, %v10625
    %v11250 = vpack.c.b16 %v10634, %v10626
    %v11251 = vpack.c.b16 %v10635, %v10627
    %v11252 = vpack.c.b16 %v10636, %v10628
    %v11253 = vpack.c.b16 %v10637, %v10629
    %v11254 = vpack.c.b16 %v10638, %v10630
    %v11255 = vpack.c.b16 %v10639, %v10631
    %v11256 = vpack.c.b16 %v10648, %v10640
    %v11257 = vpack.c.b16 %v10649, %v10641
    %v11258 = vpack.c.b16 %v10650, %v10642
    %v11259 = vpack.c.b16 %v10651, %v10643
    %v11260 = vpack.c.b16 %v10652, %v10644
    %v11261 = vpack.c.b16 %v10653, %v10645
    %v11262 = vpack.c.b16 %v10654, %v10646
    %v11263 = vpack.c.b16 %v10655, %v10647
    %v11264 = vpack.c.b16 %v10664, %v10656
    %v11265 = vpack.c.b16 %v10665, %v10657
    %v11266 = vpack.c.b16 %v10666, %v10658
    %v11267 = vpack.c.b16 %v10667, %v10659
    %v11268 = vpack.c.b16 %v10668, %v10660
    %v11269 = vpack.c.b16 %v10669, %v10661
    %v11270 = vpack.c.b16 %v10670, %v10662
    %v11271 = vpack.c.b16 %v10671, %v10663
    %v11272 = vpack.c.b16 %v10680, %v10672
    %v11273 = vpack.c.b16 %v10681, %v10673
    %v11274 = vpack.c.b16 %v10682, %v10674
    %v11275 = vpack.c.b16 %v10683, %v10675
    %v11276 = vpack.c.b16 %v10684, %v10676
    %v11277 = vpack.c.b16 %v10685, %v10677
    %v11278 = vpack.c.b16 %v10686, %v10678
    %v11279 = vpack.c.b16 %v10687, %v10679
    %v11280 = vpack.c.b16 %v10696, %v10688
    %v11281 = vpack.c.b16 %v10697, %v10689
    %v11282 = vpack.c.b16 %v10698, %v10690
    %v11283 = vpack.c.b16 %v10699, %v10691
    %v11284 = vpack.c.b16 %v10700, %v10692
    %v11285 = vpack.c.b16 %v10701, %v10693
    %v11286 = vpack.c.b16 %v10702, %v10694
    %v11287 = vpack.c.b16 %v10703, %v10695
    %v11288 = vpack.c.b16 %v10712, %v10704
    %v11289 = vpack.c.b16 %v10713, %v10705
    %v11290 = vpack.c.b16 %v10714, %v10706
    %v11291 = vpack.c.b16 %v10715, %v10707
    %v11292 = vpack.c.b16 %v10716, %v10708
    %v11293 = vpack.c.b16 %v10717, %v10709
    %v11294 = vpack.c.b16 %v10718, %v10710
    %v11295 = vpack.c.b16 %v10719, %v10711
    %v11296 = vpack.c.b16 %v10728, %v10720
    %v11297 = vpack.c.b16 %v10729, %v10721
    %v11298 = vpack.c.b16 %v10730, %v10722
    %v11299 = vpack.c.b16 %v10731, %v10723
    %v11300 = vpack.c.b16 %v10732, %v10724
    %v11301 = vpack.c.b16 %v10733, %v10725
    %v11302 = vpack.c.b16 %v10734, %v10726
    %v11303 = vpack.c.b16 %v10735, %v10727
    %v11304 = vpack.c.b16 %v10744, %v10736
    %v11305 = vpack.c.b16 %v10745, %v10737
    %v11306 = vpack.c.b16 %v10746, %v10738
    %v11307 = vpack.c.b16 %v10747, %v10739
    %v11308 = vpack.c.b16 %v10748, %v10740
    %v11309 = vpack.c.b16 %v10749, %v10741
    %v11310 = vpack.c.b16 %v10750, %v10742
    %v11311 = vpack.c.b16 %v10751, %v10743
    %v11312 = vpack.c.b16 %v10760, %v10752
    %v11313 = vpack.c.b16 %v10761, %v10753
    %v11314 = vpack.c.b16 %v10762, %v10754
    %v11315 = vpack.c.b16 %v10763, %v10755
    %v11316 = vpack.c.b16 %v10764, %v10756
    %v11317 = vpack.c.b16 %v10765, %v10757
    %v11318 = vpack.c.b16 %v10766, %v10758
    %v11319 = vpack.c.b16 %v10767, %v10759
    %v11320 = vpack.c.b16 %v10776, %v10768
    %v11321 = vpack.c.b16 %v10777, %v10769
    %v11322 = vpack.c.b16 %v10778, %v10770
    %v11323 = vpack.c.b16 %v10779, %v10771
    %v11324 = vpack.c.b16 %v10780, %v10772
    %v11325 = vpack.c.b16 %v10781, %v10773
    %v11326 = vpack.c.b16 %v10782, %v10774
    %v11327 = vpack.c.b16 %v10783, %v10775
    %v11328 = vpack.c.b16 %v10792, %v10784
    %v11329 = vpack.c.b16 %v10793, %v10785
    %v11330 = vpack.c.b16 %v10794, %v10786
    %v11331 = vpack.c.b16 %v10795, %v10787
    %v11332 = vpack.c.b16 %v10796, %v10788
    %v11333 = vpack.c.b16 %v10797, %v10789
    %v11334 = vpack.c.b16 %v10798, %v10790
    %v11335 = vpack.c.b16 %v10799, %v10791
    %v11336 = vpack.c.b16 %v10808, %v10800
    %v11337 = vpack.c.b16 %v10809, %v10801
    %v11338 = vpack.c.b16 %v10810, %v10802
    %v11339 = vpack.c.b16 %v10811, %v10803
    %v11340 = vpack.c.b16 %v10812, %v10804
    %v11341 = vpack.c.b16 %v10813, %v10805
    %v11342 = vpack.c.b16 %v10814, %v10806
    %v11343 = vpack.c.b16 %v10815, %v10807
    %v11344 = vpack.c.b16 %v10824, %v10816
    %v11345 = vpack.c.b16 %v10825, %v10817
    %v11346 = vpack.c.b16 %v10826, %v10818
    %v11347 = vpack.c.b16 %v10827, %v10819
    %v11348 = vpack.c.b16 %v10828, %v10820
    %v11349 = vpack.c.b16 %v10829, %v10821
    %v11350 = vpack.c.b16 %v10830, %v10822
    %v11351 = vpack.c.b16 %v10831, %v10823
    %v11352 = vpack.c.b16 %v10840, %v10832
    %v11353 = vpack.c.b16 %v10841, %v10833
    %v11354 = vpack.c.b16 %v10842, %v10834
    %v11355 = vpack.c.b16 %v10843, %v10835
    %v11356 = vpack.c.b16 %v10844, %v10836
    %v11357 = vpack.c.b16 %v10845, %v10837
    %v11358 = vpack.c.b16 %v10846, %v10838
    %v11359 = vpack.c.b16 %v10847, %v10839
    %11872 = vmatprep.subr.bf16.mxu0 %v10849
    %11873 = vmatpush1.bf16.msra.mxu0 %v10848
    %11874 = vmatprep.subr.bf16.mxu0 %v10857
    %11875 = vmatpush1.bf16.msra.mxu0 %v10856
    %11876 = vmatprep.subr.bf16.mxu0 %v10865
    %11877 = vmatpush1.bf16.msra.mxu0 %v10864
    %11878 = vmatprep.subr.bf16.mxu0 %v10873
    %11879 = vmatpush1.bf16.msra.mxu0 %v10872
    %11880 = vmatprep.subr.bf16.mxu0 %v10881
    %11881 = vmatpush1.bf16.msra.mxu0 %v10880
    %11882 = vmatprep.subr.bf16.mxu0 %v10889
    %11883 = vmatpush1.bf16.msra.mxu0 %v10888
    %11884 = vmatprep.subr.bf16.mxu0 %v10897
    %11885 = vmatpush1.bf16.msra.mxu0 %v10896
    %11886 = vmatprep.subr.bf16.mxu0 %v10905
    %11887 = vmatpush1.bf16.msra.mxu0 %v10904
    %11888 = vmatprep.subr.bf16.mxu0 %v10913
    %11889 = vmatpush1.bf16.msra.mxu0 %v10912
    %11890 = vmatprep.subr.bf16.mxu0 %v10921
    %11891 = vmatpush1.bf16.msra.mxu0 %v10920
    %11892 = vmatprep.subr.bf16.mxu0 %v10929
    %11893 = vmatpush1.bf16.msra.mxu0 %v10928
    %11894 = vmatprep.subr.bf16.mxu0 %v10937
    %11895 = vmatpush1.bf16.msra.mxu0 %v10936
    %11896 = vmatprep.subr.bf16.mxu0 %v10945
    %11897 = vmatpush1.bf16.msra.mxu0 %v10944
    %11898 = vmatprep.subr.bf16.mxu0 %v10953
    %11899 = vmatpush1.bf16.msra.mxu0 %v10952
    %11900 = vmatprep.subr.bf16.mxu0 %v10961
    %11901 = vmatpush1.bf16.msra.mxu0 %v10960
    %11902 = vmatprep.subr.bf16.mxu0 %v10969
    %11903 = vmatpush1.bf16.msra.mxu0 %v10968
    %11904 = vmatprep.mubr.bf16.mxu0 %v8751
    %11905 = vmatmul.mubr.bf16.gmra.mrb[0].mxu0 %v8750
    %v11906 = vpop.f32.mrb[0].mxu0
    %v11907 = vadd.f32 %v9275, %v11906
    %v11908 = vpop.f32.mrb[0].mxu0
    %v11909 = vadd.f32 %v9279, %v11908
    %v11910 = vpop.f32.mrb[0].mxu0
    %v11911 = vpop.f32.mrb[0].mxu0
    %11912 = vdwg.mxu0
    %11913 = vmatprep.subr.bf16.mxu0 %v10977
    %11914 = vmatpush1.bf16.msra.mxu0 %v10976
    %11915 = vmatprep.subr.bf16.mxu0 %v10985
    %11916 = vmatpush1.bf16.msra.mxu0 %v10984
    %11917 = vmatprep.subr.bf16.mxu0 %v10993
    %11918 = vmatpush1.bf16.msra.mxu0 %v10992
    %11919 = vmatprep.subr.bf16.mxu0 %v11001
    %11920 = vmatpush1.bf16.msra.mxu0 %v11000
    %11921 = vmatprep.subr.bf16.mxu0 %v11009
    %11922 = vmatpush1.bf16.msra.mxu0 %v11008
    %11923 = vmatprep.subr.bf16.mxu0 %v11017
    %11924 = vmatpush1.bf16.msra.mxu0 %v11016
    %11925 = vmatprep.subr.bf16.mxu0 %v11025
    %11926 = vmatpush1.bf16.msra.mxu0 %v11024
    %11927 = vmatprep.subr.bf16.mxu0 %v11033
    %11928 = vmatpush1.bf16.msra.mxu0 %v11032
    %11929 = vmatprep.subr.bf16.mxu0 %v11041
    %11930 = vmatpush1.bf16.msra.mxu0 %v11040
    %11931 = vmatprep.subr.bf16.mxu0 %v11049
    %11932 = vmatpush1.bf16.msra.mxu0 %v11048
    %11933 = vmatprep.subr.bf16.mxu0 %v11057
    %11934 = vmatpush1.bf16.msra.mxu0 %v11056
    %11935 = vmatprep.subr.bf16.mxu0 %v11065
    %11936 = vmatpush1.bf16.msra.mxu0 %v11064
    %11937 = vmatprep.subr.bf16.mxu0 %v11073
    %11938 = vmatpush1.bf16.msra.mxu0 %v11072
    %11939 = vmatprep.subr.bf16.mxu0 %v11081
    %11940 = vmatpush1.bf16.msra.mxu0 %v11080
    %11941 = vmatprep.subr.bf16.mxu0 %v11089
    %11942 = vmatpush1.bf16.msra.mxu0 %v11088
    %11943 = vmatprep.subr.bf16.mxu0 %v11097
    %11944 = vmatpush1.bf16.msra.mxu0 %v11096
    %11945 = vmatprep.mubr.bf16.mxu0 %v8753
    %11946 = vmatmul.mubr.bf16.gmra.mrb[0].mxu0 %v8752
    %v11947 = vpop.f32.mrb[0].mxu0
    %v11948 = vadd.f32 %v11907, %v11947
    %v11949 = vpop.f32.mrb[0].mxu0
    %v11950 = vadd.f32 %v11909, %v11949
    %v11951 = vpop.f32.mrb[0].mxu0
    %v11952 = vpop.f32.mrb[0].mxu0
    %11953 = vdwg.mxu0
    %11954 = vmatprep.subr.bf16.mxu0 %v11105
    %11955 = vmatpush1.bf16.msra.mxu0 %v11104
    %11956 = vmatprep.subr.bf16.mxu0 %v11113
    %11957 = vmatpush1.bf16.msra.mxu0 %v11112
    %11958 = vmatprep.subr.bf16.mxu0 %v11121
    %11959 = vmatpush1.bf16.msra.mxu0 %v11120
    %11960 = vmatprep.subr.bf16.mxu0 %v11129
    %11961 = vmatpush1.bf16.msra.mxu0 %v11128
    %11962 = vmatprep.subr.bf16.mxu0 %v11137
    %11963 = vmatpush1.bf16.msra.mxu0 %v11136
    %11964 = vmatprep.subr.bf16.mxu0 %v11145
    %11965 = vmatpush1.bf16.msra.mxu0 %v11144
    %11966 = vmatprep.subr.bf16.mxu0 %v11153
    %11967 = vmatpush1.bf16.msra.mxu0 %v11152
    %11968 = vmatprep.subr.bf16.mxu0 %v11161
    %11969 = vmatpush1.bf16.msra.mxu0 %v11160
    %11970 = vmatprep.subr.bf16.mxu0 %v11169
    %11971 = vmatpush1.bf16.msra.mxu0 %v11168
    %11972 = vmatprep.subr.bf16.mxu0 %v11177
    %11973 = vmatpush1.bf16.msra.mxu0 %v11176
    %11974 = vmatprep.subr.bf16.mxu0 %v11185
    %11975 = vmatpush1.bf16.msra.mxu0 %v11184
    %11976 = vmatprep.subr.bf16.mxu0 %v11193
    %11977 = vmatpush1.bf16.msra.mxu0 %v11192
    %11978 = vmatprep.subr.bf16.mxu0 %v11201
    %11979 = vmatpush1.bf16.msra.mxu0 %v11200
    %11980 = vmatprep.subr.bf16.mxu0 %v11209
    %11981 = vmatpush1.bf16.msra.mxu0 %v11208
    %11982 = vmatprep.subr.bf16.mxu0 %v11217
    %11983 = vmatpush1.bf16.msra.mxu0 %v11216
    %11984 = vmatprep.subr.bf16.mxu0 %v11225
    %11985 = vmatpush1.bf16.msra.mxu0 %v11224
    %11986 = vmatprep.mubr.bf16.mxu0 %v8755
    %11987 = vmatmul.mubr.bf16.gmra.mrb[0].mxu0 %v8754
    %v11988 = vpop.f32.mrb[0].mxu0
    %v11989 = vadd.f32 %v11948, %v11988
    %v11990 = vpop.f32.mrb[0].mxu0
    %v11991 = vadd.f32 %v11950, %v11990
    %v11992 = vpop.f32.mrb[0].mxu0
    %v11993 = vpop.f32.mrb[0].mxu0
    %11994 = vdwg.mxu0
    %11995 = vmatprep.subr.bf16.mxu0 %v11233
    %11996 = vmatpush1.bf16.msra.mxu0 %v11232
    %11997 = vmatprep.subr.bf16.mxu0 %v11241
    %11998 = vmatpush1.bf16.msra.mxu0 %v11240
    %11999 = vmatprep.subr.bf16.mxu0 %v11249
    %12000 = vmatpush1.bf16.msra.mxu0 %v11248
    %12001 = vmatprep.subr.bf16.mxu0 %v11257
    %12002 = vmatpush1.bf16.msra.mxu0 %v11256
    %12003 = vmatprep.subr.bf16.mxu0 %v11265
    %12004 = vmatpush1.bf16.msra.mxu0 %v11264
    %12005 = vmatprep.subr.bf16.mxu0 %v11273
    %12006 = vmatpush1.bf16.msra.mxu0 %v11272
    %12007 = vmatprep.subr.bf16.mxu0 %v11281
    %12008 = vmatpush1.bf16.msra.mxu0 %v11280
    %12009 = vmatprep.subr.bf16.mxu0 %v11289
    %12010 = vmatpush1.bf16.msra.mxu0 %v11288
    %12011 = vmatprep.subr.bf16.mxu0 %v11297
    %12012 = vmatpush1.bf16.msra.mxu0 %v11296
    %12013 = vmatprep.subr.bf16.mxu0 %v11305
    %12014 = vmatpush1.bf16.msra.mxu0 %v11304
    %12015 = vmatprep.subr.bf16.mxu0 %v11313
    %12016 = vmatpush1.bf16.msra.mxu0 %v11312
    %12017 = vmatprep.subr.bf16.mxu0 %v11321
    %12018 = vmatpush1.bf16.msra.mxu0 %v11320
    %12019 = vmatprep.subr.bf16.mxu0 %v11329
    %12020 = vmatpush1.bf16.msra.mxu0 %v11328
    %12021 = vmatprep.subr.bf16.mxu0 %v11337
    %12022 = vmatpush1.bf16.msra.mxu0 %v11336
    %12023 = vmatprep.subr.bf16.mxu0 %v11345
    %12024 = vmatpush1.bf16.msra.mxu0 %v11344
    %12025 = vmatprep.subr.bf16.mxu0 %v11353
    %12026 = vmatpush1.bf16.msra.mxu0 %v11352
    %12027 = vmatprep.mubr.bf16.mxu0 %v8757
    %12028 = vmatmul.mubr.bf16.gmra.mrb[0].mxu0 %v8756
    %v12029 = vpop.f32.mrb[0].mxu0
    %v12030 = vadd.f32 %v11989, %v12029
    %v12031 = vpop.f32.mrb[0].mxu0
    %v12032 = vadd.f32 %v11991, %v12031
    %v12033 = vpop.f32.mrb[0].mxu0
    %v12034 = vpop.f32.mrb[0].mxu0
    %12035 = vdwg.mxu0
    %12036 = vmatprep.subr.bf16.mxu0 %v10851
    %12037 = vmatpush1.bf16.msra.mxu0 %v10850
    %12038 = vmatprep.subr.bf16.mxu0 %v10859
    %12039 = vmatpush1.bf16.msra.mxu0 %v10858
    %12040 = vmatprep.subr.bf16.mxu0 %v10867
    %12041 = vmatpush1.bf16.msra.mxu0 %v10866
    %12042 = vmatprep.subr.bf16.mxu0 %v10875
    %12043 = vmatpush1.bf16.msra.mxu0 %v10874
    %12044 = vmatprep.subr.bf16.mxu0 %v10883
    %12045 = vmatpush1.bf16.msra.mxu0 %v10882
    %12046 = vmatprep.subr.bf16.mxu0 %v10891
    %12047 = vmatpush1.bf16.msra.mxu0 %v10890
    %12048 = vmatprep.subr.bf16.mxu0 %v10899
    %12049 = vmatpush1.bf16.msra.mxu0 %v10898
    %12050 = vmatprep.subr.bf16.mxu0 %v10907
    %12051 = vmatpush1.bf16.msra.mxu0 %v10906
    %12052 = vmatprep.subr.bf16.mxu0 %v10915
    %12053 = vmatpush1.bf16.msra.mxu0 %v10914
    %12054 = vmatprep.subr.bf16.mxu0 %v10923
    %12055 = vmatpush1.bf16.msra.mxu0 %v10922
    %12056 = vmatprep.subr.bf16.mxu0 %v10931
    %12057 = vmatpush1.bf16.msra.mxu0 %v10930
    %12058 = vmatprep.subr.bf16.mxu0 %v10939
    %12059 = vmatpush1.bf16.msra.mxu0 %v10938
    %12060 = vmatprep.subr.bf16.mxu0 %v10947
    %12061 = vmatpush1.bf16.msra.mxu0 %v10946
    %12062 = vmatprep.subr.bf16.mxu0 %v10955
    %12063 = vmatpush1.bf16.msra.mxu0 %v10954
    %12064 = vmatprep.subr.bf16.mxu0 %v10963
    %12065 = vmatpush1.bf16.msra.mxu0 %v10962
    %12066 = vmatprep.subr.bf16.mxu0 %v10971
    %12067 = vmatpush1.bf16.msra.mxu0 %v10970
    %12068 = vmatprep.mubr.bf16.mxu0 %v8751
    %12069 = vmatmul.mubr.bf16.gmra.mrb[0].mxu0 %v8750
    %v12070 = vpop.f32.mrb[0].mxu0
    %v12071 = vadd.f32 %v9283, %v12070
    %v12072 = vpop.f32.mrb[0].mxu0
    %v12073 = vadd.f32 %v9287, %v12072
    %v12074 = vpop.f32.mrb[0].mxu0
    %v12075 = vpop.f32.mrb[0].mxu0
    %12076 = vdwg.mxu0
    %12077 = vmatprep.subr.bf16.mxu0 %v10979
    %12078 = vmatpush1.bf16.msra.mxu0 %v10978
    %12079 = vmatprep.subr.bf16.mxu0 %v10987
    %12080 = vmatpush1.bf16.msra.mxu0 %v10986
    %12081 = vmatprep.subr.bf16.mxu0 %v10995
    %12082 = vmatpush1.bf16.msra.mxu0 %v10994
    %12083 = vmatprep.subr.bf16.mxu0 %v11003
    %12084 = vmatpush1.bf16.msra.mxu0 %v11002
    %12085 = vmatprep.subr.bf16.mxu0 %v11011
    %12086 = vmatpush1.bf16.msra.mxu0 %v11010
    %12087 = vmatprep.subr.bf16.mxu0 %v11019
    %12088 = vmatpush1.bf16.msra.mxu0 %v11018
    %12089 = vmatprep.subr.bf16.mxu0 %v11027
    %12090 = vmatpush1.bf16.msra.mxu0 %v11026
    %12091 = vmatprep.subr.bf16.mxu0 %v11035
    %12092 = vmatpush1.bf16.msra.mxu0 %v11034
    %12093 = vmatprep.subr.bf16.mxu0 %v11043
    %12094 = vmatpush1.bf16.msra.mxu0 %v11042
    %12095 = vmatprep.subr.bf16.mxu0 %v11051
    %12096 = vmatpush1.bf16.msra.mxu0 %v11050
    %12097 = vmatprep.subr.bf16.mxu0 %v11059
    %12098 = vmatpush1.bf16.msra.mxu0 %v11058
    %12099 = vmatprep.subr.bf16.mxu0 %v11067
    %12100 = vmatpush1.bf16.msra.mxu0 %v11066
    %12101 = vmatprep.subr.bf16.mxu0 %v11075
    %12102 = vmatpush1.bf16.msra.mxu0 %v11074
    %12103 = vmatprep.subr.bf16.mxu0 %v11083
    %12104 = vmatpush1.bf16.msra.mxu0 %v11082
    %12105 = vmatprep.subr.bf16.mxu0 %v11091
    %12106 = vmatpush1.bf16.msra.mxu0 %v11090
    %12107 = vmatprep.subr.bf16.mxu0 %v11099
    %12108 = vmatpush1.bf16.msra.mxu0 %v11098
    %12109 = vmatprep.mubr.bf16.mxu0 %v8753
    %12110 = vmatmul.mubr.bf16.gmra.mrb[0].mxu0 %v8752
    %v12111 = vpop.f32.mrb[0].mxu0
    %v12112 = vadd.f32 %v12071, %v12111
    %v12113 = vpop.f32.mrb[0].mxu0
    %v12114 = vadd.f32 %v12073, %v12113
    %v12115 = vpop.f32.mrb[0].mxu0
    %v12116 = vpop.f32.mrb[0].mxu0
    %12117 = vdwg.mxu0
    %12118 = vmatprep.subr.bf16.mxu0 %v11107
    %12119 = vmatpush1.bf16.msra.mxu0 %v11106
    %12120 = vmatprep.subr.bf16.mxu0 %v11115
    %12121 = vmatpush1.bf16.msra.mxu0 %v11114
    %12122 = vmatprep.subr.bf16.mxu0 %v11123
    %12123 = vmatpush1.bf16.msra.mxu0 %v11122
    %12124 = vmatprep.subr.bf16.mxu0 %v11131
    %12125 = vmatpush1.bf16.msra.mxu0 %v11130
    %12126 = vmatprep.subr.bf16.mxu0 %v11139
    %12127 = vmatpush1.bf16.msra.mxu0 %v11138
    %12128 = vmatprep.subr.bf16.mxu0 %v11147
    %12129 = vmatpush1.bf16.msra.mxu0 %v11146
    %12130 = vmatprep.subr.bf16.mxu0 %v11155
    %12131 = vmatpush1.bf16.msra.mxu0 %v11154
    %12132 = vmatprep.subr.bf16.mxu0 %v11163
    %12133 = vmatpush1.bf16.msra.mxu0 %v11162
    %12134 = vmatprep.subr.bf16.mxu0 %v11171
    %12135 = vmatpush1.bf16.msra.mxu0 %v11170
    %12136 = vmatprep.subr.bf16.mxu0 %v11179
    %12137 = vmatpush1.bf16.msra.mxu0 %v11178
    %12138 = vmatprep.subr.bf16.mxu0 %v11187
    %12139 = vmatpush1.bf16.msra.mxu0 %v11186
    %12140 = vmatprep.subr.bf16.mxu0 %v11195
    %12141 = vmatpush1.bf16.msra.mxu0 %v11194
    %12142 = vmatprep.subr.bf16.mxu0 %v11203
    %12143 = vmatpush1.bf16.msra.mxu0 %v11202
    %12144 = vmatprep.subr.bf16.mxu0 %v11211
    %12145 = vmatpush1.bf16.msra.mxu0 %v11210
    %12146 = vmatprep.subr.bf16.mxu0 %v11219
    %12147 = vmatpush1.bf16.msra.mxu0 %v11218
    %12148 = vmatprep.subr.bf16.mxu0 %v11227
    %12149 = vmatpush1.bf16.msra.mxu0 %v11226
    %12150 = vmatprep.mubr.bf16.mxu0 %v8755
    %12151 = vmatmul.mubr.bf16.gmra.mrb[0].mxu0 %v8754
    %v12152 = vpop.f32.mrb[0].mxu0
    %v12153 = vadd.f32 %v12112, %v12152
    %v12154 = vpop.f32.mrb[0].mxu0
    %v12155 = vadd.f32 %v12114, %v12154
    %v12156 = vpop.f32.mrb[0].mxu0
    %v12157 = vpop.f32.mrb[0].mxu0
    %12158 = vdwg.mxu0
    %12159 = vmatprep.subr.bf16.mxu0 %v11235
    %12160 = vmatpush1.bf16.msra.mxu0 %v11234
    %12161 = vmatprep.subr.bf16.mxu0 %v11243
    %12162 = vmatpush1.bf16.msra.mxu0 %v11242
    %12163 = vmatprep.subr.bf16.mxu0 %v11251
    %12164 = vmatpush1.bf16.msra.mxu0 %v11250
    %12165 = vmatprep.subr.bf16.mxu0 %v11259
    %12166 = vmatpush1.bf16.msra.mxu0 %v11258
    %12167 = vmatprep.subr.bf16.mxu0 %v11267
    %12168 = vmatpush1.bf16.msra.mxu0 %v11266
    %12169 = vmatprep.subr.bf16.mxu0 %v11275
    %12170 = vmatpush1.bf16.msra.mxu0 %v11274
    %12171 = vmatprep.subr.bf16.mxu0 %v11283
    %12172 = vmatpush1.bf16.msra.mxu0 %v11282
    %12173 = vmatprep.subr.bf16.mxu0 %v11291
    %12174 = vmatpush1.bf16.msra.mxu0 %v11290
    %12175 = vmatprep.subr.bf16.mxu0 %v11299
    %12176 = vmatpush1.bf16.msra.mxu0 %v11298
    %12177 = vmatprep.subr.bf16.mxu0 %v11307
    %12178 = vmatpush1.bf16.msra.mxu0 %v11306
    %12179 = vmatprep.subr.bf16.mxu0 %v11315
    %12180 = vmatpush1.bf16.msra.mxu0 %v11314
    %12181 = vmatprep.subr.bf16.mxu0 %v11323
    %12182 = vmatpush1.bf16.msra.mxu0 %v11322
    %12183 = vmatprep.subr.bf16.mxu0 %v11331
    %12184 = vmatpush1.bf16.msra.mxu0 %v11330
    %12185 = vmatprep.subr.bf16.mxu0 %v11339
    %12186 = vmatpush1.bf16.msra.mxu0 %v11338
    %12187 = vmatprep.subr.bf16.mxu0 %v11347
    %12188 = vmatpush1.bf16.msra.mxu0 %v11346
    %12189 = vmatprep.subr.bf16.mxu0 %v11355
    %12190 = vmatpush1.bf16.msra.mxu0 %v11354
    %12191 = vmatprep.mubr.bf16.mxu0 %v8757
    %12192 = vmatmul.mubr.bf16.gmra.mrb[0].mxu0 %v8756
    %v12193 = vpop.f32.mrb[0].mxu0
    %v12194 = vadd.f32 %v12153, %v12193
    %v12195 = vpop.f32.mrb[0].mxu0
    %v12196 = vadd.f32 %v12155, %v12195
    %v12197 = vpop.f32.mrb[0].mxu0
    %v12198 = vpop.f32.mrb[0].mxu0
    %12199 = vdwg.mxu0
    %12200 = vmatprep.subr.bf16.mxu0 %v10853
    %12201 = vmatpush1.bf16.msra.mxu0 %v10852
    %12202 = vmatprep.subr.bf16.mxu0 %v10861
    %12203 = vmatpush1.bf16.msra.mxu0 %v10860
    %12204 = vmatprep.subr.bf16.mxu0 %v10869
    %12205 = vmatpush1.bf16.msra.mxu0 %v10868
    %12206 = vmatprep.subr.bf16.mxu0 %v10877
    %12207 = vmatpush1.bf16.msra.mxu0 %v10876
    %12208 = vmatprep.subr.bf16.mxu0 %v10885
    %12209 = vmatpush1.bf16.msra.mxu0 %v10884
    %12210 = vmatprep.subr.bf16.mxu0 %v10893
    %12211 = vmatpush1.bf16.msra.mxu0 %v10892
    %12212 = vmatprep.subr.bf16.mxu0 %v10901
    %12213 = vmatpush1.bf16.msra.mxu0 %v10900
    %12214 = vmatprep.subr.bf16.mxu0 %v10909
    %12215 = vmatpush1.bf16.msra.mxu0 %v10908
    %12216 = vmatprep.subr.bf16.mxu0 %v10917
    %12217 = vmatpush1.bf16.msra.mxu0 %v10916
    %12218 = vmatprep.subr.bf16.mxu0 %v10925
    %12219 = vmatpush1.bf16.msra.mxu0 %v10924
    %12220 = vmatprep.subr.bf16.mxu0 %v10933
    %12221 = vmatpush1.bf16.msra.mxu0 %v10932
    %12222 = vmatprep.subr.bf16.mxu0 %v10941
    %12223 = vmatpush1.bf16.msra.mxu0 %v10940
    %12224 = vmatprep.subr.bf16.mxu0 %v10949
    %12225 = vmatpush1.bf16.msra.mxu0 %v10948
    %12226 = vmatprep.subr.bf16.mxu0 %v10957
    %12227 = vmatpush1.bf16.msra.mxu0 %v10956
    %12228 = vmatprep.subr.bf16.mxu0 %v10965
    %12229 = vmatpush1.bf16.msra.mxu0 %v10964
    %12230 = vmatprep.subr.bf16.mxu0 %v10973
    %12231 = vmatpush1.bf16.msra.mxu0 %v10972
    %12232 = vmatprep.mubr.bf16.mxu0 %v8751
    %12233 = vmatmul.mubr.bf16.gmra.mrb[0].mxu0 %v8750
    %v12234 = vpop.f32.mrb[0].mxu0
    %v12235 = vadd.f32 %v9291, %v12234
    %v12236 = vpop.f32.mrb[0].mxu0
    %v12237 = vadd.f32 %v9295, %v12236
    %v12238 = vpop.f32.mrb[0].mxu0
    %v12239 = vpop.f32.mrb[0].mxu0
    %12240 = vdwg.mxu0
    %12241 = vmatprep.subr.bf16.mxu0 %v10981
    %12242 = vmatpush1.bf16.msra.mxu0 %v10980
    %12243 = vmatprep.subr.bf16.mxu0 %v10989
    %12244 = vmatpush1.bf16.msra.mxu0 %v10988
    %12245 = vmatprep.subr.bf16.mxu0 %v10997
    %12246 = vmatpush1.bf16.msra.mxu0 %v10996
    %12247 = vmatprep.subr.bf16.mxu0 %v11005
    %12248 = vmatpush1.bf16.msra.mxu0 %v11004
    %12249 = vmatprep.subr.bf16.mxu0 %v11013
    %12250 = vmatpush1.bf16.msra.mxu0 %v11012
    %12251 = vmatprep.subr.bf16.mxu0 %v11021
    %12252 = vmatpush1.bf16.msra.mxu0 %v11020
    %12253 = vmatprep.subr.bf16.mxu0 %v11029
    %12254 = vmatpush1.bf16.msra.mxu0 %v11028
    %12255 = vmatprep.subr.bf16.mxu0 %v11037
    %12256 = vmatpush1.bf16.msra.mxu0 %v11036
    %12257 = vmatprep.subr.bf16.mxu0 %v11045
    %12258 = vmatpush1.bf16.msra.mxu0 %v11044
    %12259 = vmatprep.subr.bf16.mxu0 %v11053
    %12260 = vmatpush1.bf16.msra.mxu0 %v11052
    %12261 = vmatprep.subr.bf16.mxu0 %v11061
    %12262 = vmatpush1.bf16.msra.mxu0 %v11060
    %12263 = vmatprep.subr.bf16.mxu0 %v11069
    %12264 = vmatpush1.bf16.msra.mxu0 %v11068
    %12265 = vmatprep.subr.bf16.mxu0 %v11077
    %12266 = vmatpush1.bf16.msra.mxu0 %v11076
    %12267 = vmatprep.subr.bf16.mxu0 %v11085
    %12268 = vmatpush1.bf16.msra.mxu0 %v11084
    %12269 = vmatprep.subr.bf16.mxu0 %v11093
    %12270 = vmatpush1.bf16.msra.mxu0 %v11092
    %12271 = vmatprep.subr.bf16.mxu0 %v11101
    %12272 = vmatpush1.bf16.msra.mxu0 %v11100
    %12273 = vmatprep.mubr.bf16.mxu0 %v8753
    %12274 = vmatmul.mubr.bf16.gmra.mrb[0].mxu0 %v8752
    %v12275 = vpop.f32.mrb[0].mxu0
    %v12276 = vadd.f32 %v12235, %v12275
    %v12277 = vpop.f32.mrb[0].mxu0
    %v12278 = vadd.f32 %v12237, %v12277
    %v12279 = vpop.f32.mrb[0].mxu0
    %v12280 = vpop.f32.mrb[0].mxu0
    %12281 = vdwg.mxu0
    %12282 = vmatprep.subr.bf16.mxu0 %v11109
    %12283 = vmatpush1.bf16.msra.mxu0 %v11108
    %12284 = vmatprep.subr.bf16.mxu0 %v11117
    %12285 = vmatpush1.bf16.msra.mxu0 %v11116
    %12286 = vmatprep.subr.bf16.mxu0 %v11125
    %12287 = vmatpush1.bf16.msra.mxu0 %v11124
    %12288 = vmatprep.subr.bf16.mxu0 %v11133
    %12289 = vmatpush1.bf16.msra.mxu0 %v11132
    %12290 = vmatprep.subr.bf16.mxu0 %v11141
    %12291 = vmatpush1.bf16.msra.mxu0 %v11140
    %12292 = vmatprep.subr.bf16.mxu0 %v11149
    %12293 = vmatpush1.bf16.msra.mxu0 %v11148
    %12294 = vmatprep.subr.bf16.mxu0 %v11157
    %12295 = vmatpush1.bf16.msra.mxu0 %v11156
    %12296 = vmatprep.subr.bf16.mxu0 %v11165
    %12297 = vmatpush1.bf16.msra.mxu0 %v11164
    %12298 = vmatprep.subr.bf16.mxu0 %v11173
    %12299 = vmatpush1.bf16.msra.mxu0 %v11172
    %12300 = vmatprep.subr.bf16.mxu0 %v11181
    %12301 = vmatpush1.bf16.msra.mxu0 %v11180
    %12302 = vmatprep.subr.bf16.mxu0 %v11189
    %12303 = vmatpush1.bf16.msra.mxu0 %v11188
    %12304 = vmatprep.subr.bf16.mxu0 %v11197
    %12305 = vmatpush1.bf16.msra.mxu0 %v11196
    %12306 = vmatprep.subr.bf16.mxu0 %v11205
    %12307 = vmatpush1.bf16.msra.mxu0 %v11204
    %12308 = vmatprep.subr.bf16.mxu0 %v11213
    %12309 = vmatpush1.bf16.msra.mxu0 %v11212
    %12310 = vmatprep.subr.bf16.mxu0 %v11221
    %12311 = vmatpush1.bf16.msra.mxu0 %v11220
    %12312 = vmatprep.subr.bf16.mxu0 %v11229
    %12313 = vmatpush1.bf16.msra.mxu0 %v11228
    %12314 = vmatprep.mubr.bf16.mxu0 %v8755
    %12315 = vmatmul.mubr.bf16.gmra.mrb[0].mxu0 %v8754
    %v12316 = vpop.f32.mrb[0].mxu0
    %v12317 = vadd.f32 %v12276, %v12316
    %v12318 = vpop.f32.mrb[0].mxu0
    %v12319 = vadd.f32 %v12278, %v12318
    %v12320 = vpop.f32.mrb[0].mxu0
    %v12321 = vpop.f32.mrb[0].mxu0
    %12322 = vdwg.mxu0
    %12323 = vmatprep.subr.bf16.mxu0 %v11237
    %12324 = vmatpush1.bf16.msra.mxu0 %v11236
    %12325 = vmatprep.subr.bf16.mxu0 %v11245
    %12326 = vmatpush1.bf16.msra.mxu0 %v11244
    %12327 = vmatprep.subr.bf16.mxu0 %v11253
    %12328 = vmatpush1.bf16.msra.mxu0 %v11252
    %12329 = vmatprep.subr.bf16.mxu0 %v11261
    %12330 = vmatpush1.bf16.msra.mxu0 %v11260
    %12331 = vmatprep.subr.bf16.mxu0 %v11269
    %12332 = vmatpush1.bf16.msra.mxu0 %v11268
    %12333 = vmatprep.subr.bf16.mxu0 %v11277
    %12334 = vmatpush1.bf16.msra.mxu0 %v11276
    %12335 = vmatprep.subr.bf16.mxu0 %v11285
    %12336 = vmatpush1.bf16.msra.mxu0 %v11284
    %12337 = vmatprep.subr.bf16.mxu0 %v11293
    %12338 = vmatpush1.bf16.msra.mxu0 %v11292
    %12339 = vmatprep.subr.bf16.mxu0 %v11301
    %12340 = vmatpush1.bf16.msra.mxu0 %v11300
    %12341 = vmatprep.subr.bf16.mxu0 %v11309
    %12342 = vmatpush1.bf16.msra.mxu0 %v11308
    %12343 = vmatprep.subr.bf16.mxu0 %v11317
    %12344 = vmatpush1.bf16.msra.mxu0 %v11316
    %12345 = vmatprep.subr.bf16.mxu0 %v11325
    %12346 = vmatpush1.bf16.msra.mxu0 %v11324
    %12347 = vmatprep.subr.bf16.mxu0 %v11333
    %12348 = vmatpush1.bf16.msra.mxu0 %v11332
    %12349 = vmatprep.subr.bf16.mxu0 %v11341
    %12350 = vmatpush1.bf16.msra.mxu0 %v11340
    %12351 = vmatprep.subr.bf16.mxu0 %v11349
    %12352 = vmatpush1.bf16.msra.mxu0 %v11348
    %12353 = vmatprep.subr.bf16.mxu0 %v11357
    %12354 = vmatpush1.bf16.msra.mxu0 %v11356
    %12355 = vmatprep.mubr.bf16.mxu0 %v8757
    %12356 = vmatmul.mubr.bf16.gmra.mrb[0].mxu0 %v8756
    %v12357 = vpop.f32.mrb[0].mxu0
    %v12358 = vadd.f32 %v12317, %v12357
    %v12359 = vpop.f32.mrb[0].mxu0
    %v12360 = vadd.f32 %v12319, %v12359
    %v12361 = vpop.f32.mrb[0].mxu0
    %v12362 = vpop.f32.mrb[0].mxu0
    %12363 = vdwg.mxu0
    %12364 = vmatprep.subr.bf16.mxu0 %v10855
    %12365 = vmatpush1.bf16.msra.mxu0 %v10854
    %12366 = vmatprep.subr.bf16.mxu0 %v10863
    %12367 = vmatpush1.bf16.msra.mxu0 %v10862
    %12368 = vmatprep.subr.bf16.mxu0 %v10871
    %12369 = vmatpush1.bf16.msra.mxu0 %v10870
    %12370 = vmatprep.subr.bf16.mxu0 %v10879
    %12371 = vmatpush1.bf16.msra.mxu0 %v10878
    %12372 = vmatprep.subr.bf16.mxu0 %v10887
    %12373 = vmatpush1.bf16.msra.mxu0 %v10886
    %12374 = vmatprep.subr.bf16.mxu0 %v10895
    %12375 = vmatpush1.bf16.msra.mxu0 %v10894
    %12376 = vmatprep.subr.bf16.mxu0 %v10903
    %12377 = vmatpush1.bf16.msra.mxu0 %v10902
    %12378 = vmatprep.subr.bf16.mxu0 %v10911
    %12379 = vmatpush1.bf16.msra.mxu0 %v10910
    %12380 = vmatprep.subr.bf16.mxu0 %v10919
    %12381 = vmatpush1.bf16.msra.mxu0 %v10918
    %12382 = vmatprep.subr.bf16.mxu0 %v10927
    %12383 = vmatpush1.bf16.msra.mxu0 %v10926
    %12384 = vmatprep.subr.bf16.mxu0 %v10935
    %12385 = vmatpush1.bf16.msra.mxu0 %v10934
    %12386 = vmatprep.subr.bf16.mxu0 %v10943
    %12387 = vmatpush1.bf16.msra.mxu0 %v10942
    %12388 = vmatprep.subr.bf16.mxu0 %v10951
    %12389 = vmatpush1.bf16.msra.mxu0 %v10950
    %12390 = vmatprep.subr.bf16.mxu0 %v10959
    %12391 = vmatpush1.bf16.msra.mxu0 %v10958
    %12392 = vmatprep.subr.bf16.mxu0 %v10967
    %12393 = vmatpush1.bf16.msra.mxu0 %v10966
    %12394 = vmatprep.subr.bf16.mxu0 %v10975
    %12395 = vmatpush1.bf16.msra.mxu0 %v10974
    %12396 = vmatprep.mubr.bf16.mxu0 %v8751
    %12397 = vmatmul.mubr.bf16.gmra.mrb[0].mxu0 %v8750
    %v12398 = vpop.f32.mrb[0].mxu0
    %v12399 = vadd.f32 %v9299, %v12398
    %v12400 = vpop.f32.mrb[0].mxu0
    %v12401 = vadd.f32 %v9303, %v12400
    %v12402 = vpop.f32.mrb[0].mxu0
    %v12403 = vpop.f32.mrb[0].mxu0
    %12404 = vdwg.mxu0
    %12405 = vmatprep.subr.bf16.mxu0 %v10983
    %12406 = vmatpush1.bf16.msra.mxu0 %v10982
    %12407 = vmatprep.subr.bf16.mxu0 %v10991
    %12408 = vmatpush1.bf16.msra.mxu0 %v10990
    %12409 = vmatprep.subr.bf16.mxu0 %v10999
    %12410 = vmatpush1.bf16.msra.mxu0 %v10998
    %12411 = vmatprep.subr.bf16.mxu0 %v11007
    %12412 = vmatpush1.bf16.msra.mxu0 %v11006
    %12413 = vmatprep.subr.bf16.mxu0 %v11015
    %12414 = vmatpush1.bf16.msra.mxu0 %v11014
    %12415 = vmatprep.subr.bf16.mxu0 %v11023
    %12416 = vmatpush1.bf16.msra.mxu0 %v11022
    %12417 = vmatprep.subr.bf16.mxu0 %v11031
    %12418 = vmatpush1.bf16.msra.mxu0 %v11030
    %12419 = vmatprep.subr.bf16.mxu0 %v11039
    %12420 = vmatpush1.bf16.msra.mxu0 %v11038
    %12421 = vmatprep.subr.bf16.mxu0 %v11047
    %12422 = vmatpush1.bf16.msra.mxu0 %v11046
    %12423 = vmatprep.subr.bf16.mxu0 %v11055
    %12424 = vmatpush1.bf16.msra.mxu0 %v11054
    %12425 = vmatprep.subr.bf16.mxu0 %v11063
    %12426 = vmatpush1.bf16.msra.mxu0 %v11062
    %12427 = vmatprep.subr.bf16.mxu0 %v11071
    %12428 = vmatpush1.bf16.msra.mxu0 %v11070
    %12429 = vmatprep.subr.bf16.mxu0 %v11079
    %12430 = vmatpush1.bf16.msra.mxu0 %v11078
    %12431 = vmatprep.subr.bf16.mxu0 %v11087
    %12432 = vmatpush1.bf16.msra.mxu0 %v11086
    %12433 = vmatprep.subr.bf16.mxu0 %v11095
    %12434 = vmatpush1.bf16.msra.mxu0 %v11094
    %12435 = vmatprep.subr.bf16.mxu0 %v11103
    %12436 = vmatpush1.bf16.msra.mxu0 %v11102
    %12437 = vmatprep.mubr.bf16.mxu0 %v8753
    %12438 = vmatmul.mubr.bf16.gmra.mrb[0].mxu0 %v8752
    %v12439 = vpop.f32.mrb[0].mxu0
    %v12440 = vadd.f32 %v12399, %v12439
    %v12441 = vpop.f32.mrb[0].mxu0
    %v12442 = vadd.f32 %v12401, %v12441
    %v12443 = vpop.f32.mrb[0].mxu0
    %v12444 = vpop.f32.mrb[0].mxu0
    %12445 = vdwg.mxu0
    %12446 = vmatprep.subr.bf16.mxu0 %v11111
    %12447 = vmatpush1.bf16.msra.mxu0 %v11110
    %12448 = vmatprep.subr.bf16.mxu0 %v11119
    %12449 = vmatpush1.bf16.msra.mxu0 %v11118
    %12450 = vmatprep.subr.bf16.mxu0 %v11127
    %12451 = vmatpush1.bf16.msra.mxu0 %v11126
    %12452 = vmatprep.subr.bf16.mxu0 %v11135
    %12453 = vmatpush1.bf16.msra.mxu0 %v11134
    %12454 = vmatprep.subr.bf16.mxu0 %v11143
    %12455 = vmatpush1.bf16.msra.mxu0 %v11142
    %12456 = vmatprep.subr.bf16.mxu0 %v11151
    %12457 = vmatpush1.bf16.msra.mxu0 %v11150
    %12458 = vmatprep.subr.bf16.mxu0 %v11159
    %12459 = vmatpush1.bf16.msra.mxu0 %v11158
    %12460 = vmatprep.subr.bf16.mxu0 %v11167
    %12461 = vmatpush1.bf16.msra.mxu0 %v11166
    %12462 = vmatprep.subr.bf16.mxu0 %v11175
    %12463 = vmatpush1.bf16.msra.mxu0 %v11174
    %12464 = vmatprep.subr.bf16.mxu0 %v11183
    %12465 = vmatpush1.bf16.msra.mxu0 %v11182
    %12466 = vmatprep.subr.bf16.mxu0 %v11191
    %12467 = vmatpush1.bf16.msra.mxu0 %v11190
    %12468 = vmatprep.subr.bf16.mxu0 %v11199
    %12469 = vmatpush1.bf16.msra.mxu0 %v11198
    %12470 = vmatprep.subr.bf16.mxu0 %v11207
    %12471 = vmatpush1.bf16.msra.mxu0 %v11206
    %12472 = vmatprep.subr.bf16.mxu0 %v11215
    %12473 = vmatpush1.bf16.msra.mxu0 %v11214
    %12474 = vmatprep.subr.bf16.mxu0 %v11223
    %12475 = vmatpush1.bf16.msra.mxu0 %v11222
    %12476 = vmatprep.subr.bf16.mxu0 %v11231
    %12477 = vmatpush1.bf16.msra.mxu0 %v11230
    %12478 = vmatprep.mubr.bf16.mxu0 %v8755
    %12479 = vmatmul.mubr.bf16.gmra.mrb[0].mxu0 %v8754
    %v12480 = vpop.f32.mrb[0].mxu0
    %v12481 = vadd.f32 %v12440, %v12480
    %v12482 = vpop.f32.mrb[0].mxu0
    %v12483 = vadd.f32 %v12442, %v12482
    %v12484 = vpop.f32.mrb[0].mxu0
    %v12485 = vpop.f32.mrb[0].mxu0
    %12486 = vdwg.mxu0
    %12487 = vmatprep.subr.bf16.mxu0 %v11239
    %12488 = vmatpush1.bf16.msra.mxu0 %v11238
    %12489 = vmatprep.subr.bf16.mxu0 %v11247
    %12490 = vmatpush1.bf16.msra.mxu0 %v11246
    %12491 = vmatprep.subr.bf16.mxu0 %v11255
    %12492 = vmatpush1.bf16.msra.mxu0 %v11254
    %12493 = vmatprep.subr.bf16.mxu0 %v11263
    %12494 = vmatpush1.bf16.msra.mxu0 %v11262
    %12495 = vmatprep.subr.bf16.mxu0 %v11271
    %12496 = vmatpush1.bf16.msra.mxu0 %v11270
    %12497 = vmatprep.subr.bf16.mxu0 %v11279
    %12498 = vmatpush1.bf16.msra.mxu0 %v11278
    %12499 = vmatprep.subr.bf16.mxu0 %v11287
    %12500 = vmatpush1.bf16.msra.mxu0 %v11286
    %12501 = vmatprep.subr.bf16.mxu0 %v11295
    %12502 = vmatpush1.bf16.msra.mxu0 %v11294
    %12503 = vmatprep.subr.bf16.mxu0 %v11303
    %12504 = vmatpush1.bf16.msra.mxu0 %v11302
    %12505 = vmatprep.subr.bf16.mxu0 %v11311
    %12506 = vmatpush1.bf16.msra.mxu0 %v11310
    %12507 = vmatprep.subr.bf16.mxu0 %v11319
    %12508 = vmatpush1.bf16.msra.mxu0 %v11318
    %12509 = vmatprep.subr.bf16.mxu0 %v11327
    %12510 = vmatpush1.bf16.msra.mxu0 %v11326
    %12511 = vmatprep.subr.bf16.mxu0 %v11335
    %12512 = vmatpush1.bf16.msra.mxu0 %v11334
    %12513 = vmatprep.subr.bf16.mxu0 %v11343
    %12514 = vmatpush1.bf16.msra.mxu0 %v11342
    %12515 = vmatprep.subr.bf16.mxu0 %v11351
    %12516 = vmatpush1.bf16.msra.mxu0 %v11350
    %12517 = vmatprep.subr.bf16.mxu0 %v11359
    %12518 = vmatpush1.bf16.msra.mxu0 %v11358
    %12519 = vmatprep.mubr.bf16.mxu0 %v8757
    %12520 = vmatmul.mubr.bf16.gmra.mrb[0].mxu0 %v8756
    %v12521 = vpop.f32.mrb[0].mxu0
    %v12522 = vadd.f32 %v12481, %v12521
    %v12523 = vpop.f32.mrb[0].mxu0
    %v12524 = vadd.f32 %v12483, %v12523
    %v12525 = vpop.f32.mrb[0].mxu0
    %v12526 = vpop.f32.mrb[0].mxu0
    %12527 = vdwg.mxu0
    %v12528 = vtanh.pop %v12030
    %v12529 = vtanh.pop %v12032
    %v12530 = vtanh.pop %v12194
    %v12531 = vtanh.pop %v12196
    %v12532 = vtanh.pop %v12358
    %v12533 = vtanh.pop %v12360
    %v12534 = vtanh.pop %v12522
    %v12535 = vtanh.pop %v12524
    %v12544 = vcombine.low %v12528, %v12529
    %v12545 = vcombine.low %v12530, %v12531
    %v12547 = vunpack.c.l.s4 1983009808
    %v12548 = vunpack.c.0.s8 %v12547
    %v12549 = vlaneseq
    %v12550 = vshrl.u32 %v12549, 7
    %v12551 = vsub.s32 %v12548, %v12550
    %v12552 = vrot.slane %v12544, %v12551
    %v12554 = vunpack.c.l.s4 1983009808
    %v12555 = vunpack.c.0.s8 %v12554
    %v12556 = vlaneseq
    %v12557 = vshrl.u32 %v12556, 7
    %v12558 = vsub.s32 %v12555, %v12557
    %v12559 = vrot.slane %v12545, %v12558
    %v12560 = vcombine.low %v12552, %v12559
    %v12561 = vcombine.low %v12532, %v12533
    %v12562 = vcombine.low %v12534, %v12535
    %v12564 = vunpack.c.l.s4 1983009808
    %v12565 = vunpack.c.0.s8 %v12564
    %v12566 = vlaneseq
    %v12567 = vshrl.u32 %v12566, 7
    %v12568 = vsub.s32 %v12565, %v12567
    %v12569 = vrot.slane %v12561, %v12568
    %v12571 = vunpack.c.l.s4 1983009808
    %v12572 = vunpack.c.0.s8 %v12571
    %v12573 = vlaneseq
    %v12574 = vshrl.u32 %v12573, 7
    %v12575 = vsub.s32 %v12572, %v12574
    %v12576 = vrot.slane %v12562, %v12575
    %v12577 = vcombine.low %v12569, %v12576
    %12580 = vst [vmem:[%s16] sm:$0xff] %v12560
    %12581 = vst [vmem:[%s16 + $0x8] sm:$0xff] %v12577
    %vm12582 = vcmask 254976
    %12583 = vst.msk [vmem:[%s17] sm:$0x3] %vm12582, %v6317
    %12585 = vrot.lane.b32.xlu0 %v6660, 32
    %v12586 = vpop.permute.xlu0 %12585
    %vm12588 = vcmask 517376
    %12589 = vst.msk [vmem:[%s17] sm:$0x3] %vm12588, %v12586
    %12591 = vrot.lane.b32.xlu0 %v6670, 64
    %v12592 = vpop.permute.xlu0 %12591
    %vm12594 = vcmask 779776
    %12595 = vst.msk [vmem:[%s17] sm:$0x3] %vm12594, %v12592
    // Predicated region
    $region118: #{generator_forward.1} parent=1 // pred_check
      _
    $region119: #{generator_forward.1} parent=1 // pred_check_branch
      %12597 = sbr.rel (0) target = $region121
    $region120: #{generator_forward.1} parent=1 // pred_region
      _
    $region121: #{generator_forward.1} parent=1 // pred_fallthru
      _
    // Predicated region
    $region122: #{generator_forward.1} parent=1 // pred_check
      _
    $region123: #{generator_forward.1} parent=1 // pred_check_branch
      %12599 = sbr.rel (0) target = $region125
    $region124: #{generator_forward.1} parent=1 // pred_region
      _
    $region125: #{generator_forward.1} parent=1 // pred_fallthru
      _
    // Predicated region
    $region126: #{generator_forward.1} parent=1 // pred_check
      _
    $region127: #{generator_forward.1} parent=1 // pred_check_branch
      %12601 = sbr.rel (0) target = $region129
    $region128: #{generator_forward.1} parent=1 // pred_region
      _
    $region129: #{generator_forward.1} parent=1 // pred_fallthru
      _
    // Predicated region
    $region130: #{generator_forward.1} parent=1 // pred_check
      _
    $region131: #{generator_forward.1} parent=1 // pred_check_branch
      %12603 = sbr.rel (0) target = $region133
    $region132: #{generator_forward.1} parent=1 // pred_region
      _
    $region133: #{generator_forward.1} parent=1 // pred_fallthru
      _
    %12604 = vsyncpa [#allocation3], 1
    %12605 = vsyncpa [#allocation5], 1
    %12606 = vsyncpa [#allocation8], 1
    %12607 = vsyncpa [#allocation11], 1
    %12608 = vsyncpa [#allocation14], 1
    %12609 = vsyncpa [#allocation17], 1
    %12610 = vsyncpa [#allocation20], 1

</llo_original>
